<compile_context>
chip_gen: v6e
topology: v6e:2x2x1
jax: 0.10.0
libtpu: 0.0.40
codegen_flags: <defaults>
</compile_context>

<pallas_src>
import functools

import jax
import jax.numpy as jnp
from jax.experimental import pallas as pl
from jax.experimental.pallas import tpu as pltpu

LANE = 128
SUBLANE = 8
_VMEM = pl.BlockSpec(memory_space=pltpu.MemorySpace.VMEM)
_VMEM_LIMIT = 32 * 1024 * 1024


def _round_up(n, m):
    return ((n + m - 1) // m) * m


def _pad2(a, rows, cols):
    r, c = a.shape
    return jnp.pad(a, ((0, rows - r), (0, cols - c)))


# ----------------------------------------------------------------------------
# Pallas kernels
# ----------------------------------------------------------------------------
def _linear_kernel(x_ref, w_ref, b_ref, o_ref, *, activation):
    """One fused y = act(x @ W + b) block; grid axis tiles the output features."""
    y = jnp.dot(x_ref[...].astype(w_ref.dtype), w_ref[...],
                preferred_element_type=jnp.float32)
    y = y + b_ref[...]  # (1, TN) broadcasts over batch, f32
    if activation == "relu":
        y = jnp.maximum(y, 0.0)
    elif activation == "sigmoid":
        # exp + approx reciprocal both run on the EUP (keeps the VPU slot free);
        # clamp restores the exact [0, 1] Sigmoid range.
        y = jnp.clip(pl.reciprocal(1.0 + jnp.exp(-y), approx=True), 0.0, 1.0)
    o_ref[...] = y.astype(o_ref.dtype)


def _mlp_chain_kernel(x_ref, w_ref, b_ref, o_ref, h_scratch, *, last_act):
    """L fused [Linear -> activation] layers; grid axis = layer index.

    Per-layer bf16 weights are streamed from HBM via the BlockSpec pipeline
    (layer l+1 is prefetched while layer l computes); the running activation is
    kept in a persistent f32 VMEM scratch, and the output is written only at
    the last layer.
    """
    l = pl.program_id(0)
    n = pl.num_programs(0)

    @pl.when(l == 0)
    def _():
        h_scratch[...] = x_ref[...]

    y = jnp.dot(h_scratch[...].astype(w_ref.dtype), w_ref[...],
                preferred_element_type=jnp.float32)
    y = y + b_ref[...]
    y_relu = jnp.maximum(y, 0.0)

    @pl.when(l < n - 1)
    def _():
        h_scratch[...] = y_relu

    @pl.when(l == n - 1)
    def _():
        if last_act == "relu":
            out = y_relu
        elif last_act == "sigmoid":
            out = jnp.clip(pl.reciprocal(1.0 + jnp.exp(-y), approx=True), 0.0, 1.0)
        else:
            out = y
        o_ref[...] = out.astype(o_ref.dtype)


def _bottleneck_kernel(h_ref, w12_ref, b12_ref, eps_ref, w3_ref, b3_ref,
                       h2_ref, mu_ref, lv_ref, *, zp):
    """fc1|fc2 as one matmul -> reparameterize -> fc3, all in-register."""
    h = h_ref[...].astype(w12_ref.dtype)
    y = jnp.dot(h, w12_ref[...], preferred_element_type=jnp.float32) + b12_ref[...]
    mu = y[:, :zp]
    lv = y[:, zp:]
    z = mu + jnp.exp(lv * 0.5) * eps_ref[...]
    h2 = jnp.dot(z.astype(w3_ref.dtype), w3_ref[...],
                 preferred_element_type=jnp.float32) + b3_ref[...]
    h2_ref[...] = h2
    mu_ref[...] = mu
    lv_ref[...] = lv


# ----------------------------------------------------------------------------
# Pallas wrappers
# ----------------------------------------------------------------------------
def pallas_linear(x, w, b, activation=None):
    """x: (Bp, K) f32, w: (K, N) bf16, b: (1, N) f32 -> (Bp, N) f32.

    Grid over N (512-wide lane-dense blocks) marked "parallel" so both v7x
    TensorCores stream half the weight; K kept whole (no accumulator needed).
    """
    Bp, K = x.shape
    Kw, N = w.shape
    assert K == Kw and b.shape == (1, N)
    tn = 512 if N % 512 == 0 else N
    cost = pl.CostEstimate(
        flops=2 * Bp * K * N,
        transcendentals=(Bp * N) if activation == "sigmoid" else 0,
        bytes_accessed=int(x.size * x.dtype.itemsize + w.size * w.dtype.itemsize
                           + b.size * 4 + Bp * N * 4))
    return pl.pallas_call(
        functools.partial(_linear_kernel, activation=activation),
        out_shape=jax.ShapeDtypeStruct((Bp, N), jnp.float32),
        grid=(N // tn,),
        in_specs=[pl.BlockSpec((Bp, K), lambda j: (0, 0)),
                  pl.BlockSpec((K, tn), lambda j: (0, j)),
                  pl.BlockSpec((1, tn), lambda j: (0, j))],
        out_specs=pl.BlockSpec((Bp, tn), lambda j: (0, j)),
        compiler_params=pltpu.CompilerParams(
            dimension_semantics=("parallel",),
            vmem_limit_bytes=_VMEM_LIMIT),
        cost_estimate=cost,
    )(x, w, b)


def pallas_mlp_chain(x, w_stack, b_stack, last_act="relu"):
    """x: (Bp, K) f32, w_stack: (L, K, K) bf16, b_stack: (L, 1, K) f32."""
    L, K, N = w_stack.shape
    Bp = x.shape[0]
    assert x.shape[1] == K and K == N and b_stack.shape == (L, 1, N)
    cost = pl.CostEstimate(
        flops=2 * Bp * K * N * L,
        transcendentals=0,
        bytes_accessed=int(w_stack.size * w_stack.dtype.itemsize
                           + b_stack.size * 4 + x.size * 4 + Bp * N * 4))
    return pl.pallas_call(
        functools.partial(_mlp_chain_kernel, last_act=last_act),
        out_shape=jax.ShapeDtypeStruct((Bp, N), jnp.float32),
        grid=(L,),
        in_specs=[pl.BlockSpec((Bp, K), lambda l: (0, 0)),
                  pl.BlockSpec((None, K, N), lambda l: (l, 0, 0)),
                  pl.BlockSpec((None, 1, N), lambda l: (l, 0, 0))],
        out_specs=pl.BlockSpec((Bp, N), lambda l: (0, 0)),
        scratch_shapes=[pltpu.VMEM((Bp, K), jnp.float32)],
        compiler_params=pltpu.CompilerParams(
            dimension_semantics=("arbitrary",),  # layer l+1 depends on layer l
            vmem_limit_bytes=_VMEM_LIMIT),
        cost_estimate=cost,
    )(x, w_stack, b_stack)


def pallas_bottleneck(h, w12, b12, eps, w3, b3):
    """Fused fc1|fc2 -> reparameterize -> fc3 (single kernel, no grid)."""
    Bp, H = h.shape
    zp = w3.shape[0]
    assert w12.shape == (H, 2 * zp) and eps.shape == (Bp, zp)
    cost = pl.CostEstimate(
        flops=2 * Bp * H * 2 * zp + 2 * Bp * zp * H,
        transcendentals=Bp * zp,
        bytes_accessed=int(h.size * 4 + w12.size * 2 + w3.size * 2
                           + eps.size * 4 + (Bp * H + 2 * Bp * zp) * 4))
    return pl.pallas_call(
        functools.partial(_bottleneck_kernel, zp=zp),
        out_shape=(jax.ShapeDtypeStruct((Bp, H), jnp.float32),
                   jax.ShapeDtypeStruct((Bp, zp), jnp.float32),
                   jax.ShapeDtypeStruct((Bp, zp), jnp.float32)),
        in_specs=[_VMEM] * 6,
        out_specs=(_VMEM, _VMEM, _VMEM),
        compiler_params=pltpu.CompilerParams(vmem_limit_bytes=_VMEM_LIMIT),
        cost_estimate=cost,
    )(h, w12, b12, eps, w3, b3)


# ----------------------------------------------------------------------------
# Parameters (PyTorch-default-style init) and padded/packed kernel layout
# ----------------------------------------------------------------------------
def _init_linear(key, in_f, out_f):
    kw, kb = jax.random.split(key)
    bound = 1.0 / (in_f ** 0.5)
    w = jax.random.uniform(kw, (in_f, out_f), jnp.float32, -bound, bound)
    b = jax.random.uniform(kb, (1, out_f), jnp.float32, -bound, bound)
    return w, b


def init_vae_params(key, image_size, h_dim=1000, z_dim=4):
    keys = iter(jax.random.split(key, 16))
    enc_dims = [(image_size, 1000)] + [(1000, 1000)] * 5
    dec_dims = [(1000, 1000)] * 5 + [(1000, image_size)]
    return {
        "encoder": [_init_linear(next(keys), i, o) for i, o in enc_dims],
        "fc1": _init_linear(next(keys), h_dim, z_dim),
        "fc2": _init_linear(next(keys), h_dim, z_dim),
        "fc3": _init_linear(next(keys), z_dim, h_dim),
        "decoder": [_init_linear(next(keys), i, o) for i, o in dec_dims],
    }


def prepare_params(params, image_size, h_dim=1000, z_dim=4):
    """One-time layout conversion: zero-pad every feature dim to a multiple of
    128, cast weights to bf16 (biases stay f32), stack the uniform 1000x1000
    layers into (L, H, H) so they can be streamed by the chain kernel, and
    concatenate fc1|fc2 into one weight."""
    H = _round_up(h_dim, LANE)
    IMG = _round_up(image_size, LANE)
    Z = _round_up(z_dim, LANE)

    def w_pad(w, k, n):
        return _pad2(w, k, n).astype(jnp.bfloat16)

    def b_pad(b, n):
        return _pad2(b, 1, n)  # float32

    enc = params["encoder"]
    dec = params["decoder"]
    w1, b1 = params["fc1"]
    w2, b2 = params["fc2"]
    w3, b3 = params["fc3"]
    return {
        "enc0_w": w_pad(enc[0][0], IMG, H), "enc0_b": b_pad(enc[0][1], H),
        "enc_w": jnp.stack([w_pad(w, H, H) for w, _ in enc[1:]]),
        "enc_b": jnp.stack([b_pad(b, H) for _, b in enc[1:]]),
        "w12": jnp.concatenate([w_pad(w1, H, Z), w_pad(w2, H, Z)], axis=1),
        "b12": jnp.concatenate([b_pad(b1, Z), b_pad(b2, Z)], axis=1),
        "w3": w_pad(w3, Z, H), "b3": b_pad(b3, H),
        "dec_w": jnp.stack([w_pad(w, H, H) for w, _ in dec[:5]]),
        "dec_b": jnp.stack([b_pad(b, H) for _, b in dec[:5]]),
        "dec5_w": w_pad(dec[5][0], H, IMG), "dec5_b": b_pad(dec[5][1], IMG),
    }


# ----------------------------------------------------------------------------
# Forward pass (mirrors VAE_mlp_MRI.forward)
# ----------------------------------------------------------------------------
def vae_mlp_mri_forward(prep, x, eps):
    B, image_size = x.shape
    z_dim = eps.shape[1]
    IMG = prep["enc0_w"].shape[0]
    Z = prep["w3"].shape[0]
    Bp = _round_up(B, SUBLANE)

    x_pad = jnp.pad(x, ((0, Bp - B), (0, IMG - image_size)))
    eps_pad = jnp.pad(eps, ((0, Bp - B), (0, Z - z_dim)))

    # encoder: layer 0 (image_size -> 1000), then 5 fused 1000->1000 ReLU layers
    h = pallas_linear(x_pad, prep["enc0_w"], prep["enc0_b"], activation="relu")
    h = pallas_mlp_chain(h, prep["enc_w"], prep["enc_b"], last_act="relu")

    # bottleneck: fc1|fc2 + reparameterize + fc3 (no activation) in one kernel
    h2, mu_p, lv_p = pallas_bottleneck(h, prep["w12"], prep["b12"], eps_pad,
                                       prep["w3"], prep["b3"])

    # decoder: 5 fused 1000->1000 ReLU layers, then 1000 -> image_size + Sigmoid
    h2 = pallas_mlp_chain(h2, prep["dec_w"], prep["dec_b"], last_act="relu")
    recon_p = pallas_linear(h2, prep["dec5_w"], prep["dec5_b"],
                            activation="sigmoid")

    return (recon_p[:B, :image_size], mu_p[:B, :z_dim], lv_p[:B, :z_dim])


# ----------------------------------------------------------------------------
if __name__ == "__main__":
    # Small-but-consistent config: 16x16 "images" flattened to 256 features,
    # h_dim fixed at 1000 (hardcoded in the module's encoder/decoder), z_dim=4.
    batch = 2
    image_size = 16 * 16
    h_dim = 1000
    z_dim = 4

    key = jax.random.PRNGKey(0)
    k_params, k_x, k_eps = jax.random.split(key, 3)

    params = init_vae_params(k_params, image_size, h_dim, z_dim)
    prep = prepare_params(params, image_size, h_dim, z_dim)

    x = jax.random.uniform(k_x, (batch, image_size), jnp.float32)   # flattened input
    eps = jax.random.normal(k_eps, (batch, z_dim), jnp.float32)     # reparam noise

    fwd = jax.jit(vae_mlp_mri_forward)
    recon, mu, logvar = fwd(prep, x, eps)
    jax.block_until_ready((recon, mu, logvar))

    assert recon.shape == (batch, image_size)
    assert mu.shape == (batch, z_dim)
    assert logvar.shape == (batch, z_dim)
    assert bool(jnp.all(jnp.isfinite(recon)))
    assert bool(jnp.all(jnp.isfinite(mu))) and bool(jnp.all(jnp.isfinite(logvar)))
    assert bool(jnp.all((recon >= 0.0) & (recon <= 1.0)))  # sigmoid output

    print("KERNEL_OK")
</pallas_src>

<mosaic_0001>
module attributes {stable_mosaic.version = 11 : i64} {
  func.func @_bottleneck_kernel(%arg0: memref<8x1024xf32, #tpu.memory_space<vmem>>, %arg1: memref<1024x256xbf16, #tpu.memory_space<vmem>>, %arg2: memref<1x256xf32, #tpu.memory_space<vmem>>, %arg3: memref<8x128xf32, #tpu.memory_space<vmem>>, %arg4: memref<128x1024xbf16, #tpu.memory_space<vmem>>, %arg5: memref<1x1024xf32, #tpu.memory_space<vmem>>, %arg6: memref<8x1024xf32, #tpu.memory_space<vmem>>, %arg7: memref<8x128xf32, #tpu.memory_space<vmem>>, %arg8: memref<8x128xf32, #tpu.memory_space<vmem>>) attributes {dimension_semantics = [], scalar_prefetch = 0 : i64, scratch_operands = 0 : i64, tpu.core_type = #tpu.core_type<tc>} {
    %c0 = arith.constant 0 : index
    %c0_0 = arith.constant 0 : index
    %0 = vector.load %arg0[%c0, %c0_0] : memref<8x1024xf32, #tpu.memory_space<vmem>>, vector<8x1024xf32>
    %1 = arith.truncf %0 : vector<8x1024xf32> to vector<8x1024xbf16>
    %c0_1 = arith.constant 0 : index
    %c0_2 = arith.constant 0 : index
    %2 = vector.load %arg1[%c0_1, %c0_2] : memref<1024x256xbf16, #tpu.memory_space<vmem>>, vector<1024x256xbf16>
    %cst = arith.constant dense<0.000000e+00> : vector<8x256xf32>
    %3 = tpu.matmul %1, %2, %cst {dimension_numbers = #tpu.dot_dimension_numbers<[1], [0], [0], [1], [0, 0, 1, 1], [], []>} : vector<8x1024xbf16>, vector<1024x256xbf16>, vector<8x256xf32> -> vector<8x256xf32>
    %c0_3 = arith.constant 0 : index
    %c0_4 = arith.constant 0 : index
    %4 = vector.load %arg2[%c0_3, %c0_4] : memref<1x256xf32, #tpu.memory_space<vmem>>, vector<1x256xf32>
    %5 = vector.broadcast %4 : vector<1x256xf32> to vector<8x256xf32>
    %6 = arith.addf %3, %5 : vector<8x256xf32>
    %7 = vector.extract_strided_slice %6 {offsets = [0, 0], sizes = [8, 128], strides = [1, 1]} : vector<8x256xf32> to vector<8x128xf32>
    %8 = vector.extract_strided_slice %6 {offsets = [0, 128], sizes = [8, 128], strides = [1, 1]} : vector<8x256xf32> to vector<8x128xf32>
    %cst_5 = arith.constant 5.000000e-01 : f32
    %9 = vector.broadcast %cst_5 : f32 to vector<8x128xf32>
    %10 = arith.mulf %8, %9 : vector<8x128xf32>
    %11 = math.exp %10 : vector<8x128xf32>
    %c0_6 = arith.constant 0 : index
    %c0_7 = arith.constant 0 : index
    %12 = vector.load %arg3[%c0_6, %c0_7] : memref<8x128xf32, #tpu.memory_space<vmem>>, vector<8x128xf32>
    %13 = arith.mulf %11, %12 : vector<8x128xf32>
    %14 = arith.addf %7, %13 : vector<8x128xf32>
    %15 = arith.truncf %14 : vector<8x128xf32> to vector<8x128xbf16>
    %c0_8 = arith.constant 0 : index
    %c0_9 = arith.constant 0 : index
    %16 = vector.load %arg4[%c0_8, %c0_9] : memref<128x1024xbf16, #tpu.memory_space<vmem>>, vector<128x1024xbf16>
    %cst_10 = arith.constant dense<0.000000e+00> : vector<8x1024xf32>
    %17 = tpu.matmul %15, %16, %cst_10 {dimension_numbers = #tpu.dot_dimension_numbers<[1], [0], [0], [1], [0, 0, 1, 1], [], []>} : vector<8x128xbf16>, vector<128x1024xbf16>, vector<8x1024xf32> -> vector<8x1024xf32>
    %c0_11 = arith.constant 0 : index
    %c0_12 = arith.constant 0 : index
    %18 = vector.load %arg5[%c0_11, %c0_12] : memref<1x1024xf32, #tpu.memory_space<vmem>>, vector<1x1024xf32>
    %19 = vector.broadcast %18 : vector<1x1024xf32> to vector<8x1024xf32>
    %20 = arith.addf %17, %19 : vector<8x1024xf32>
    %c0_13 = arith.constant 0 : index
    %c0_14 = arith.constant 0 : index
    %21 = vector.load %arg6[%c0_13, %c0_14] : memref<8x1024xf32, #tpu.memory_space<vmem>>, vector<8x1024xf32>
    tpu.vector_store %arg6[%c0_13, %c0_14], %20 {strides = array<i32>} : memref<8x1024xf32, #tpu.memory_space<vmem>>, vector<8x1024xf32>,
    %c0_15 = arith.constant 0 : index
    %c0_16 = arith.constant 0 : index
    %22 = vector.load %arg7[%c0_15, %c0_16] : memref<8x128xf32, #tpu.memory_space<vmem>>, vector<8x128xf32>
    tpu.vector_store %arg7[%c0_15, %c0_16], %7 {strides = array<i32>} : memref<8x128xf32, #tpu.memory_space<vmem>>, vector<8x128xf32>,
    %c0_17 = arith.constant 0 : index
    %c0_18 = arith.constant 0 : index
    %23 = vector.load %arg8[%c0_17, %c0_18] : memref<8x128xf32, #tpu.memory_space<vmem>>, vector<8x128xf32>
    tpu.vector_store %arg8[%c0_17, %c0_18], %8 {strides = array<i32>} : memref<8x128xf32, #tpu.memory_space<vmem>>, vector<8x128xf32>,
    return
  }
}

module attributes {stable_mosaic.version = 11 : i64} {
  func.func @_mlp_chain_kernel(%arg0: i32, %arg1: memref<8x1024xf32, #tpu.memory_space<vmem>>, %arg2: memref<1x1024x1024xbf16, #tpu.memory_space<vmem>>, %arg3: memref<1x1x1024xf32, #tpu.memory_space<vmem>>, %arg4: memref<8x1024xf32, #tpu.memory_space<vmem>>, %arg5: memref<8x1024xf32, #tpu.memory_space<vmem>>) attributes {dimension_semantics = [#tpu.dimension_semantics<arbitrary>], iteration_bounds = array<i64: 5>, scalar_prefetch = 0 : i64, scratch_operands = 1 : i64, tpu.core_type = #tpu.core_type<tc>, window_params = [{pipeline_mode = #tpu.pipeline_mode<synchronous>, transform_indices = @transform_0, window_bounds = array<i64: 8, 1024>}, {transform_indices = @transform_1, window_bounds = array<i64: 1, 1024, 1024>}, {transform_indices = @transform_2, window_bounds = array<i64: 1, 1, 1024>}, {pipeline_mode = #tpu.pipeline_mode<synchronous>, transform_indices = @transform_3, window_bounds = array<i64: 8, 1024>}]} {
    %c0_i32 = arith.constant 0 : i32
    %0 = arith.cmpi eq, %arg0, %c0_i32 : i32
    %1 = arith.extui %0 : i1 to i32
    %c0_i32_0 = arith.constant 0 : i32
    %2 = arith.cmpi ne, %1, %c0_i32_0 : i32
    scf.if %2 {
      %c0_12 = arith.constant 0 : index
      %c0_13 = arith.constant 0 : index
      %20 = vector.load %arg1[%c0_12, %c0_13] : memref<8x1024xf32, #tpu.memory_space<vmem>>, vector<8x1024xf32>
      %c0_14 = arith.constant 0 : index
      %c0_15 = arith.constant 0 : index
      %21 = vector.load %arg5[%c0_14, %c0_15] : memref<8x1024xf32, #tpu.memory_space<vmem>>, vector<8x1024xf32>
      tpu.vector_store %arg5[%c0_14, %c0_15], %20 {strides = array<i32>} : memref<8x1024xf32, #tpu.memory_space<vmem>>, vector<8x1024xf32>,
    } else {
    }
    %c0 = arith.constant 0 : index
    %c0_1 = arith.constant 0 : index
    %3 = vector.load %arg5[%c0, %c0_1] : memref<8x1024xf32, #tpu.memory_space<vmem>>, vector<8x1024xf32>
    %4 = arith.truncf %3 : vector<8x1024xf32> to vector<8x1024xbf16>
    %c0_2 = arith.constant 0 : index
    %c0_3 = arith.constant 0 : index
    %c0_4 = arith.constant 0 : index
    %5 = vector.load %arg2[%c0_2, %c0_3, %c0_4] : memref<1x1024x1024xbf16, #tpu.memory_space<vmem>>, vector<1x1024x1024xbf16>
    %6 = vector.shape_cast %5 : vector<1x1024x1024xbf16> to vector<1024x1024xbf16>
    %cst = arith.constant dense<0.000000e+00> : vector<8x1024xf32>
    %7 = tpu.matmul %4, %6, %cst {dimension_numbers = #tpu.dot_dimension_numbers<[1], [0], [0], [1], [0, 0, 1, 1], [], []>} : vector<8x1024xbf16>, vector<1024x1024xbf16>, vector<8x1024xf32> -> vector<8x1024xf32>
    %c0_5 = arith.constant 0 : index
    %c0_6 = arith.constant 0 : index
    %c0_7 = arith.constant 0 : index
    %8 = vector.load %arg3[%c0_5, %c0_6, %c0_7] : memref<1x1x1024xf32, #tpu.memory_space<vmem>>, vector<1x1x1024xf32>
    %9 = vector.shape_cast %8 : vector<1x1x1024xf32> to vector<1x1024xf32>
    %10 = vector.broadcast %9 : vector<1x1024xf32> to vector<8x1024xf32>
    %11 = arith.addf %7, %10 : vector<8x1024xf32>
    %cst_8 = arith.constant 0.000000e+00 : f32
    %12 = vector.broadcast %cst_8 : f32 to vector<8x1024xf32>
    %13 = arith.maximumf %11, %12 : vector<8x1024xf32>
    %c4_i32 = arith.constant 4 : i32
    %14 = arith.cmpi slt, %arg0, %c4_i32 : i32
    %15 = arith.extui %14 : i1 to i32
    %c0_i32_9 = arith.constant 0 : i32
    %16 = arith.cmpi ne, %15, %c0_i32_9 : i32
    scf.if %16 {
      %c0_12 = arith.constant 0 : index
      %c0_13 = arith.constant 0 : index
      %20 = vector.load %arg5[%c0_12, %c0_13] : memref<8x1024xf32, #tpu.memory_space<vmem>>, vector<8x1024xf32>
      tpu.vector_store %arg5[%c0_12, %c0_13], %13 {strides = array<i32>} : memref<8x1024xf32, #tpu.memory_space<vmem>>, vector<8x1024xf32>,
    } else {
    }
    %c4_i32_10 = arith.constant 4 : i32
    %17 = arith.cmpi eq, %arg0, %c4_i32_10 : i32
    %18 = arith.extui %17 : i1 to i32
    %c0_i32_11 = arith.constant 0 : i32
    %19 = arith.cmpi ne, %18, %c0_i32_11 : i32
    scf.if %19 {
      %c0_12 = arith.constant 0 : index
      %c0_13 = arith.constant 0 : index
      %20 = vector.load %arg4[%c0_12, %c0_13] : memref<8x1024xf32, #tpu.memory_space<vmem>>, vector<8x1024xf32>
      tpu.vector_store %arg4[%c0_12, %c0_13], %13 {strides = array<i32>} : memref<8x1024xf32, #tpu.memory_space<vmem>>, vector<8x1024xf32>,
    } else {
    }
    return
  }
  func.func @transform_0(%arg0: i32) -> (i32, i32) {
    %c0_i32 = arith.constant 0 : i32
    %c0_i32_0 = arith.constant 0 : i32
    %c0_i32_1 = arith.constant 0 : i32
    return %c0_i32, %c0_i32_0 : i32, i32
  }
  func.func @transform_1(%arg0: i32) -> (i32, i32, i32) {
    %c0_i32 = arith.constant 0 : i32
    %c0_i32_0 = arith.constant 0 : i32
    %c0_i32_1 = arith.constant 0 : i32
    return %arg0, %c0_i32, %c0_i32_0 : i32, i32, i32
  }
  func.func @transform_2(%arg0: i32) -> (i32, i32, i32) {
    %c0_i32 = arith.constant 0 : i32
    %c0_i32_0 = arith.constant 0 : i32
    %c0_i32_1 = arith.constant 0 : i32
    return %arg0, %c0_i32, %c0_i32_0 : i32, i32, i32
  }
  func.func @transform_3(%arg0: i32) -> (i32, i32) {
    %c0_i32 = arith.constant 0 : i32
    %c0_i32_0 = arith.constant 0 : i32
    %c0_i32_1 = arith.constant 0 : i32
    return %c0_i32, %c0_i32_0 : i32, i32
  }
}

module attributes {stable_mosaic.version = 11 : i64} {
  func.func @_mlp_chain_kernel(%arg0: i32, %arg1: memref<8x1024xf32, #tpu.memory_space<vmem>>, %arg2: memref<1x1024x1024xbf16, #tpu.memory_space<vmem>>, %arg3: memref<1x1x1024xf32, #tpu.memory_space<vmem>>, %arg4: memref<8x1024xf32, #tpu.memory_space<vmem>>, %arg5: memref<8x1024xf32, #tpu.memory_space<vmem>>) attributes {dimension_semantics = [#tpu.dimension_semantics<arbitrary>], iteration_bounds = array<i64: 5>, scalar_prefetch = 0 : i64, scratch_operands = 1 : i64, tpu.core_type = #tpu.core_type<tc>, window_params = [{pipeline_mode = #tpu.pipeline_mode<synchronous>, transform_indices = @transform_0, window_bounds = array<i64: 8, 1024>}, {transform_indices = @transform_1, window_bounds = array<i64: 1, 1024, 1024>}, {transform_indices = @transform_2, window_bounds = array<i64: 1, 1, 1024>}, {pipeline_mode = #tpu.pipeline_mode<synchronous>, transform_indices = @transform_3, window_bounds = array<i64: 8, 1024>}]} {
    %c0_i32 = arith.constant 0 : i32
    %0 = arith.cmpi eq, %arg0, %c0_i32 : i32
    %1 = arith.extui %0 : i1 to i32
    %c0_i32_0 = arith.constant 0 : i32
    %2 = arith.cmpi ne, %1, %c0_i32_0 : i32
    scf.if %2 {
      %c0_12 = arith.constant 0 : index
      %c0_13 = arith.constant 0 : index
      %20 = vector.load %arg1[%c0_12, %c0_13] : memref<8x1024xf32, #tpu.memory_space<vmem>>, vector<8x1024xf32>
      %c0_14 = arith.constant 0 : index
      %c0_15 = arith.constant 0 : index
      %21 = vector.load %arg5[%c0_14, %c0_15] : memref<8x1024xf32, #tpu.memory_space<vmem>>, vector<8x1024xf32>
      tpu.vector_store %arg5[%c0_14, %c0_15], %20 {strides = array<i32>} : memref<8x1024xf32, #tpu.memory_space<vmem>>, vector<8x1024xf32>,
    } else {
    }
    %c0 = arith.constant 0 : index
    %c0_1 = arith.constant 0 : index
    %3 = vector.load %arg5[%c0, %c0_1] : memref<8x1024xf32, #tpu.memory_space<vmem>>, vector<8x1024xf32>
    %4 = arith.truncf %3 : vector<8x1024xf32> to vector<8x1024xbf16>
    %c0_2 = arith.constant 0 : index
    %c0_3 = arith.constant 0 : index
    %c0_4 = arith.constant 0 : index
    %5 = vector.load %arg2[%c0_2, %c0_3, %c0_4] : memref<1x1024x1024xbf16, #tpu.memory_space<vmem>>, vector<1x1024x1024xbf16>
    %6 = vector.shape_cast %5 : vector<1x1024x1024xbf16> to vector<1024x1024xbf16>
    %cst = arith.constant dense<0.000000e+00> : vector<8x1024xf32>
    %7 = tpu.matmul %4, %6, %cst {dimension_numbers = #tpu.dot_dimension_numbers<[1], [0], [0], [1], [0, 0, 1, 1], [], []>} : vector<8x1024xbf16>, vector<1024x1024xbf16>, vector<8x1024xf32> -> vector<8x1024xf32>
    %c0_5 = arith.constant 0 : index
    %c0_6 = arith.constant 0 : index
    %c0_7 = arith.constant 0 : index
    %8 = vector.load %arg3[%c0_5, %c0_6, %c0_7] : memref<1x1x1024xf32, #tpu.memory_space<vmem>>, vector<1x1x1024xf32>
    %9 = vector.shape_cast %8 : vector<1x1x1024xf32> to vector<1x1024xf32>
    %10 = vector.broadcast %9 : vector<1x1024xf32> to vector<8x1024xf32>
    %11 = arith.addf %7, %10 : vector<8x1024xf32>
    %cst_8 = arith.constant 0.000000e+00 : f32
    %12 = vector.broadcast %cst_8 : f32 to vector<8x1024xf32>
    %13 = arith.maximumf %11, %12 : vector<8x1024xf32>
    %c4_i32 = arith.constant 4 : i32
    %14 = arith.cmpi slt, %arg0, %c4_i32 : i32
    %15 = arith.extui %14 : i1 to i32
    %c0_i32_9 = arith.constant 0 : i32
    %16 = arith.cmpi ne, %15, %c0_i32_9 : i32
    scf.if %16 {
      %c0_12 = arith.constant 0 : index
      %c0_13 = arith.constant 0 : index
      %20 = vector.load %arg5[%c0_12, %c0_13] : memref<8x1024xf32, #tpu.memory_space<vmem>>, vector<8x1024xf32>
      tpu.vector_store %arg5[%c0_12, %c0_13], %13 {strides = array<i32>} : memref<8x1024xf32, #tpu.memory_space<vmem>>, vector<8x1024xf32>,
    } else {
    }
    %c4_i32_10 = arith.constant 4 : i32
    %17 = arith.cmpi eq, %arg0, %c4_i32_10 : i32
    %18 = arith.extui %17 : i1 to i32
    %c0_i32_11 = arith.constant 0 : i32
    %19 = arith.cmpi ne, %18, %c0_i32_11 : i32
    scf.if %19 {
      %c0_12 = arith.constant 0 : index
      %c0_13 = arith.constant 0 : index
      %20 = vector.load %arg4[%c0_12, %c0_13] : memref<8x1024xf32, #tpu.memory_space<vmem>>, vector<8x1024xf32>
      tpu.vector_store %arg4[%c0_12, %c0_13], %13 {strides = array<i32>} : memref<8x1024xf32, #tpu.memory_space<vmem>>, vector<8x1024xf32>,
    } else {
    }
    return
  }
  func.func @transform_0(%arg0: i32) -> (i32, i32) {
    %c0_i32 = arith.constant 0 : i32
    %c0_i32_0 = arith.constant 0 : i32
    %c0_i32_1 = arith.constant 0 : i32
    return %c0_i32, %c0_i32_0 : i32, i32
  }
  func.func @transform_1(%arg0: i32) -> (i32, i32, i32) {
    %c0_i32 = arith.constant 0 : i32
    %c0_i32_0 = arith.constant 0 : i32
    %c0_i32_1 = arith.constant 0 : i32
    return %arg0, %c0_i32, %c0_i32_0 : i32, i32, i32
  }
  func.func @transform_2(%arg0: i32) -> (i32, i32, i32) {
    %c0_i32 = arith.constant 0 : i32
    %c0_i32_0 = arith.constant 0 : i32
    %c0_i32_1 = arith.constant 0 : i32
    return %arg0, %c0_i32, %c0_i32_0 : i32, i32, i32
  }
  func.func @transform_3(%arg0: i32) -> (i32, i32) {
    %c0_i32 = arith.constant 0 : i32
    %c0_i32_0 = arith.constant 0 : i32
    %c0_i32_1 = arith.constant 0 : i32
    return %c0_i32, %c0_i32_0 : i32, i32
  }
}

module attributes {stable_mosaic.version = 11 : i64} {
  func.func @_linear_kernel(%arg0: i32, %arg1: memref<8x256xf32, #tpu.memory_space<vmem>>, %arg2: memref<256x512xbf16, #tpu.memory_space<vmem>>, %arg3: memref<1x512xf32, #tpu.memory_space<vmem>>, %arg4: memref<8x512xf32, #tpu.memory_space<vmem>>) attributes {dimension_semantics = [#tpu.dimension_semantics<parallel>], iteration_bounds = array<i64: 2>, scalar_prefetch = 0 : i64, scratch_operands = 0 : i64, tpu.core_type = #tpu.core_type<tc>, window_params = [{pipeline_mode = #tpu.pipeline_mode<synchronous>, transform_indices = @transform_0, window_bounds = array<i64: 8, 256>}, {transform_indices = @transform_1, window_bounds = array<i64: 256, 512>}, {transform_indices = @transform_2, window_bounds = array<i64: 1, 512>}, {transform_indices = @transform_3, window_bounds = array<i64: 8, 512>}]} {
    %c0 = arith.constant 0 : index
    %c0_0 = arith.constant 0 : index
    %0 = vector.load %arg1[%c0, %c0_0] : memref<8x256xf32, #tpu.memory_space<vmem>>, vector<8x256xf32>
    %1 = arith.truncf %0 : vector<8x256xf32> to vector<8x256xbf16>
    %c0_1 = arith.constant 0 : index
    %c0_2 = arith.constant 0 : index
    %2 = vector.load %arg2[%c0_1, %c0_2] : memref<256x512xbf16, #tpu.memory_space<vmem>>, vector<256x512xbf16>
    %cst = arith.constant dense<0.000000e+00> : vector<8x512xf32>
    %3 = tpu.matmul %1, %2, %cst {dimension_numbers = #tpu.dot_dimension_numbers<[1], [0], [0], [1], [0, 0, 1, 1], [], []>} : vector<8x256xbf16>, vector<256x512xbf16>, vector<8x512xf32> -> vector<8x512xf32>
    %c0_3 = arith.constant 0 : index
    %c0_4 = arith.constant 0 : index
    %4 = vector.load %arg3[%c0_3, %c0_4] : memref<1x512xf32, #tpu.memory_space<vmem>>, vector<1x512xf32>
    %5 = vector.broadcast %4 : vector<1x512xf32> to vector<8x512xf32>
    %6 = arith.addf %3, %5 : vector<8x512xf32>
    %cst_5 = arith.constant 0.000000e+00 : f32
    %7 = vector.broadcast %cst_5 : f32 to vector<8x512xf32>
    %8 = arith.maximumf %6, %7 : vector<8x512xf32>
    %c0_6 = arith.constant 0 : index
    %c0_7 = arith.constant 0 : index
    %9 = vector.load %arg4[%c0_6, %c0_7] : memref<8x512xf32, #tpu.memory_space<vmem>>, vector<8x512xf32>
    tpu.vector_store %arg4[%c0_6, %c0_7], %8 {strides = array<i32>} : memref<8x512xf32, #tpu.memory_space<vmem>>, vector<8x512xf32>,
    return
  }
  func.func @transform_0(%arg0: i32) -> (i32, i32) {
    %c0_i32 = arith.constant 0 : i32
    %c0_i32_0 = arith.constant 0 : i32
    %c0_i32_1 = arith.constant 0 : i32
    return %c0_i32, %c0_i32_0 : i32, i32
  }
  func.func @transform_1(%arg0: i32) -> (i32, i32) {
    %c0_i32 = arith.constant 0 : i32
    %c0_i32_0 = arith.constant 0 : i32
    return %c0_i32, %arg0 : i32, i32
  }
  func.func @transform_2(%arg0: i32) -> (i32, i32) {
    %c0_i32 = arith.constant 0 : i32
    %c0_i32_0 = arith.constant 0 : i32
    return %c0_i32, %arg0 : i32, i32
  }
  func.func @transform_3(%arg0: i32) -> (i32, i32) {
    %c0_i32 = arith.constant 0 : i32
    %c0_i32_0 = arith.constant 0 : i32
    return %c0_i32, %arg0 : i32, i32
  }
}

module attributes {stable_mosaic.version = 11 : i64} {
  func.func @_linear_kernel(%arg0: i32, %arg1: memref<8x1024xf32, #tpu.memory_space<vmem>>, %arg2: memref<1024x256xbf16, #tpu.memory_space<vmem>>, %arg3: memref<1x256xf32, #tpu.memory_space<vmem>>, %arg4: memref<8x256xf32, #tpu.memory_space<vmem>>) attributes {dimension_semantics = [#tpu.dimension_semantics<parallel>], iteration_bounds = array<i64: 1>, scalar_prefetch = 0 : i64, scratch_operands = 0 : i64, tpu.core_type = #tpu.core_type<tc>, window_params = [{pipeline_mode = #tpu.pipeline_mode<synchronous>, transform_indices = @transform_0, window_bounds = array<i64: 8, 1024>}, {transform_indices = @transform_1, window_bounds = array<i64: 1024, 256>}, {transform_indices = @transform_2, window_bounds = array<i64: 1, 256>}, {transform_indices = @transform_3, window_bounds = array<i64: 8, 256>}]} {
    %c0 = arith.constant 0 : index
    %c0_0 = arith.constant 0 : index
    %0 = vector.load %arg1[%c0, %c0_0] : memref<8x1024xf32, #tpu.memory_space<vmem>>, vector<8x1024xf32>
    %1 = arith.truncf %0 : vector<8x1024xf32> to vector<8x1024xbf16>
    %c0_1 = arith.constant 0 : index
    %c0_2 = arith.constant 0 : index
    %2 = vector.load %arg2[%c0_1, %c0_2] : memref<1024x256xbf16, #tpu.memory_space<vmem>>, vector<1024x256xbf16>
    %cst = arith.constant dense<0.000000e+00> : vector<8x256xf32>
    %3 = tpu.matmul %1, %2, %cst {dimension_numbers = #tpu.dot_dimension_numbers<[1], [0], [0], [1], [0, 0, 1, 1], [], []>} : vector<8x1024xbf16>, vector<1024x256xbf16>, vector<8x256xf32> -> vector<8x256xf32>
    %c0_3 = arith.constant 0 : index
    %c0_4 = arith.constant 0 : index
    %4 = vector.load %arg3[%c0_3, %c0_4] : memref<1x256xf32, #tpu.memory_space<vmem>>, vector<1x256xf32>
    %5 = vector.broadcast %4 : vector<1x256xf32> to vector<8x256xf32>
    %6 = arith.addf %3, %5 : vector<8x256xf32>
    %cst_5 = arith.constant 0.000000e+00 : f32
    %7 = vector.broadcast %cst_5 : f32 to vector<8x256xf32>
    %8 = arith.subf %7, %6 : vector<8x256xf32>
    %9 = math.exp %8 : vector<8x256xf32>
    %cst_6 = arith.constant 1.000000e+00 : f32
    %10 = vector.broadcast %cst_6 : f32 to vector<8x256xf32>
    %11 = arith.addf %10, %9 : vector<8x256xf32>
    %12 = tpu.reciprocal %11 {approx = true} : vector<8x256xf32> -> vector<8x256xf32>
    %cst_7 = arith.constant 0.000000e+00 : f32
    %cst_8 = arith.constant 1.000000e+00 : f32
    %13 = vector.broadcast %cst_7 : f32 to vector<8x256xf32>
    %14 = arith.maximumf %13, %12 : vector<8x256xf32>
    %15 = vector.broadcast %cst_8 : f32 to vector<8x256xf32>
    %16 = arith.minimumf %15, %14 : vector<8x256xf32>
    %c0_9 = arith.constant 0 : index
    %c0_10 = arith.constant 0 : index
    %17 = vector.load %arg4[%c0_9, %c0_10] : memref<8x256xf32, #tpu.memory_space<vmem>>, vector<8x256xf32>
    tpu.vector_store %arg4[%c0_9, %c0_10], %16 {strides = array<i32>} : memref<8x256xf32, #tpu.memory_space<vmem>>, vector<8x256xf32>,
    return
  }
  func.func @transform_0(%arg0: i32) -> (i32, i32) {
    %c0_i32 = arith.constant 0 : i32
    %c0_i32_0 = arith.constant 0 : i32
    %c0_i32_1 = arith.constant 0 : i32
    return %c0_i32, %c0_i32_0 : i32, i32
  }
  func.func @transform_1(%arg0: i32) -> (i32, i32) {
    %c0_i32 = arith.constant 0 : i32
    %c0_i32_0 = arith.constant 0 : i32
    return %c0_i32, %arg0 : i32, i32
  }
  func.func @transform_2(%arg0: i32) -> (i32, i32) {
    %c0_i32 = arith.constant 0 : i32
    %c0_i32_0 = arith.constant 0 : i32
    return %c0_i32, %arg0 : i32, i32
  }
  func.func @transform_3(%arg0: i32) -> (i32, i32) {
    %c0_i32 = arith.constant 0 : i32
    %c0_i32_0 = arith.constant 0 : i32
    return %c0_i32, %arg0 : i32, i32
  }
}

</mosaic_0001>

<llo_original>
// kernel: vae_mlp_mri_forward.5
$region0: #{vae_mlp_mri_forward.5}
  #allocation0 [shape = 'u32[]', space=smem, size = 0x4, offset = 0x4, fixed_abs, tag = 'smem constant byte address 0x4 - core index']
  #allocation1 [shape = 'u32[144,128]{1,0:T(1,128)}', space=vmem, size = 0x12000, scoped, tag = 'internal scratch']
  %s0 = inlined_call_operand.vmem [shape: f32[8,256], index: 0, kind: input, shape index: {}]
  %s1 = inlined_call_operand.hbm [shape: bf16[256,1024], index: 1, kind: input, shape index: {}]
  %s2 = inlined_call_operand.hbm [shape: f32[1,1024], index: 2, kind: input, shape index: {}]
  %s3 = inlined_call_operand.vmem [shape: f32[8,1024], index: 3, kind: output, shape index: {}]
  %s4 = sld [smem:[#allocation0]]
  $region53: #{vae_mlp_mri_forward.5} parent=0
    _
  %s6 = ssub.s32 1, %s4
  %s7 = scalar_select 0, %s6, %s4
  $region1: #{vae_mlp_mri_forward.5} parent=0
    #allocation2 [shape = 'u8[524288]{0}', space=vmem, size = 0x80000, scoped, tag = 'input window, operand 1']
    #allocation3 [shape = 's32[2]{0}', space=sflag, size = 0x8, scoped, tag = 'scoped memory for vae_mlp_mri_forward.5']
    #allocation4 [shape = 'u8[4096]{0}', space=vmem, size = 0x1000, scoped, tag = 'input window, operand 2']
    #allocation5 [shape = 's32[2]{0}', space=sflag, size = 0x8, scoped, tag = 'scoped memory for vae_mlp_mri_forward.5']
    %8 = vsyncpa [#allocation3], 0
    %s9 = scalar_lea.sflag [#allocation3], 1
    %10 = vsyncpa %s9, 0
    %11 = vsyncpa [#allocation5], 0
    %s12 = scalar_lea.sflag [#allocation5], 1
    %13 = vsyncpa %s12, 0
    loop: start=0, step=1, limit=4
    $region2: #{vae_mlp_mri_forward.5} parent=1 // loop_pre_header
      _
    $region3: #{vae_mlp_mri_forward.5} parent=1 // loop_header
      %s15 = sphi 0, %s19
      %p16 = scmp.ge.s32.totalorder %s15, 4
      %s23 = sphi 0, %s23
      %s25 = sphi 0, %s23
      %s26 = sphi 0, %s25
      %s40 = sphi 0, %s26
      %s46 = sphi 0, %s48
      %s49 = sphi 0, %s46
      %s50 = sphi 0, %s49
      %s66 = sphi 0, %s50
      %s72 = sphi 0, %s74
      %s75 = sphi 0, %s72
      %s76 = sphi 0, %s75
      %s92 = sphi 0, %s76
      %s98 = sphi 0, %s100
      %s101 = sphi 0, %s98
      %s102 = sphi 0, %s101
      %s118 = sphi 0, %s102
    $region4: #{vae_mlp_mri_forward.5} parent=1 // loop_header_branch
      %18 = sbr.rel (%p16) target = $region8
    $region5: #{vae_mlp_mri_forward.5} parent=1 // loop_body
      %s20 = ssub.s32 %s15, 1
      %s21 = ssub.s32 %s15, 2
      %s22 = sadd.s32 %s15, 1
      %s24 = sadd.s32 %s23, 1
      %p27 = scmp.eq.s32.totalorder %s15, 1
      %p28 = scmp.ne.s32.totalorder %s23, %s25
      %p29 = scmp.eq.s32.totalorder %s15, 0
      %p30 = por %p28, %p29
      %p31 = scmp.ne.s32.totalorder %s23, %s25
      %p32 = scmp.eq.s32.totalorder %s20, 1
      %p33 = por %p31, %p32
      %p34 = scmp.ne.s32.totalorder %s25, %s26
      %p35 = scmp.eq.s32.totalorder %s20, 0
      %p36 = por %p34, %p35
      %p37 = scmp.ne.s32.totalorder %s25, %s26
      %p38 = scmp.eq.s32.totalorder %s21, 1
      %p39 = por %p37, %p38
      %p41 = scmp.ne.s32.totalorder %s26, %s40
      %p42 = scmp.eq.s32.totalorder %s21, 0
      %p43 = por %p41, %p42
      %s44 = ssub.s32 %s15, %s22
      %p45 = scmp.eq.s32.totalorder %s44, 0
      %s47 = sadd.s32 %s46, 1
      %s48 = scalar_select %p45, %s46, %s47
      %p51 = pneg %p45
      %p52 = scmp.eq.s32.totalorder %s15, 1
      %p53 = por %p51, %p52
      %p54 = scmp.ne.s32.totalorder %s46, %s49
      %p55 = scmp.eq.s32.totalorder %s15, 0
      %p56 = por %p54, %p55
      %p57 = scmp.ne.s32.totalorder %s46, %s49
      %p58 = scmp.eq.s32.totalorder %s20, 1
      %p59 = por %p57, %p58
      %p60 = scmp.ne.s32.totalorder %s49, %s50
      %p61 = scmp.eq.s32.totalorder %s20, 0
      %p62 = por %p60, %p61
      %p63 = scmp.ne.s32.totalorder %s49, %s50
      %p64 = scmp.eq.s32.totalorder %s21, 1
      %p65 = por %p63, %p64
      %p67 = scmp.ne.s32.totalorder %s50, %s66
      %p68 = scmp.eq.s32.totalorder %s21, 0
      %p69 = por %p67, %p68
      %s70 = ssub.s32 %s15, %s22
      %p71 = scmp.eq.s32.totalorder %s70, 0
      %s73 = sadd.s32 %s72, 1
      %s74 = scalar_select %p71, %s72, %s73
      %p77 = pneg %p71
      %p78 = scmp.eq.s32.totalorder %s15, 1
      %p79 = por %p77, %p78
      %p80 = scmp.ne.s32.totalorder %s72, %s75
      %p81 = scmp.eq.s32.totalorder %s15, 0
      %p82 = por %p80, %p81
      %p83 = scmp.ne.s32.totalorder %s72, %s75
      %p84 = scmp.eq.s32.totalorder %s20, 1
      %p85 = por %p83, %p84
      %p86 = scmp.ne.s32.totalorder %s75, %s76
      %p87 = scmp.eq.s32.totalorder %s20, 0
      %p88 = por %p86, %p87
      %p89 = scmp.ne.s32.totalorder %s75, %s76
      %p90 = scmp.eq.s32.totalorder %s21, 1
      %p91 = por %p89, %p90
      %p93 = scmp.ne.s32.totalorder %s76, %s92
      %p94 = scmp.eq.s32.totalorder %s21, 0
      %p95 = por %p93, %p94
      %s96 = ssub.s32 %s15, %s22
      %p97 = scmp.eq.s32.totalorder %s96, 0
      %s99 = sadd.s32 %s98, 1
      %s100 = scalar_select %p97, %s98, %s99
      %p103 = pneg %p97
      %p104 = scmp.eq.s32.totalorder %s15, 1
      %p105 = por %p103, %p104
      %p106 = scmp.ne.s32.totalorder %s98, %s101
      %p107 = scmp.eq.s32.totalorder %s15, 0
      %p108 = por %p106, %p107
      %p109 = scmp.ne.s32.totalorder %s98, %s101
      %p110 = scmp.eq.s32.totalorder %s20, 1
      %p111 = por %p109, %p110
      %p112 = scmp.ne.s32.totalorder %s101, %s102
      %p113 = scmp.eq.s32.totalorder %s20, 0
      %p114 = por %p112, %p113
      %p115 = scmp.ne.s32.totalorder %s101, %s102
      %p116 = scmp.eq.s32.totalorder %s21, 1
      %p117 = por %p115, %p116
      %p119 = scmp.ne.s32.totalorder %s102, %s118
      %p120 = scmp.eq.s32.totalorder %s21, 0
      %p121 = por %p119, %p120
      %p122 = scmp.le.s32.totalorder 1, %s15
      %p123 = scmp.lt.s32.totalorder %s15, 3
      %p124 = pnand %p122, %p123
      %p125 = pneg %p124
      // Predicated region
      $region9: #{vae_mlp_mri_forward.5} parent=5 // pred_check
        _
      $region10: #{vae_mlp_mri_forward.5} parent=5 // pred_check_branch
        %127 = sbr.rel (%p124) target = $region12
      $region11: #{vae_mlp_mri_forward.5} parent=5 // pred_region
        %s128 = ssub.s32 %s15, 1
        // Predicated region
        $region13: #{vae_mlp_mri_forward.5} parent=11 // pred_check
          %p129 = pneg %p36
        $region14: #{vae_mlp_mri_forward.5} parent=11 // pred_check_branch
          %131 = sbr.rel (%p129) target = $region16
        $region15: #{vae_mlp_mri_forward.5} parent=11 // pred_region
          _
        $region16: #{vae_mlp_mri_forward.5} parent=11 // pred_fallthru
          _
      $region12: #{vae_mlp_mri_forward.5} parent=5 // pred_fallthru
        _
      %p132 = scmp.lt.s32.totalorder %s15, 2
      // Predicated region
      $region17: #{vae_mlp_mri_forward.5} parent=5 // pred_check
        %p133 = pneg %p132
      $region18: #{vae_mlp_mri_forward.5} parent=5 // pred_check_branch
        %135 = sbr.rel (%p133) target = $region20
      $region19: #{vae_mlp_mri_forward.5} parent=5 // pred_region
        // Predicated region
        $region21: #{vae_mlp_mri_forward.5} parent=19 // pred_check
          %p136 = pneg %p56
        $region22: #{vae_mlp_mri_forward.5} parent=19 // pred_check_branch
          %138 = sbr.rel (%p136) target = $region24
        $region23: #{vae_mlp_mri_forward.5} parent=19 // pred_region
          %s139 = sand.u32 %s46, 1
          %s140 = scalar_lea.sflag [#allocation3], %s139
          %s141 = sand.u32 %s46, 1
          %s142 = smul.addr %s141, 512
          %s143 = scalar_lea.vmem [#allocation2], %s142
          %s144 = smul.u32 4, %s15
          %s146 = ssub.s32 8192, 8192
          %147 = vsyncadd %s140, %s146
          %s148 = smul.addr %s144, 64
          %s149 = scalar_lea.hbm %s1, %s148
          %s150 = sshll.u32 %s143, 4
          %s151 = int_to_ptr.vmem [resolvable:$true] %s150
          %156 = dma.hbm_to_vmem [thread:$0]  %s149, 8192, %s151, %s140, 512, 256, 16
        $region24: #{vae_mlp_mri_forward.5} parent=19 // pred_fallthru
          _
        // Predicated region
        $region25: #{vae_mlp_mri_forward.5} parent=19 // pred_check
          %p157 = pneg %p82
        $region26: #{vae_mlp_mri_forward.5} parent=19 // pred_check_branch
          %159 = sbr.rel (%p157) target = $region28
        $region27: #{vae_mlp_mri_forward.5} parent=19 // pred_region
          %s160 = sand.u32 %s72, 1
          %s161 = scalar_lea.sflag [#allocation5], %s160
          %s162 = sand.u32 %s72, 1
          %s163 = smul.addr %s162, 4
          %s164 = scalar_lea.vmem [#allocation4], %s163
          %s165 = smul.u32 4, %s15
          %s167 = ssub.s32 64, 64
          %168 = vsyncadd %s161, %s167
          %s169 = smul.addr %s165, 16
          %s170 = scalar_lea.hbm %s2, %s169
          %s172 = sshll.u32 %s164, 4
          %s173 = int_to_ptr.vmem [resolvable:$true] %s172
          %175 = dma.hbm_to_vmem [thread:$0]  %s170, 64, %s173, %s161
        $region28: #{vae_mlp_mri_forward.5} parent=19 // pred_fallthru
          _
      $region20: #{vae_mlp_mri_forward.5} parent=5 // pred_fallthru
        _
      %p176 = scmp.le.s32.totalorder 1, %s15
      %p177 = scmp.lt.s32.totalorder %s15, 3
      %p178 = pnand %p176, %p177
      %p179 = pneg %p178
      // Predicated region
      $region29: #{vae_mlp_mri_forward.5} parent=5 // pred_check
        _
      $region30: #{vae_mlp_mri_forward.5} parent=5 // pred_check_branch
        %181 = sbr.rel (%p178) target = $region32
      $region31: #{vae_mlp_mri_forward.5} parent=5 // pred_region
        %s182 = ssub.s32 %s15, 1
        %s183 = sand.u32 %s49, 1
        %s184 = scalar_lea.sflag [#allocation3], %s183
        %s185 = sand.u32 %s49, 1
        %s186 = smul.addr %s185, 512
        %s187 = scalar_lea.vmem [#allocation2], %s186
        // Predicated region
        $region33: #{vae_mlp_mri_forward.5} parent=31 // pred_check
          %p188 = pneg %p62
        $region34: #{vae_mlp_mri_forward.5} parent=31 // pred_check_branch
          %190 = sbr.rel (%p188) target = $region36
        $region35: #{vae_mlp_mri_forward.5} parent=31 // pred_region
          %191 = dma.done %s184, 8192
        $region36: #{vae_mlp_mri_forward.5} parent=31 // pred_fallthru
          _
        %s192 = sand.u32 %s75, 1
        %s193 = scalar_lea.sflag [#allocation5], %s192
        %s194 = sand.u32 %s75, 1
        %s195 = smul.addr %s194, 4
        %s196 = scalar_lea.vmem [#allocation4], %s195
        // Predicated region
        $region37: #{vae_mlp_mri_forward.5} parent=31 // pred_check
          %p197 = pneg %p88
        $region38: #{vae_mlp_mri_forward.5} parent=31 // pred_check_branch
          %199 = sbr.rel (%p197) target = $region40
        $region39: #{vae_mlp_mri_forward.5} parent=31 // pred_region
          %200 = dma.done %s193, 64
        $region40: #{vae_mlp_mri_forward.5} parent=31 // pred_fallthru
          _
        %p201 = pneg %p36
        %p202 = pneg %p33
        %s203 = sand.u32 %s49, 1
        %s204 = scalar_lea.sflag [#allocation3], %s203
        %s205 = sand.u32 %s49, 1
        %s206 = smul.addr %s205, 512
        %s207 = scalar_lea.vmem [#allocation2], %s206
        %p208 = pneg %p62
        %p209 = pneg %p59
        %s210 = sand.u32 %s75, 1
        %s211 = scalar_lea.sflag [#allocation5], %s210
        %s212 = sand.u32 %s75, 1
        %s213 = smul.addr %s212, 4
        %s214 = scalar_lea.vmem [#allocation4], %s213
        %p215 = pneg %p88
        %p216 = pneg %p85
        %p217 = pneg %p114
        %p218 = pneg %p111
        %s219 = smul.u32 4, %s20
        %p220 = scmp.lt.s32.totalorder %s219, 7
        %s221 = scalar_select %p220, %s219, 7
        %s222 = smul.addr %s221, 8
        %s223 = scalar_lea.vmem %s3, %s222
        %s224 = smul.u32 4, %s20
        %s225 = smul.u32 4, %s20
        %s226 = smul.u32 4, %s20
        %p227 = scmp.lt.s32.totalorder %s226, 7
        %s228 = scalar_select %p227, %s226, 7
        %s229 = smul.addr %s228, 8
        %s230 = scalar_lea.vmem %s3, %s229
        %s231 = smul.u32 4, %s20
        %v232 = vld [vmem:[%s0] sm:$0xff]
        %v233 = vld [vmem:[%s0 + $0x8] sm:$0xff]
        %v234 = vpack.c.bf16 %v232, %v232
        %v235 = vpack.c.bf16 %v233, %v233
        %v236 = vld [vmem:[%s187] sm:$0xff]
        %v237 = vld [vmem:[%s187 + $0x8] sm:$0xff]
        %v238 = vld [vmem:[%s187 + $0x10] sm:$0xff]
        %v239 = vld [vmem:[%s187 + $0x18] sm:$0xff]
        %v240 = vld [vmem:[%s187 + $0x20] sm:$0xff]
        %v241 = vld [vmem:[%s187 + $0x28] sm:$0xff]
        %v242 = vld [vmem:[%s187 + $0x30] sm:$0xff]
        %v243 = vld [vmem:[%s187 + $0x38] sm:$0xff]
        %v244 = vld [vmem:[%s187 + $0x40] sm:$0xff]
        %v245 = vld [vmem:[%s187 + $0x48] sm:$0xff]
        %v246 = vld [vmem:[%s187 + $0x50] sm:$0xff]
        %v247 = vld [vmem:[%s187 + $0x58] sm:$0xff]
        %v248 = vld [vmem:[%s187 + $0x60] sm:$0xff]
        %v249 = vld [vmem:[%s187 + $0x68] sm:$0xff]
        %v250 = vld [vmem:[%s187 + $0x70] sm:$0xff]
        %v251 = vld [vmem:[%s187 + $0x78] sm:$0xff]
        %v252 = vld [vmem:[%s187 + $0x80] sm:$0xff]
        %v253 = vld [vmem:[%s187 + $0x88] sm:$0xff]
        %v254 = vld [vmem:[%s187 + $0x90] sm:$0xff]
        %v255 = vld [vmem:[%s187 + $0x98] sm:$0xff]
        %v256 = vld [vmem:[%s187 + $0xa0] sm:$0xff]
        %v257 = vld [vmem:[%s187 + $0xa8] sm:$0xff]
        %v258 = vld [vmem:[%s187 + $0xb0] sm:$0xff]
        %v259 = vld [vmem:[%s187 + $0xb8] sm:$0xff]
        %v260 = vld [vmem:[%s187 + $0xc0] sm:$0xff]
        %v261 = vld [vmem:[%s187 + $0xc8] sm:$0xff]
        %v262 = vld [vmem:[%s187 + $0xd0] sm:$0xff]
        %v263 = vld [vmem:[%s187 + $0xd8] sm:$0xff]
        %v264 = vld [vmem:[%s187 + $0xe0] sm:$0xff]
        %v265 = vld [vmem:[%s187 + $0xe8] sm:$0xff]
        %v266 = vld [vmem:[%s187 + $0xf0] sm:$0xff]
        %v267 = vld [vmem:[%s187 + $0xf8] sm:$0xff]
        %v268 = vld [vmem:[%s187 + $0x100] sm:$0xff]
        %v269 = vld [vmem:[%s187 + $0x108] sm:$0xff]
        %v270 = vld [vmem:[%s187 + $0x110] sm:$0xff]
        %v271 = vld [vmem:[%s187 + $0x118] sm:$0xff]
        %v272 = vld [vmem:[%s187 + $0x120] sm:$0xff]
        %v273 = vld [vmem:[%s187 + $0x128] sm:$0xff]
        %v274 = vld [vmem:[%s187 + $0x130] sm:$0xff]
        %v275 = vld [vmem:[%s187 + $0x138] sm:$0xff]
        %v276 = vld [vmem:[%s187 + $0x140] sm:$0xff]
        %v277 = vld [vmem:[%s187 + $0x148] sm:$0xff]
        %v278 = vld [vmem:[%s187 + $0x150] sm:$0xff]
        %v279 = vld [vmem:[%s187 + $0x158] sm:$0xff]
        %v280 = vld [vmem:[%s187 + $0x160] sm:$0xff]
        %v281 = vld [vmem:[%s187 + $0x168] sm:$0xff]
        %v282 = vld [vmem:[%s187 + $0x170] sm:$0xff]
        %v283 = vld [vmem:[%s187 + $0x178] sm:$0xff]
        %v284 = vld [vmem:[%s187 + $0x180] sm:$0xff]
        %v285 = vld [vmem:[%s187 + $0x188] sm:$0xff]
        %v286 = vld [vmem:[%s187 + $0x190] sm:$0xff]
        %v287 = vld [vmem:[%s187 + $0x198] sm:$0xff]
        %v288 = vld [vmem:[%s187 + $0x1a0] sm:$0xff]
        %v289 = vld [vmem:[%s187 + $0x1a8] sm:$0xff]
        %v290 = vld [vmem:[%s187 + $0x1b0] sm:$0xff]
        %v291 = vld [vmem:[%s187 + $0x1b8] sm:$0xff]
        %v292 = vld [vmem:[%s187 + $0x1c0] sm:$0xff]
        %v293 = vld [vmem:[%s187 + $0x1c8] sm:$0xff]
        %v294 = vld [vmem:[%s187 + $0x1d0] sm:$0xff]
        %v295 = vld [vmem:[%s187 + $0x1d8] sm:$0xff]
        %v296 = vld [vmem:[%s187 + $0x1e0] sm:$0xff]
        %v297 = vld [vmem:[%s187 + $0x1e8] sm:$0xff]
        %v298 = vld [vmem:[%s187 + $0x1f0] sm:$0xff]
        %v299 = vld [vmem:[%s187 + $0x1f8] sm:$0xff]
        %v300 = vld [vmem:[%s196] sm:$0xf]
        %v302 = vlaneseq
        %v303 = vshrl.u32 %v302, 7
        %v304 = vsub.s32 0, %v303
        %v305 = vrot.slane %v300, %v304
        %v306 = vlaneseq
        %v307 = vshrl.u32 %v306, 7
        %v308 = vsub.s32 1, %v307
        %v309 = vrot.slane %v300, %v308
        %v310 = vlaneseq
        %v311 = vshrl.u32 %v310, 7
        %v312 = vsub.s32 2, %v311
        %v313 = vrot.slane %v300, %v312
        %v314 = vlaneseq
        %v315 = vshrl.u32 %v314, 7
        %v316 = vsub.s32 3, %v315
        %v317 = vrot.slane %v300, %v316
        %v386 = vunpack.c.l.b16 %v236
        %v387 = vunpack.c.h.b16 %v236
        %v388 = vunpack.c.l.b16 %v237
        %v389 = vunpack.c.h.b16 %v237
        %v390 = vunpack.c.l.b16 %v238
        %v391 = vunpack.c.h.b16 %v238
        %v392 = vunpack.c.l.b16 %v239
        %v393 = vunpack.c.h.b16 %v239
        %v394 = vunpack.c.l.b16 %v240
        %v395 = vunpack.c.h.b16 %v240
        %v396 = vunpack.c.l.b16 %v241
        %v397 = vunpack.c.h.b16 %v241
        %v398 = vunpack.c.l.b16 %v242
        %v399 = vunpack.c.h.b16 %v242
        %v400 = vunpack.c.l.b16 %v243
        %v401 = vunpack.c.h.b16 %v243
        %v402 = vunpack.c.l.b16 %v244
        %v403 = vunpack.c.h.b16 %v244
        %v404 = vunpack.c.l.b16 %v245
        %v405 = vunpack.c.h.b16 %v245
        %v406 = vunpack.c.l.b16 %v246
        %v407 = vunpack.c.h.b16 %v246
        %v408 = vunpack.c.l.b16 %v247
        %v409 = vunpack.c.h.b16 %v247
        %v410 = vunpack.c.l.b16 %v248
        %v411 = vunpack.c.h.b16 %v248
        %v412 = vunpack.c.l.b16 %v249
        %v413 = vunpack.c.h.b16 %v249
        %v414 = vunpack.c.l.b16 %v250
        %v415 = vunpack.c.h.b16 %v250
        %v416 = vunpack.c.l.b16 %v251
        %v417 = vunpack.c.h.b16 %v251
        %v418 = vunpack.c.l.b16 %v252
        %v419 = vunpack.c.h.b16 %v252
        %v420 = vunpack.c.l.b16 %v253
        %v421 = vunpack.c.h.b16 %v253
        %v422 = vunpack.c.l.b16 %v254
        %v423 = vunpack.c.h.b16 %v254
        %v424 = vunpack.c.l.b16 %v255
        %v425 = vunpack.c.h.b16 %v255
        %v426 = vunpack.c.l.b16 %v256
        %v427 = vunpack.c.h.b16 %v256
        %v428 = vunpack.c.l.b16 %v257
        %v429 = vunpack.c.h.b16 %v257
        %v430 = vunpack.c.l.b16 %v258
        %v431 = vunpack.c.h.b16 %v258
        %v432 = vunpack.c.l.b16 %v259
        %v433 = vunpack.c.h.b16 %v259
        %v434 = vunpack.c.l.b16 %v260
        %v435 = vunpack.c.h.b16 %v260
        %v436 = vunpack.c.l.b16 %v261
        %v437 = vunpack.c.h.b16 %v261
        %v438 = vunpack.c.l.b16 %v262
        %v439 = vunpack.c.h.b16 %v262
        %v440 = vunpack.c.l.b16 %v263
        %v441 = vunpack.c.h.b16 %v263
        %v442 = vunpack.c.l.b16 %v264
        %v443 = vunpack.c.h.b16 %v264
        %v444 = vunpack.c.l.b16 %v265
        %v445 = vunpack.c.h.b16 %v265
        %v446 = vunpack.c.l.b16 %v266
        %v447 = vunpack.c.h.b16 %v266
        %v448 = vunpack.c.l.b16 %v267
        %v449 = vunpack.c.h.b16 %v267
        %v450 = vunpack.c.l.b16 %v268
        %v451 = vunpack.c.h.b16 %v268
        %v452 = vunpack.c.l.b16 %v269
        %v453 = vunpack.c.h.b16 %v269
        %v454 = vunpack.c.l.b16 %v270
        %v455 = vunpack.c.h.b16 %v270
        %v456 = vunpack.c.l.b16 %v271
        %v457 = vunpack.c.h.b16 %v271
        %v458 = vunpack.c.l.b16 %v272
        %v459 = vunpack.c.h.b16 %v272
        %v460 = vunpack.c.l.b16 %v273
        %v461 = vunpack.c.h.b16 %v273
        %v462 = vunpack.c.l.b16 %v274
        %v463 = vunpack.c.h.b16 %v274
        %v464 = vunpack.c.l.b16 %v275
        %v465 = vunpack.c.h.b16 %v275
        %v466 = vunpack.c.l.b16 %v276
        %v467 = vunpack.c.h.b16 %v276
        %v468 = vunpack.c.l.b16 %v277
        %v469 = vunpack.c.h.b16 %v277
        %v470 = vunpack.c.l.b16 %v278
        %v471 = vunpack.c.h.b16 %v278
        %v472 = vunpack.c.l.b16 %v279
        %v473 = vunpack.c.h.b16 %v279
        %v474 = vunpack.c.l.b16 %v280
        %v475 = vunpack.c.h.b16 %v280
        %v476 = vunpack.c.l.b16 %v281
        %v477 = vunpack.c.h.b16 %v281
        %v478 = vunpack.c.l.b16 %v282
        %v479 = vunpack.c.h.b16 %v282
        %v480 = vunpack.c.l.b16 %v283
        %v481 = vunpack.c.h.b16 %v283
        %v482 = vunpack.c.l.b16 %v284
        %v483 = vunpack.c.h.b16 %v284
        %v484 = vunpack.c.l.b16 %v285
        %v485 = vunpack.c.h.b16 %v285
        %v486 = vunpack.c.l.b16 %v286
        %v487 = vunpack.c.h.b16 %v286
        %v488 = vunpack.c.l.b16 %v287
        %v489 = vunpack.c.h.b16 %v287
        %v490 = vunpack.c.l.b16 %v288
        %v491 = vunpack.c.h.b16 %v288
        %v492 = vunpack.c.l.b16 %v289
        %v493 = vunpack.c.h.b16 %v289
        %v494 = vunpack.c.l.b16 %v290
        %v495 = vunpack.c.h.b16 %v290
        %v496 = vunpack.c.l.b16 %v291
        %v497 = vunpack.c.h.b16 %v291
        %v498 = vunpack.c.l.b16 %v292
        %v499 = vunpack.c.h.b16 %v292
        %v500 = vunpack.c.l.b16 %v293
        %v501 = vunpack.c.h.b16 %v293
        %v502 = vunpack.c.l.b16 %v294
        %v503 = vunpack.c.h.b16 %v294
        %v504 = vunpack.c.l.b16 %v295
        %v505 = vunpack.c.h.b16 %v295
        %v506 = vunpack.c.l.b16 %v296
        %v507 = vunpack.c.h.b16 %v296
        %v508 = vunpack.c.l.b16 %v297
        %v509 = vunpack.c.h.b16 %v297
        %v510 = vunpack.c.l.b16 %v298
        %v511 = vunpack.c.h.b16 %v298
        %v512 = vunpack.c.l.b16 %v299
        %v513 = vunpack.c.h.b16 %v299
        %v514 = vpack.c.b16 %v390, %v386
        %v515 = vpack.c.b16 %v391, %v387
        %v516 = vpack.c.b16 %v392, %v388
        %v517 = vpack.c.b16 %v393, %v389
        %v518 = vpack.c.b16 %v398, %v394
        %v519 = vpack.c.b16 %v399, %v395
        %v520 = vpack.c.b16 %v400, %v396
        %v521 = vpack.c.b16 %v401, %v397
        %v522 = vpack.c.b16 %v406, %v402
        %v523 = vpack.c.b16 %v407, %v403
        %v524 = vpack.c.b16 %v408, %v404
        %v525 = vpack.c.b16 %v409, %v405
        %v526 = vpack.c.b16 %v414, %v410
        %v527 = vpack.c.b16 %v415, %v411
        %v528 = vpack.c.b16 %v416, %v412
        %v529 = vpack.c.b16 %v417, %v413
        %v530 = vpack.c.b16 %v422, %v418
        %v531 = vpack.c.b16 %v423, %v419
        %v532 = vpack.c.b16 %v424, %v420
        %v533 = vpack.c.b16 %v425, %v421
        %v534 = vpack.c.b16 %v430, %v426
        %v535 = vpack.c.b16 %v431, %v427
        %v536 = vpack.c.b16 %v432, %v428
        %v537 = vpack.c.b16 %v433, %v429
        %v538 = vpack.c.b16 %v438, %v434
        %v539 = vpack.c.b16 %v439, %v435
        %v540 = vpack.c.b16 %v440, %v436
        %v541 = vpack.c.b16 %v441, %v437
        %v542 = vpack.c.b16 %v446, %v442
        %v543 = vpack.c.b16 %v447, %v443
        %v544 = vpack.c.b16 %v448, %v444
        %v545 = vpack.c.b16 %v449, %v445
        %v546 = vpack.c.b16 %v454, %v450
        %v547 = vpack.c.b16 %v455, %v451
        %v548 = vpack.c.b16 %v456, %v452
        %v549 = vpack.c.b16 %v457, %v453
        %v550 = vpack.c.b16 %v462, %v458
        %v551 = vpack.c.b16 %v463, %v459
        %v552 = vpack.c.b16 %v464, %v460
        %v553 = vpack.c.b16 %v465, %v461
        %v554 = vpack.c.b16 %v470, %v466
        %v555 = vpack.c.b16 %v471, %v467
        %v556 = vpack.c.b16 %v472, %v468
        %v557 = vpack.c.b16 %v473, %v469
        %v558 = vpack.c.b16 %v478, %v474
        %v559 = vpack.c.b16 %v479, %v475
        %v560 = vpack.c.b16 %v480, %v476
        %v561 = vpack.c.b16 %v481, %v477
        %v562 = vpack.c.b16 %v486, %v482
        %v563 = vpack.c.b16 %v487, %v483
        %v564 = vpack.c.b16 %v488, %v484
        %v565 = vpack.c.b16 %v489, %v485
        %v566 = vpack.c.b16 %v494, %v490
        %v567 = vpack.c.b16 %v495, %v491
        %v568 = vpack.c.b16 %v496, %v492
        %v569 = vpack.c.b16 %v497, %v493
        %v570 = vpack.c.b16 %v502, %v498
        %v571 = vpack.c.b16 %v503, %v499
        %v572 = vpack.c.b16 %v504, %v500
        %v573 = vpack.c.b16 %v505, %v501
        %v574 = vpack.c.b16 %v510, %v506
        %v575 = vpack.c.b16 %v511, %v507
        %v576 = vpack.c.b16 %v512, %v508
        %v577 = vpack.c.b16 %v513, %v509
        %642 = vmatprep.subr.bf16.mxu0 %v543
        %643 = vmatpush1.bf16.msra.mxu0 %v542
        %644 = vmatprep.subr.bf16.mxu0 %v539
        %645 = vmatpush1.bf16.msra.mxu0 %v538
        %646 = vmatprep.subr.bf16.mxu0 %v535
        %647 = vmatpush1.bf16.msra.mxu0 %v534
        %648 = vmatprep.subr.bf16.mxu0 %v531
        %649 = vmatpush1.bf16.msra.mxu0 %v530
        %650 = vmatprep.subr.bf16.mxu0 %v527
        %651 = vmatpush1.bf16.msra.mxu0 %v526
        %652 = vmatprep.subr.bf16.mxu0 %v523
        %653 = vmatpush1.bf16.msra.mxu0 %v522
        %654 = vmatprep.subr.bf16.mxu0 %v519
        %655 = vmatpush1.bf16.msra.mxu0 %v518
        %656 = vmatprep.subr.bf16.mxu0 %v515
        %657 = vmatpush1.bf16.msra.mxu0 %v514
        %658 = vmatprep.subr.bf16.mxu0 %v575
        %659 = vmatpush2.bf16.msra.mxu0 %v574
        %660 = vmatprep.subr.bf16.mxu0 %v571
        %661 = vmatpush2.bf16.msra.mxu0 %v570
        %662 = vmatprep.subr.bf16.mxu0 %v567
        %663 = vmatpush2.bf16.msra.mxu0 %v566
        %664 = vmatprep.subr.bf16.mxu0 %v563
        %665 = vmatpush2.bf16.msra.mxu0 %v562
        %666 = vmatprep.subr.bf16.mxu0 %v559
        %667 = vmatpush2.bf16.msra.mxu0 %v558
        %668 = vmatprep.subr.bf16.mxu0 %v555
        %669 = vmatpush2.bf16.msra.mxu0 %v554
        %670 = vmatprep.subr.bf16.mxu0 %v551
        %671 = vmatpush2.bf16.msra.mxu0 %v550
        %672 = vmatprep.subr.bf16.mxu0 %v547
        %673 = vmatpush2.bf16.msra.mxu0 %v546
        %674 = vmatprep.mubr.bf16.mxu0 %v235
        %675 = vmatmul.mubr.bf16.gmra.mxu0 %v234
        %v676 = vpop.f32.mrf.mxu0
        %v677 = vadd.f32 %v305, %v676
        %v678 = vpop.f32.mrf.mxu0
        %v679 = vadd.f32 %v309, %v678
        %v680 = vpop.f32.mrf.mxu0
        %v681 = vpop.f32.mrf.mxu0
        %682 = vdwg.mxu0
        %683 = vmatprep.subr.bf16.mxu0 %v545
        %684 = vmatpush1.bf16.msra.mxu0 %v544
        %685 = vmatprep.subr.bf16.mxu0 %v541
        %686 = vmatpush1.bf16.msra.mxu0 %v540
        %687 = vmatprep.subr.bf16.mxu0 %v537
        %688 = vmatpush1.bf16.msra.mxu0 %v536
        %689 = vmatprep.subr.bf16.mxu0 %v533
        %690 = vmatpush1.bf16.msra.mxu0 %v532
        %691 = vmatprep.subr.bf16.mxu0 %v529
        %692 = vmatpush1.bf16.msra.mxu0 %v528
        %693 = vmatprep.subr.bf16.mxu0 %v525
        %694 = vmatpush1.bf16.msra.mxu0 %v524
        %695 = vmatprep.subr.bf16.mxu0 %v521
        %696 = vmatpush1.bf16.msra.mxu0 %v520
        %697 = vmatprep.subr.bf16.mxu0 %v517
        %698 = vmatpush1.bf16.msra.mxu0 %v516
        %699 = vmatprep.subr.bf16.mxu0 %v577
        %700 = vmatpush2.bf16.msra.mxu0 %v576
        %701 = vmatprep.subr.bf16.mxu0 %v573
        %702 = vmatpush2.bf16.msra.mxu0 %v572
        %703 = vmatprep.subr.bf16.mxu0 %v569
        %704 = vmatpush2.bf16.msra.mxu0 %v568
        %705 = vmatprep.subr.bf16.mxu0 %v565
        %706 = vmatpush2.bf16.msra.mxu0 %v564
        %707 = vmatprep.subr.bf16.mxu0 %v561
        %708 = vmatpush2.bf16.msra.mxu0 %v560
        %709 = vmatprep.subr.bf16.mxu0 %v557
        %710 = vmatpush2.bf16.msra.mxu0 %v556
        %711 = vmatprep.subr.bf16.mxu0 %v553
        %712 = vmatpush2.bf16.msra.mxu0 %v552
        %713 = vmatprep.subr.bf16.mxu0 %v549
        %714 = vmatpush2.bf16.msra.mxu0 %v548
        %715 = vmatprep.mubr.bf16.mxu0 %v235
        %716 = vmatmul.mubr.bf16.gmra.mxu0 %v234
        %v717 = vpop.f32.mrf.mxu0
        %v718 = vadd.f32 %v313, %v717
        %v719 = vpop.f32.mrf.mxu0
        %v720 = vadd.f32 %v317, %v719
        %v721 = vpop.f32.mrf.mxu0
        %v722 = vpop.f32.mrf.mxu0
        %723 = vdwg.mxu0
        %v724 = vmax.f32 %v677, 0.0
        %v725 = vmax.f32 %v679, 0.0
        %v726 = vmax.f32 %v718, 0.0
        %v727 = vmax.f32 %v720, 0.0
        %728 = vst [vmem:[%s230] sm:$0xff] %v724
        %729 = vst [vmem:[%s230 + $0x8] sm:$0xff] %v725
        %730 = vst [vmem:[%s230 + $0x10] sm:$0xff] %v726
        %731 = vst [vmem:[%s230 + $0x18] sm:$0xff] %v727
        %s732 = smul.u32 4, %s20
        %p733 = scmp.lt.s32.totalorder %s732, 7
        %s734 = scalar_select %p733, %s732, 7
        %s735 = smul.addr %s734, 8
        %s736 = scalar_lea.vmem %s3, %s735
        // Predicated region
        $region41: #{vae_mlp_mri_forward.5} parent=31 // pred_check
          %p737 = pneg %p111
        $region42: #{vae_mlp_mri_forward.5} parent=31 // pred_check_branch
          %739 = sbr.rel (%p737) target = $region44
        $region43: #{vae_mlp_mri_forward.5} parent=31 // pred_region
          %s740 = smul.u32 4, %s20
        $region44: #{vae_mlp_mri_forward.5} parent=31 // pred_fallthru
          _
      $region32: #{vae_mlp_mri_forward.5} parent=5 // pred_fallthru
        _
      %p741 = scmp.le.s32.totalorder 2, %s15
      // Predicated region
      $region45: #{vae_mlp_mri_forward.5} parent=5 // pred_check
        %p742 = pneg %p741
      $region46: #{vae_mlp_mri_forward.5} parent=5 // pred_check_branch
        %744 = sbr.rel (%p742) target = $region48
      $region47: #{vae_mlp_mri_forward.5} parent=5 // pred_region
        %s745 = ssub.s32 %s15, 2
        // Predicated region
        $region49: #{vae_mlp_mri_forward.5} parent=47 // pred_check
          %p746 = pneg %p117
        $region50: #{vae_mlp_mri_forward.5} parent=47 // pred_check_branch
          %748 = sbr.rel (%p746) target = $region52
        $region51: #{vae_mlp_mri_forward.5} parent=47 // pred_region
          %s749 = smul.u32 4, %s21
          %p750 = scmp.lt.s32.totalorder %s749, 7
          %s751 = scalar_select %p750, %s749, 7
          %s752 = smul.addr %s751, 8
          %s753 = scalar_lea.vmem %s3, %s752
        $region52: #{vae_mlp_mri_forward.5} parent=47 // pred_fallthru
          _
      $region48: #{vae_mlp_mri_forward.5} parent=5 // pred_fallthru
        _
    $region6: #{vae_mlp_mri_forward.5} parent=1 // loop_footer
      %s19 = sadd.s32 1, %s15
    $region7: #{vae_mlp_mri_forward.5} parent=1 // loop_footer_branch
      %14 = sbr.rel target = $region3
    $region8: #{vae_mlp_mri_forward.5} parent=1 // loop_exit
      _
    %754 = vsyncpa [#allocation3], 1
    %s755 = scalar_lea.sflag [#allocation3], 1
    %756 = vsyncpa %s755, 1
    %757 = vsyncpa [#allocation5], 1
    %s758 = scalar_lea.sflag [#allocation5], 1
    %759 = vsyncpa %s758, 1

// kernel: vae_mlp_mri_forward.7
$region0: #{vae_mlp_mri_forward.7}
  #allocation0 [shape = 'u32[]', space=smem, size = 0x4, offset = 0x4, fixed_abs, tag = 'smem constant byte address 0x4 - core index']
  #allocation1 [shape = 'u32[144,128]{1,0:T(1,128)}', space=vmem, size = 0x12000, scoped, tag = 'internal scratch']
  %s0 = inlined_call_operand.vmem [shape: f32[8,1024], index: 0, kind: input, shape index: {}]
  %s1 = inlined_call_operand.vmem [shape: bf16[1024,256], index: 1, kind: input, shape index: {}]
  %s2 = inlined_call_operand.hbm [shape: f32[1,256], index: 2, kind: input, shape index: {}]
  %s3 = inlined_call_operand.vmem [shape: f32[8,128], index: 3, kind: input, shape index: {}]
  %s4 = inlined_call_operand.vmem [shape: bf16[128,1024], index: 4, kind: input, shape index: {}]
  %s5 = inlined_call_operand.hbm [shape: f32[1,1024], index: 5, kind: input, shape index: {}]
  %s6 = inlined_call_operand.vmem [shape: f32[8,1024], index: 6, kind: output, shape index: {0}]
  %s7 = inlined_call_operand.vmem [shape: f32[8,128], index: 7, kind: output, shape index: {1}]
  %s8 = inlined_call_operand.vmem [shape: f32[8,128], index: 8, kind: output, shape index: {2}]
  %9 = xla_tuple %s6, %s7, %s8
  %s10 = sld [smem:[#allocation0]]
  $region58: #{vae_mlp_mri_forward.7} parent=0
    _
  %s12 = ssub.s32 1, %s10
  %s13 = scalar_select 0, %s12, %s10
  $region1: #{vae_mlp_mri_forward.7} parent=0
    #allocation2 [shape = 'u8[1024]{0}', space=vmem, size = 0x400, scoped, tag = 'input window, operand 2, single buffered']
    #allocation3 [shape = 's32[1]{0}', space=sflag, size = 0x4, scoped, tag = 'scoped memory for vae_mlp_mri_forward.7']
    #allocation4 [shape = 'u8[4096]{0}', space=vmem, size = 0x1000, scoped, tag = 'input window, operand 5, single buffered']
    #allocation5 [shape = 's32[1]{0}', space=sflag, size = 0x4, scoped, tag = 'scoped memory for vae_mlp_mri_forward.7']
    %14 = vsyncpa [#allocation3], 0
    %15 = vsyncpa [#allocation5], 0
    // Predicated region
    $region2: #{vae_mlp_mri_forward.7} parent=1 // pred_check
      _
    $region3: #{vae_mlp_mri_forward.7} parent=1 // pred_check_branch
      %17 = sbr.rel (0) target = $region5
    $region4: #{vae_mlp_mri_forward.7} parent=1 // pred_region
      _
    $region5: #{vae_mlp_mri_forward.7} parent=1 // pred_fallthru
      _
    // Predicated region
    $region6: #{vae_mlp_mri_forward.7} parent=1 // pred_check
      _
    $region7: #{vae_mlp_mri_forward.7} parent=1 // pred_check_branch
      %19 = sbr.rel (0) target = $region9
    $region8: #{vae_mlp_mri_forward.7} parent=1 // pred_region
      _
    $region9: #{vae_mlp_mri_forward.7} parent=1 // pred_fallthru
      _
    // Predicated region
    $region10: #{vae_mlp_mri_forward.7} parent=1 // pred_check
      _
    $region11: #{vae_mlp_mri_forward.7} parent=1 // pred_check_branch
      %21 = sbr.rel (0) target = $region13
    $region12: #{vae_mlp_mri_forward.7} parent=1 // pred_region
      %s23 = ssub.s32 32, 32
      %24 = vsyncadd [#allocation3], %s23
      %s26 = sshll.u32 [#allocation2], 4
      %s27 = int_to_ptr.vmem [resolvable:$true] %s26
      %29 = dma.hbm_to_vmem [thread:$0]  %s2, 32, %s27, [#allocation3]
    $region13: #{vae_mlp_mri_forward.7} parent=1 // pred_fallthru
      _
    // Predicated region
    $region14: #{vae_mlp_mri_forward.7} parent=1 // pred_check
      _
    $region15: #{vae_mlp_mri_forward.7} parent=1 // pred_check_branch
      %31 = sbr.rel (0) target = $region17
    $region16: #{vae_mlp_mri_forward.7} parent=1 // pred_region
      _
    $region17: #{vae_mlp_mri_forward.7} parent=1 // pred_fallthru
      _
    // Predicated region
    $region18: #{vae_mlp_mri_forward.7} parent=1 // pred_check
      _
    $region19: #{vae_mlp_mri_forward.7} parent=1 // pred_check_branch
      %33 = sbr.rel (0) target = $region21
    $region20: #{vae_mlp_mri_forward.7} parent=1 // pred_region
      _
    $region21: #{vae_mlp_mri_forward.7} parent=1 // pred_fallthru
      _
    // Predicated region
    $region22: #{vae_mlp_mri_forward.7} parent=1 // pred_check
      _
    $region23: #{vae_mlp_mri_forward.7} parent=1 // pred_check_branch
      %35 = sbr.rel (0) target = $region25
    $region24: #{vae_mlp_mri_forward.7} parent=1 // pred_region
      %s37 = ssub.s32 128, 128
      %38 = vsyncadd [#allocation5], %s37
      %s40 = sshll.u32 [#allocation4], 4
      %s41 = int_to_ptr.vmem [resolvable:$true] %s40
      %43 = dma.hbm_to_vmem [thread:$0]  %s5, 128, %s41, [#allocation5]
    $region25: #{vae_mlp_mri_forward.7} parent=1 // pred_fallthru
      _
    // Predicated region
    $region26: #{vae_mlp_mri_forward.7} parent=1 // pred_check
      _
    $region27: #{vae_mlp_mri_forward.7} parent=1 // pred_check_branch
      %45 = sbr.rel (0) target = $region29
    $region28: #{vae_mlp_mri_forward.7} parent=1 // pred_region
      %46 = dma.done [#allocation3], 32
    $region29: #{vae_mlp_mri_forward.7} parent=1 // pred_fallthru
      _
    // Predicated region
    $region30: #{vae_mlp_mri_forward.7} parent=1 // pred_check
      _
    $region31: #{vae_mlp_mri_forward.7} parent=1 // pred_check_branch
      %48 = sbr.rel (0) target = $region33
    $region32: #{vae_mlp_mri_forward.7} parent=1 // pred_region
      %49 = dma.done [#allocation5], 128
    $region33: #{vae_mlp_mri_forward.7} parent=1 // pred_fallthru
      _
    %v51 = vld [vmem:[%s0] sm:$0xff]
    %v52 = vld [vmem:[%s0 + $0x8] sm:$0xff]
    %v53 = vld [vmem:[%s0 + $0x10] sm:$0xff]
    %v54 = vld [vmem:[%s0 + $0x18] sm:$0xff]
    %v55 = vld [vmem:[%s0 + $0x20] sm:$0xff]
    %v56 = vld [vmem:[%s0 + $0x28] sm:$0xff]
    %v57 = vld [vmem:[%s0 + $0x30] sm:$0xff]
    %v58 = vld [vmem:[%s0 + $0x38] sm:$0xff]
    %v59 = vpack.c.bf16 %v51, %v51
    %v60 = vpack.c.bf16 %v52, %v52
    %v61 = vpack.c.bf16 %v53, %v53
    %v62 = vpack.c.bf16 %v54, %v54
    %v63 = vpack.c.bf16 %v55, %v55
    %v64 = vpack.c.bf16 %v56, %v56
    %v65 = vpack.c.bf16 %v57, %v57
    %v66 = vpack.c.bf16 %v58, %v58
    %v67 = vld [vmem:[%s1] sm:$0xff]
    %v68 = vld [vmem:[%s1 + $0x8] sm:$0xff]
    %v69 = vld [vmem:[%s1 + $0x10] sm:$0xff]
    %v70 = vld [vmem:[%s1 + $0x18] sm:$0xff]
    %v71 = vld [vmem:[%s1 + $0x20] sm:$0xff]
    %v72 = vld [vmem:[%s1 + $0x28] sm:$0xff]
    %v73 = vld [vmem:[%s1 + $0x30] sm:$0xff]
    %v74 = vld [vmem:[%s1 + $0x38] sm:$0xff]
    %v75 = vld [vmem:[%s1 + $0x40] sm:$0xff]
    %v76 = vld [vmem:[%s1 + $0x48] sm:$0xff]
    %v77 = vld [vmem:[%s1 + $0x50] sm:$0xff]
    %v78 = vld [vmem:[%s1 + $0x58] sm:$0xff]
    %v79 = vld [vmem:[%s1 + $0x60] sm:$0xff]
    %v80 = vld [vmem:[%s1 + $0x68] sm:$0xff]
    %v81 = vld [vmem:[%s1 + $0x70] sm:$0xff]
    %v82 = vld [vmem:[%s1 + $0x78] sm:$0xff]
    %v83 = vld [vmem:[%s1 + $0x80] sm:$0xff]
    %v84 = vld [vmem:[%s1 + $0x88] sm:$0xff]
    %v85 = vld [vmem:[%s1 + $0x90] sm:$0xff]
    %v86 = vld [vmem:[%s1 + $0x98] sm:$0xff]
    %v87 = vld [vmem:[%s1 + $0xa0] sm:$0xff]
    %v88 = vld [vmem:[%s1 + $0xa8] sm:$0xff]
    %v89 = vld [vmem:[%s1 + $0xb0] sm:$0xff]
    %v90 = vld [vmem:[%s1 + $0xb8] sm:$0xff]
    %v91 = vld [vmem:[%s1 + $0xc0] sm:$0xff]
    %v92 = vld [vmem:[%s1 + $0xc8] sm:$0xff]
    %v93 = vld [vmem:[%s1 + $0xd0] sm:$0xff]
    %v94 = vld [vmem:[%s1 + $0xd8] sm:$0xff]
    %v95 = vld [vmem:[%s1 + $0xe0] sm:$0xff]
    %v96 = vld [vmem:[%s1 + $0xe8] sm:$0xff]
    %v97 = vld [vmem:[%s1 + $0xf0] sm:$0xff]
    %v98 = vld [vmem:[%s1 + $0xf8] sm:$0xff]
    %v99 = vld [vmem:[%s1 + $0x100] sm:$0xff]
    %v100 = vld [vmem:[%s1 + $0x108] sm:$0xff]
    %v101 = vld [vmem:[%s1 + $0x110] sm:$0xff]
    %v102 = vld [vmem:[%s1 + $0x118] sm:$0xff]
    %v103 = vld [vmem:[%s1 + $0x120] sm:$0xff]
    %v104 = vld [vmem:[%s1 + $0x128] sm:$0xff]
    %v105 = vld [vmem:[%s1 + $0x130] sm:$0xff]
    %v106 = vld [vmem:[%s1 + $0x138] sm:$0xff]
    %v107 = vld [vmem:[%s1 + $0x140] sm:$0xff]
    %v108 = vld [vmem:[%s1 + $0x148] sm:$0xff]
    %v109 = vld [vmem:[%s1 + $0x150] sm:$0xff]
    %v110 = vld [vmem:[%s1 + $0x158] sm:$0xff]
    %v111 = vld [vmem:[%s1 + $0x160] sm:$0xff]
    %v112 = vld [vmem:[%s1 + $0x168] sm:$0xff]
    %v113 = vld [vmem:[%s1 + $0x170] sm:$0xff]
    %v114 = vld [vmem:[%s1 + $0x178] sm:$0xff]
    %v115 = vld [vmem:[%s1 + $0x180] sm:$0xff]
    %v116 = vld [vmem:[%s1 + $0x188] sm:$0xff]
    %v117 = vld [vmem:[%s1 + $0x190] sm:$0xff]
    %v118 = vld [vmem:[%s1 + $0x198] sm:$0xff]
    %v119 = vld [vmem:[%s1 + $0x1a0] sm:$0xff]
    %v120 = vld [vmem:[%s1 + $0x1a8] sm:$0xff]
    %v121 = vld [vmem:[%s1 + $0x1b0] sm:$0xff]
    %v122 = vld [vmem:[%s1 + $0x1b8] sm:$0xff]
    %v123 = vld [vmem:[%s1 + $0x1c0] sm:$0xff]
    %v124 = vld [vmem:[%s1 + $0x1c8] sm:$0xff]
    %v125 = vld [vmem:[%s1 + $0x1d0] sm:$0xff]
    %v126 = vld [vmem:[%s1 + $0x1d8] sm:$0xff]
    %v127 = vld [vmem:[%s1 + $0x1e0] sm:$0xff]
    %v128 = vld [vmem:[%s1 + $0x1e8] sm:$0xff]
    %v129 = vld [vmem:[%s1 + $0x1f0] sm:$0xff]
    %v130 = vld [vmem:[%s1 + $0x1f8] sm:$0xff]
    %v131 = vld [vmem:[%s1 + $0x200] sm:$0xff]
    %v132 = vld [vmem:[%s1 + $0x208] sm:$0xff]
    %v133 = vld [vmem:[%s1 + $0x210] sm:$0xff]
    %v134 = vld [vmem:[%s1 + $0x218] sm:$0xff]
    %v135 = vld [vmem:[%s1 + $0x220] sm:$0xff]
    %v136 = vld [vmem:[%s1 + $0x228] sm:$0xff]
    %v137 = vld [vmem:[%s1 + $0x230] sm:$0xff]
    %v138 = vld [vmem:[%s1 + $0x238] sm:$0xff]
    %v139 = vld [vmem:[%s1 + $0x240] sm:$0xff]
    %v140 = vld [vmem:[%s1 + $0x248] sm:$0xff]
    %v141 = vld [vmem:[%s1 + $0x250] sm:$0xff]
    %v142 = vld [vmem:[%s1 + $0x258] sm:$0xff]
    %v143 = vld [vmem:[%s1 + $0x260] sm:$0xff]
    %v144 = vld [vmem:[%s1 + $0x268] sm:$0xff]
    %v145 = vld [vmem:[%s1 + $0x270] sm:$0xff]
    %v146 = vld [vmem:[%s1 + $0x278] sm:$0xff]
    %v147 = vld [vmem:[%s1 + $0x280] sm:$0xff]
    %v148 = vld [vmem:[%s1 + $0x288] sm:$0xff]
    %v149 = vld [vmem:[%s1 + $0x290] sm:$0xff]
    %v150 = vld [vmem:[%s1 + $0x298] sm:$0xff]
    %v151 = vld [vmem:[%s1 + $0x2a0] sm:$0xff]
    %v152 = vld [vmem:[%s1 + $0x2a8] sm:$0xff]
    %v153 = vld [vmem:[%s1 + $0x2b0] sm:$0xff]
    %v154 = vld [vmem:[%s1 + $0x2b8] sm:$0xff]
    %v155 = vld [vmem:[%s1 + $0x2c0] sm:$0xff]
    %v156 = vld [vmem:[%s1 + $0x2c8] sm:$0xff]
    %v157 = vld [vmem:[%s1 + $0x2d0] sm:$0xff]
    %v158 = vld [vmem:[%s1 + $0x2d8] sm:$0xff]
    %v159 = vld [vmem:[%s1 + $0x2e0] sm:$0xff]
    %v160 = vld [vmem:[%s1 + $0x2e8] sm:$0xff]
    %v161 = vld [vmem:[%s1 + $0x2f0] sm:$0xff]
    %v162 = vld [vmem:[%s1 + $0x2f8] sm:$0xff]
    %v163 = vld [vmem:[%s1 + $0x300] sm:$0xff]
    %v164 = vld [vmem:[%s1 + $0x308] sm:$0xff]
    %v165 = vld [vmem:[%s1 + $0x310] sm:$0xff]
    %v166 = vld [vmem:[%s1 + $0x318] sm:$0xff]
    %v167 = vld [vmem:[%s1 + $0x320] sm:$0xff]
    %v168 = vld [vmem:[%s1 + $0x328] sm:$0xff]
    %v169 = vld [vmem:[%s1 + $0x330] sm:$0xff]
    %v170 = vld [vmem:[%s1 + $0x338] sm:$0xff]
    %v171 = vld [vmem:[%s1 + $0x340] sm:$0xff]
    %v172 = vld [vmem:[%s1 + $0x348] sm:$0xff]
    %v173 = vld [vmem:[%s1 + $0x350] sm:$0xff]
    %v174 = vld [vmem:[%s1 + $0x358] sm:$0xff]
    %v175 = vld [vmem:[%s1 + $0x360] sm:$0xff]
    %v176 = vld [vmem:[%s1 + $0x368] sm:$0xff]
    %v177 = vld [vmem:[%s1 + $0x370] sm:$0xff]
    %v178 = vld [vmem:[%s1 + $0x378] sm:$0xff]
    %v179 = vld [vmem:[%s1 + $0x380] sm:$0xff]
    %v180 = vld [vmem:[%s1 + $0x388] sm:$0xff]
    %v181 = vld [vmem:[%s1 + $0x390] sm:$0xff]
    %v182 = vld [vmem:[%s1 + $0x398] sm:$0xff]
    %v183 = vld [vmem:[%s1 + $0x3a0] sm:$0xff]
    %v184 = vld [vmem:[%s1 + $0x3a8] sm:$0xff]
    %v185 = vld [vmem:[%s1 + $0x3b0] sm:$0xff]
    %v186 = vld [vmem:[%s1 + $0x3b8] sm:$0xff]
    %v187 = vld [vmem:[%s1 + $0x3c0] sm:$0xff]
    %v188 = vld [vmem:[%s1 + $0x3c8] sm:$0xff]
    %v189 = vld [vmem:[%s1 + $0x3d0] sm:$0xff]
    %v190 = vld [vmem:[%s1 + $0x3d8] sm:$0xff]
    %v191 = vld [vmem:[%s1 + $0x3e0] sm:$0xff]
    %v192 = vld [vmem:[%s1 + $0x3e8] sm:$0xff]
    %v193 = vld [vmem:[%s1 + $0x3f0] sm:$0xff]
    %v194 = vld [vmem:[%s1 + $0x3f8] sm:$0xff]
    %v195 = vld [vmem:[#allocation2] sm:$0x3]
    %v197 = vlaneseq
    %v198 = vshrl.u32 %v197, 7
    %v199 = vsub.s32 0, %v198
    %v200 = vrot.slane %v195, %v199
    %v201 = vlaneseq
    %v202 = vshrl.u32 %v201, 7
    %v203 = vsub.s32 1, %v202
    %v204 = vrot.slane %v195, %v203
    %v335 = vunpack.c.l.b16 %v67
    %v336 = vunpack.c.h.b16 %v67
    %v337 = vunpack.c.l.b16 %v68
    %v338 = vunpack.c.h.b16 %v68
    %v339 = vunpack.c.l.b16 %v69
    %v340 = vunpack.c.h.b16 %v69
    %v341 = vunpack.c.l.b16 %v70
    %v342 = vunpack.c.h.b16 %v70
    %v343 = vunpack.c.l.b16 %v71
    %v344 = vunpack.c.h.b16 %v71
    %v345 = vunpack.c.l.b16 %v72
    %v346 = vunpack.c.h.b16 %v72
    %v347 = vunpack.c.l.b16 %v73
    %v348 = vunpack.c.h.b16 %v73
    %v349 = vunpack.c.l.b16 %v74
    %v350 = vunpack.c.h.b16 %v74
    %v351 = vunpack.c.l.b16 %v75
    %v352 = vunpack.c.h.b16 %v75
    %v353 = vunpack.c.l.b16 %v76
    %v354 = vunpack.c.h.b16 %v76
    %v355 = vunpack.c.l.b16 %v77
    %v356 = vunpack.c.h.b16 %v77
    %v357 = vunpack.c.l.b16 %v78
    %v358 = vunpack.c.h.b16 %v78
    %v359 = vunpack.c.l.b16 %v79
    %v360 = vunpack.c.h.b16 %v79
    %v361 = vunpack.c.l.b16 %v80
    %v362 = vunpack.c.h.b16 %v80
    %v363 = vunpack.c.l.b16 %v81
    %v364 = vunpack.c.h.b16 %v81
    %v365 = vunpack.c.l.b16 %v82
    %v366 = vunpack.c.h.b16 %v82
    %v367 = vunpack.c.l.b16 %v83
    %v368 = vunpack.c.h.b16 %v83
    %v369 = vunpack.c.l.b16 %v84
    %v370 = vunpack.c.h.b16 %v84
    %v371 = vunpack.c.l.b16 %v85
    %v372 = vunpack.c.h.b16 %v85
    %v373 = vunpack.c.l.b16 %v86
    %v374 = vunpack.c.h.b16 %v86
    %v375 = vunpack.c.l.b16 %v87
    %v376 = vunpack.c.h.b16 %v87
    %v377 = vunpack.c.l.b16 %v88
    %v378 = vunpack.c.h.b16 %v88
    %v379 = vunpack.c.l.b16 %v89
    %v380 = vunpack.c.h.b16 %v89
    %v381 = vunpack.c.l.b16 %v90
    %v382 = vunpack.c.h.b16 %v90
    %v383 = vunpack.c.l.b16 %v91
    %v384 = vunpack.c.h.b16 %v91
    %v385 = vunpack.c.l.b16 %v92
    %v386 = vunpack.c.h.b16 %v92
    %v387 = vunpack.c.l.b16 %v93
    %v388 = vunpack.c.h.b16 %v93
    %v389 = vunpack.c.l.b16 %v94
    %v390 = vunpack.c.h.b16 %v94
    %v391 = vunpack.c.l.b16 %v95
    %v392 = vunpack.c.h.b16 %v95
    %v393 = vunpack.c.l.b16 %v96
    %v394 = vunpack.c.h.b16 %v96
    %v395 = vunpack.c.l.b16 %v97
    %v396 = vunpack.c.h.b16 %v97
    %v397 = vunpack.c.l.b16 %v98
    %v398 = vunpack.c.h.b16 %v98
    %v399 = vunpack.c.l.b16 %v99
    %v400 = vunpack.c.h.b16 %v99
    %v401 = vunpack.c.l.b16 %v100
    %v402 = vunpack.c.h.b16 %v100
    %v403 = vunpack.c.l.b16 %v101
    %v404 = vunpack.c.h.b16 %v101
    %v405 = vunpack.c.l.b16 %v102
    %v406 = vunpack.c.h.b16 %v102
    %v407 = vunpack.c.l.b16 %v103
    %v408 = vunpack.c.h.b16 %v103
    %v409 = vunpack.c.l.b16 %v104
    %v410 = vunpack.c.h.b16 %v104
    %v411 = vunpack.c.l.b16 %v105
    %v412 = vunpack.c.h.b16 %v105
    %v413 = vunpack.c.l.b16 %v106
    %v414 = vunpack.c.h.b16 %v106
    %v415 = vunpack.c.l.b16 %v107
    %v416 = vunpack.c.h.b16 %v107
    %v417 = vunpack.c.l.b16 %v108
    %v418 = vunpack.c.h.b16 %v108
    %v419 = vunpack.c.l.b16 %v109
    %v420 = vunpack.c.h.b16 %v109
    %v421 = vunpack.c.l.b16 %v110
    %v422 = vunpack.c.h.b16 %v110
    %v423 = vunpack.c.l.b16 %v111
    %v424 = vunpack.c.h.b16 %v111
    %v425 = vunpack.c.l.b16 %v112
    %v426 = vunpack.c.h.b16 %v112
    %v427 = vunpack.c.l.b16 %v113
    %v428 = vunpack.c.h.b16 %v113
    %v429 = vunpack.c.l.b16 %v114
    %v430 = vunpack.c.h.b16 %v114
    %v431 = vunpack.c.l.b16 %v115
    %v432 = vunpack.c.h.b16 %v115
    %v433 = vunpack.c.l.b16 %v116
    %v434 = vunpack.c.h.b16 %v116
    %v435 = vunpack.c.l.b16 %v117
    %v436 = vunpack.c.h.b16 %v117
    %v437 = vunpack.c.l.b16 %v118
    %v438 = vunpack.c.h.b16 %v118
    %v439 = vunpack.c.l.b16 %v119
    %v440 = vunpack.c.h.b16 %v119
    %v441 = vunpack.c.l.b16 %v120
    %v442 = vunpack.c.h.b16 %v120
    %v443 = vunpack.c.l.b16 %v121
    %v444 = vunpack.c.h.b16 %v121
    %v445 = vunpack.c.l.b16 %v122
    %v446 = vunpack.c.h.b16 %v122
    %v447 = vunpack.c.l.b16 %v123
    %v448 = vunpack.c.h.b16 %v123
    %v449 = vunpack.c.l.b16 %v124
    %v450 = vunpack.c.h.b16 %v124
    %v451 = vunpack.c.l.b16 %v125
    %v452 = vunpack.c.h.b16 %v125
    %v453 = vunpack.c.l.b16 %v126
    %v454 = vunpack.c.h.b16 %v126
    %v455 = vunpack.c.l.b16 %v127
    %v456 = vunpack.c.h.b16 %v127
    %v457 = vunpack.c.l.b16 %v128
    %v458 = vunpack.c.h.b16 %v128
    %v459 = vunpack.c.l.b16 %v129
    %v460 = vunpack.c.h.b16 %v129
    %v461 = vunpack.c.l.b16 %v130
    %v462 = vunpack.c.h.b16 %v130
    %v463 = vunpack.c.l.b16 %v131
    %v464 = vunpack.c.h.b16 %v131
    %v465 = vunpack.c.l.b16 %v132
    %v466 = vunpack.c.h.b16 %v132
    %v467 = vunpack.c.l.b16 %v133
    %v468 = vunpack.c.h.b16 %v133
    %v469 = vunpack.c.l.b16 %v134
    %v470 = vunpack.c.h.b16 %v134
    %v471 = vunpack.c.l.b16 %v135
    %v472 = vunpack.c.h.b16 %v135
    %v473 = vunpack.c.l.b16 %v136
    %v474 = vunpack.c.h.b16 %v136
    %v475 = vunpack.c.l.b16 %v137
    %v476 = vunpack.c.h.b16 %v137
    %v477 = vunpack.c.l.b16 %v138
    %v478 = vunpack.c.h.b16 %v138
    %v479 = vunpack.c.l.b16 %v139
    %v480 = vunpack.c.h.b16 %v139
    %v481 = vunpack.c.l.b16 %v140
    %v482 = vunpack.c.h.b16 %v140
    %v483 = vunpack.c.l.b16 %v141
    %v484 = vunpack.c.h.b16 %v141
    %v485 = vunpack.c.l.b16 %v142
    %v486 = vunpack.c.h.b16 %v142
    %v487 = vunpack.c.l.b16 %v143
    %v488 = vunpack.c.h.b16 %v143
    %v489 = vunpack.c.l.b16 %v144
    %v490 = vunpack.c.h.b16 %v144
    %v491 = vunpack.c.l.b16 %v145
    %v492 = vunpack.c.h.b16 %v145
    %v493 = vunpack.c.l.b16 %v146
    %v494 = vunpack.c.h.b16 %v146
    %v495 = vunpack.c.l.b16 %v147
    %v496 = vunpack.c.h.b16 %v147
    %v497 = vunpack.c.l.b16 %v148
    %v498 = vunpack.c.h.b16 %v148
    %v499 = vunpack.c.l.b16 %v149
    %v500 = vunpack.c.h.b16 %v149
    %v501 = vunpack.c.l.b16 %v150
    %v502 = vunpack.c.h.b16 %v150
    %v503 = vunpack.c.l.b16 %v151
    %v504 = vunpack.c.h.b16 %v151
    %v505 = vunpack.c.l.b16 %v152
    %v506 = vunpack.c.h.b16 %v152
    %v507 = vunpack.c.l.b16 %v153
    %v508 = vunpack.c.h.b16 %v153
    %v509 = vunpack.c.l.b16 %v154
    %v510 = vunpack.c.h.b16 %v154
    %v511 = vunpack.c.l.b16 %v155
    %v512 = vunpack.c.h.b16 %v155
    %v513 = vunpack.c.l.b16 %v156
    %v514 = vunpack.c.h.b16 %v156
    %v515 = vunpack.c.l.b16 %v157
    %v516 = vunpack.c.h.b16 %v157
    %v517 = vunpack.c.l.b16 %v158
    %v518 = vunpack.c.h.b16 %v158
    %v519 = vunpack.c.l.b16 %v159
    %v520 = vunpack.c.h.b16 %v159
    %v521 = vunpack.c.l.b16 %v160
    %v522 = vunpack.c.h.b16 %v160
    %v523 = vunpack.c.l.b16 %v161
    %v524 = vunpack.c.h.b16 %v161
    %v525 = vunpack.c.l.b16 %v162
    %v526 = vunpack.c.h.b16 %v162
    %v527 = vunpack.c.l.b16 %v163
    %v528 = vunpack.c.h.b16 %v163
    %v529 = vunpack.c.l.b16 %v164
    %v530 = vunpack.c.h.b16 %v164
    %v531 = vunpack.c.l.b16 %v165
    %v532 = vunpack.c.h.b16 %v165
    %v533 = vunpack.c.l.b16 %v166
    %v534 = vunpack.c.h.b16 %v166
    %v535 = vunpack.c.l.b16 %v167
    %v536 = vunpack.c.h.b16 %v167
    %v537 = vunpack.c.l.b16 %v168
    %v538 = vunpack.c.h.b16 %v168
    %v539 = vunpack.c.l.b16 %v169
    %v540 = vunpack.c.h.b16 %v169
    %v541 = vunpack.c.l.b16 %v170
    %v542 = vunpack.c.h.b16 %v170
    %v543 = vunpack.c.l.b16 %v171
    %v544 = vunpack.c.h.b16 %v171
    %v545 = vunpack.c.l.b16 %v172
    %v546 = vunpack.c.h.b16 %v172
    %v547 = vunpack.c.l.b16 %v173
    %v548 = vunpack.c.h.b16 %v173
    %v549 = vunpack.c.l.b16 %v174
    %v550 = vunpack.c.h.b16 %v174
    %v551 = vunpack.c.l.b16 %v175
    %v552 = vunpack.c.h.b16 %v175
    %v553 = vunpack.c.l.b16 %v176
    %v554 = vunpack.c.h.b16 %v176
    %v555 = vunpack.c.l.b16 %v177
    %v556 = vunpack.c.h.b16 %v177
    %v557 = vunpack.c.l.b16 %v178
    %v558 = vunpack.c.h.b16 %v178
    %v559 = vunpack.c.l.b16 %v179
    %v560 = vunpack.c.h.b16 %v179
    %v561 = vunpack.c.l.b16 %v180
    %v562 = vunpack.c.h.b16 %v180
    %v563 = vunpack.c.l.b16 %v181
    %v564 = vunpack.c.h.b16 %v181
    %v565 = vunpack.c.l.b16 %v182
    %v566 = vunpack.c.h.b16 %v182
    %v567 = vunpack.c.l.b16 %v183
    %v568 = vunpack.c.h.b16 %v183
    %v569 = vunpack.c.l.b16 %v184
    %v570 = vunpack.c.h.b16 %v184
    %v571 = vunpack.c.l.b16 %v185
    %v572 = vunpack.c.h.b16 %v185
    %v573 = vunpack.c.l.b16 %v186
    %v574 = vunpack.c.h.b16 %v186
    %v575 = vunpack.c.l.b16 %v187
    %v576 = vunpack.c.h.b16 %v187
    %v577 = vunpack.c.l.b16 %v188
    %v578 = vunpack.c.h.b16 %v188
    %v579 = vunpack.c.l.b16 %v189
    %v580 = vunpack.c.h.b16 %v189
    %v581 = vunpack.c.l.b16 %v190
    %v582 = vunpack.c.h.b16 %v190
    %v583 = vunpack.c.l.b16 %v191
    %v584 = vunpack.c.h.b16 %v191
    %v585 = vunpack.c.l.b16 %v192
    %v586 = vunpack.c.h.b16 %v192
    %v587 = vunpack.c.l.b16 %v193
    %v588 = vunpack.c.h.b16 %v193
    %v589 = vunpack.c.l.b16 %v194
    %v590 = vunpack.c.h.b16 %v194
    %v591 = vpack.c.b16 %v337, %v335
    %v592 = vpack.c.b16 %v338, %v336
    %v593 = vpack.c.b16 %v341, %v339
    %v594 = vpack.c.b16 %v342, %v340
    %v595 = vpack.c.b16 %v345, %v343
    %v596 = vpack.c.b16 %v346, %v344
    %v597 = vpack.c.b16 %v349, %v347
    %v598 = vpack.c.b16 %v350, %v348
    %v599 = vpack.c.b16 %v353, %v351
    %v600 = vpack.c.b16 %v354, %v352
    %v601 = vpack.c.b16 %v357, %v355
    %v602 = vpack.c.b16 %v358, %v356
    %v603 = vpack.c.b16 %v361, %v359
    %v604 = vpack.c.b16 %v362, %v360
    %v605 = vpack.c.b16 %v365, %v363
    %v606 = vpack.c.b16 %v366, %v364
    %v607 = vpack.c.b16 %v369, %v367
    %v608 = vpack.c.b16 %v370, %v368
    %v609 = vpack.c.b16 %v373, %v371
    %v610 = vpack.c.b16 %v374, %v372
    %v611 = vpack.c.b16 %v377, %v375
    %v612 = vpack.c.b16 %v378, %v376
    %v613 = vpack.c.b16 %v381, %v379
    %v614 = vpack.c.b16 %v382, %v380
    %v615 = vpack.c.b16 %v385, %v383
    %v616 = vpack.c.b16 %v386, %v384
    %v617 = vpack.c.b16 %v389, %v387
    %v618 = vpack.c.b16 %v390, %v388
    %v619 = vpack.c.b16 %v393, %v391
    %v620 = vpack.c.b16 %v394, %v392
    %v621 = vpack.c.b16 %v397, %v395
    %v622 = vpack.c.b16 %v398, %v396
    %v623 = vpack.c.b16 %v401, %v399
    %v624 = vpack.c.b16 %v402, %v400
    %v625 = vpack.c.b16 %v405, %v403
    %v626 = vpack.c.b16 %v406, %v404
    %v627 = vpack.c.b16 %v409, %v407
    %v628 = vpack.c.b16 %v410, %v408
    %v629 = vpack.c.b16 %v413, %v411
    %v630 = vpack.c.b16 %v414, %v412
    %v631 = vpack.c.b16 %v417, %v415
    %v632 = vpack.c.b16 %v418, %v416
    %v633 = vpack.c.b16 %v421, %v419
    %v634 = vpack.c.b16 %v422, %v420
    %v635 = vpack.c.b16 %v425, %v423
    %v636 = vpack.c.b16 %v426, %v424
    %v637 = vpack.c.b16 %v429, %v427
    %v638 = vpack.c.b16 %v430, %v428
    %v639 = vpack.c.b16 %v433, %v431
    %v640 = vpack.c.b16 %v434, %v432
    %v641 = vpack.c.b16 %v437, %v435
    %v642 = vpack.c.b16 %v438, %v436
    %v643 = vpack.c.b16 %v441, %v439
    %v644 = vpack.c.b16 %v442, %v440
    %v645 = vpack.c.b16 %v445, %v443
    %v646 = vpack.c.b16 %v446, %v444
    %v647 = vpack.c.b16 %v449, %v447
    %v648 = vpack.c.b16 %v450, %v448
    %v649 = vpack.c.b16 %v453, %v451
    %v650 = vpack.c.b16 %v454, %v452
    %v651 = vpack.c.b16 %v457, %v455
    %v652 = vpack.c.b16 %v458, %v456
    %v653 = vpack.c.b16 %v461, %v459
    %v654 = vpack.c.b16 %v462, %v460
    %v655 = vpack.c.b16 %v465, %v463
    %v656 = vpack.c.b16 %v466, %v464
    %v657 = vpack.c.b16 %v469, %v467
    %v658 = vpack.c.b16 %v470, %v468
    %v659 = vpack.c.b16 %v473, %v471
    %v660 = vpack.c.b16 %v474, %v472
    %v661 = vpack.c.b16 %v477, %v475
    %v662 = vpack.c.b16 %v478, %v476
    %v663 = vpack.c.b16 %v481, %v479
    %v664 = vpack.c.b16 %v482, %v480
    %v665 = vpack.c.b16 %v485, %v483
    %v666 = vpack.c.b16 %v486, %v484
    %v667 = vpack.c.b16 %v489, %v487
    %v668 = vpack.c.b16 %v490, %v488
    %v669 = vpack.c.b16 %v493, %v491
    %v670 = vpack.c.b16 %v494, %v492
    %v671 = vpack.c.b16 %v497, %v495
    %v672 = vpack.c.b16 %v498, %v496
    %v673 = vpack.c.b16 %v501, %v499
    %v674 = vpack.c.b16 %v502, %v500
    %v675 = vpack.c.b16 %v505, %v503
    %v676 = vpack.c.b16 %v506, %v504
    %v677 = vpack.c.b16 %v509, %v507
    %v678 = vpack.c.b16 %v510, %v508
    %v679 = vpack.c.b16 %v513, %v511
    %v680 = vpack.c.b16 %v514, %v512
    %v681 = vpack.c.b16 %v517, %v515
    %v682 = vpack.c.b16 %v518, %v516
    %v683 = vpack.c.b16 %v521, %v519
    %v684 = vpack.c.b16 %v522, %v520
    %v685 = vpack.c.b16 %v525, %v523
    %v686 = vpack.c.b16 %v526, %v524
    %v687 = vpack.c.b16 %v529, %v527
    %v688 = vpack.c.b16 %v530, %v528
    %v689 = vpack.c.b16 %v533, %v531
    %v690 = vpack.c.b16 %v534, %v532
    %v691 = vpack.c.b16 %v537, %v535
    %v692 = vpack.c.b16 %v538, %v536
    %v693 = vpack.c.b16 %v541, %v539
    %v694 = vpack.c.b16 %v542, %v540
    %v695 = vpack.c.b16 %v545, %v543
    %v696 = vpack.c.b16 %v546, %v544
    %v697 = vpack.c.b16 %v549, %v547
    %v698 = vpack.c.b16 %v550, %v548
    %v699 = vpack.c.b16 %v553, %v551
    %v700 = vpack.c.b16 %v554, %v552
    %v701 = vpack.c.b16 %v557, %v555
    %v702 = vpack.c.b16 %v558, %v556
    %v703 = vpack.c.b16 %v561, %v559
    %v704 = vpack.c.b16 %v562, %v560
    %v705 = vpack.c.b16 %v565, %v563
    %v706 = vpack.c.b16 %v566, %v564
    %v707 = vpack.c.b16 %v569, %v567
    %v708 = vpack.c.b16 %v570, %v568
    %v709 = vpack.c.b16 %v573, %v571
    %v710 = vpack.c.b16 %v574, %v572
    %v711 = vpack.c.b16 %v577, %v575
    %v712 = vpack.c.b16 %v578, %v576
    %v713 = vpack.c.b16 %v581, %v579
    %v714 = vpack.c.b16 %v582, %v580
    %v715 = vpack.c.b16 %v585, %v583
    %v716 = vpack.c.b16 %v586, %v584
    %v717 = vpack.c.b16 %v589, %v587
    %v718 = vpack.c.b16 %v590, %v588
    %847 = vmatprep.subr.bf16.mxu0 %v606
    %848 = vmatpush1.bf16.msra.mxu0 %v605
    %849 = vmatprep.subr.bf16.mxu0 %v604
    %850 = vmatpush1.bf16.msra.mxu0 %v603
    %851 = vmatprep.subr.bf16.mxu0 %v602
    %852 = vmatpush1.bf16.msra.mxu0 %v601
    %853 = vmatprep.subr.bf16.mxu0 %v600
    %854 = vmatpush1.bf16.msra.mxu0 %v599
    %855 = vmatprep.subr.bf16.mxu0 %v598
    %856 = vmatpush1.bf16.msra.mxu0 %v597
    %857 = vmatprep.subr.bf16.mxu0 %v596
    %858 = vmatpush1.bf16.msra.mxu0 %v595
    %859 = vmatprep.subr.bf16.mxu0 %v594
    %860 = vmatpush1.bf16.msra.mxu0 %v593
    %861 = vmatprep.subr.bf16.mxu0 %v592
    %862 = vmatpush1.bf16.msra.mxu0 %v591
    %863 = vmatprep.subr.bf16.mxu0 %v622
    %864 = vmatpush2.bf16.msra.mxu0 %v621
    %865 = vmatprep.subr.bf16.mxu0 %v620
    %866 = vmatpush2.bf16.msra.mxu0 %v619
    %867 = vmatprep.subr.bf16.mxu0 %v618
    %868 = vmatpush2.bf16.msra.mxu0 %v617
    %869 = vmatprep.subr.bf16.mxu0 %v616
    %870 = vmatpush2.bf16.msra.mxu0 %v615
    %871 = vmatprep.subr.bf16.mxu0 %v614
    %872 = vmatpush2.bf16.msra.mxu0 %v613
    %873 = vmatprep.subr.bf16.mxu0 %v612
    %874 = vmatpush2.bf16.msra.mxu0 %v611
    %875 = vmatprep.subr.bf16.mxu0 %v610
    %876 = vmatpush2.bf16.msra.mxu0 %v609
    %877 = vmatprep.subr.bf16.mxu0 %v608
    %878 = vmatpush2.bf16.msra.mxu0 %v607
    %879 = vmatprep.mubr.bf16.mxu0 %v60
    %880 = vmatmul.mubr.bf16.gmra.mxu0 %v59
    %v881 = vpop.f32.mrf.mxu0
    %v882 = vadd.f32 %v200, %v881
    %v883 = vpop.f32.mrf.mxu0
    %v884 = vadd.f32 %v204, %v883
    %v885 = vpop.f32.mrf.mxu0
    %v886 = vpop.f32.mrf.mxu0
    %887 = vdwg.mxu0
    %888 = vmatprep.subr.bf16.mxu0 %v638
    %889 = vmatpush1.bf16.msra.mxu0 %v637
    %890 = vmatprep.subr.bf16.mxu0 %v636
    %891 = vmatpush1.bf16.msra.mxu0 %v635
    %892 = vmatprep.subr.bf16.mxu0 %v634
    %893 = vmatpush1.bf16.msra.mxu0 %v633
    %894 = vmatprep.subr.bf16.mxu0 %v632
    %895 = vmatpush1.bf16.msra.mxu0 %v631
    %896 = vmatprep.subr.bf16.mxu0 %v630
    %897 = vmatpush1.bf16.msra.mxu0 %v629
    %898 = vmatprep.subr.bf16.mxu0 %v628
    %899 = vmatpush1.bf16.msra.mxu0 %v627
    %900 = vmatprep.subr.bf16.mxu0 %v626
    %901 = vmatpush1.bf16.msra.mxu0 %v625
    %902 = vmatprep.subr.bf16.mxu0 %v624
    %903 = vmatpush1.bf16.msra.mxu0 %v623
    %904 = vmatprep.subr.bf16.mxu0 %v654
    %905 = vmatpush2.bf16.msra.mxu0 %v653
    %906 = vmatprep.subr.bf16.mxu0 %v652
    %907 = vmatpush2.bf16.msra.mxu0 %v651
    %908 = vmatprep.subr.bf16.mxu0 %v650
    %909 = vmatpush2.bf16.msra.mxu0 %v649
    %910 = vmatprep.subr.bf16.mxu0 %v648
    %911 = vmatpush2.bf16.msra.mxu0 %v647
    %912 = vmatprep.subr.bf16.mxu0 %v646
    %913 = vmatpush2.bf16.msra.mxu0 %v645
    %914 = vmatprep.subr.bf16.mxu0 %v644
    %915 = vmatpush2.bf16.msra.mxu0 %v643
    %916 = vmatprep.subr.bf16.mxu0 %v642
    %917 = vmatpush2.bf16.msra.mxu0 %v641
    %918 = vmatprep.subr.bf16.mxu0 %v640
    %919 = vmatpush2.bf16.msra.mxu0 %v639
    %920 = vmatprep.mubr.bf16.mxu0 %v62
    %921 = vmatmul.mubr.bf16.gmra.mxu0 %v61
    %v922 = vpop.f32.mrf.mxu0
    %v923 = vadd.f32 %v882, %v922
    %v924 = vpop.f32.mrf.mxu0
    %v925 = vadd.f32 %v884, %v924
    %v926 = vpop.f32.mrf.mxu0
    %v927 = vpop.f32.mrf.mxu0
    %928 = vdwg.mxu0
    %929 = vmatprep.subr.bf16.mxu0 %v670
    %930 = vmatpush1.bf16.msra.mxu0 %v669
    %931 = vmatprep.subr.bf16.mxu0 %v668
    %932 = vmatpush1.bf16.msra.mxu0 %v667
    %933 = vmatprep.subr.bf16.mxu0 %v666
    %934 = vmatpush1.bf16.msra.mxu0 %v665
    %935 = vmatprep.subr.bf16.mxu0 %v664
    %936 = vmatpush1.bf16.msra.mxu0 %v663
    %937 = vmatprep.subr.bf16.mxu0 %v662
    %938 = vmatpush1.bf16.msra.mxu0 %v661
    %939 = vmatprep.subr.bf16.mxu0 %v660
    %940 = vmatpush1.bf16.msra.mxu0 %v659
    %941 = vmatprep.subr.bf16.mxu0 %v658
    %942 = vmatpush1.bf16.msra.mxu0 %v657
    %943 = vmatprep.subr.bf16.mxu0 %v656
    %944 = vmatpush1.bf16.msra.mxu0 %v655
    %945 = vmatprep.subr.bf16.mxu0 %v686
    %946 = vmatpush2.bf16.msra.mxu0 %v685
    %947 = vmatprep.subr.bf16.mxu0 %v684
    %948 = vmatpush2.bf16.msra.mxu0 %v683
    %949 = vmatprep.subr.bf16.mxu0 %v682
    %950 = vmatpush2.bf16.msra.mxu0 %v681
    %951 = vmatprep.subr.bf16.mxu0 %v680
    %952 = vmatpush2.bf16.msra.mxu0 %v679
    %953 = vmatprep.subr.bf16.mxu0 %v678
    %954 = vmatpush2.bf16.msra.mxu0 %v677
    %955 = vmatprep.subr.bf16.mxu0 %v676
    %956 = vmatpush2.bf16.msra.mxu0 %v675
    %957 = vmatprep.subr.bf16.mxu0 %v674
    %958 = vmatpush2.bf16.msra.mxu0 %v673
    %959 = vmatprep.subr.bf16.mxu0 %v672
    %960 = vmatpush2.bf16.msra.mxu0 %v671
    %961 = vmatprep.mubr.bf16.mxu0 %v64
    %962 = vmatmul.mubr.bf16.gmra.mxu0 %v63
    %v963 = vpop.f32.mrf.mxu0
    %v964 = vadd.f32 %v923, %v963
    %v965 = vpop.f32.mrf.mxu0
    %v966 = vadd.f32 %v925, %v965
    %v967 = vpop.f32.mrf.mxu0
    %v968 = vpop.f32.mrf.mxu0
    %969 = vdwg.mxu0
    %970 = vmatprep.subr.bf16.mxu0 %v702
    %971 = vmatpush1.bf16.msra.mxu0 %v701
    %972 = vmatprep.subr.bf16.mxu0 %v700
    %973 = vmatpush1.bf16.msra.mxu0 %v699
    %974 = vmatprep.subr.bf16.mxu0 %v698
    %975 = vmatpush1.bf16.msra.mxu0 %v697
    %976 = vmatprep.subr.bf16.mxu0 %v696
    %977 = vmatpush1.bf16.msra.mxu0 %v695
    %978 = vmatprep.subr.bf16.mxu0 %v694
    %979 = vmatpush1.bf16.msra.mxu0 %v693
    %980 = vmatprep.subr.bf16.mxu0 %v692
    %981 = vmatpush1.bf16.msra.mxu0 %v691
    %982 = vmatprep.subr.bf16.mxu0 %v690
    %983 = vmatpush1.bf16.msra.mxu0 %v689
    %984 = vmatprep.subr.bf16.mxu0 %v688
    %985 = vmatpush1.bf16.msra.mxu0 %v687
    %986 = vmatprep.subr.bf16.mxu0 %v718
    %987 = vmatpush2.bf16.msra.mxu0 %v717
    %988 = vmatprep.subr.bf16.mxu0 %v716
    %989 = vmatpush2.bf16.msra.mxu0 %v715
    %990 = vmatprep.subr.bf16.mxu0 %v714
    %991 = vmatpush2.bf16.msra.mxu0 %v713
    %992 = vmatprep.subr.bf16.mxu0 %v712
    %993 = vmatpush2.bf16.msra.mxu0 %v711
    %994 = vmatprep.subr.bf16.mxu0 %v710
    %995 = vmatpush2.bf16.msra.mxu0 %v709
    %996 = vmatprep.subr.bf16.mxu0 %v708
    %997 = vmatpush2.bf16.msra.mxu0 %v707
    %998 = vmatprep.subr.bf16.mxu0 %v706
    %999 = vmatpush2.bf16.msra.mxu0 %v705
    %1000 = vmatprep.subr.bf16.mxu0 %v704
    %1001 = vmatpush2.bf16.msra.mxu0 %v703
    %1002 = vmatprep.mubr.bf16.mxu0 %v66
    %1003 = vmatmul.mubr.bf16.gmra.mxu0 %v65
    %v1004 = vpop.f32.mrf.mxu0
    %v1005 = vadd.f32 %v964, %v1004
    %v1006 = vpop.f32.mrf.mxu0
    %v1007 = vadd.f32 %v966, %v1006
    %v1008 = vpop.f32.mrf.mxu0
    %v1009 = vpop.f32.mrf.mxu0
    %1010 = vdwg.mxu0
    %v1011 = vmul.f32 %v1007, 0.5
    %v1012 = vmul.f32 %v1011, 1.442695
    %v1013 = vpow.pop %v1012
    %v1014 = vld [vmem:[%s3] sm:$0xff]
    %v1015 = vmul.f32 %v1013, %v1014
    %v1016 = vadd.f32 %v1005, %v1015
    %v1017 = vpack.c.bf16 %v1016, %v1016
    %v1018 = vld [vmem:[%s4] sm:$0xff]
    %v1019 = vld [vmem:[%s4 + $0x8] sm:$0xff]
    %v1020 = vld [vmem:[%s4 + $0x10] sm:$0xff]
    %v1021 = vld [vmem:[%s4 + $0x18] sm:$0xff]
    %v1022 = vld [vmem:[%s4 + $0x20] sm:$0xff]
    %v1023 = vld [vmem:[%s4 + $0x28] sm:$0xff]
    %v1024 = vld [vmem:[%s4 + $0x30] sm:$0xff]
    %v1025 = vld [vmem:[%s4 + $0x38] sm:$0xff]
    %v1026 = vld [vmem:[%s4 + $0x40] sm:$0xff]
    %v1027 = vld [vmem:[%s4 + $0x48] sm:$0xff]
    %v1028 = vld [vmem:[%s4 + $0x50] sm:$0xff]
    %v1029 = vld [vmem:[%s4 + $0x58] sm:$0xff]
    %v1030 = vld [vmem:[%s4 + $0x60] sm:$0xff]
    %v1031 = vld [vmem:[%s4 + $0x68] sm:$0xff]
    %v1032 = vld [vmem:[%s4 + $0x70] sm:$0xff]
    %v1033 = vld [vmem:[%s4 + $0x78] sm:$0xff]
    %v1034 = vld [vmem:[%s4 + $0x80] sm:$0xff]
    %v1035 = vld [vmem:[%s4 + $0x88] sm:$0xff]
    %v1036 = vld [vmem:[%s4 + $0x90] sm:$0xff]
    %v1037 = vld [vmem:[%s4 + $0x98] sm:$0xff]
    %v1038 = vld [vmem:[%s4 + $0xa0] sm:$0xff]
    %v1039 = vld [vmem:[%s4 + $0xa8] sm:$0xff]
    %v1040 = vld [vmem:[%s4 + $0xb0] sm:$0xff]
    %v1041 = vld [vmem:[%s4 + $0xb8] sm:$0xff]
    %v1042 = vld [vmem:[%s4 + $0xc0] sm:$0xff]
    %v1043 = vld [vmem:[%s4 + $0xc8] sm:$0xff]
    %v1044 = vld [vmem:[%s4 + $0xd0] sm:$0xff]
    %v1045 = vld [vmem:[%s4 + $0xd8] sm:$0xff]
    %v1046 = vld [vmem:[%s4 + $0xe0] sm:$0xff]
    %v1047 = vld [vmem:[%s4 + $0xe8] sm:$0xff]
    %v1048 = vld [vmem:[%s4 + $0xf0] sm:$0xff]
    %v1049 = vld [vmem:[%s4 + $0xf8] sm:$0xff]
    %v1050 = vld [vmem:[%s4 + $0x100] sm:$0xff]
    %v1051 = vld [vmem:[%s4 + $0x108] sm:$0xff]
    %v1052 = vld [vmem:[%s4 + $0x110] sm:$0xff]
    %v1053 = vld [vmem:[%s4 + $0x118] sm:$0xff]
    %v1054 = vld [vmem:[%s4 + $0x120] sm:$0xff]
    %v1055 = vld [vmem:[%s4 + $0x128] sm:$0xff]
    %v1056 = vld [vmem:[%s4 + $0x130] sm:$0xff]
    %v1057 = vld [vmem:[%s4 + $0x138] sm:$0xff]
    %v1058 = vld [vmem:[%s4 + $0x140] sm:$0xff]
    %v1059 = vld [vmem:[%s4 + $0x148] sm:$0xff]
    %v1060 = vld [vmem:[%s4 + $0x150] sm:$0xff]
    %v1061 = vld [vmem:[%s4 + $0x158] sm:$0xff]
    %v1062 = vld [vmem:[%s4 + $0x160] sm:$0xff]
    %v1063 = vld [vmem:[%s4 + $0x168] sm:$0xff]
    %v1064 = vld [vmem:[%s4 + $0x170] sm:$0xff]
    %v1065 = vld [vmem:[%s4 + $0x178] sm:$0xff]
    %v1066 = vld [vmem:[%s4 + $0x180] sm:$0xff]
    %v1067 = vld [vmem:[%s4 + $0x188] sm:$0xff]
    %v1068 = vld [vmem:[%s4 + $0x190] sm:$0xff]
    %v1069 = vld [vmem:[%s4 + $0x198] sm:$0xff]
    %v1070 = vld [vmem:[%s4 + $0x1a0] sm:$0xff]
    %v1071 = vld [vmem:[%s4 + $0x1a8] sm:$0xff]
    %v1072 = vld [vmem:[%s4 + $0x1b0] sm:$0xff]
    %v1073 = vld [vmem:[%s4 + $0x1b8] sm:$0xff]
    %v1074 = vld [vmem:[%s4 + $0x1c0] sm:$0xff]
    %v1075 = vld [vmem:[%s4 + $0x1c8] sm:$0xff]
    %v1076 = vld [vmem:[%s4 + $0x1d0] sm:$0xff]
    %v1077 = vld [vmem:[%s4 + $0x1d8] sm:$0xff]
    %v1078 = vld [vmem:[%s4 + $0x1e0] sm:$0xff]
    %v1079 = vld [vmem:[%s4 + $0x1e8] sm:$0xff]
    %v1080 = vld [vmem:[%s4 + $0x1f0] sm:$0xff]
    %v1081 = vld [vmem:[%s4 + $0x1f8] sm:$0xff]
    %v1082 = vld [vmem:[#allocation4] sm:$0xff]
    %v1084 = vlaneseq
    %v1085 = vshrl.u32 %v1084, 7
    %v1086 = vsub.s32 0, %v1085
    %v1087 = vrot.slane %v1082, %v1086
    %v1088 = vlaneseq
    %v1089 = vshrl.u32 %v1088, 7
    %v1090 = vsub.s32 1, %v1089
    %v1091 = vrot.slane %v1082, %v1090
    %v1092 = vlaneseq
    %v1093 = vshrl.u32 %v1092, 7
    %v1094 = vsub.s32 2, %v1093
    %v1095 = vrot.slane %v1082, %v1094
    %v1096 = vlaneseq
    %v1097 = vshrl.u32 %v1096, 7
    %v1098 = vsub.s32 3, %v1097
    %v1099 = vrot.slane %v1082, %v1098
    %v1100 = vlaneseq
    %v1101 = vshrl.u32 %v1100, 7
    %v1102 = vsub.s32 4, %v1101
    %v1103 = vrot.slane %v1082, %v1102
    %v1104 = vlaneseq
    %v1105 = vshrl.u32 %v1104, 7
    %v1106 = vsub.s32 5, %v1105
    %v1107 = vrot.slane %v1082, %v1106
    %v1108 = vlaneseq
    %v1109 = vshrl.u32 %v1108, 7
    %v1110 = vsub.s32 6, %v1109
    %v1111 = vrot.slane %v1082, %v1110
    %v1112 = vlaneseq
    %v1113 = vshrl.u32 %v1112, 7
    %v1114 = vsub.s32 7, %v1113
    %v1115 = vrot.slane %v1082, %v1114
    %v1188 = vunpack.c.l.b16 %v1018
    %v1189 = vunpack.c.h.b16 %v1018
    %v1190 = vunpack.c.l.b16 %v1019
    %v1191 = vunpack.c.h.b16 %v1019
    %v1192 = vunpack.c.l.b16 %v1020
    %v1193 = vunpack.c.h.b16 %v1020
    %v1194 = vunpack.c.l.b16 %v1021
    %v1195 = vunpack.c.h.b16 %v1021
    %v1196 = vunpack.c.l.b16 %v1022
    %v1197 = vunpack.c.h.b16 %v1022
    %v1198 = vunpack.c.l.b16 %v1023
    %v1199 = vunpack.c.h.b16 %v1023
    %v1200 = vunpack.c.l.b16 %v1024
    %v1201 = vunpack.c.h.b16 %v1024
    %v1202 = vunpack.c.l.b16 %v1025
    %v1203 = vunpack.c.h.b16 %v1025
    %v1204 = vunpack.c.l.b16 %v1026
    %v1205 = vunpack.c.h.b16 %v1026
    %v1206 = vunpack.c.l.b16 %v1027
    %v1207 = vunpack.c.h.b16 %v1027
    %v1208 = vunpack.c.l.b16 %v1028
    %v1209 = vunpack.c.h.b16 %v1028
    %v1210 = vunpack.c.l.b16 %v1029
    %v1211 = vunpack.c.h.b16 %v1029
    %v1212 = vunpack.c.l.b16 %v1030
    %v1213 = vunpack.c.h.b16 %v1030
    %v1214 = vunpack.c.l.b16 %v1031
    %v1215 = vunpack.c.h.b16 %v1031
    %v1216 = vunpack.c.l.b16 %v1032
    %v1217 = vunpack.c.h.b16 %v1032
    %v1218 = vunpack.c.l.b16 %v1033
    %v1219 = vunpack.c.h.b16 %v1033
    %v1220 = vunpack.c.l.b16 %v1034
    %v1221 = vunpack.c.h.b16 %v1034
    %v1222 = vunpack.c.l.b16 %v1035
    %v1223 = vunpack.c.h.b16 %v1035
    %v1224 = vunpack.c.l.b16 %v1036
    %v1225 = vunpack.c.h.b16 %v1036
    %v1226 = vunpack.c.l.b16 %v1037
    %v1227 = vunpack.c.h.b16 %v1037
    %v1228 = vunpack.c.l.b16 %v1038
    %v1229 = vunpack.c.h.b16 %v1038
    %v1230 = vunpack.c.l.b16 %v1039
    %v1231 = vunpack.c.h.b16 %v1039
    %v1232 = vunpack.c.l.b16 %v1040
    %v1233 = vunpack.c.h.b16 %v1040
    %v1234 = vunpack.c.l.b16 %v1041
    %v1235 = vunpack.c.h.b16 %v1041
    %v1236 = vunpack.c.l.b16 %v1042
    %v1237 = vunpack.c.h.b16 %v1042
    %v1238 = vunpack.c.l.b16 %v1043
    %v1239 = vunpack.c.h.b16 %v1043
    %v1240 = vunpack.c.l.b16 %v1044
    %v1241 = vunpack.c.h.b16 %v1044
    %v1242 = vunpack.c.l.b16 %v1045
    %v1243 = vunpack.c.h.b16 %v1045
    %v1244 = vunpack.c.l.b16 %v1046
    %v1245 = vunpack.c.h.b16 %v1046
    %v1246 = vunpack.c.l.b16 %v1047
    %v1247 = vunpack.c.h.b16 %v1047
    %v1248 = vunpack.c.l.b16 %v1048
    %v1249 = vunpack.c.h.b16 %v1048
    %v1250 = vunpack.c.l.b16 %v1049
    %v1251 = vunpack.c.h.b16 %v1049
    %v1252 = vunpack.c.l.b16 %v1050
    %v1253 = vunpack.c.h.b16 %v1050
    %v1254 = vunpack.c.l.b16 %v1051
    %v1255 = vunpack.c.h.b16 %v1051
    %v1256 = vunpack.c.l.b16 %v1052
    %v1257 = vunpack.c.h.b16 %v1052
    %v1258 = vunpack.c.l.b16 %v1053
    %v1259 = vunpack.c.h.b16 %v1053
    %v1260 = vunpack.c.l.b16 %v1054
    %v1261 = vunpack.c.h.b16 %v1054
    %v1262 = vunpack.c.l.b16 %v1055
    %v1263 = vunpack.c.h.b16 %v1055
    %v1264 = vunpack.c.l.b16 %v1056
    %v1265 = vunpack.c.h.b16 %v1056
    %v1266 = vunpack.c.l.b16 %v1057
    %v1267 = vunpack.c.h.b16 %v1057
    %v1268 = vunpack.c.l.b16 %v1058
    %v1269 = vunpack.c.h.b16 %v1058
    %v1270 = vunpack.c.l.b16 %v1059
    %v1271 = vunpack.c.h.b16 %v1059
    %v1272 = vunpack.c.l.b16 %v1060
    %v1273 = vunpack.c.h.b16 %v1060
    %v1274 = vunpack.c.l.b16 %v1061
    %v1275 = vunpack.c.h.b16 %v1061
    %v1276 = vunpack.c.l.b16 %v1062
    %v1277 = vunpack.c.h.b16 %v1062
    %v1278 = vunpack.c.l.b16 %v1063
    %v1279 = vunpack.c.h.b16 %v1063
    %v1280 = vunpack.c.l.b16 %v1064
    %v1281 = vunpack.c.h.b16 %v1064
    %v1282 = vunpack.c.l.b16 %v1065
    %v1283 = vunpack.c.h.b16 %v1065
    %v1284 = vunpack.c.l.b16 %v1066
    %v1285 = vunpack.c.h.b16 %v1066
    %v1286 = vunpack.c.l.b16 %v1067
    %v1287 = vunpack.c.h.b16 %v1067
    %v1288 = vunpack.c.l.b16 %v1068
    %v1289 = vunpack.c.h.b16 %v1068
    %v1290 = vunpack.c.l.b16 %v1069
    %v1291 = vunpack.c.h.b16 %v1069
    %v1292 = vunpack.c.l.b16 %v1070
    %v1293 = vunpack.c.h.b16 %v1070
    %v1294 = vunpack.c.l.b16 %v1071
    %v1295 = vunpack.c.h.b16 %v1071
    %v1296 = vunpack.c.l.b16 %v1072
    %v1297 = vunpack.c.h.b16 %v1072
    %v1298 = vunpack.c.l.b16 %v1073
    %v1299 = vunpack.c.h.b16 %v1073
    %v1300 = vunpack.c.l.b16 %v1074
    %v1301 = vunpack.c.h.b16 %v1074
    %v1302 = vunpack.c.l.b16 %v1075
    %v1303 = vunpack.c.h.b16 %v1075
    %v1304 = vunpack.c.l.b16 %v1076
    %v1305 = vunpack.c.h.b16 %v1076
    %v1306 = vunpack.c.l.b16 %v1077
    %v1307 = vunpack.c.h.b16 %v1077
    %v1308 = vunpack.c.l.b16 %v1078
    %v1309 = vunpack.c.h.b16 %v1078
    %v1310 = vunpack.c.l.b16 %v1079
    %v1311 = vunpack.c.h.b16 %v1079
    %v1312 = vunpack.c.l.b16 %v1080
    %v1313 = vunpack.c.h.b16 %v1080
    %v1314 = vunpack.c.l.b16 %v1081
    %v1315 = vunpack.c.h.b16 %v1081
    %v1316 = vpack.c.b16 %v1196, %v1188
    %v1317 = vpack.c.b16 %v1197, %v1189
    %v1318 = vpack.c.b16 %v1198, %v1190
    %v1319 = vpack.c.b16 %v1199, %v1191
    %v1320 = vpack.c.b16 %v1200, %v1192
    %v1321 = vpack.c.b16 %v1201, %v1193
    %v1322 = vpack.c.b16 %v1202, %v1194
    %v1323 = vpack.c.b16 %v1203, %v1195
    %v1324 = vpack.c.b16 %v1212, %v1204
    %v1325 = vpack.c.b16 %v1213, %v1205
    %v1326 = vpack.c.b16 %v1214, %v1206
    %v1327 = vpack.c.b16 %v1215, %v1207
    %v1328 = vpack.c.b16 %v1216, %v1208
    %v1329 = vpack.c.b16 %v1217, %v1209
    %v1330 = vpack.c.b16 %v1218, %v1210
    %v1331 = vpack.c.b16 %v1219, %v1211
    %v1332 = vpack.c.b16 %v1228, %v1220
    %v1333 = vpack.c.b16 %v1229, %v1221
    %v1334 = vpack.c.b16 %v1230, %v1222
    %v1335 = vpack.c.b16 %v1231, %v1223
    %v1336 = vpack.c.b16 %v1232, %v1224
    %v1337 = vpack.c.b16 %v1233, %v1225
    %v1338 = vpack.c.b16 %v1234, %v1226
    %v1339 = vpack.c.b16 %v1235, %v1227
    %v1340 = vpack.c.b16 %v1244, %v1236
    %v1341 = vpack.c.b16 %v1245, %v1237
    %v1342 = vpack.c.b16 %v1246, %v1238
    %v1343 = vpack.c.b16 %v1247, %v1239
    %v1344 = vpack.c.b16 %v1248, %v1240
    %v1345 = vpack.c.b16 %v1249, %v1241
    %v1346 = vpack.c.b16 %v1250, %v1242
    %v1347 = vpack.c.b16 %v1251, %v1243
    %v1348 = vpack.c.b16 %v1260, %v1252
    %v1349 = vpack.c.b16 %v1261, %v1253
    %v1350 = vpack.c.b16 %v1262, %v1254
    %v1351 = vpack.c.b16 %v1263, %v1255
    %v1352 = vpack.c.b16 %v1264, %v1256
    %v1353 = vpack.c.b16 %v1265, %v1257
    %v1354 = vpack.c.b16 %v1266, %v1258
    %v1355 = vpack.c.b16 %v1267, %v1259
    %v1356 = vpack.c.b16 %v1276, %v1268
    %v1357 = vpack.c.b16 %v1277, %v1269
    %v1358 = vpack.c.b16 %v1278, %v1270
    %v1359 = vpack.c.b16 %v1279, %v1271
    %v1360 = vpack.c.b16 %v1280, %v1272
    %v1361 = vpack.c.b16 %v1281, %v1273
    %v1362 = vpack.c.b16 %v1282, %v1274
    %v1363 = vpack.c.b16 %v1283, %v1275
    %v1364 = vpack.c.b16 %v1292, %v1284
    %v1365 = vpack.c.b16 %v1293, %v1285
    %v1366 = vpack.c.b16 %v1294, %v1286
    %v1367 = vpack.c.b16 %v1295, %v1287
    %v1368 = vpack.c.b16 %v1296, %v1288
    %v1369 = vpack.c.b16 %v1297, %v1289
    %v1370 = vpack.c.b16 %v1298, %v1290
    %v1371 = vpack.c.b16 %v1299, %v1291
    %v1372 = vpack.c.b16 %v1308, %v1300
    %v1373 = vpack.c.b16 %v1309, %v1301
    %v1374 = vpack.c.b16 %v1310, %v1302
    %v1375 = vpack.c.b16 %v1311, %v1303
    %v1376 = vpack.c.b16 %v1312, %v1304
    %v1377 = vpack.c.b16 %v1313, %v1305
    %v1378 = vpack.c.b16 %v1314, %v1306
    %v1379 = vpack.c.b16 %v1315, %v1307
    %1444 = vmatprep.subr.bf16.mxu0 %v1373
    %1445 = vmatpush1.bf16.msra.mxu0 %v1372
    %1446 = vmatprep.subr.bf16.mxu0 %v1365
    %1447 = vmatpush1.bf16.msra.mxu0 %v1364
    %1448 = vmatprep.subr.bf16.mxu0 %v1357
    %1449 = vmatpush1.bf16.msra.mxu0 %v1356
    %1450 = vmatprep.subr.bf16.mxu0 %v1349
    %1451 = vmatpush1.bf16.msra.mxu0 %v1348
    %1452 = vmatprep.subr.bf16.mxu0 %v1341
    %1453 = vmatpush1.bf16.msra.mxu0 %v1340
    %1454 = vmatprep.subr.bf16.mxu0 %v1333
    %1455 = vmatpush1.bf16.msra.mxu0 %v1332
    %1456 = vmatprep.subr.bf16.mxu0 %v1325
    %1457 = vmatpush1.bf16.msra.mxu0 %v1324
    %1458 = vmatprep.subr.bf16.mxu0 %v1317
    %1459 = vmatpush1.bf16.msra.mxu0 %v1316
    %1460 = vmatprep.subr.bf16.mxu0 0
    %1461 = vmatpush2.bf16.msra.mxu0 0
    %1462 = vmatprep.subr.bf16.mxu0 0
    %1463 = vmatpush2.bf16.msra.mxu0 0
    %1464 = vmatprep.subr.bf16.mxu0 0
    %1465 = vmatpush2.bf16.msra.mxu0 0
    %1466 = vmatprep.subr.bf16.mxu0 0
    %1467 = vmatpush2.bf16.msra.mxu0 0
    %1468 = vmatprep.subr.bf16.mxu0 0
    %1469 = vmatpush2.bf16.msra.mxu0 0
    %1470 = vmatprep.subr.bf16.mxu0 0
    %1471 = vmatpush2.bf16.msra.mxu0 0
    %1472 = vmatprep.subr.bf16.mxu0 0
    %1473 = vmatpush2.bf16.msra.mxu0 0
    %1474 = vmatprep.subr.bf16.mxu0 0
    %1475 = vmatpush2.bf16.msra.mxu0 0
    %1476 = vmatprep.mubr.bf16.mxu0 0
    %1477 = vmatmul.mubr.bf16.gmra.mxu0 %v1017
    %v1478 = vpop.f32.mrf.mxu0
    %v1479 = vadd.f32 %v1087, %v1478
    %v1480 = vpop.f32.mrf.mxu0
    %v1481 = vadd.f32 %v1091, %v1480
    %v1482 = vpop.f32.mrf.mxu0
    %v1483 = vpop.f32.mrf.mxu0
    %1484 = vdwg.mxu0
    %1485 = vmatprep.subr.bf16.mxu0 %v1375
    %1486 = vmatpush1.bf16.msra.mxu0 %v1374
    %1487 = vmatprep.subr.bf16.mxu0 %v1367
    %1488 = vmatpush1.bf16.msra.mxu0 %v1366
    %1489 = vmatprep.subr.bf16.mxu0 %v1359
    %1490 = vmatpush1.bf16.msra.mxu0 %v1358
    %1491 = vmatprep.subr.bf16.mxu0 %v1351
    %1492 = vmatpush1.bf16.msra.mxu0 %v1350
    %1493 = vmatprep.subr.bf16.mxu0 %v1343
    %1494 = vmatpush1.bf16.msra.mxu0 %v1342
    %1495 = vmatprep.subr.bf16.mxu0 %v1335
    %1496 = vmatpush1.bf16.msra.mxu0 %v1334
    %1497 = vmatprep.subr.bf16.mxu0 %v1327
    %1498 = vmatpush1.bf16.msra.mxu0 %v1326
    %1499 = vmatprep.subr.bf16.mxu0 %v1319
    %1500 = vmatpush1.bf16.msra.mxu0 %v1318
    %1501 = vmatprep.subr.bf16.mxu0 0
    %1502 = vmatpush2.bf16.msra.mxu0 0
    %1503 = vmatprep.subr.bf16.mxu0 0
    %1504 = vmatpush2.bf16.msra.mxu0 0
    %1505 = vmatprep.subr.bf16.mxu0 0
    %1506 = vmatpush2.bf16.msra.mxu0 0
    %1507 = vmatprep.subr.bf16.mxu0 0
    %1508 = vmatpush2.bf16.msra.mxu0 0
    %1509 = vmatprep.subr.bf16.mxu0 0
    %1510 = vmatpush2.bf16.msra.mxu0 0
    %1511 = vmatprep.subr.bf16.mxu0 0
    %1512 = vmatpush2.bf16.msra.mxu0 0
    %1513 = vmatprep.subr.bf16.mxu0 0
    %1514 = vmatpush2.bf16.msra.mxu0 0
    %1515 = vmatprep.subr.bf16.mxu0 0
    %1516 = vmatpush2.bf16.msra.mxu0 0
    %1517 = vmatprep.mubr.bf16.mxu0 0
    %1518 = vmatmul.mubr.bf16.gmra.mxu0 %v1017
    %v1519 = vpop.f32.mrf.mxu0
    %v1520 = vadd.f32 %v1095, %v1519
    %v1521 = vpop.f32.mrf.mxu0
    %v1522 = vadd.f32 %v1099, %v1521
    %v1523 = vpop.f32.mrf.mxu0
    %v1524 = vpop.f32.mrf.mxu0
    %1525 = vdwg.mxu0
    %1526 = vmatprep.subr.bf16.mxu0 %v1377
    %1527 = vmatpush1.bf16.msra.mxu0 %v1376
    %1528 = vmatprep.subr.bf16.mxu0 %v1369
    %1529 = vmatpush1.bf16.msra.mxu0 %v1368
    %1530 = vmatprep.subr.bf16.mxu0 %v1361
    %1531 = vmatpush1.bf16.msra.mxu0 %v1360
    %1532 = vmatprep.subr.bf16.mxu0 %v1353
    %1533 = vmatpush1.bf16.msra.mxu0 %v1352
    %1534 = vmatprep.subr.bf16.mxu0 %v1345
    %1535 = vmatpush1.bf16.msra.mxu0 %v1344
    %1536 = vmatprep.subr.bf16.mxu0 %v1337
    %1537 = vmatpush1.bf16.msra.mxu0 %v1336
    %1538 = vmatprep.subr.bf16.mxu0 %v1329
    %1539 = vmatpush1.bf16.msra.mxu0 %v1328
    %1540 = vmatprep.subr.bf16.mxu0 %v1321
    %1541 = vmatpush1.bf16.msra.mxu0 %v1320
    %1542 = vmatprep.subr.bf16.mxu0 0
    %1543 = vmatpush2.bf16.msra.mxu0 0
    %1544 = vmatprep.subr.bf16.mxu0 0
    %1545 = vmatpush2.bf16.msra.mxu0 0
    %1546 = vmatprep.subr.bf16.mxu0 0
    %1547 = vmatpush2.bf16.msra.mxu0 0
    %1548 = vmatprep.subr.bf16.mxu0 0
    %1549 = vmatpush2.bf16.msra.mxu0 0
    %1550 = vmatprep.subr.bf16.mxu0 0
    %1551 = vmatpush2.bf16.msra.mxu0 0
    %1552 = vmatprep.subr.bf16.mxu0 0
    %1553 = vmatpush2.bf16.msra.mxu0 0
    %1554 = vmatprep.subr.bf16.mxu0 0
    %1555 = vmatpush2.bf16.msra.mxu0 0
    %1556 = vmatprep.subr.bf16.mxu0 0
    %1557 = vmatpush2.bf16.msra.mxu0 0
    %1558 = vmatprep.mubr.bf16.mxu0 0
    %1559 = vmatmul.mubr.bf16.gmra.mxu0 %v1017
    %v1560 = vpop.f32.mrf.mxu0
    %v1561 = vadd.f32 %v1103, %v1560
    %v1562 = vpop.f32.mrf.mxu0
    %v1563 = vadd.f32 %v1107, %v1562
    %v1564 = vpop.f32.mrf.mxu0
    %v1565 = vpop.f32.mrf.mxu0
    %1566 = vdwg.mxu0
    %1567 = vmatprep.subr.bf16.mxu0 %v1379
    %1568 = vmatpush1.bf16.msra.mxu0 %v1378
    %1569 = vmatprep.subr.bf16.mxu0 %v1371
    %1570 = vmatpush1.bf16.msra.mxu0 %v1370
    %1571 = vmatprep.subr.bf16.mxu0 %v1363
    %1572 = vmatpush1.bf16.msra.mxu0 %v1362
    %1573 = vmatprep.subr.bf16.mxu0 %v1355
    %1574 = vmatpush1.bf16.msra.mxu0 %v1354
    %1575 = vmatprep.subr.bf16.mxu0 %v1347
    %1576 = vmatpush1.bf16.msra.mxu0 %v1346
    %1577 = vmatprep.subr.bf16.mxu0 %v1339
    %1578 = vmatpush1.bf16.msra.mxu0 %v1338
    %1579 = vmatprep.subr.bf16.mxu0 %v1331
    %1580 = vmatpush1.bf16.msra.mxu0 %v1330
    %1581 = vmatprep.subr.bf16.mxu0 %v1323
    %1582 = vmatpush1.bf16.msra.mxu0 %v1322
    %1583 = vmatprep.subr.bf16.mxu0 0
    %1584 = vmatpush2.bf16.msra.mxu0 0
    %1585 = vmatprep.subr.bf16.mxu0 0
    %1586 = vmatpush2.bf16.msra.mxu0 0
    %1587 = vmatprep.subr.bf16.mxu0 0
    %1588 = vmatpush2.bf16.msra.mxu0 0
    %1589 = vmatprep.subr.bf16.mxu0 0
    %1590 = vmatpush2.bf16.msra.mxu0 0
    %1591 = vmatprep.subr.bf16.mxu0 0
    %1592 = vmatpush2.bf16.msra.mxu0 0
    %1593 = vmatprep.subr.bf16.mxu0 0
    %1594 = vmatpush2.bf16.msra.mxu0 0
    %1595 = vmatprep.subr.bf16.mxu0 0
    %1596 = vmatpush2.bf16.msra.mxu0 0
    %1597 = vmatprep.subr.bf16.mxu0 0
    %1598 = vmatpush2.bf16.msra.mxu0 0
    %1599 = vmatprep.mubr.bf16.mxu0 0
    %1600 = vmatmul.mubr.bf16.gmra.mxu0 %v1017
    %v1601 = vpop.f32.mrf.mxu0
    %v1602 = vadd.f32 %v1111, %v1601
    %v1603 = vpop.f32.mrf.mxu0
    %v1604 = vadd.f32 %v1115, %v1603
    %v1605 = vpop.f32.mrf.mxu0
    %v1606 = vpop.f32.mrf.mxu0
    %1607 = vdwg.mxu0
    %1608 = vst [vmem:[%s6] sm:$0xff] %v1479
    %1609 = vst [vmem:[%s6 + $0x8] sm:$0xff] %v1481
    %1610 = vst [vmem:[%s6 + $0x10] sm:$0xff] %v1520
    %1611 = vst [vmem:[%s6 + $0x18] sm:$0xff] %v1522
    %1612 = vst [vmem:[%s6 + $0x20] sm:$0xff] %v1561
    %1613 = vst [vmem:[%s6 + $0x28] sm:$0xff] %v1563
    %1614 = vst [vmem:[%s6 + $0x30] sm:$0xff] %v1602
    %1615 = vst [vmem:[%s6 + $0x38] sm:$0xff] %v1604
    %1616 = vst [vmem:[%s7] sm:$0xff] %v1005
    %1617 = vst [vmem:[%s8] sm:$0xff] %v1007
    // Predicated region
    $region34: #{vae_mlp_mri_forward.7} parent=1 // pred_check
      _
    $region35: #{vae_mlp_mri_forward.7} parent=1 // pred_check_branch
      %1619 = sbr.rel (0) target = $region37
    $region36: #{vae_mlp_mri_forward.7} parent=1 // pred_region
      _
    $region37: #{vae_mlp_mri_forward.7} parent=1 // pred_fallthru
      _
    // Predicated region
    $region38: #{vae_mlp_mri_forward.7} parent=1 // pred_check
      _
    $region39: #{vae_mlp_mri_forward.7} parent=1 // pred_check_branch
      %1621 = sbr.rel (0) target = $region41
    $region40: #{vae_mlp_mri_forward.7} parent=1 // pred_region
      _
    $region41: #{vae_mlp_mri_forward.7} parent=1 // pred_fallthru
      _
    // Predicated region
    $region42: #{vae_mlp_mri_forward.7} parent=1 // pred_check
      _
    $region43: #{vae_mlp_mri_forward.7} parent=1 // pred_check_branch
      %1623 = sbr.rel (0) target = $region45
    $region44: #{vae_mlp_mri_forward.7} parent=1 // pred_region
      _
    $region45: #{vae_mlp_mri_forward.7} parent=1 // pred_fallthru
      _
    // Predicated region
    $region46: #{vae_mlp_mri_forward.7} parent=1 // pred_check
      _
    $region47: #{vae_mlp_mri_forward.7} parent=1 // pred_check_branch
      %1625 = sbr.rel (0) target = $region49
    $region48: #{vae_mlp_mri_forward.7} parent=1 // pred_region
      _
    $region49: #{vae_mlp_mri_forward.7} parent=1 // pred_fallthru
      _
    // Predicated region
    $region50: #{vae_mlp_mri_forward.7} parent=1 // pred_check
      _
    $region51: #{vae_mlp_mri_forward.7} parent=1 // pred_check_branch
      %1627 = sbr.rel (0) target = $region53
    $region52: #{vae_mlp_mri_forward.7} parent=1 // pred_region
      _
    $region53: #{vae_mlp_mri_forward.7} parent=1 // pred_fallthru
      _
    // Predicated region
    $region54: #{vae_mlp_mri_forward.7} parent=1 // pred_check
      _
    $region55: #{vae_mlp_mri_forward.7} parent=1 // pred_check_branch
      %1629 = sbr.rel (0) target = $region57
    $region56: #{vae_mlp_mri_forward.7} parent=1 // pred_region
      _
    $region57: #{vae_mlp_mri_forward.7} parent=1 // pred_fallthru
      _
    %1630 = vsyncpa [#allocation3], 1
    %1631 = vsyncpa [#allocation5], 1

// kernel: vae_mlp_mri_forward.9
$region0: #{vae_mlp_mri_forward.9}
  #allocation0 [shape = 'u32[]', space=smem, size = 0x4, offset = 0x4, fixed_abs, tag = 'smem constant byte address 0x4 - core index']
  #allocation1 [shape = 'u32[144,128]{1,0:T(1,128)}', space=vmem, size = 0x12000, scoped, tag = 'internal scratch']
  %s0 = inlined_call_operand.vmem [shape: f32[8,1024], index: 0, kind: input, shape index: {}]
  %s1 = inlined_call_operand.vmem [shape: bf16[1024,256], index: 1, kind: input, shape index: {}]
  %s2 = inlined_call_operand.vmem [shape: f32[1,256], index: 2, kind: input, shape index: {}]
  %s3 = inlined_call_operand.vmem [shape: f32[8,256], index: 3, kind: output, shape index: {}]
  %s4 = sld [smem:[#allocation0]]
  $region22: #{vae_mlp_mri_forward.9} parent=0
    _
  %s6 = ssub.s32 1, %s4
  %s7 = scalar_select 0, %s6, %s4
  // Predicated region
  $region2: #{vae_mlp_mri_forward.9} parent=0 // pred_check
    _
  $region3: #{vae_mlp_mri_forward.9} parent=0 // pred_check_branch
    %9 = sbr.rel (0) target = $region5
  $region4: #{vae_mlp_mri_forward.9} parent=0 // pred_region
    _
  $region5: #{vae_mlp_mri_forward.9} parent=0 // pred_fallthru
    _
  // Predicated region
  $region6: #{vae_mlp_mri_forward.9} parent=0 // pred_check
    _
  $region7: #{vae_mlp_mri_forward.9} parent=0 // pred_check_branch
    %11 = sbr.rel (0) target = $region9
  $region8: #{vae_mlp_mri_forward.9} parent=0 // pred_region
    _
  $region9: #{vae_mlp_mri_forward.9} parent=0 // pred_fallthru
    _
  // Predicated region
  $region10: #{vae_mlp_mri_forward.9} parent=0 // pred_check
    _
  $region11: #{vae_mlp_mri_forward.9} parent=0 // pred_check_branch
    %13 = sbr.rel (0) target = $region13
  $region12: #{vae_mlp_mri_forward.9} parent=0 // pred_region
    _
  $region13: #{vae_mlp_mri_forward.9} parent=0 // pred_fallthru
    _
  %v14 = vld [vmem:[%s0] sm:$0xff]
  %v15 = vld [vmem:[%s0 + $0x8] sm:$0xff]
  %v16 = vld [vmem:[%s0 + $0x10] sm:$0xff]
  %v17 = vld [vmem:[%s0 + $0x18] sm:$0xff]
  %v18 = vld [vmem:[%s0 + $0x20] sm:$0xff]
  %v19 = vld [vmem:[%s0 + $0x28] sm:$0xff]
  %v20 = vld [vmem:[%s0 + $0x30] sm:$0xff]
  %v21 = vld [vmem:[%s0 + $0x38] sm:$0xff]
  %v22 = vpack.c.bf16 %v14, %v14
  %v23 = vpack.c.bf16 %v15, %v15
  %v24 = vpack.c.bf16 %v16, %v16
  %v25 = vpack.c.bf16 %v17, %v17
  %v26 = vpack.c.bf16 %v18, %v18
  %v27 = vpack.c.bf16 %v19, %v19
  %v28 = vpack.c.bf16 %v20, %v20
  %v29 = vpack.c.bf16 %v21, %v21
  %v30 = vld [vmem:[%s1] sm:$0xff]
  %v31 = vld [vmem:[%s1 + $0x8] sm:$0xff]
  %v32 = vld [vmem:[%s1 + $0x10] sm:$0xff]
  %v33 = vld [vmem:[%s1 + $0x18] sm:$0xff]
  %v34 = vld [vmem:[%s1 + $0x20] sm:$0xff]
  %v35 = vld [vmem:[%s1 + $0x28] sm:$0xff]
  %v36 = vld [vmem:[%s1 + $0x30] sm:$0xff]
  %v37 = vld [vmem:[%s1 + $0x38] sm:$0xff]
  %v38 = vld [vmem:[%s1 + $0x40] sm:$0xff]
  %v39 = vld [vmem:[%s1 + $0x48] sm:$0xff]
  %v40 = vld [vmem:[%s1 + $0x50] sm:$0xff]
  %v41 = vld [vmem:[%s1 + $0x58] sm:$0xff]
  %v42 = vld [vmem:[%s1 + $0x60] sm:$0xff]
  %v43 = vld [vmem:[%s1 + $0x68] sm:$0xff]
  %v44 = vld [vmem:[%s1 + $0x70] sm:$0xff]
  %v45 = vld [vmem:[%s1 + $0x78] sm:$0xff]
  %v46 = vld [vmem:[%s1 + $0x80] sm:$0xff]
  %v47 = vld [vmem:[%s1 + $0x88] sm:$0xff]
  %v48 = vld [vmem:[%s1 + $0x90] sm:$0xff]
  %v49 = vld [vmem:[%s1 + $0x98] sm:$0xff]
  %v50 = vld [vmem:[%s1 + $0xa0] sm:$0xff]
  %v51 = vld [vmem:[%s1 + $0xa8] sm:$0xff]
  %v52 = vld [vmem:[%s1 + $0xb0] sm:$0xff]
  %v53 = vld [vmem:[%s1 + $0xb8] sm:$0xff]
  %v54 = vld [vmem:[%s1 + $0xc0] sm:$0xff]
  %v55 = vld [vmem:[%s1 + $0xc8] sm:$0xff]
  %v56 = vld [vmem:[%s1 + $0xd0] sm:$0xff]
  %v57 = vld [vmem:[%s1 + $0xd8] sm:$0xff]
  %v58 = vld [vmem:[%s1 + $0xe0] sm:$0xff]
  %v59 = vld [vmem:[%s1 + $0xe8] sm:$0xff]
  %v60 = vld [vmem:[%s1 + $0xf0] sm:$0xff]
  %v61 = vld [vmem:[%s1 + $0xf8] sm:$0xff]
  %v62 = vld [vmem:[%s1 + $0x100] sm:$0xff]
  %v63 = vld [vmem:[%s1 + $0x108] sm:$0xff]
  %v64 = vld [vmem:[%s1 + $0x110] sm:$0xff]
  %v65 = vld [vmem:[%s1 + $0x118] sm:$0xff]
  %v66 = vld [vmem:[%s1 + $0x120] sm:$0xff]
  %v67 = vld [vmem:[%s1 + $0x128] sm:$0xff]
  %v68 = vld [vmem:[%s1 + $0x130] sm:$0xff]
  %v69 = vld [vmem:[%s1 + $0x138] sm:$0xff]
  %v70 = vld [vmem:[%s1 + $0x140] sm:$0xff]
  %v71 = vld [vmem:[%s1 + $0x148] sm:$0xff]
  %v72 = vld [vmem:[%s1 + $0x150] sm:$0xff]
  %v73 = vld [vmem:[%s1 + $0x158] sm:$0xff]
  %v74 = vld [vmem:[%s1 + $0x160] sm:$0xff]
  %v75 = vld [vmem:[%s1 + $0x168] sm:$0xff]
  %v76 = vld [vmem:[%s1 + $0x170] sm:$0xff]
  %v77 = vld [vmem:[%s1 + $0x178] sm:$0xff]
  %v78 = vld [vmem:[%s1 + $0x180] sm:$0xff]
  %v79 = vld [vmem:[%s1 + $0x188] sm:$0xff]
  %v80 = vld [vmem:[%s1 + $0x190] sm:$0xff]
  %v81 = vld [vmem:[%s1 + $0x198] sm:$0xff]
  %v82 = vld [vmem:[%s1 + $0x1a0] sm:$0xff]
  %v83 = vld [vmem:[%s1 + $0x1a8] sm:$0xff]
  %v84 = vld [vmem:[%s1 + $0x1b0] sm:$0xff]
  %v85 = vld [vmem:[%s1 + $0x1b8] sm:$0xff]
  %v86 = vld [vmem:[%s1 + $0x1c0] sm:$0xff]
  %v87 = vld [vmem:[%s1 + $0x1c8] sm:$0xff]
  %v88 = vld [vmem:[%s1 + $0x1d0] sm:$0xff]
  %v89 = vld [vmem:[%s1 + $0x1d8] sm:$0xff]
  %v90 = vld [vmem:[%s1 + $0x1e0] sm:$0xff]
  %v91 = vld [vmem:[%s1 + $0x1e8] sm:$0xff]
  %v92 = vld [vmem:[%s1 + $0x1f0] sm:$0xff]
  %v93 = vld [vmem:[%s1 + $0x1f8] sm:$0xff]
  %v94 = vld [vmem:[%s1 + $0x200] sm:$0xff]
  %v95 = vld [vmem:[%s1 + $0x208] sm:$0xff]
  %v96 = vld [vmem:[%s1 + $0x210] sm:$0xff]
  %v97 = vld [vmem:[%s1 + $0x218] sm:$0xff]
  %v98 = vld [vmem:[%s1 + $0x220] sm:$0xff]
  %v99 = vld [vmem:[%s1 + $0x228] sm:$0xff]
  %v100 = vld [vmem:[%s1 + $0x230] sm:$0xff]
  %v101 = vld [vmem:[%s1 + $0x238] sm:$0xff]
  %v102 = vld [vmem:[%s1 + $0x240] sm:$0xff]
  %v103 = vld [vmem:[%s1 + $0x248] sm:$0xff]
  %v104 = vld [vmem:[%s1 + $0x250] sm:$0xff]
  %v105 = vld [vmem:[%s1 + $0x258] sm:$0xff]
  %v106 = vld [vmem:[%s1 + $0x260] sm:$0xff]
  %v107 = vld [vmem:[%s1 + $0x268] sm:$0xff]
  %v108 = vld [vmem:[%s1 + $0x270] sm:$0xff]
  %v109 = vld [vmem:[%s1 + $0x278] sm:$0xff]
  %v110 = vld [vmem:[%s1 + $0x280] sm:$0xff]
  %v111 = vld [vmem:[%s1 + $0x288] sm:$0xff]
  %v112 = vld [vmem:[%s1 + $0x290] sm:$0xff]
  %v113 = vld [vmem:[%s1 + $0x298] sm:$0xff]
  %v114 = vld [vmem:[%s1 + $0x2a0] sm:$0xff]
  %v115 = vld [vmem:[%s1 + $0x2a8] sm:$0xff]
  %v116 = vld [vmem:[%s1 + $0x2b0] sm:$0xff]
  %v117 = vld [vmem:[%s1 + $0x2b8] sm:$0xff]
  %v118 = vld [vmem:[%s1 + $0x2c0] sm:$0xff]
  %v119 = vld [vmem:[%s1 + $0x2c8] sm:$0xff]
  %v120 = vld [vmem:[%s1 + $0x2d0] sm:$0xff]
  %v121 = vld [vmem:[%s1 + $0x2d8] sm:$0xff]
  %v122 = vld [vmem:[%s1 + $0x2e0] sm:$0xff]
  %v123 = vld [vmem:[%s1 + $0x2e8] sm:$0xff]
  %v124 = vld [vmem:[%s1 + $0x2f0] sm:$0xff]
  %v125 = vld [vmem:[%s1 + $0x2f8] sm:$0xff]
  %v126 = vld [vmem:[%s1 + $0x300] sm:$0xff]
  %v127 = vld [vmem:[%s1 + $0x308] sm:$0xff]
  %v128 = vld [vmem:[%s1 + $0x310] sm:$0xff]
  %v129 = vld [vmem:[%s1 + $0x318] sm:$0xff]
  %v130 = vld [vmem:[%s1 + $0x320] sm:$0xff]
  %v131 = vld [vmem:[%s1 + $0x328] sm:$0xff]
  %v132 = vld [vmem:[%s1 + $0x330] sm:$0xff]
  %v133 = vld [vmem:[%s1 + $0x338] sm:$0xff]
  %v134 = vld [vmem:[%s1 + $0x340] sm:$0xff]
  %v135 = vld [vmem:[%s1 + $0x348] sm:$0xff]
  %v136 = vld [vmem:[%s1 + $0x350] sm:$0xff]
  %v137 = vld [vmem:[%s1 + $0x358] sm:$0xff]
  %v138 = vld [vmem:[%s1 + $0x360] sm:$0xff]
  %v139 = vld [vmem:[%s1 + $0x368] sm:$0xff]
  %v140 = vld [vmem:[%s1 + $0x370] sm:$0xff]
  %v141 = vld [vmem:[%s1 + $0x378] sm:$0xff]
  %v142 = vld [vmem:[%s1 + $0x380] sm:$0xff]
  %v143 = vld [vmem:[%s1 + $0x388] sm:$0xff]
  %v144 = vld [vmem:[%s1 + $0x390] sm:$0xff]
  %v145 = vld [vmem:[%s1 + $0x398] sm:$0xff]
  %v146 = vld [vmem:[%s1 + $0x3a0] sm:$0xff]
  %v147 = vld [vmem:[%s1 + $0x3a8] sm:$0xff]
  %v148 = vld [vmem:[%s1 + $0x3b0] sm:$0xff]
  %v149 = vld [vmem:[%s1 + $0x3b8] sm:$0xff]
  %v150 = vld [vmem:[%s1 + $0x3c0] sm:$0xff]
  %v151 = vld [vmem:[%s1 + $0x3c8] sm:$0xff]
  %v152 = vld [vmem:[%s1 + $0x3d0] sm:$0xff]
  %v153 = vld [vmem:[%s1 + $0x3d8] sm:$0xff]
  %v154 = vld [vmem:[%s1 + $0x3e0] sm:$0xff]
  %v155 = vld [vmem:[%s1 + $0x3e8] sm:$0xff]
  %v156 = vld [vmem:[%s1 + $0x3f0] sm:$0xff]
  %v157 = vld [vmem:[%s1 + $0x3f8] sm:$0xff]
  %v158 = vld [vmem:[%s2] sm:$0x3]
  %v160 = vlaneseq
  %v161 = vshrl.u32 %v160, 7
  %v162 = vsub.s32 0, %v161
  %v163 = vrot.slane %v158, %v162
  %v164 = vlaneseq
  %v165 = vshrl.u32 %v164, 7
  %v166 = vsub.s32 1, %v165
  %v167 = vrot.slane %v158, %v166
  %v298 = vunpack.c.l.b16 %v30
  %v299 = vunpack.c.h.b16 %v30
  %v300 = vunpack.c.l.b16 %v31
  %v301 = vunpack.c.h.b16 %v31
  %v302 = vunpack.c.l.b16 %v32
  %v303 = vunpack.c.h.b16 %v32
  %v304 = vunpack.c.l.b16 %v33
  %v305 = vunpack.c.h.b16 %v33
  %v306 = vunpack.c.l.b16 %v34
  %v307 = vunpack.c.h.b16 %v34
  %v308 = vunpack.c.l.b16 %v35
  %v309 = vunpack.c.h.b16 %v35
  %v310 = vunpack.c.l.b16 %v36
  %v311 = vunpack.c.h.b16 %v36
  %v312 = vunpack.c.l.b16 %v37
  %v313 = vunpack.c.h.b16 %v37
  %v314 = vunpack.c.l.b16 %v38
  %v315 = vunpack.c.h.b16 %v38
  %v316 = vunpack.c.l.b16 %v39
  %v317 = vunpack.c.h.b16 %v39
  %v318 = vunpack.c.l.b16 %v40
  %v319 = vunpack.c.h.b16 %v40
  %v320 = vunpack.c.l.b16 %v41
  %v321 = vunpack.c.h.b16 %v41
  %v322 = vunpack.c.l.b16 %v42
  %v323 = vunpack.c.h.b16 %v42
  %v324 = vunpack.c.l.b16 %v43
  %v325 = vunpack.c.h.b16 %v43
  %v326 = vunpack.c.l.b16 %v44
  %v327 = vunpack.c.h.b16 %v44
  %v328 = vunpack.c.l.b16 %v45
  %v329 = vunpack.c.h.b16 %v45
  %v330 = vunpack.c.l.b16 %v46
  %v331 = vunpack.c.h.b16 %v46
  %v332 = vunpack.c.l.b16 %v47
  %v333 = vunpack.c.h.b16 %v47
  %v334 = vunpack.c.l.b16 %v48
  %v335 = vunpack.c.h.b16 %v48
  %v336 = vunpack.c.l.b16 %v49
  %v337 = vunpack.c.h.b16 %v49
  %v338 = vunpack.c.l.b16 %v50
  %v339 = vunpack.c.h.b16 %v50
  %v340 = vunpack.c.l.b16 %v51
  %v341 = vunpack.c.h.b16 %v51
  %v342 = vunpack.c.l.b16 %v52
  %v343 = vunpack.c.h.b16 %v52
  %v344 = vunpack.c.l.b16 %v53
  %v345 = vunpack.c.h.b16 %v53
  %v346 = vunpack.c.l.b16 %v54
  %v347 = vunpack.c.h.b16 %v54
  %v348 = vunpack.c.l.b16 %v55
  %v349 = vunpack.c.h.b16 %v55
  %v350 = vunpack.c.l.b16 %v56
  %v351 = vunpack.c.h.b16 %v56
  %v352 = vunpack.c.l.b16 %v57
  %v353 = vunpack.c.h.b16 %v57
  %v354 = vunpack.c.l.b16 %v58
  %v355 = vunpack.c.h.b16 %v58
  %v356 = vunpack.c.l.b16 %v59
  %v357 = vunpack.c.h.b16 %v59
  %v358 = vunpack.c.l.b16 %v60
  %v359 = vunpack.c.h.b16 %v60
  %v360 = vunpack.c.l.b16 %v61
  %v361 = vunpack.c.h.b16 %v61
  %v362 = vunpack.c.l.b16 %v62
  %v363 = vunpack.c.h.b16 %v62
  %v364 = vunpack.c.l.b16 %v63
  %v365 = vunpack.c.h.b16 %v63
  %v366 = vunpack.c.l.b16 %v64
  %v367 = vunpack.c.h.b16 %v64
  %v368 = vunpack.c.l.b16 %v65
  %v369 = vunpack.c.h.b16 %v65
  %v370 = vunpack.c.l.b16 %v66
  %v371 = vunpack.c.h.b16 %v66
  %v372 = vunpack.c.l.b16 %v67
  %v373 = vunpack.c.h.b16 %v67
  %v374 = vunpack.c.l.b16 %v68
  %v375 = vunpack.c.h.b16 %v68
  %v376 = vunpack.c.l.b16 %v69
  %v377 = vunpack.c.h.b16 %v69
  %v378 = vunpack.c.l.b16 %v70
  %v379 = vunpack.c.h.b16 %v70
  %v380 = vunpack.c.l.b16 %v71
  %v381 = vunpack.c.h.b16 %v71
  %v382 = vunpack.c.l.b16 %v72
  %v383 = vunpack.c.h.b16 %v72
  %v384 = vunpack.c.l.b16 %v73
  %v385 = vunpack.c.h.b16 %v73
  %v386 = vunpack.c.l.b16 %v74
  %v387 = vunpack.c.h.b16 %v74
  %v388 = vunpack.c.l.b16 %v75
  %v389 = vunpack.c.h.b16 %v75
  %v390 = vunpack.c.l.b16 %v76
  %v391 = vunpack.c.h.b16 %v76
  %v392 = vunpack.c.l.b16 %v77
  %v393 = vunpack.c.h.b16 %v77
  %v394 = vunpack.c.l.b16 %v78
  %v395 = vunpack.c.h.b16 %v78
  %v396 = vunpack.c.l.b16 %v79
  %v397 = vunpack.c.h.b16 %v79
  %v398 = vunpack.c.l.b16 %v80
  %v399 = vunpack.c.h.b16 %v80
  %v400 = vunpack.c.l.b16 %v81
  %v401 = vunpack.c.h.b16 %v81
  %v402 = vunpack.c.l.b16 %v82
  %v403 = vunpack.c.h.b16 %v82
  %v404 = vunpack.c.l.b16 %v83
  %v405 = vunpack.c.h.b16 %v83
  %v406 = vunpack.c.l.b16 %v84
  %v407 = vunpack.c.h.b16 %v84
  %v408 = vunpack.c.l.b16 %v85
  %v409 = vunpack.c.h.b16 %v85
  %v410 = vunpack.c.l.b16 %v86
  %v411 = vunpack.c.h.b16 %v86
  %v412 = vunpack.c.l.b16 %v87
  %v413 = vunpack.c.h.b16 %v87
  %v414 = vunpack.c.l.b16 %v88
  %v415 = vunpack.c.h.b16 %v88
  %v416 = vunpack.c.l.b16 %v89
  %v417 = vunpack.c.h.b16 %v89
  %v418 = vunpack.c.l.b16 %v90
  %v419 = vunpack.c.h.b16 %v90
  %v420 = vunpack.c.l.b16 %v91
  %v421 = vunpack.c.h.b16 %v91
  %v422 = vunpack.c.l.b16 %v92
  %v423 = vunpack.c.h.b16 %v92
  %v424 = vunpack.c.l.b16 %v93
  %v425 = vunpack.c.h.b16 %v93
  %v426 = vunpack.c.l.b16 %v94
  %v427 = vunpack.c.h.b16 %v94
  %v428 = vunpack.c.l.b16 %v95
  %v429 = vunpack.c.h.b16 %v95
  %v430 = vunpack.c.l.b16 %v96
  %v431 = vunpack.c.h.b16 %v96
  %v432 = vunpack.c.l.b16 %v97
  %v433 = vunpack.c.h.b16 %v97
  %v434 = vunpack.c.l.b16 %v98
  %v435 = vunpack.c.h.b16 %v98
  %v436 = vunpack.c.l.b16 %v99
  %v437 = vunpack.c.h.b16 %v99
  %v438 = vunpack.c.l.b16 %v100
  %v439 = vunpack.c.h.b16 %v100
  %v440 = vunpack.c.l.b16 %v101
  %v441 = vunpack.c.h.b16 %v101
  %v442 = vunpack.c.l.b16 %v102
  %v443 = vunpack.c.h.b16 %v102
  %v444 = vunpack.c.l.b16 %v103
  %v445 = vunpack.c.h.b16 %v103
  %v446 = vunpack.c.l.b16 %v104
  %v447 = vunpack.c.h.b16 %v104
  %v448 = vunpack.c.l.b16 %v105
  %v449 = vunpack.c.h.b16 %v105
  %v450 = vunpack.c.l.b16 %v106
  %v451 = vunpack.c.h.b16 %v106
  %v452 = vunpack.c.l.b16 %v107
  %v453 = vunpack.c.h.b16 %v107
  %v454 = vunpack.c.l.b16 %v108
  %v455 = vunpack.c.h.b16 %v108
  %v456 = vunpack.c.l.b16 %v109
  %v457 = vunpack.c.h.b16 %v109
  %v458 = vunpack.c.l.b16 %v110
  %v459 = vunpack.c.h.b16 %v110
  %v460 = vunpack.c.l.b16 %v111
  %v461 = vunpack.c.h.b16 %v111
  %v462 = vunpack.c.l.b16 %v112
  %v463 = vunpack.c.h.b16 %v112
  %v464 = vunpack.c.l.b16 %v113
  %v465 = vunpack.c.h.b16 %v113
  %v466 = vunpack.c.l.b16 %v114
  %v467 = vunpack.c.h.b16 %v114
  %v468 = vunpack.c.l.b16 %v115
  %v469 = vunpack.c.h.b16 %v115
  %v470 = vunpack.c.l.b16 %v116
  %v471 = vunpack.c.h.b16 %v116
  %v472 = vunpack.c.l.b16 %v117
  %v473 = vunpack.c.h.b16 %v117
  %v474 = vunpack.c.l.b16 %v118
  %v475 = vunpack.c.h.b16 %v118
  %v476 = vunpack.c.l.b16 %v119
  %v477 = vunpack.c.h.b16 %v119
  %v478 = vunpack.c.l.b16 %v120
  %v479 = vunpack.c.h.b16 %v120
  %v480 = vunpack.c.l.b16 %v121
  %v481 = vunpack.c.h.b16 %v121
  %v482 = vunpack.c.l.b16 %v122
  %v483 = vunpack.c.h.b16 %v122
  %v484 = vunpack.c.l.b16 %v123
  %v485 = vunpack.c.h.b16 %v123
  %v486 = vunpack.c.l.b16 %v124
  %v487 = vunpack.c.h.b16 %v124
  %v488 = vunpack.c.l.b16 %v125
  %v489 = vunpack.c.h.b16 %v125
  %v490 = vunpack.c.l.b16 %v126
  %v491 = vunpack.c.h.b16 %v126
  %v492 = vunpack.c.l.b16 %v127
  %v493 = vunpack.c.h.b16 %v127
  %v494 = vunpack.c.l.b16 %v128
  %v495 = vunpack.c.h.b16 %v128
  %v496 = vunpack.c.l.b16 %v129
  %v497 = vunpack.c.h.b16 %v129
  %v498 = vunpack.c.l.b16 %v130
  %v499 = vunpack.c.h.b16 %v130
  %v500 = vunpack.c.l.b16 %v131
  %v501 = vunpack.c.h.b16 %v131
  %v502 = vunpack.c.l.b16 %v132
  %v503 = vunpack.c.h.b16 %v132
  %v504 = vunpack.c.l.b16 %v133
  %v505 = vunpack.c.h.b16 %v133
  %v506 = vunpack.c.l.b16 %v134
  %v507 = vunpack.c.h.b16 %v134
  %v508 = vunpack.c.l.b16 %v135
  %v509 = vunpack.c.h.b16 %v135
  %v510 = vunpack.c.l.b16 %v136
  %v511 = vunpack.c.h.b16 %v136
  %v512 = vunpack.c.l.b16 %v137
  %v513 = vunpack.c.h.b16 %v137
  %v514 = vunpack.c.l.b16 %v138
  %v515 = vunpack.c.h.b16 %v138
  %v516 = vunpack.c.l.b16 %v139
  %v517 = vunpack.c.h.b16 %v139
  %v518 = vunpack.c.l.b16 %v140
  %v519 = vunpack.c.h.b16 %v140
  %v520 = vunpack.c.l.b16 %v141
  %v521 = vunpack.c.h.b16 %v141
  %v522 = vunpack.c.l.b16 %v142
  %v523 = vunpack.c.h.b16 %v142
  %v524 = vunpack.c.l.b16 %v143
  %v525 = vunpack.c.h.b16 %v143
  %v526 = vunpack.c.l.b16 %v144
  %v527 = vunpack.c.h.b16 %v144
  %v528 = vunpack.c.l.b16 %v145
  %v529 = vunpack.c.h.b16 %v145
  %v530 = vunpack.c.l.b16 %v146
  %v531 = vunpack.c.h.b16 %v146
  %v532 = vunpack.c.l.b16 %v147
  %v533 = vunpack.c.h.b16 %v147
  %v534 = vunpack.c.l.b16 %v148
  %v535 = vunpack.c.h.b16 %v148
  %v536 = vunpack.c.l.b16 %v149
  %v537 = vunpack.c.h.b16 %v149
  %v538 = vunpack.c.l.b16 %v150
  %v539 = vunpack.c.h.b16 %v150
  %v540 = vunpack.c.l.b16 %v151
  %v541 = vunpack.c.h.b16 %v151
  %v542 = vunpack.c.l.b16 %v152
  %v543 = vunpack.c.h.b16 %v152
  %v544 = vunpack.c.l.b16 %v153
  %v545 = vunpack.c.h.b16 %v153
  %v546 = vunpack.c.l.b16 %v154
  %v547 = vunpack.c.h.b16 %v154
  %v548 = vunpack.c.l.b16 %v155
  %v549 = vunpack.c.h.b16 %v155
  %v550 = vunpack.c.l.b16 %v156
  %v551 = vunpack.c.h.b16 %v156
  %v552 = vunpack.c.l.b16 %v157
  %v553 = vunpack.c.h.b16 %v157
  %v554 = vpack.c.b16 %v300, %v298
  %v555 = vpack.c.b16 %v301, %v299
  %v556 = vpack.c.b16 %v304, %v302
  %v557 = vpack.c.b16 %v305, %v303
  %v558 = vpack.c.b16 %v308, %v306
  %v559 = vpack.c.b16 %v309, %v307
  %v560 = vpack.c.b16 %v312, %v310
  %v561 = vpack.c.b16 %v313, %v311
  %v562 = vpack.c.b16 %v316, %v314
  %v563 = vpack.c.b16 %v317, %v315
  %v564 = vpack.c.b16 %v320, %v318
  %v565 = vpack.c.b16 %v321, %v319
  %v566 = vpack.c.b16 %v324, %v322
  %v567 = vpack.c.b16 %v325, %v323
  %v568 = vpack.c.b16 %v328, %v326
  %v569 = vpack.c.b16 %v329, %v327
  %v570 = vpack.c.b16 %v332, %v330
  %v571 = vpack.c.b16 %v333, %v331
  %v572 = vpack.c.b16 %v336, %v334
  %v573 = vpack.c.b16 %v337, %v335
  %v574 = vpack.c.b16 %v340, %v338
  %v575 = vpack.c.b16 %v341, %v339
  %v576 = vpack.c.b16 %v344, %v342
  %v577 = vpack.c.b16 %v345, %v343
  %v578 = vpack.c.b16 %v348, %v346
  %v579 = vpack.c.b16 %v349, %v347
  %v580 = vpack.c.b16 %v352, %v350
  %v581 = vpack.c.b16 %v353, %v351
  %v582 = vpack.c.b16 %v356, %v354
  %v583 = vpack.c.b16 %v357, %v355
  %v584 = vpack.c.b16 %v360, %v358
  %v585 = vpack.c.b16 %v361, %v359
  %v586 = vpack.c.b16 %v364, %v362
  %v587 = vpack.c.b16 %v365, %v363
  %v588 = vpack.c.b16 %v368, %v366
  %v589 = vpack.c.b16 %v369, %v367
  %v590 = vpack.c.b16 %v372, %v370
  %v591 = vpack.c.b16 %v373, %v371
  %v592 = vpack.c.b16 %v376, %v374
  %v593 = vpack.c.b16 %v377, %v375
  %v594 = vpack.c.b16 %v380, %v378
  %v595 = vpack.c.b16 %v381, %v379
  %v596 = vpack.c.b16 %v384, %v382
  %v597 = vpack.c.b16 %v385, %v383
  %v598 = vpack.c.b16 %v388, %v386
  %v599 = vpack.c.b16 %v389, %v387
  %v600 = vpack.c.b16 %v392, %v390
  %v601 = vpack.c.b16 %v393, %v391
  %v602 = vpack.c.b16 %v396, %v394
  %v603 = vpack.c.b16 %v397, %v395
  %v604 = vpack.c.b16 %v400, %v398
  %v605 = vpack.c.b16 %v401, %v399
  %v606 = vpack.c.b16 %v404, %v402
  %v607 = vpack.c.b16 %v405, %v403
  %v608 = vpack.c.b16 %v408, %v406
  %v609 = vpack.c.b16 %v409, %v407
  %v610 = vpack.c.b16 %v412, %v410
  %v611 = vpack.c.b16 %v413, %v411
  %v612 = vpack.c.b16 %v416, %v414
  %v613 = vpack.c.b16 %v417, %v415
  %v614 = vpack.c.b16 %v420, %v418
  %v615 = vpack.c.b16 %v421, %v419
  %v616 = vpack.c.b16 %v424, %v422
  %v617 = vpack.c.b16 %v425, %v423
  %v618 = vpack.c.b16 %v428, %v426
  %v619 = vpack.c.b16 %v429, %v427
  %v620 = vpack.c.b16 %v432, %v430
  %v621 = vpack.c.b16 %v433, %v431
  %v622 = vpack.c.b16 %v436, %v434
  %v623 = vpack.c.b16 %v437, %v435
  %v624 = vpack.c.b16 %v440, %v438
  %v625 = vpack.c.b16 %v441, %v439
  %v626 = vpack.c.b16 %v444, %v442
  %v627 = vpack.c.b16 %v445, %v443
  %v628 = vpack.c.b16 %v448, %v446
  %v629 = vpack.c.b16 %v449, %v447
  %v630 = vpack.c.b16 %v452, %v450
  %v631 = vpack.c.b16 %v453, %v451
  %v632 = vpack.c.b16 %v456, %v454
  %v633 = vpack.c.b16 %v457, %v455
  %v634 = vpack.c.b16 %v460, %v458
  %v635 = vpack.c.b16 %v461, %v459
  %v636 = vpack.c.b16 %v464, %v462
  %v637 = vpack.c.b16 %v465, %v463
  %v638 = vpack.c.b16 %v468, %v466
  %v639 = vpack.c.b16 %v469, %v467
  %v640 = vpack.c.b16 %v472, %v470
  %v641 = vpack.c.b16 %v473, %v471
  %v642 = vpack.c.b16 %v476, %v474
  %v643 = vpack.c.b16 %v477, %v475
  %v644 = vpack.c.b16 %v480, %v478
  %v645 = vpack.c.b16 %v481, %v479
  %v646 = vpack.c.b16 %v484, %v482
  %v647 = vpack.c.b16 %v485, %v483
  %v648 = vpack.c.b16 %v488, %v486
  %v649 = vpack.c.b16 %v489, %v487
  %v650 = vpack.c.b16 %v492, %v490
  %v651 = vpack.c.b16 %v493, %v491
  %v652 = vpack.c.b16 %v496, %v494
  %v653 = vpack.c.b16 %v497, %v495
  %v654 = vpack.c.b16 %v500, %v498
  %v655 = vpack.c.b16 %v501, %v499
  %v656 = vpack.c.b16 %v504, %v502
  %v657 = vpack.c.b16 %v505, %v503
  %v658 = vpack.c.b16 %v508, %v506
  %v659 = vpack.c.b16 %v509, %v507
  %v660 = vpack.c.b16 %v512, %v510
  %v661 = vpack.c.b16 %v513, %v511
  %v662 = vpack.c.b16 %v516, %v514
  %v663 = vpack.c.b16 %v517, %v515
  %v664 = vpack.c.b16 %v520, %v518
  %v665 = vpack.c.b16 %v521, %v519
  %v666 = vpack.c.b16 %v524, %v522
  %v667 = vpack.c.b16 %v525, %v523
  %v668 = vpack.c.b16 %v528, %v526
  %v669 = vpack.c.b16 %v529, %v527
  %v670 = vpack.c.b16 %v532, %v530
  %v671 = vpack.c.b16 %v533, %v531
  %v672 = vpack.c.b16 %v536, %v534
  %v673 = vpack.c.b16 %v537, %v535
  %v674 = vpack.c.b16 %v540, %v538
  %v675 = vpack.c.b16 %v541, %v539
  %v676 = vpack.c.b16 %v544, %v542
  %v677 = vpack.c.b16 %v545, %v543
  %v678 = vpack.c.b16 %v548, %v546
  %v679 = vpack.c.b16 %v549, %v547
  %v680 = vpack.c.b16 %v552, %v550
  %v681 = vpack.c.b16 %v553, %v551
  %810 = vmatprep.subr.bf16.mxu0 %v569
  %811 = vmatpush1.bf16.msra.mxu0 %v568
  %812 = vmatprep.subr.bf16.mxu0 %v567
  %813 = vmatpush1.bf16.msra.mxu0 %v566
  %814 = vmatprep.subr.bf16.mxu0 %v565
  %815 = vmatpush1.bf16.msra.mxu0 %v564
  %816 = vmatprep.subr.bf16.mxu0 %v563
  %817 = vmatpush1.bf16.msra.mxu0 %v562
  %818 = vmatprep.subr.bf16.mxu0 %v561
  %819 = vmatpush1.bf16.msra.mxu0 %v560
  %820 = vmatprep.subr.bf16.mxu0 %v559
  %821 = vmatpush1.bf16.msra.mxu0 %v558
  %822 = vmatprep.subr.bf16.mxu0 %v557
  %823 = vmatpush1.bf16.msra.mxu0 %v556
  %824 = vmatprep.subr.bf16.mxu0 %v555
  %825 = vmatpush1.bf16.msra.mxu0 %v554
  %826 = vmatprep.subr.bf16.mxu0 %v585
  %827 = vmatpush2.bf16.msra.mxu0 %v584
  %828 = vmatprep.subr.bf16.mxu0 %v583
  %829 = vmatpush2.bf16.msra.mxu0 %v582
  %830 = vmatprep.subr.bf16.mxu0 %v581
  %831 = vmatpush2.bf16.msra.mxu0 %v580
  %832 = vmatprep.subr.bf16.mxu0 %v579
  %833 = vmatpush2.bf16.msra.mxu0 %v578
  %834 = vmatprep.subr.bf16.mxu0 %v577
  %835 = vmatpush2.bf16.msra.mxu0 %v576
  %836 = vmatprep.subr.bf16.mxu0 %v575
  %837 = vmatpush2.bf16.msra.mxu0 %v574
  %838 = vmatprep.subr.bf16.mxu0 %v573
  %839 = vmatpush2.bf16.msra.mxu0 %v572
  %840 = vmatprep.subr.bf16.mxu0 %v571
  %841 = vmatpush2.bf16.msra.mxu0 %v570
  %842 = vmatprep.mubr.bf16.mxu0 %v23
  %843 = vmatmul.mubr.bf16.gmra.mxu0 %v22
  %v844 = vpop.f32.mrf.mxu0
  %v845 = vadd.f32 %v163, %v844
  %v846 = vpop.f32.mrf.mxu0
  %v847 = vadd.f32 %v167, %v846
  %v848 = vpop.f32.mrf.mxu0
  %v849 = vpop.f32.mrf.mxu0
  %850 = vdwg.mxu0
  %851 = vmatprep.subr.bf16.mxu0 %v601
  %852 = vmatpush1.bf16.msra.mxu0 %v600
  %853 = vmatprep.subr.bf16.mxu0 %v599
  %854 = vmatpush1.bf16.msra.mxu0 %v598
  %855 = vmatprep.subr.bf16.mxu0 %v597
  %856 = vmatpush1.bf16.msra.mxu0 %v596
  %857 = vmatprep.subr.bf16.mxu0 %v595
  %858 = vmatpush1.bf16.msra.mxu0 %v594
  %859 = vmatprep.subr.bf16.mxu0 %v593
  %860 = vmatpush1.bf16.msra.mxu0 %v592
  %861 = vmatprep.subr.bf16.mxu0 %v591
  %862 = vmatpush1.bf16.msra.mxu0 %v590
  %863 = vmatprep.subr.bf16.mxu0 %v589
  %864 = vmatpush1.bf16.msra.mxu0 %v588
  %865 = vmatprep.subr.bf16.mxu0 %v587
  %866 = vmatpush1.bf16.msra.mxu0 %v586
  %867 = vmatprep.subr.bf16.mxu0 %v617
  %868 = vmatpush2.bf16.msra.mxu0 %v616
  %869 = vmatprep.subr.bf16.mxu0 %v615
  %870 = vmatpush2.bf16.msra.mxu0 %v614
  %871 = vmatprep.subr.bf16.mxu0 %v613
  %872 = vmatpush2.bf16.msra.mxu0 %v612
  %873 = vmatprep.subr.bf16.mxu0 %v611
  %874 = vmatpush2.bf16.msra.mxu0 %v610
  %875 = vmatprep.subr.bf16.mxu0 %v609
  %876 = vmatpush2.bf16.msra.mxu0 %v608
  %877 = vmatprep.subr.bf16.mxu0 %v607
  %878 = vmatpush2.bf16.msra.mxu0 %v606
  %879 = vmatprep.subr.bf16.mxu0 %v605
  %880 = vmatpush2.bf16.msra.mxu0 %v604
  %881 = vmatprep.subr.bf16.mxu0 %v603
  %882 = vmatpush2.bf16.msra.mxu0 %v602
  %883 = vmatprep.mubr.bf16.mxu0 %v25
  %884 = vmatmul.mubr.bf16.gmra.mxu0 %v24
  %v885 = vpop.f32.mrf.mxu0
  %v886 = vadd.f32 %v845, %v885
  %v887 = vpop.f32.mrf.mxu0
  %v888 = vadd.f32 %v847, %v887
  %v889 = vpop.f32.mrf.mxu0
  %v890 = vpop.f32.mrf.mxu0
  %891 = vdwg.mxu0
  %892 = vmatprep.subr.bf16.mxu0 %v633
  %893 = vmatpush1.bf16.msra.mxu0 %v632
  %894 = vmatprep.subr.bf16.mxu0 %v631
  %895 = vmatpush1.bf16.msra.mxu0 %v630
  %896 = vmatprep.subr.bf16.mxu0 %v629
  %897 = vmatpush1.bf16.msra.mxu0 %v628
  %898 = vmatprep.subr.bf16.mxu0 %v627
  %899 = vmatpush1.bf16.msra.mxu0 %v626
  %900 = vmatprep.subr.bf16.mxu0 %v625
  %901 = vmatpush1.bf16.msra.mxu0 %v624
  %902 = vmatprep.subr.bf16.mxu0 %v623
  %903 = vmatpush1.bf16.msra.mxu0 %v622
  %904 = vmatprep.subr.bf16.mxu0 %v621
  %905 = vmatpush1.bf16.msra.mxu0 %v620
  %906 = vmatprep.subr.bf16.mxu0 %v619
  %907 = vmatpush1.bf16.msra.mxu0 %v618
  %908 = vmatprep.subr.bf16.mxu0 %v649
  %909 = vmatpush2.bf16.msra.mxu0 %v648
  %910 = vmatprep.subr.bf16.mxu0 %v647
  %911 = vmatpush2.bf16.msra.mxu0 %v646
  %912 = vmatprep.subr.bf16.mxu0 %v645
  %913 = vmatpush2.bf16.msra.mxu0 %v644
  %914 = vmatprep.subr.bf16.mxu0 %v643
  %915 = vmatpush2.bf16.msra.mxu0 %v642
  %916 = vmatprep.subr.bf16.mxu0 %v641
  %917 = vmatpush2.bf16.msra.mxu0 %v640
  %918 = vmatprep.subr.bf16.mxu0 %v639
  %919 = vmatpush2.bf16.msra.mxu0 %v638
  %920 = vmatprep.subr.bf16.mxu0 %v637
  %921 = vmatpush2.bf16.msra.mxu0 %v636
  %922 = vmatprep.subr.bf16.mxu0 %v635
  %923 = vmatpush2.bf16.msra.mxu0 %v634
  %924 = vmatprep.mubr.bf16.mxu0 %v27
  %925 = vmatmul.mubr.bf16.gmra.mxu0 %v26
  %v926 = vpop.f32.mrf.mxu0
  %v927 = vadd.f32 %v886, %v926
  %v928 = vpop.f32.mrf.mxu0
  %v929 = vadd.f32 %v888, %v928
  %v930 = vpop.f32.mrf.mxu0
  %v931 = vpop.f32.mrf.mxu0
  %932 = vdwg.mxu0
  %933 = vmatprep.subr.bf16.mxu0 %v665
  %934 = vmatpush1.bf16.msra.mxu0 %v664
  %935 = vmatprep.subr.bf16.mxu0 %v663
  %936 = vmatpush1.bf16.msra.mxu0 %v662
  %937 = vmatprep.subr.bf16.mxu0 %v661
  %938 = vmatpush1.bf16.msra.mxu0 %v660
  %939 = vmatprep.subr.bf16.mxu0 %v659
  %940 = vmatpush1.bf16.msra.mxu0 %v658
  %941 = vmatprep.subr.bf16.mxu0 %v657
  %942 = vmatpush1.bf16.msra.mxu0 %v656
  %943 = vmatprep.subr.bf16.mxu0 %v655
  %944 = vmatpush1.bf16.msra.mxu0 %v654
  %945 = vmatprep.subr.bf16.mxu0 %v653
  %946 = vmatpush1.bf16.msra.mxu0 %v652
  %947 = vmatprep.subr.bf16.mxu0 %v651
  %948 = vmatpush1.bf16.msra.mxu0 %v650
  %949 = vmatprep.subr.bf16.mxu0 %v681
  %950 = vmatpush2.bf16.msra.mxu0 %v680
  %951 = vmatprep.subr.bf16.mxu0 %v679
  %952 = vmatpush2.bf16.msra.mxu0 %v678
  %953 = vmatprep.subr.bf16.mxu0 %v677
  %954 = vmatpush2.bf16.msra.mxu0 %v676
  %955 = vmatprep.subr.bf16.mxu0 %v675
  %956 = vmatpush2.bf16.msra.mxu0 %v674
  %957 = vmatprep.subr.bf16.mxu0 %v673
  %958 = vmatpush2.bf16.msra.mxu0 %v672
  %959 = vmatprep.subr.bf16.mxu0 %v671
  %960 = vmatpush2.bf16.msra.mxu0 %v670
  %961 = vmatprep.subr.bf16.mxu0 %v669
  %962 = vmatpush2.bf16.msra.mxu0 %v668
  %963 = vmatprep.subr.bf16.mxu0 %v667
  %964 = vmatpush2.bf16.msra.mxu0 %v666
  %965 = vmatprep.mubr.bf16.mxu0 %v29
  %966 = vmatmul.mubr.bf16.gmra.mxu0 %v28
  %v967 = vpop.f32.mrf.mxu0
  %v968 = vadd.f32 %v927, %v967
  %v969 = vpop.f32.mrf.mxu0
  %v970 = vadd.f32 %v929, %v969
  %v971 = vpop.f32.mrf.mxu0
  %v972 = vpop.f32.mrf.mxu0
  %973 = vdwg.mxu0
  %v974 = vsub.f32 0.0, %v968
  %v975 = vsub.f32 0.0, %v970
  %v976 = vmul.f32 %v974, 1.442695
  %v977 = vpow.pop %v976
  %v978 = vmul.f32 %v975, 1.442695
  %v979 = vpow.pop %v978
  %v980 = vadd.f32 %v977, 1.0
  %v981 = vadd.f32 %v979, 1.0
  %v982 = vrcp.pop %v980
  %v983 = vrcp.pop %v981
  %v984 = vmax.f32 %v982, 0.0
  %v985 = vmax.f32 %v983, 0.0
  %v986 = vmin.f32 %v984, 1.0
  %v987 = vmin.f32 %v985, 1.0
  %988 = vst [vmem:[%s3] sm:$0xff] %v986
  %989 = vst [vmem:[%s3 + $0x8] sm:$0xff] %v987
  // Predicated region
  $region14: #{vae_mlp_mri_forward.9} parent=0 // pred_check
    _
  $region15: #{vae_mlp_mri_forward.9} parent=0 // pred_check_branch
    %991 = sbr.rel (0) target = $region17
  $region16: #{vae_mlp_mri_forward.9} parent=0 // pred_region
    _
  $region17: #{vae_mlp_mri_forward.9} parent=0 // pred_fallthru
    _
  // Predicated region
  $region18: #{vae_mlp_mri_forward.9} parent=0 // pred_check
    _
  $region19: #{vae_mlp_mri_forward.9} parent=0 // pred_check_branch
    %993 = sbr.rel (0) target = $region21
  $region20: #{vae_mlp_mri_forward.9} parent=0 // pred_region
    _
  $region21: #{vae_mlp_mri_forward.9} parent=0 // pred_fallthru
    _

// kernel: vae_mlp_mri_forward.8
$region0: #{vae_mlp_mri_forward.8}
  #allocation0 [shape = 'u32[]', space=smem, size = 0x4, offset = 0x4, fixed_abs, tag = 'smem constant byte address 0x4 - core index']
  #allocation1 [shape = 'u32[144,128]{1,0:T(1,128)}', space=vmem, size = 0x12000, scoped, tag = 'internal scratch']
  #allocation2 [shape = 'f32[8,1024]{1,0:T(8,128)}', space=vmem, size = 0x8000, scoped, tag = 'scratch operand']
  %s0 = inlined_call_operand.vmem [shape: f32[8,1024], index: 0, kind: input, shape index: {}]
  %s1 = inlined_call_operand.vmem [shape: bf16[5,1024,1024], index: 1, kind: input, shape index: {}]
  %s2 = inlined_call_operand.vmem [shape: f32[5,1,1024], index: 2, kind: input, shape index: {}]
  %s3 = inlined_call_operand.vmem [shape: f32[8,1024], index: 3, kind: output, shape index: {}]
  %s4 = sld [smem:[#allocation0]]
  $region57: #{vae_mlp_mri_forward.8} parent=0
    _
  %s6 = ssub.s32 1, %s4
  %s7 = scalar_select 0, %s6, %s4
  loop: start=0, step=1, limit=7
  $region2: #{vae_mlp_mri_forward.8} parent=0 // loop_pre_header
    _
  $region3: #{vae_mlp_mri_forward.8} parent=0 // loop_header
    %s9 = sphi 0, %s13
    %p10 = scmp.ge.s32.totalorder %s9, 7
    %s17 = sphi 0, %s17
    %s19 = sphi 0, %s17
    %s20 = sphi 0, %s19
    %s34 = sphi 0, %s20
    %s40 = sphi 0, %s42
    %s43 = sphi 0, %s40
    %s44 = sphi 0, %s43
    %s60 = sphi 0, %s44
    %s66 = sphi 0, %s68
    %s69 = sphi 0, %s66
    %s70 = sphi 0, %s69
    %s86 = sphi 0, %s70
    %s90 = sphi 0, %s90
    %s92 = sphi 0, %s90
    %s93 = sphi 0, %s92
    %s107 = sphi 0, %s93
  $region4: #{vae_mlp_mri_forward.8} parent=0 // loop_header_branch
    %12 = sbr.rel (%p10) target = $region8
  $region5: #{vae_mlp_mri_forward.8} parent=0 // loop_body
    %s14 = ssub.s32 %s9, 1
    %s15 = ssub.s32 %s9, 2
    %s16 = sadd.s32 %s9, 1
    %s18 = sadd.s32 %s17, 1
    %p21 = scmp.eq.s32.totalorder %s9, 4
    %p22 = scmp.ne.s32.totalorder %s17, %s19
    %p23 = scmp.eq.s32.totalorder %s9, 0
    %p24 = por %p22, %p23
    %p25 = scmp.ne.s32.totalorder %s17, %s19
    %p26 = scmp.eq.s32.totalorder %s14, 4
    %p27 = por %p25, %p26
    %p28 = scmp.ne.s32.totalorder %s19, %s20
    %p29 = scmp.eq.s32.totalorder %s14, 0
    %p30 = por %p28, %p29
    %p31 = scmp.ne.s32.totalorder %s19, %s20
    %p32 = scmp.eq.s32.totalorder %s15, 4
    %p33 = por %p31, %p32
    %p35 = scmp.ne.s32.totalorder %s20, %s34
    %p36 = scmp.eq.s32.totalorder %s15, 0
    %p37 = por %p35, %p36
    %s38 = ssub.s32 %s9, %s16
    %p39 = scmp.eq.s32.totalorder %s38, 0
    %s41 = sadd.s32 %s40, 1
    %s42 = scalar_select %p39, %s40, %s41
    %p45 = pneg %p39
    %p46 = scmp.eq.s32.totalorder %s9, 4
    %p47 = por %p45, %p46
    %p48 = scmp.ne.s32.totalorder %s40, %s43
    %p49 = scmp.eq.s32.totalorder %s9, 0
    %p50 = por %p48, %p49
    %p51 = scmp.ne.s32.totalorder %s40, %s43
    %p52 = scmp.eq.s32.totalorder %s14, 4
    %p53 = por %p51, %p52
    %p54 = scmp.ne.s32.totalorder %s43, %s44
    %p55 = scmp.eq.s32.totalorder %s14, 0
    %p56 = por %p54, %p55
    %p57 = scmp.ne.s32.totalorder %s43, %s44
    %p58 = scmp.eq.s32.totalorder %s15, 4
    %p59 = por %p57, %p58
    %p61 = scmp.ne.s32.totalorder %s44, %s60
    %p62 = scmp.eq.s32.totalorder %s15, 0
    %p63 = por %p61, %p62
    %s64 = ssub.s32 %s9, %s16
    %p65 = scmp.eq.s32.totalorder %s64, 0
    %s67 = sadd.s32 %s66, 1
    %s68 = scalar_select %p65, %s66, %s67
    %p71 = pneg %p65
    %p72 = scmp.eq.s32.totalorder %s9, 4
    %p73 = por %p71, %p72
    %p74 = scmp.ne.s32.totalorder %s66, %s69
    %p75 = scmp.eq.s32.totalorder %s9, 0
    %p76 = por %p74, %p75
    %p77 = scmp.ne.s32.totalorder %s66, %s69
    %p78 = scmp.eq.s32.totalorder %s14, 4
    %p79 = por %p77, %p78
    %p80 = scmp.ne.s32.totalorder %s69, %s70
    %p81 = scmp.eq.s32.totalorder %s14, 0
    %p82 = por %p80, %p81
    %p83 = scmp.ne.s32.totalorder %s69, %s70
    %p84 = scmp.eq.s32.totalorder %s15, 4
    %p85 = por %p83, %p84
    %p87 = scmp.ne.s32.totalorder %s70, %s86
    %p88 = scmp.eq.s32.totalorder %s15, 0
    %p89 = por %p87, %p88
    %s91 = sadd.s32 %s90, 1
    %p94 = scmp.eq.s32.totalorder %s9, 4
    %p95 = scmp.ne.s32.totalorder %s90, %s92
    %p96 = scmp.eq.s32.totalorder %s9, 0
    %p97 = por %p95, %p96
    %p98 = scmp.ne.s32.totalorder %s90, %s92
    %p99 = scmp.eq.s32.totalorder %s14, 4
    %p100 = por %p98, %p99
    %p101 = scmp.ne.s32.totalorder %s92, %s93
    %p102 = scmp.eq.s32.totalorder %s14, 0
    %p103 = por %p101, %p102
    %p104 = scmp.ne.s32.totalorder %s92, %s93
    %p105 = scmp.eq.s32.totalorder %s15, 4
    %p106 = por %p104, %p105
    %p108 = scmp.ne.s32.totalorder %s93, %s107
    %p109 = scmp.eq.s32.totalorder %s15, 0
    %p110 = por %p108, %p109
    %p111 = scmp.le.s32.totalorder 1, %s9
    %p112 = scmp.lt.s32.totalorder %s9, 6
    %p113 = pnand %p111, %p112
    %p114 = pneg %p113
    // Predicated region
    $region9: #{vae_mlp_mri_forward.8} parent=5 // pred_check
      _
    $region10: #{vae_mlp_mri_forward.8} parent=5 // pred_check_branch
      %116 = sbr.rel (%p113) target = $region12
    $region11: #{vae_mlp_mri_forward.8} parent=5 // pred_region
      %s117 = ssub.s32 %s9, 1
      // Predicated region
      $region13: #{vae_mlp_mri_forward.8} parent=11 // pred_check
        %p118 = pneg %p30
      $region14: #{vae_mlp_mri_forward.8} parent=11 // pred_check_branch
        %120 = sbr.rel (%p118) target = $region16
      $region15: #{vae_mlp_mri_forward.8} parent=11 // pred_region
        _
      $region16: #{vae_mlp_mri_forward.8} parent=11 // pred_fallthru
        _
    $region12: #{vae_mlp_mri_forward.8} parent=5 // pred_fallthru
      _
    %p121 = scmp.lt.s32.totalorder %s9, 5
    // Predicated region
    $region17: #{vae_mlp_mri_forward.8} parent=5 // pred_check
      %p122 = pneg %p121
    $region18: #{vae_mlp_mri_forward.8} parent=5 // pred_check_branch
      %124 = sbr.rel (%p122) target = $region20
    $region19: #{vae_mlp_mri_forward.8} parent=5 // pred_region
      // Predicated region
      $region21: #{vae_mlp_mri_forward.8} parent=19 // pred_check
        %p125 = pneg %p50
      $region22: #{vae_mlp_mri_forward.8} parent=19 // pred_check_branch
        %127 = sbr.rel (%p125) target = $region24
      $region23: #{vae_mlp_mri_forward.8} parent=19 // pred_region
        %p128 = scmp.lt.s32.totalorder %s9, 4
        %s129 = scalar_select %p128, %s9, 4
        %s130 = smul.addr %s129, 1024
        %s131 = smul.addr %s130, 4
        %s132 = scalar_lea.vmem %s1, %s131
      $region24: #{vae_mlp_mri_forward.8} parent=19 // pred_fallthru
        _
      // Predicated region
      $region25: #{vae_mlp_mri_forward.8} parent=19 // pred_check
        %p133 = pneg %p76
      $region26: #{vae_mlp_mri_forward.8} parent=19 // pred_check_branch
        %135 = sbr.rel (%p133) target = $region28
      $region27: #{vae_mlp_mri_forward.8} parent=19 // pred_region
        %p136 = scmp.lt.s32.totalorder %s9, 4
        %s137 = scalar_select %p136, %s9, 4
        %s138 = smul.addr %s137, 8
        %s139 = scalar_lea.vmem %s2, %s138
      $region28: #{vae_mlp_mri_forward.8} parent=19 // pred_fallthru
        _
    $region20: #{vae_mlp_mri_forward.8} parent=5 // pred_fallthru
      _
    %p140 = scmp.le.s32.totalorder 1, %s9
    %p141 = scmp.lt.s32.totalorder %s9, 6
    %p142 = pnand %p140, %p141
    %p143 = pneg %p142
    // Predicated region
    $region29: #{vae_mlp_mri_forward.8} parent=5 // pred_check
      _
    $region30: #{vae_mlp_mri_forward.8} parent=5 // pred_check_branch
      %145 = sbr.rel (%p142) target = $region32
    $region31: #{vae_mlp_mri_forward.8} parent=5 // pred_region
      %s146 = ssub.s32 %s9, 1
      %p147 = pneg %p30
      %p148 = pneg %p27
      %p149 = scmp.lt.s32.totalorder %s14, 4
      %s150 = scalar_select %p149, %s14, 4
      %s151 = smul.addr %s150, 1024
      %s152 = smul.addr %s151, 4
      %s153 = scalar_lea.vmem %s1, %s152
      %p154 = pneg %p56
      %p155 = pneg %p53
      %p156 = scmp.lt.s32.totalorder %s14, 4
      %s157 = scalar_select %p156, %s14, 4
      %s158 = smul.addr %s157, 8
      %s159 = scalar_lea.vmem %s2, %s158
      %p160 = pneg %p82
      %p161 = pneg %p79
      %p162 = pneg %p103
      %p163 = pneg %p100
      %p164 = scmp.lt.s32.totalorder %s14, 4
      %s165 = scalar_select %p164, %s14, 4
      %s166 = smul.addr %s165, 1024
      %s167 = smul.addr %s166, 4
      %s168 = scalar_lea.vmem %s1, %s167
      %p169 = scmp.lt.s32.totalorder %s14, 4
      %s170 = scalar_select %p169, %s14, 4
      %s171 = smul.addr %s170, 8
      %s172 = scalar_lea.vmem %s2, %s171
      %p173 = scmp.eq.s32.totalorder %s14, 0
      // Predicated region
      $region33: #{vae_mlp_mri_forward.8} parent=31 // pred_check
        %p174 = pneg %p173
      $region34: #{vae_mlp_mri_forward.8} parent=31 // pred_check_branch
        %176 = sbr.rel (%p174) target = $region36
      $region35: #{vae_mlp_mri_forward.8} parent=31 // pred_region
        %v177 = vld [vmem:[%s0] sm:$0xff]
        %v178 = vld [vmem:[%s0 + $0x8] sm:$0xff]
        %v179 = vld [vmem:[%s0 + $0x10] sm:$0xff]
        %v180 = vld [vmem:[%s0 + $0x18] sm:$0xff]
        %v181 = vld [vmem:[%s0 + $0x20] sm:$0xff]
        %v182 = vld [vmem:[%s0 + $0x28] sm:$0xff]
        %v183 = vld [vmem:[%s0 + $0x30] sm:$0xff]
        %v184 = vld [vmem:[%s0 + $0x38] sm:$0xff]
        %185 = vst [vmem:[#allocation2] sm:$0xff] %v177
        %186 = vst [vmem:[#allocation2 + $0x8] sm:$0xff] %v178
        %187 = vst [vmem:[#allocation2 + $0x10] sm:$0xff] %v179
        %188 = vst [vmem:[#allocation2 + $0x18] sm:$0xff] %v180
        %189 = vst [vmem:[#allocation2 + $0x20] sm:$0xff] %v181
        %190 = vst [vmem:[#allocation2 + $0x28] sm:$0xff] %v182
        %191 = vst [vmem:[#allocation2 + $0x30] sm:$0xff] %v183
        %192 = vst [vmem:[#allocation2 + $0x38] sm:$0xff] %v184
      $region36: #{vae_mlp_mri_forward.8} parent=31 // pred_fallthru
        _
      %v193 = vld [vmem:[#allocation2] sm:$0xff]
      %v194 = vld [vmem:[#allocation2 + $0x8] sm:$0xff]
      %v195 = vld [vmem:[#allocation2 + $0x10] sm:$0xff]
      %v196 = vld [vmem:[#allocation2 + $0x18] sm:$0xff]
      %v197 = vld [vmem:[#allocation2 + $0x20] sm:$0xff]
      %v198 = vld [vmem:[#allocation2 + $0x28] sm:$0xff]
      %v199 = vld [vmem:[#allocation2 + $0x30] sm:$0xff]
      %v200 = vld [vmem:[#allocation2 + $0x38] sm:$0xff]
      %v201 = vpack.c.bf16 %v193, %v193
      %v202 = vpack.c.bf16 %v194, %v194
      %v203 = vpack.c.bf16 %v195, %v195
      %v204 = vpack.c.bf16 %v196, %v196
      %v205 = vpack.c.bf16 %v197, %v197
      %v206 = vpack.c.bf16 %v198, %v198
      %v207 = vpack.c.bf16 %v199, %v199
      %v208 = vpack.c.bf16 %v200, %v200
      %v209 = vld [vmem:[%s168] sm:$0xff]
      %v210 = vld [vmem:[%s168 + $0x8] sm:$0xff]
      %v211 = vld [vmem:[%s168 + $0x10] sm:$0xff]
      %v212 = vld [vmem:[%s168 + $0x18] sm:$0xff]
      %v213 = vld [vmem:[%s168 + $0x20] sm:$0xff]
      %v214 = vld [vmem:[%s168 + $0x28] sm:$0xff]
      %v215 = vld [vmem:[%s168 + $0x30] sm:$0xff]
      %v216 = vld [vmem:[%s168 + $0x38] sm:$0xff]
      %v217 = vld [vmem:[%s168 + $0x40] sm:$0xff]
      %v218 = vld [vmem:[%s168 + $0x48] sm:$0xff]
      %v219 = vld [vmem:[%s168 + $0x50] sm:$0xff]
      %v220 = vld [vmem:[%s168 + $0x58] sm:$0xff]
      %v221 = vld [vmem:[%s168 + $0x60] sm:$0xff]
      %v222 = vld [vmem:[%s168 + $0x68] sm:$0xff]
      %v223 = vld [vmem:[%s168 + $0x70] sm:$0xff]
      %v224 = vld [vmem:[%s168 + $0x78] sm:$0xff]
      %v225 = vld [vmem:[%s168 + $0x80] sm:$0xff]
      %v226 = vld [vmem:[%s168 + $0x88] sm:$0xff]
      %v227 = vld [vmem:[%s168 + $0x90] sm:$0xff]
      %v228 = vld [vmem:[%s168 + $0x98] sm:$0xff]
      %v229 = vld [vmem:[%s168 + $0xa0] sm:$0xff]
      %v230 = vld [vmem:[%s168 + $0xa8] sm:$0xff]
      %v231 = vld [vmem:[%s168 + $0xb0] sm:$0xff]
      %v232 = vld [vmem:[%s168 + $0xb8] sm:$0xff]
      %v233 = vld [vmem:[%s168 + $0xc0] sm:$0xff]
      %v234 = vld [vmem:[%s168 + $0xc8] sm:$0xff]
      %v235 = vld [vmem:[%s168 + $0xd0] sm:$0xff]
      %v236 = vld [vmem:[%s168 + $0xd8] sm:$0xff]
      %v237 = vld [vmem:[%s168 + $0xe0] sm:$0xff]
      %v238 = vld [vmem:[%s168 + $0xe8] sm:$0xff]
      %v239 = vld [vmem:[%s168 + $0xf0] sm:$0xff]
      %v240 = vld [vmem:[%s168 + $0xf8] sm:$0xff]
      %v241 = vld [vmem:[%s168 + $0x100] sm:$0xff]
      %v242 = vld [vmem:[%s168 + $0x108] sm:$0xff]
      %v243 = vld [vmem:[%s168 + $0x110] sm:$0xff]
      %v244 = vld [vmem:[%s168 + $0x118] sm:$0xff]
      %v245 = vld [vmem:[%s168 + $0x120] sm:$0xff]
      %v246 = vld [vmem:[%s168 + $0x128] sm:$0xff]
      %v247 = vld [vmem:[%s168 + $0x130] sm:$0xff]
      %v248 = vld [vmem:[%s168 + $0x138] sm:$0xff]
      %v249 = vld [vmem:[%s168 + $0x140] sm:$0xff]
      %v250 = vld [vmem:[%s168 + $0x148] sm:$0xff]
      %v251 = vld [vmem:[%s168 + $0x150] sm:$0xff]
      %v252 = vld [vmem:[%s168 + $0x158] sm:$0xff]
      %v253 = vld [vmem:[%s168 + $0x160] sm:$0xff]
      %v254 = vld [vmem:[%s168 + $0x168] sm:$0xff]
      %v255 = vld [vmem:[%s168 + $0x170] sm:$0xff]
      %v256 = vld [vmem:[%s168 + $0x178] sm:$0xff]
      %v257 = vld [vmem:[%s168 + $0x180] sm:$0xff]
      %v258 = vld [vmem:[%s168 + $0x188] sm:$0xff]
      %v259 = vld [vmem:[%s168 + $0x190] sm:$0xff]
      %v260 = vld [vmem:[%s168 + $0x198] sm:$0xff]
      %v261 = vld [vmem:[%s168 + $0x1a0] sm:$0xff]
      %v262 = vld [vmem:[%s168 + $0x1a8] sm:$0xff]
      %v263 = vld [vmem:[%s168 + $0x1b0] sm:$0xff]
      %v264 = vld [vmem:[%s168 + $0x1b8] sm:$0xff]
      %v265 = vld [vmem:[%s168 + $0x1c0] sm:$0xff]
      %v266 = vld [vmem:[%s168 + $0x1c8] sm:$0xff]
      %v267 = vld [vmem:[%s168 + $0x1d0] sm:$0xff]
      %v268 = vld [vmem:[%s168 + $0x1d8] sm:$0xff]
      %v269 = vld [vmem:[%s168 + $0x1e0] sm:$0xff]
      %v270 = vld [vmem:[%s168 + $0x1e8] sm:$0xff]
      %v271 = vld [vmem:[%s168 + $0x1f0] sm:$0xff]
      %v272 = vld [vmem:[%s168 + $0x1f8] sm:$0xff]
      %v273 = vld [vmem:[%s168 + $0x200] sm:$0xff]
      %v274 = vld [vmem:[%s168 + $0x208] sm:$0xff]
      %v275 = vld [vmem:[%s168 + $0x210] sm:$0xff]
      %v276 = vld [vmem:[%s168 + $0x218] sm:$0xff]
      %v277 = vld [vmem:[%s168 + $0x220] sm:$0xff]
      %v278 = vld [vmem:[%s168 + $0x228] sm:$0xff]
      %v279 = vld [vmem:[%s168 + $0x230] sm:$0xff]
      %v280 = vld [vmem:[%s168 + $0x238] sm:$0xff]
      %v281 = vld [vmem:[%s168 + $0x240] sm:$0xff]
      %v282 = vld [vmem:[%s168 + $0x248] sm:$0xff]
      %v283 = vld [vmem:[%s168 + $0x250] sm:$0xff]
      %v284 = vld [vmem:[%s168 + $0x258] sm:$0xff]
      %v285 = vld [vmem:[%s168 + $0x260] sm:$0xff]
      %v286 = vld [vmem:[%s168 + $0x268] sm:$0xff]
      %v287 = vld [vmem:[%s168 + $0x270] sm:$0xff]
      %v288 = vld [vmem:[%s168 + $0x278] sm:$0xff]
      %v289 = vld [vmem:[%s168 + $0x280] sm:$0xff]
      %v290 = vld [vmem:[%s168 + $0x288] sm:$0xff]
      %v291 = vld [vmem:[%s168 + $0x290] sm:$0xff]
      %v292 = vld [vmem:[%s168 + $0x298] sm:$0xff]
      %v293 = vld [vmem:[%s168 + $0x2a0] sm:$0xff]
      %v294 = vld [vmem:[%s168 + $0x2a8] sm:$0xff]
      %v295 = vld [vmem:[%s168 + $0x2b0] sm:$0xff]
      %v296 = vld [vmem:[%s168 + $0x2b8] sm:$0xff]
      %v297 = vld [vmem:[%s168 + $0x2c0] sm:$0xff]
      %v298 = vld [vmem:[%s168 + $0x2c8] sm:$0xff]
      %v299 = vld [vmem:[%s168 + $0x2d0] sm:$0xff]
      %v300 = vld [vmem:[%s168 + $0x2d8] sm:$0xff]
      %v301 = vld [vmem:[%s168 + $0x2e0] sm:$0xff]
      %v302 = vld [vmem:[%s168 + $0x2e8] sm:$0xff]
      %v303 = vld [vmem:[%s168 + $0x2f0] sm:$0xff]
      %v304 = vld [vmem:[%s168 + $0x2f8] sm:$0xff]
      %v305 = vld [vmem:[%s168 + $0x300] sm:$0xff]
      %v306 = vld [vmem:[%s168 + $0x308] sm:$0xff]
      %v307 = vld [vmem:[%s168 + $0x310] sm:$0xff]
      %v308 = vld [vmem:[%s168 + $0x318] sm:$0xff]
      %v309 = vld [vmem:[%s168 + $0x320] sm:$0xff]
      %v310 = vld [vmem:[%s168 + $0x328] sm:$0xff]
      %v311 = vld [vmem:[%s168 + $0x330] sm:$0xff]
      %v312 = vld [vmem:[%s168 + $0x338] sm:$0xff]
      %v313 = vld [vmem:[%s168 + $0x340] sm:$0xff]
      %v314 = vld [vmem:[%s168 + $0x348] sm:$0xff]
      %v315 = vld [vmem:[%s168 + $0x350] sm:$0xff]
      %v316 = vld [vmem:[%s168 + $0x358] sm:$0xff]
      %v317 = vld [vmem:[%s168 + $0x360] sm:$0xff]
      %v318 = vld [vmem:[%s168 + $0x368] sm:$0xff]
      %v319 = vld [vmem:[%s168 + $0x370] sm:$0xff]
      %v320 = vld [vmem:[%s168 + $0x378] sm:$0xff]
      %v321 = vld [vmem:[%s168 + $0x380] sm:$0xff]
      %v322 = vld [vmem:[%s168 + $0x388] sm:$0xff]
      %v323 = vld [vmem:[%s168 + $0x390] sm:$0xff]
      %v324 = vld [vmem:[%s168 + $0x398] sm:$0xff]
      %v325 = vld [vmem:[%s168 + $0x3a0] sm:$0xff]
      %v326 = vld [vmem:[%s168 + $0x3a8] sm:$0xff]
      %v327 = vld [vmem:[%s168 + $0x3b0] sm:$0xff]
      %v328 = vld [vmem:[%s168 + $0x3b8] sm:$0xff]
      %v329 = vld [vmem:[%s168 + $0x3c0] sm:$0xff]
      %v330 = vld [vmem:[%s168 + $0x3c8] sm:$0xff]
      %v331 = vld [vmem:[%s168 + $0x3d0] sm:$0xff]
      %v332 = vld [vmem:[%s168 + $0x3d8] sm:$0xff]
      %v333 = vld [vmem:[%s168 + $0x3e0] sm:$0xff]
      %v334 = vld [vmem:[%s168 + $0x3e8] sm:$0xff]
      %v335 = vld [vmem:[%s168 + $0x3f0] sm:$0xff]
      %v336 = vld [vmem:[%s168 + $0x3f8] sm:$0xff]
      %v337 = vld [vmem:[%s168 + $0x400] sm:$0xff]
      %v338 = vld [vmem:[%s168 + $0x408] sm:$0xff]
      %v339 = vld [vmem:[%s168 + $0x410] sm:$0xff]
      %v340 = vld [vmem:[%s168 + $0x418] sm:$0xff]
      %v341 = vld [vmem:[%s168 + $0x420] sm:$0xff]
      %v342 = vld [vmem:[%s168 + $0x428] sm:$0xff]
      %v343 = vld [vmem:[%s168 + $0x430] sm:$0xff]
      %v344 = vld [vmem:[%s168 + $0x438] sm:$0xff]
      %v345 = vld [vmem:[%s168 + $0x440] sm:$0xff]
      %v346 = vld [vmem:[%s168 + $0x448] sm:$0xff]
      %v347 = vld [vmem:[%s168 + $0x450] sm:$0xff]
      %v348 = vld [vmem:[%s168 + $0x458] sm:$0xff]
      %v349 = vld [vmem:[%s168 + $0x460] sm:$0xff]
      %v350 = vld [vmem:[%s168 + $0x468] sm:$0xff]
      %v351 = vld [vmem:[%s168 + $0x470] sm:$0xff]
      %v352 = vld [vmem:[%s168 + $0x478] sm:$0xff]
      %v353 = vld [vmem:[%s168 + $0x480] sm:$0xff]
      %v354 = vld [vmem:[%s168 + $0x488] sm:$0xff]
      %v355 = vld [vmem:[%s168 + $0x490] sm:$0xff]
      %v356 = vld [vmem:[%s168 + $0x498] sm:$0xff]
      %v357 = vld [vmem:[%s168 + $0x4a0] sm:$0xff]
      %v358 = vld [vmem:[%s168 + $0x4a8] sm:$0xff]
      %v359 = vld [vmem:[%s168 + $0x4b0] sm:$0xff]
      %v360 = vld [vmem:[%s168 + $0x4b8] sm:$0xff]
      %v361 = vld [vmem:[%s168 + $0x4c0] sm:$0xff]
      %v362 = vld [vmem:[%s168 + $0x4c8] sm:$0xff]
      %v363 = vld [vmem:[%s168 + $0x4d0] sm:$0xff]
      %v364 = vld [vmem:[%s168 + $0x4d8] sm:$0xff]
      %v365 = vld [vmem:[%s168 + $0x4e0] sm:$0xff]
      %v366 = vld [vmem:[%s168 + $0x4e8] sm:$0xff]
      %v367 = vld [vmem:[%s168 + $0x4f0] sm:$0xff]
      %v368 = vld [vmem:[%s168 + $0x4f8] sm:$0xff]
      %v369 = vld [vmem:[%s168 + $0x500] sm:$0xff]
      %v370 = vld [vmem:[%s168 + $0x508] sm:$0xff]
      %v371 = vld [vmem:[%s168 + $0x510] sm:$0xff]
      %v372 = vld [vmem:[%s168 + $0x518] sm:$0xff]
      %v373 = vld [vmem:[%s168 + $0x520] sm:$0xff]
      %v374 = vld [vmem:[%s168 + $0x528] sm:$0xff]
      %v375 = vld [vmem:[%s168 + $0x530] sm:$0xff]
      %v376 = vld [vmem:[%s168 + $0x538] sm:$0xff]
      %v377 = vld [vmem:[%s168 + $0x540] sm:$0xff]
      %v378 = vld [vmem:[%s168 + $0x548] sm:$0xff]
      %v379 = vld [vmem:[%s168 + $0x550] sm:$0xff]
      %v380 = vld [vmem:[%s168 + $0x558] sm:$0xff]
      %v381 = vld [vmem:[%s168 + $0x560] sm:$0xff]
      %v382 = vld [vmem:[%s168 + $0x568] sm:$0xff]
      %v383 = vld [vmem:[%s168 + $0x570] sm:$0xff]
      %v384 = vld [vmem:[%s168 + $0x578] sm:$0xff]
      %v385 = vld [vmem:[%s168 + $0x580] sm:$0xff]
      %v386 = vld [vmem:[%s168 + $0x588] sm:$0xff]
      %v387 = vld [vmem:[%s168 + $0x590] sm:$0xff]
      %v388 = vld [vmem:[%s168 + $0x598] sm:$0xff]
      %v389 = vld [vmem:[%s168 + $0x5a0] sm:$0xff]
      %v390 = vld [vmem:[%s168 + $0x5a8] sm:$0xff]
      %v391 = vld [vmem:[%s168 + $0x5b0] sm:$0xff]
      %v392 = vld [vmem:[%s168 + $0x5b8] sm:$0xff]
      %v393 = vld [vmem:[%s168 + $0x5c0] sm:$0xff]
      %v394 = vld [vmem:[%s168 + $0x5c8] sm:$0xff]
      %v395 = vld [vmem:[%s168 + $0x5d0] sm:$0xff]
      %v396 = vld [vmem:[%s168 + $0x5d8] sm:$0xff]
      %v397 = vld [vmem:[%s168 + $0x5e0] sm:$0xff]
      %v398 = vld [vmem:[%s168 + $0x5e8] sm:$0xff]
      %v399 = vld [vmem:[%s168 + $0x5f0] sm:$0xff]
      %v400 = vld [vmem:[%s168 + $0x5f8] sm:$0xff]
      %v401 = vld [vmem:[%s168 + $0x600] sm:$0xff]
      %v402 = vld [vmem:[%s168 + $0x608] sm:$0xff]
      %v403 = vld [vmem:[%s168 + $0x610] sm:$0xff]
      %v404 = vld [vmem:[%s168 + $0x618] sm:$0xff]
      %v405 = vld [vmem:[%s168 + $0x620] sm:$0xff]
      %v406 = vld [vmem:[%s168 + $0x628] sm:$0xff]
      %v407 = vld [vmem:[%s168 + $0x630] sm:$0xff]
      %v408 = vld [vmem:[%s168 + $0x638] sm:$0xff]
      %v409 = vld [vmem:[%s168 + $0x640] sm:$0xff]
      %v410 = vld [vmem:[%s168 + $0x648] sm:$0xff]
      %v411 = vld [vmem:[%s168 + $0x650] sm:$0xff]
      %v412 = vld [vmem:[%s168 + $0x658] sm:$0xff]
      %v413 = vld [vmem:[%s168 + $0x660] sm:$0xff]
      %v414 = vld [vmem:[%s168 + $0x668] sm:$0xff]
      %v415 = vld [vmem:[%s168 + $0x670] sm:$0xff]
      %v416 = vld [vmem:[%s168 + $0x678] sm:$0xff]
      %v417 = vld [vmem:[%s168 + $0x680] sm:$0xff]
      %v418 = vld [vmem:[%s168 + $0x688] sm:$0xff]
      %v419 = vld [vmem:[%s168 + $0x690] sm:$0xff]
      %v420 = vld [vmem:[%s168 + $0x698] sm:$0xff]
      %v421 = vld [vmem:[%s168 + $0x6a0] sm:$0xff]
      %v422 = vld [vmem:[%s168 + $0x6a8] sm:$0xff]
      %v423 = vld [vmem:[%s168 + $0x6b0] sm:$0xff]
      %v424 = vld [vmem:[%s168 + $0x6b8] sm:$0xff]
      %v425 = vld [vmem:[%s168 + $0x6c0] sm:$0xff]
      %v426 = vld [vmem:[%s168 + $0x6c8] sm:$0xff]
      %v427 = vld [vmem:[%s168 + $0x6d0] sm:$0xff]
      %v428 = vld [vmem:[%s168 + $0x6d8] sm:$0xff]
      %v429 = vld [vmem:[%s168 + $0x6e0] sm:$0xff]
      %v430 = vld [vmem:[%s168 + $0x6e8] sm:$0xff]
      %v431 = vld [vmem:[%s168 + $0x6f0] sm:$0xff]
      %v432 = vld [vmem:[%s168 + $0x6f8] sm:$0xff]
      %v433 = vld [vmem:[%s168 + $0x700] sm:$0xff]
      %v434 = vld [vmem:[%s168 + $0x708] sm:$0xff]
      %v435 = vld [vmem:[%s168 + $0x710] sm:$0xff]
      %v436 = vld [vmem:[%s168 + $0x718] sm:$0xff]
      %v437 = vld [vmem:[%s168 + $0x720] sm:$0xff]
      %v438 = vld [vmem:[%s168 + $0x728] sm:$0xff]
      %v439 = vld [vmem:[%s168 + $0x730] sm:$0xff]
      %v440 = vld [vmem:[%s168 + $0x738] sm:$0xff]
      %v441 = vld [vmem:[%s168 + $0x740] sm:$0xff]
      %v442 = vld [vmem:[%s168 + $0x748] sm:$0xff]
      %v443 = vld [vmem:[%s168 + $0x750] sm:$0xff]
      %v444 = vld [vmem:[%s168 + $0x758] sm:$0xff]
      %v445 = vld [vmem:[%s168 + $0x760] sm:$0xff]
      %v446 = vld [vmem:[%s168 + $0x768] sm:$0xff]
      %v447 = vld [vmem:[%s168 + $0x770] sm:$0xff]
      %v448 = vld [vmem:[%s168 + $0x778] sm:$0xff]
      %v449 = vld [vmem:[%s168 + $0x780] sm:$0xff]
      %v450 = vld [vmem:[%s168 + $0x788] sm:$0xff]
      %v451 = vld [vmem:[%s168 + $0x790] sm:$0xff]
      %v452 = vld [vmem:[%s168 + $0x798] sm:$0xff]
      %v453 = vld [vmem:[%s168 + $0x7a0] sm:$0xff]
      %v454 = vld [vmem:[%s168 + $0x7a8] sm:$0xff]
      %v455 = vld [vmem:[%s168 + $0x7b0] sm:$0xff]
      %v456 = vld [vmem:[%s168 + $0x7b8] sm:$0xff]
      %v457 = vld [vmem:[%s168 + $0x7c0] sm:$0xff]
      %v458 = vld [vmem:[%s168 + $0x7c8] sm:$0xff]
      %v459 = vld [vmem:[%s168 + $0x7d0] sm:$0xff]
      %v460 = vld [vmem:[%s168 + $0x7d8] sm:$0xff]
      %v461 = vld [vmem:[%s168 + $0x7e0] sm:$0xff]
      %v462 = vld [vmem:[%s168 + $0x7e8] sm:$0xff]
      %v463 = vld [vmem:[%s168 + $0x7f0] sm:$0xff]
      %v464 = vld [vmem:[%s168 + $0x7f8] sm:$0xff]
      %v465 = vld [vmem:[%s168 + $0x800] sm:$0xff]
      %v466 = vld [vmem:[%s168 + $0x808] sm:$0xff]
      %v467 = vld [vmem:[%s168 + $0x810] sm:$0xff]
      %v468 = vld [vmem:[%s168 + $0x818] sm:$0xff]
      %v469 = vld [vmem:[%s168 + $0x820] sm:$0xff]
      %v470 = vld [vmem:[%s168 + $0x828] sm:$0xff]
      %v471 = vld [vmem:[%s168 + $0x830] sm:$0xff]
      %v472 = vld [vmem:[%s168 + $0x838] sm:$0xff]
      %v473 = vld [vmem:[%s168 + $0x840] sm:$0xff]
      %v474 = vld [vmem:[%s168 + $0x848] sm:$0xff]
      %v475 = vld [vmem:[%s168 + $0x850] sm:$0xff]
      %v476 = vld [vmem:[%s168 + $0x858] sm:$0xff]
      %v477 = vld [vmem:[%s168 + $0x860] sm:$0xff]
      %v478 = vld [vmem:[%s168 + $0x868] sm:$0xff]
      %v479 = vld [vmem:[%s168 + $0x870] sm:$0xff]
      %v480 = vld [vmem:[%s168 + $0x878] sm:$0xff]
      %v481 = vld [vmem:[%s168 + $0x880] sm:$0xff]
      %v482 = vld [vmem:[%s168 + $0x888] sm:$0xff]
      %v483 = vld [vmem:[%s168 + $0x890] sm:$0xff]
      %v484 = vld [vmem:[%s168 + $0x898] sm:$0xff]
      %v485 = vld [vmem:[%s168 + $0x8a0] sm:$0xff]
      %v486 = vld [vmem:[%s168 + $0x8a8] sm:$0xff]
      %v487 = vld [vmem:[%s168 + $0x8b0] sm:$0xff]
      %v488 = vld [vmem:[%s168 + $0x8b8] sm:$0xff]
      %v489 = vld [vmem:[%s168 + $0x8c0] sm:$0xff]
      %v490 = vld [vmem:[%s168 + $0x8c8] sm:$0xff]
      %v491 = vld [vmem:[%s168 + $0x8d0] sm:$0xff]
      %v492 = vld [vmem:[%s168 + $0x8d8] sm:$0xff]
      %v493 = vld [vmem:[%s168 + $0x8e0] sm:$0xff]
      %v494 = vld [vmem:[%s168 + $0x8e8] sm:$0xff]
      %v495 = vld [vmem:[%s168 + $0x8f0] sm:$0xff]
      %v496 = vld [vmem:[%s168 + $0x8f8] sm:$0xff]
      %v497 = vld [vmem:[%s168 + $0x900] sm:$0xff]
      %v498 = vld [vmem:[%s168 + $0x908] sm:$0xff]
      %v499 = vld [vmem:[%s168 + $0x910] sm:$0xff]
      %v500 = vld [vmem:[%s168 + $0x918] sm:$0xff]
      %v501 = vld [vmem:[%s168 + $0x920] sm:$0xff]
      %v502 = vld [vmem:[%s168 + $0x928] sm:$0xff]
      %v503 = vld [vmem:[%s168 + $0x930] sm:$0xff]
      %v504 = vld [vmem:[%s168 + $0x938] sm:$0xff]
      %v505 = vld [vmem:[%s168 + $0x940] sm:$0xff]
      %v506 = vld [vmem:[%s168 + $0x948] sm:$0xff]
      %v507 = vld [vmem:[%s168 + $0x950] sm:$0xff]
      %v508 = vld [vmem:[%s168 + $0x958] sm:$0xff]
      %v509 = vld [vmem:[%s168 + $0x960] sm:$0xff]
      %v510 = vld [vmem:[%s168 + $0x968] sm:$0xff]
      %v511 = vld [vmem:[%s168 + $0x970] sm:$0xff]
      %v512 = vld [vmem:[%s168 + $0x978] sm:$0xff]
      %v513 = vld [vmem:[%s168 + $0x980] sm:$0xff]
      %v514 = vld [vmem:[%s168 + $0x988] sm:$0xff]
      %v515 = vld [vmem:[%s168 + $0x990] sm:$0xff]
      %v516 = vld [vmem:[%s168 + $0x998] sm:$0xff]
      %v517 = vld [vmem:[%s168 + $0x9a0] sm:$0xff]
      %v518 = vld [vmem:[%s168 + $0x9a8] sm:$0xff]
      %v519 = vld [vmem:[%s168 + $0x9b0] sm:$0xff]
      %v520 = vld [vmem:[%s168 + $0x9b8] sm:$0xff]
      %v521 = vld [vmem:[%s168 + $0x9c0] sm:$0xff]
      %v522 = vld [vmem:[%s168 + $0x9c8] sm:$0xff]
      %v523 = vld [vmem:[%s168 + $0x9d0] sm:$0xff]
      %v524 = vld [vmem:[%s168 + $0x9d8] sm:$0xff]
      %v525 = vld [vmem:[%s168 + $0x9e0] sm:$0xff]
      %v526 = vld [vmem:[%s168 + $0x9e8] sm:$0xff]
      %v527 = vld [vmem:[%s168 + $0x9f0] sm:$0xff]
      %v528 = vld [vmem:[%s168 + $0x9f8] sm:$0xff]
      %v529 = vld [vmem:[%s168 + $0xa00] sm:$0xff]
      %v530 = vld [vmem:[%s168 + $0xa08] sm:$0xff]
      %v531 = vld [vmem:[%s168 + $0xa10] sm:$0xff]
      %v532 = vld [vmem:[%s168 + $0xa18] sm:$0xff]
      %v533 = vld [vmem:[%s168 + $0xa20] sm:$0xff]
      %v534 = vld [vmem:[%s168 + $0xa28] sm:$0xff]
      %v535 = vld [vmem:[%s168 + $0xa30] sm:$0xff]
      %v536 = vld [vmem:[%s168 + $0xa38] sm:$0xff]
      %v537 = vld [vmem:[%s168 + $0xa40] sm:$0xff]
      %v538 = vld [vmem:[%s168 + $0xa48] sm:$0xff]
      %v539 = vld [vmem:[%s168 + $0xa50] sm:$0xff]
      %v540 = vld [vmem:[%s168 + $0xa58] sm:$0xff]
      %v541 = vld [vmem:[%s168 + $0xa60] sm:$0xff]
      %v542 = vld [vmem:[%s168 + $0xa68] sm:$0xff]
      %v543 = vld [vmem:[%s168 + $0xa70] sm:$0xff]
      %v544 = vld [vmem:[%s168 + $0xa78] sm:$0xff]
      %v545 = vld [vmem:[%s168 + $0xa80] sm:$0xff]
      %v546 = vld [vmem:[%s168 + $0xa88] sm:$0xff]
      %v547 = vld [vmem:[%s168 + $0xa90] sm:$0xff]
      %v548 = vld [vmem:[%s168 + $0xa98] sm:$0xff]
      %v549 = vld [vmem:[%s168 + $0xaa0] sm:$0xff]
      %v550 = vld [vmem:[%s168 + $0xaa8] sm:$0xff]
      %v551 = vld [vmem:[%s168 + $0xab0] sm:$0xff]
      %v552 = vld [vmem:[%s168 + $0xab8] sm:$0xff]
      %v553 = vld [vmem:[%s168 + $0xac0] sm:$0xff]
      %v554 = vld [vmem:[%s168 + $0xac8] sm:$0xff]
      %v555 = vld [vmem:[%s168 + $0xad0] sm:$0xff]
      %v556 = vld [vmem:[%s168 + $0xad8] sm:$0xff]
      %v557 = vld [vmem:[%s168 + $0xae0] sm:$0xff]
      %v558 = vld [vmem:[%s168 + $0xae8] sm:$0xff]
      %v559 = vld [vmem:[%s168 + $0xaf0] sm:$0xff]
      %v560 = vld [vmem:[%s168 + $0xaf8] sm:$0xff]
      %v561 = vld [vmem:[%s168 + $0xb00] sm:$0xff]
      %v562 = vld [vmem:[%s168 + $0xb08] sm:$0xff]
      %v563 = vld [vmem:[%s168 + $0xb10] sm:$0xff]
      %v564 = vld [vmem:[%s168 + $0xb18] sm:$0xff]
      %v565 = vld [vmem:[%s168 + $0xb20] sm:$0xff]
      %v566 = vld [vmem:[%s168 + $0xb28] sm:$0xff]
      %v567 = vld [vmem:[%s168 + $0xb30] sm:$0xff]
      %v568 = vld [vmem:[%s168 + $0xb38] sm:$0xff]
      %v569 = vld [vmem:[%s168 + $0xb40] sm:$0xff]
      %v570 = vld [vmem:[%s168 + $0xb48] sm:$0xff]
      %v571 = vld [vmem:[%s168 + $0xb50] sm:$0xff]
      %v572 = vld [vmem:[%s168 + $0xb58] sm:$0xff]
      %v573 = vld [vmem:[%s168 + $0xb60] sm:$0xff]
      %v574 = vld [vmem:[%s168 + $0xb68] sm:$0xff]
      %v575 = vld [vmem:[%s168 + $0xb70] sm:$0xff]
      %v576 = vld [vmem:[%s168 + $0xb78] sm:$0xff]
      %v577 = vld [vmem:[%s168 + $0xb80] sm:$0xff]
      %v578 = vld [vmem:[%s168 + $0xb88] sm:$0xff]
      %v579 = vld [vmem:[%s168 + $0xb90] sm:$0xff]
      %v580 = vld [vmem:[%s168 + $0xb98] sm:$0xff]
      %v581 = vld [vmem:[%s168 + $0xba0] sm:$0xff]
      %v582 = vld [vmem:[%s168 + $0xba8] sm:$0xff]
      %v583 = vld [vmem:[%s168 + $0xbb0] sm:$0xff]
      %v584 = vld [vmem:[%s168 + $0xbb8] sm:$0xff]
      %v585 = vld [vmem:[%s168 + $0xbc0] sm:$0xff]
      %v586 = vld [vmem:[%s168 + $0xbc8] sm:$0xff]
      %v587 = vld [vmem:[%s168 + $0xbd0] sm:$0xff]
      %v588 = vld [vmem:[%s168 + $0xbd8] sm:$0xff]
      %v589 = vld [vmem:[%s168 + $0xbe0] sm:$0xff]
      %v590 = vld [vmem:[%s168 + $0xbe8] sm:$0xff]
      %v591 = vld [vmem:[%s168 + $0xbf0] sm:$0xff]
      %v592 = vld [vmem:[%s168 + $0xbf8] sm:$0xff]
      %v593 = vld [vmem:[%s168 + $0xc00] sm:$0xff]
      %v594 = vld [vmem:[%s168 + $0xc08] sm:$0xff]
      %v595 = vld [vmem:[%s168 + $0xc10] sm:$0xff]
      %v596 = vld [vmem:[%s168 + $0xc18] sm:$0xff]
      %v597 = vld [vmem:[%s168 + $0xc20] sm:$0xff]
      %v598 = vld [vmem:[%s168 + $0xc28] sm:$0xff]
      %v599 = vld [vmem:[%s168 + $0xc30] sm:$0xff]
      %v600 = vld [vmem:[%s168 + $0xc38] sm:$0xff]
      %v601 = vld [vmem:[%s168 + $0xc40] sm:$0xff]
      %v602 = vld [vmem:[%s168 + $0xc48] sm:$0xff]
      %v603 = vld [vmem:[%s168 + $0xc50] sm:$0xff]
      %v604 = vld [vmem:[%s168 + $0xc58] sm:$0xff]
      %v605 = vld [vmem:[%s168 + $0xc60] sm:$0xff]
      %v606 = vld [vmem:[%s168 + $0xc68] sm:$0xff]
      %v607 = vld [vmem:[%s168 + $0xc70] sm:$0xff]
      %v608 = vld [vmem:[%s168 + $0xc78] sm:$0xff]
      %v609 = vld [vmem:[%s168 + $0xc80] sm:$0xff]
      %v610 = vld [vmem:[%s168 + $0xc88] sm:$0xff]
      %v611 = vld [vmem:[%s168 + $0xc90] sm:$0xff]
      %v612 = vld [vmem:[%s168 + $0xc98] sm:$0xff]
      %v613 = vld [vmem:[%s168 + $0xca0] sm:$0xff]
      %v614 = vld [vmem:[%s168 + $0xca8] sm:$0xff]
      %v615 = vld [vmem:[%s168 + $0xcb0] sm:$0xff]
      %v616 = vld [vmem:[%s168 + $0xcb8] sm:$0xff]
      %v617 = vld [vmem:[%s168 + $0xcc0] sm:$0xff]
      %v618 = vld [vmem:[%s168 + $0xcc8] sm:$0xff]
      %v619 = vld [vmem:[%s168 + $0xcd0] sm:$0xff]
      %v620 = vld [vmem:[%s168 + $0xcd8] sm:$0xff]
      %v621 = vld [vmem:[%s168 + $0xce0] sm:$0xff]
      %v622 = vld [vmem:[%s168 + $0xce8] sm:$0xff]
      %v623 = vld [vmem:[%s168 + $0xcf0] sm:$0xff]
      %v624 = vld [vmem:[%s168 + $0xcf8] sm:$0xff]
      %v625 = vld [vmem:[%s168 + $0xd00] sm:$0xff]
      %v626 = vld [vmem:[%s168 + $0xd08] sm:$0xff]
      %v627 = vld [vmem:[%s168 + $0xd10] sm:$0xff]
      %v628 = vld [vmem:[%s168 + $0xd18] sm:$0xff]
      %v629 = vld [vmem:[%s168 + $0xd20] sm:$0xff]
      %v630 = vld [vmem:[%s168 + $0xd28] sm:$0xff]
      %v631 = vld [vmem:[%s168 + $0xd30] sm:$0xff]
      %v632 = vld [vmem:[%s168 + $0xd38] sm:$0xff]
      %v633 = vld [vmem:[%s168 + $0xd40] sm:$0xff]
      %v634 = vld [vmem:[%s168 + $0xd48] sm:$0xff]
      %v635 = vld [vmem:[%s168 + $0xd50] sm:$0xff]
      %v636 = vld [vmem:[%s168 + $0xd58] sm:$0xff]
      %v637 = vld [vmem:[%s168 + $0xd60] sm:$0xff]
      %v638 = vld [vmem:[%s168 + $0xd68] sm:$0xff]
      %v639 = vld [vmem:[%s168 + $0xd70] sm:$0xff]
      %v640 = vld [vmem:[%s168 + $0xd78] sm:$0xff]
      %v641 = vld [vmem:[%s168 + $0xd80] sm:$0xff]
      %v642 = vld [vmem:[%s168 + $0xd88] sm:$0xff]
      %v643 = vld [vmem:[%s168 + $0xd90] sm:$0xff]
      %v644 = vld [vmem:[%s168 + $0xd98] sm:$0xff]
      %v645 = vld [vmem:[%s168 + $0xda0] sm:$0xff]
      %v646 = vld [vmem:[%s168 + $0xda8] sm:$0xff]
      %v647 = vld [vmem:[%s168 + $0xdb0] sm:$0xff]
      %v648 = vld [vmem:[%s168 + $0xdb8] sm:$0xff]
      %v649 = vld [vmem:[%s168 + $0xdc0] sm:$0xff]
      %v650 = vld [vmem:[%s168 + $0xdc8] sm:$0xff]
      %v651 = vld [vmem:[%s168 + $0xdd0] sm:$0xff]
      %v652 = vld [vmem:[%s168 + $0xdd8] sm:$0xff]
      %v653 = vld [vmem:[%s168 + $0xde0] sm:$0xff]
      %v654 = vld [vmem:[%s168 + $0xde8] sm:$0xff]
      %v655 = vld [vmem:[%s168 + $0xdf0] sm:$0xff]
      %v656 = vld [vmem:[%s168 + $0xdf8] sm:$0xff]
      %v657 = vld [vmem:[%s168 + $0xe00] sm:$0xff]
      %v658 = vld [vmem:[%s168 + $0xe08] sm:$0xff]
      %v659 = vld [vmem:[%s168 + $0xe10] sm:$0xff]
      %v660 = vld [vmem:[%s168 + $0xe18] sm:$0xff]
      %v661 = vld [vmem:[%s168 + $0xe20] sm:$0xff]
      %v662 = vld [vmem:[%s168 + $0xe28] sm:$0xff]
      %v663 = vld [vmem:[%s168 + $0xe30] sm:$0xff]
      %v664 = vld [vmem:[%s168 + $0xe38] sm:$0xff]
      %v665 = vld [vmem:[%s168 + $0xe40] sm:$0xff]
      %v666 = vld [vmem:[%s168 + $0xe48] sm:$0xff]
      %v667 = vld [vmem:[%s168 + $0xe50] sm:$0xff]
      %v668 = vld [vmem:[%s168 + $0xe58] sm:$0xff]
      %v669 = vld [vmem:[%s168 + $0xe60] sm:$0xff]
      %v670 = vld [vmem:[%s168 + $0xe68] sm:$0xff]
      %v671 = vld [vmem:[%s168 + $0xe70] sm:$0xff]
      %v672 = vld [vmem:[%s168 + $0xe78] sm:$0xff]
      %v673 = vld [vmem:[%s168 + $0xe80] sm:$0xff]
      %v674 = vld [vmem:[%s168 + $0xe88] sm:$0xff]
      %v675 = vld [vmem:[%s168 + $0xe90] sm:$0xff]
      %v676 = vld [vmem:[%s168 + $0xe98] sm:$0xff]
      %v677 = vld [vmem:[%s168 + $0xea0] sm:$0xff]
      %v678 = vld [vmem:[%s168 + $0xea8] sm:$0xff]
      %v679 = vld [vmem:[%s168 + $0xeb0] sm:$0xff]
      %v680 = vld [vmem:[%s168 + $0xeb8] sm:$0xff]
      %v681 = vld [vmem:[%s168 + $0xec0] sm:$0xff]
      %v682 = vld [vmem:[%s168 + $0xec8] sm:$0xff]
      %v683 = vld [vmem:[%s168 + $0xed0] sm:$0xff]
      %v684 = vld [vmem:[%s168 + $0xed8] sm:$0xff]
      %v685 = vld [vmem:[%s168 + $0xee0] sm:$0xff]
      %v686 = vld [vmem:[%s168 + $0xee8] sm:$0xff]
      %v687 = vld [vmem:[%s168 + $0xef0] sm:$0xff]
      %v688 = vld [vmem:[%s168 + $0xef8] sm:$0xff]
      %v689 = vld [vmem:[%s168 + $0xf00] sm:$0xff]
      %v690 = vld [vmem:[%s168 + $0xf08] sm:$0xff]
      %v691 = vld [vmem:[%s168 + $0xf10] sm:$0xff]
      %v692 = vld [vmem:[%s168 + $0xf18] sm:$0xff]
      %v693 = vld [vmem:[%s168 + $0xf20] sm:$0xff]
      %v694 = vld [vmem:[%s168 + $0xf28] sm:$0xff]
      %v695 = vld [vmem:[%s168 + $0xf30] sm:$0xff]
      %v696 = vld [vmem:[%s168 + $0xf38] sm:$0xff]
      %v697 = vld [vmem:[%s168 + $0xf40] sm:$0xff]
      %v698 = vld [vmem:[%s168 + $0xf48] sm:$0xff]
      %v699 = vld [vmem:[%s168 + $0xf50] sm:$0xff]
      %v700 = vld [vmem:[%s168 + $0xf58] sm:$0xff]
      %v701 = vld [vmem:[%s168 + $0xf60] sm:$0xff]
      %v702 = vld [vmem:[%s168 + $0xf68] sm:$0xff]
      %v703 = vld [vmem:[%s168 + $0xf70] sm:$0xff]
      %v704 = vld [vmem:[%s168 + $0xf78] sm:$0xff]
      %v705 = vld [vmem:[%s168 + $0xf80] sm:$0xff]
      %v706 = vld [vmem:[%s168 + $0xf88] sm:$0xff]
      %v707 = vld [vmem:[%s168 + $0xf90] sm:$0xff]
      %v708 = vld [vmem:[%s168 + $0xf98] sm:$0xff]
      %v709 = vld [vmem:[%s168 + $0xfa0] sm:$0xff]
      %v710 = vld [vmem:[%s168 + $0xfa8] sm:$0xff]
      %v711 = vld [vmem:[%s168 + $0xfb0] sm:$0xff]
      %v712 = vld [vmem:[%s168 + $0xfb8] sm:$0xff]
      %v713 = vld [vmem:[%s168 + $0xfc0] sm:$0xff]
      %v714 = vld [vmem:[%s168 + $0xfc8] sm:$0xff]
      %v715 = vld [vmem:[%s168 + $0xfd0] sm:$0xff]
      %v716 = vld [vmem:[%s168 + $0xfd8] sm:$0xff]
      %v717 = vld [vmem:[%s168 + $0xfe0] sm:$0xff]
      %v718 = vld [vmem:[%s168 + $0xfe8] sm:$0xff]
      %v719 = vld [vmem:[%s168 + $0xff0] sm:$0xff]
      %v720 = vld [vmem:[%s168 + $0xff8] sm:$0xff]
      %v721 = vld [vmem:[%s172] sm:$0xff]
      %v723 = vlaneseq
      %v724 = vshrl.u32 %v723, 7
      %v725 = vsub.s32 0, %v724
      %v726 = vrot.slane %v721, %v725
      %v727 = vlaneseq
      %v728 = vshrl.u32 %v727, 7
      %v729 = vsub.s32 1, %v728
      %v730 = vrot.slane %v721, %v729
      %v731 = vlaneseq
      %v732 = vshrl.u32 %v731, 7
      %v733 = vsub.s32 2, %v732
      %v734 = vrot.slane %v721, %v733
      %v735 = vlaneseq
      %v736 = vshrl.u32 %v735, 7
      %v737 = vsub.s32 3, %v736
      %v738 = vrot.slane %v721, %v737
      %v739 = vlaneseq
      %v740 = vshrl.u32 %v739, 7
      %v741 = vsub.s32 4, %v740
      %v742 = vrot.slane %v721, %v741
      %v743 = vlaneseq
      %v744 = vshrl.u32 %v743, 7
      %v745 = vsub.s32 5, %v744
      %v746 = vrot.slane %v721, %v745
      %v747 = vlaneseq
      %v748 = vshrl.u32 %v747, 7
      %v749 = vsub.s32 6, %v748
      %v750 = vrot.slane %v721, %v749
      %v751 = vlaneseq
      %v752 = vshrl.u32 %v751, 7
      %v753 = vsub.s32 7, %v752
      %v754 = vrot.slane %v721, %v753
      %v1275 = vunpack.c.l.b16 %v209
      %v1276 = vunpack.c.h.b16 %v209
      %v1277 = vunpack.c.l.b16 %v210
      %v1278 = vunpack.c.h.b16 %v210
      %v1279 = vunpack.c.l.b16 %v211
      %v1280 = vunpack.c.h.b16 %v211
      %v1281 = vunpack.c.l.b16 %v212
      %v1282 = vunpack.c.h.b16 %v212
      %v1283 = vunpack.c.l.b16 %v213
      %v1284 = vunpack.c.h.b16 %v213
      %v1285 = vunpack.c.l.b16 %v214
      %v1286 = vunpack.c.h.b16 %v214
      %v1287 = vunpack.c.l.b16 %v215
      %v1288 = vunpack.c.h.b16 %v215
      %v1289 = vunpack.c.l.b16 %v216
      %v1290 = vunpack.c.h.b16 %v216
      %v1291 = vunpack.c.l.b16 %v217
      %v1292 = vunpack.c.h.b16 %v217
      %v1293 = vunpack.c.l.b16 %v218
      %v1294 = vunpack.c.h.b16 %v218
      %v1295 = vunpack.c.l.b16 %v219
      %v1296 = vunpack.c.h.b16 %v219
      %v1297 = vunpack.c.l.b16 %v220
      %v1298 = vunpack.c.h.b16 %v220
      %v1299 = vunpack.c.l.b16 %v221
      %v1300 = vunpack.c.h.b16 %v221
      %v1301 = vunpack.c.l.b16 %v222
      %v1302 = vunpack.c.h.b16 %v222
      %v1303 = vunpack.c.l.b16 %v223
      %v1304 = vunpack.c.h.b16 %v223
      %v1305 = vunpack.c.l.b16 %v224
      %v1306 = vunpack.c.h.b16 %v224
      %v1307 = vunpack.c.l.b16 %v225
      %v1308 = vunpack.c.h.b16 %v225
      %v1309 = vunpack.c.l.b16 %v226
      %v1310 = vunpack.c.h.b16 %v226
      %v1311 = vunpack.c.l.b16 %v227
      %v1312 = vunpack.c.h.b16 %v227
      %v1313 = vunpack.c.l.b16 %v228
      %v1314 = vunpack.c.h.b16 %v228
      %v1315 = vunpack.c.l.b16 %v229
      %v1316 = vunpack.c.h.b16 %v229
      %v1317 = vunpack.c.l.b16 %v230
      %v1318 = vunpack.c.h.b16 %v230
      %v1319 = vunpack.c.l.b16 %v231
      %v1320 = vunpack.c.h.b16 %v231
      %v1321 = vunpack.c.l.b16 %v232
      %v1322 = vunpack.c.h.b16 %v232
      %v1323 = vunpack.c.l.b16 %v233
      %v1324 = vunpack.c.h.b16 %v233
      %v1325 = vunpack.c.l.b16 %v234
      %v1326 = vunpack.c.h.b16 %v234
      %v1327 = vunpack.c.l.b16 %v235
      %v1328 = vunpack.c.h.b16 %v235
      %v1329 = vunpack.c.l.b16 %v236
      %v1330 = vunpack.c.h.b16 %v236
      %v1331 = vunpack.c.l.b16 %v237
      %v1332 = vunpack.c.h.b16 %v237
      %v1333 = vunpack.c.l.b16 %v238
      %v1334 = vunpack.c.h.b16 %v238
      %v1335 = vunpack.c.l.b16 %v239
      %v1336 = vunpack.c.h.b16 %v239
      %v1337 = vunpack.c.l.b16 %v240
      %v1338 = vunpack.c.h.b16 %v240
      %v1339 = vunpack.c.l.b16 %v241
      %v1340 = vunpack.c.h.b16 %v241
      %v1341 = vunpack.c.l.b16 %v242
      %v1342 = vunpack.c.h.b16 %v242
      %v1343 = vunpack.c.l.b16 %v243
      %v1344 = vunpack.c.h.b16 %v243
      %v1345 = vunpack.c.l.b16 %v244
      %v1346 = vunpack.c.h.b16 %v244
      %v1347 = vunpack.c.l.b16 %v245
      %v1348 = vunpack.c.h.b16 %v245
      %v1349 = vunpack.c.l.b16 %v246
      %v1350 = vunpack.c.h.b16 %v246
      %v1351 = vunpack.c.l.b16 %v247
      %v1352 = vunpack.c.h.b16 %v247
      %v1353 = vunpack.c.l.b16 %v248
      %v1354 = vunpack.c.h.b16 %v248
      %v1355 = vunpack.c.l.b16 %v249
      %v1356 = vunpack.c.h.b16 %v249
      %v1357 = vunpack.c.l.b16 %v250
      %v1358 = vunpack.c.h.b16 %v250
      %v1359 = vunpack.c.l.b16 %v251
      %v1360 = vunpack.c.h.b16 %v251
      %v1361 = vunpack.c.l.b16 %v252
      %v1362 = vunpack.c.h.b16 %v252
      %v1363 = vunpack.c.l.b16 %v253
      %v1364 = vunpack.c.h.b16 %v253
      %v1365 = vunpack.c.l.b16 %v254
      %v1366 = vunpack.c.h.b16 %v254
      %v1367 = vunpack.c.l.b16 %v255
      %v1368 = vunpack.c.h.b16 %v255
      %v1369 = vunpack.c.l.b16 %v256
      %v1370 = vunpack.c.h.b16 %v256
      %v1371 = vunpack.c.l.b16 %v257
      %v1372 = vunpack.c.h.b16 %v257
      %v1373 = vunpack.c.l.b16 %v258
      %v1374 = vunpack.c.h.b16 %v258
      %v1375 = vunpack.c.l.b16 %v259
      %v1376 = vunpack.c.h.b16 %v259
      %v1377 = vunpack.c.l.b16 %v260
      %v1378 = vunpack.c.h.b16 %v260
      %v1379 = vunpack.c.l.b16 %v261
      %v1380 = vunpack.c.h.b16 %v261
      %v1381 = vunpack.c.l.b16 %v262
      %v1382 = vunpack.c.h.b16 %v262
      %v1383 = vunpack.c.l.b16 %v263
      %v1384 = vunpack.c.h.b16 %v263
      %v1385 = vunpack.c.l.b16 %v264
      %v1386 = vunpack.c.h.b16 %v264
      %v1387 = vunpack.c.l.b16 %v265
      %v1388 = vunpack.c.h.b16 %v265
      %v1389 = vunpack.c.l.b16 %v266
      %v1390 = vunpack.c.h.b16 %v266
      %v1391 = vunpack.c.l.b16 %v267
      %v1392 = vunpack.c.h.b16 %v267
      %v1393 = vunpack.c.l.b16 %v268
      %v1394 = vunpack.c.h.b16 %v268
      %v1395 = vunpack.c.l.b16 %v269
      %v1396 = vunpack.c.h.b16 %v269
      %v1397 = vunpack.c.l.b16 %v270
      %v1398 = vunpack.c.h.b16 %v270
      %v1399 = vunpack.c.l.b16 %v271
      %v1400 = vunpack.c.h.b16 %v271
      %v1401 = vunpack.c.l.b16 %v272
      %v1402 = vunpack.c.h.b16 %v272
      %v1403 = vunpack.c.l.b16 %v273
      %v1404 = vunpack.c.h.b16 %v273
      %v1405 = vunpack.c.l.b16 %v274
      %v1406 = vunpack.c.h.b16 %v274
      %v1407 = vunpack.c.l.b16 %v275
      %v1408 = vunpack.c.h.b16 %v275
      %v1409 = vunpack.c.l.b16 %v276
      %v1410 = vunpack.c.h.b16 %v276
      %v1411 = vunpack.c.l.b16 %v277
      %v1412 = vunpack.c.h.b16 %v277
      %v1413 = vunpack.c.l.b16 %v278
      %v1414 = vunpack.c.h.b16 %v278
      %v1415 = vunpack.c.l.b16 %v279
      %v1416 = vunpack.c.h.b16 %v279
      %v1417 = vunpack.c.l.b16 %v280
      %v1418 = vunpack.c.h.b16 %v280
      %v1419 = vunpack.c.l.b16 %v281
      %v1420 = vunpack.c.h.b16 %v281
      %v1421 = vunpack.c.l.b16 %v282
      %v1422 = vunpack.c.h.b16 %v282
      %v1423 = vunpack.c.l.b16 %v283
      %v1424 = vunpack.c.h.b16 %v283
      %v1425 = vunpack.c.l.b16 %v284
      %v1426 = vunpack.c.h.b16 %v284
      %v1427 = vunpack.c.l.b16 %v285
      %v1428 = vunpack.c.h.b16 %v285
      %v1429 = vunpack.c.l.b16 %v286
      %v1430 = vunpack.c.h.b16 %v286
      %v1431 = vunpack.c.l.b16 %v287
      %v1432 = vunpack.c.h.b16 %v287
      %v1433 = vunpack.c.l.b16 %v288
      %v1434 = vunpack.c.h.b16 %v288
      %v1435 = vunpack.c.l.b16 %v289
      %v1436 = vunpack.c.h.b16 %v289
      %v1437 = vunpack.c.l.b16 %v290
      %v1438 = vunpack.c.h.b16 %v290
      %v1439 = vunpack.c.l.b16 %v291
      %v1440 = vunpack.c.h.b16 %v291
      %v1441 = vunpack.c.l.b16 %v292
      %v1442 = vunpack.c.h.b16 %v292
      %v1443 = vunpack.c.l.b16 %v293
      %v1444 = vunpack.c.h.b16 %v293
      %v1445 = vunpack.c.l.b16 %v294
      %v1446 = vunpack.c.h.b16 %v294
      %v1447 = vunpack.c.l.b16 %v295
      %v1448 = vunpack.c.h.b16 %v295
      %v1449 = vunpack.c.l.b16 %v296
      %v1450 = vunpack.c.h.b16 %v296
      %v1451 = vunpack.c.l.b16 %v297
      %v1452 = vunpack.c.h.b16 %v297
      %v1453 = vunpack.c.l.b16 %v298
      %v1454 = vunpack.c.h.b16 %v298
      %v1455 = vunpack.c.l.b16 %v299
      %v1456 = vunpack.c.h.b16 %v299
      %v1457 = vunpack.c.l.b16 %v300
      %v1458 = vunpack.c.h.b16 %v300
      %v1459 = vunpack.c.l.b16 %v301
      %v1460 = vunpack.c.h.b16 %v301
      %v1461 = vunpack.c.l.b16 %v302
      %v1462 = vunpack.c.h.b16 %v302
      %v1463 = vunpack.c.l.b16 %v303
      %v1464 = vunpack.c.h.b16 %v303
      %v1465 = vunpack.c.l.b16 %v304
      %v1466 = vunpack.c.h.b16 %v304
      %v1467 = vunpack.c.l.b16 %v305
      %v1468 = vunpack.c.h.b16 %v305
      %v1469 = vunpack.c.l.b16 %v306
      %v1470 = vunpack.c.h.b16 %v306
      %v1471 = vunpack.c.l.b16 %v307
      %v1472 = vunpack.c.h.b16 %v307
      %v1473 = vunpack.c.l.b16 %v308
      %v1474 = vunpack.c.h.b16 %v308
      %v1475 = vunpack.c.l.b16 %v309
      %v1476 = vunpack.c.h.b16 %v309
      %v1477 = vunpack.c.l.b16 %v310
      %v1478 = vunpack.c.h.b16 %v310
      %v1479 = vunpack.c.l.b16 %v311
      %v1480 = vunpack.c.h.b16 %v311
      %v1481 = vunpack.c.l.b16 %v312
      %v1482 = vunpack.c.h.b16 %v312
      %v1483 = vunpack.c.l.b16 %v313
      %v1484 = vunpack.c.h.b16 %v313
      %v1485 = vunpack.c.l.b16 %v314
      %v1486 = vunpack.c.h.b16 %v314
      %v1487 = vunpack.c.l.b16 %v315
      %v1488 = vunpack.c.h.b16 %v315
      %v1489 = vunpack.c.l.b16 %v316
      %v1490 = vunpack.c.h.b16 %v316
      %v1491 = vunpack.c.l.b16 %v317
      %v1492 = vunpack.c.h.b16 %v317
      %v1493 = vunpack.c.l.b16 %v318
      %v1494 = vunpack.c.h.b16 %v318
      %v1495 = vunpack.c.l.b16 %v319
      %v1496 = vunpack.c.h.b16 %v319
      %v1497 = vunpack.c.l.b16 %v320
      %v1498 = vunpack.c.h.b16 %v320
      %v1499 = vunpack.c.l.b16 %v321
      %v1500 = vunpack.c.h.b16 %v321
      %v1501 = vunpack.c.l.b16 %v322
      %v1502 = vunpack.c.h.b16 %v322
      %v1503 = vunpack.c.l.b16 %v323
      %v1504 = vunpack.c.h.b16 %v323
      %v1505 = vunpack.c.l.b16 %v324
      %v1506 = vunpack.c.h.b16 %v324
      %v1507 = vunpack.c.l.b16 %v325
      %v1508 = vunpack.c.h.b16 %v325
      %v1509 = vunpack.c.l.b16 %v326
      %v1510 = vunpack.c.h.b16 %v326
      %v1511 = vunpack.c.l.b16 %v327
      %v1512 = vunpack.c.h.b16 %v327
      %v1513 = vunpack.c.l.b16 %v328
      %v1514 = vunpack.c.h.b16 %v328
      %v1515 = vunpack.c.l.b16 %v329
      %v1516 = vunpack.c.h.b16 %v329
      %v1517 = vunpack.c.l.b16 %v330
      %v1518 = vunpack.c.h.b16 %v330
      %v1519 = vunpack.c.l.b16 %v331
      %v1520 = vunpack.c.h.b16 %v331
      %v1521 = vunpack.c.l.b16 %v332
      %v1522 = vunpack.c.h.b16 %v332
      %v1523 = vunpack.c.l.b16 %v333
      %v1524 = vunpack.c.h.b16 %v333
      %v1525 = vunpack.c.l.b16 %v334
      %v1526 = vunpack.c.h.b16 %v334
      %v1527 = vunpack.c.l.b16 %v335
      %v1528 = vunpack.c.h.b16 %v335
      %v1529 = vunpack.c.l.b16 %v336
      %v1530 = vunpack.c.h.b16 %v336
      %v1531 = vunpack.c.l.b16 %v337
      %v1532 = vunpack.c.h.b16 %v337
      %v1533 = vunpack.c.l.b16 %v338
      %v1534 = vunpack.c.h.b16 %v338
      %v1535 = vunpack.c.l.b16 %v339
      %v1536 = vunpack.c.h.b16 %v339
      %v1537 = vunpack.c.l.b16 %v340
      %v1538 = vunpack.c.h.b16 %v340
      %v1539 = vunpack.c.l.b16 %v341
      %v1540 = vunpack.c.h.b16 %v341
      %v1541 = vunpack.c.l.b16 %v342
      %v1542 = vunpack.c.h.b16 %v342
      %v1543 = vunpack.c.l.b16 %v343
      %v1544 = vunpack.c.h.b16 %v343
      %v1545 = vunpack.c.l.b16 %v344
      %v1546 = vunpack.c.h.b16 %v344
      %v1547 = vunpack.c.l.b16 %v345
      %v1548 = vunpack.c.h.b16 %v345
      %v1549 = vunpack.c.l.b16 %v346
      %v1550 = vunpack.c.h.b16 %v346
      %v1551 = vunpack.c.l.b16 %v347
      %v1552 = vunpack.c.h.b16 %v347
      %v1553 = vunpack.c.l.b16 %v348
      %v1554 = vunpack.c.h.b16 %v348
      %v1555 = vunpack.c.l.b16 %v349
      %v1556 = vunpack.c.h.b16 %v349
      %v1557 = vunpack.c.l.b16 %v350
      %v1558 = vunpack.c.h.b16 %v350
      %v1559 = vunpack.c.l.b16 %v351
      %v1560 = vunpack.c.h.b16 %v351
      %v1561 = vunpack.c.l.b16 %v352
      %v1562 = vunpack.c.h.b16 %v352
      %v1563 = vunpack.c.l.b16 %v353
      %v1564 = vunpack.c.h.b16 %v353
      %v1565 = vunpack.c.l.b16 %v354
      %v1566 = vunpack.c.h.b16 %v354
      %v1567 = vunpack.c.l.b16 %v355
      %v1568 = vunpack.c.h.b16 %v355
      %v1569 = vunpack.c.l.b16 %v356
      %v1570 = vunpack.c.h.b16 %v356
      %v1571 = vunpack.c.l.b16 %v357
      %v1572 = vunpack.c.h.b16 %v357
      %v1573 = vunpack.c.l.b16 %v358
      %v1574 = vunpack.c.h.b16 %v358
      %v1575 = vunpack.c.l.b16 %v359
      %v1576 = vunpack.c.h.b16 %v359
      %v1577 = vunpack.c.l.b16 %v360
      %v1578 = vunpack.c.h.b16 %v360
      %v1579 = vunpack.c.l.b16 %v361
      %v1580 = vunpack.c.h.b16 %v361
      %v1581 = vunpack.c.l.b16 %v362
      %v1582 = vunpack.c.h.b16 %v362
      %v1583 = vunpack.c.l.b16 %v363
      %v1584 = vunpack.c.h.b16 %v363
      %v1585 = vunpack.c.l.b16 %v364
      %v1586 = vunpack.c.h.b16 %v364
      %v1587 = vunpack.c.l.b16 %v365
      %v1588 = vunpack.c.h.b16 %v365
      %v1589 = vunpack.c.l.b16 %v366
      %v1590 = vunpack.c.h.b16 %v366
      %v1591 = vunpack.c.l.b16 %v367
      %v1592 = vunpack.c.h.b16 %v367
      %v1593 = vunpack.c.l.b16 %v368
      %v1594 = vunpack.c.h.b16 %v368
      %v1595 = vunpack.c.l.b16 %v369
      %v1596 = vunpack.c.h.b16 %v369
      %v1597 = vunpack.c.l.b16 %v370
      %v1598 = vunpack.c.h.b16 %v370
      %v1599 = vunpack.c.l.b16 %v371
      %v1600 = vunpack.c.h.b16 %v371
      %v1601 = vunpack.c.l.b16 %v372
      %v1602 = vunpack.c.h.b16 %v372
      %v1603 = vunpack.c.l.b16 %v373
      %v1604 = vunpack.c.h.b16 %v373
      %v1605 = vunpack.c.l.b16 %v374
      %v1606 = vunpack.c.h.b16 %v374
      %v1607 = vunpack.c.l.b16 %v375
      %v1608 = vunpack.c.h.b16 %v375
      %v1609 = vunpack.c.l.b16 %v376
      %v1610 = vunpack.c.h.b16 %v376
      %v1611 = vunpack.c.l.b16 %v377
      %v1612 = vunpack.c.h.b16 %v377
      %v1613 = vunpack.c.l.b16 %v378
      %v1614 = vunpack.c.h.b16 %v378
      %v1615 = vunpack.c.l.b16 %v379
      %v1616 = vunpack.c.h.b16 %v379
      %v1617 = vunpack.c.l.b16 %v380
      %v1618 = vunpack.c.h.b16 %v380
      %v1619 = vunpack.c.l.b16 %v381
      %v1620 = vunpack.c.h.b16 %v381
      %v1621 = vunpack.c.l.b16 %v382
      %v1622 = vunpack.c.h.b16 %v382
      %v1623 = vunpack.c.l.b16 %v383
      %v1624 = vunpack.c.h.b16 %v383
      %v1625 = vunpack.c.l.b16 %v384
      %v1626 = vunpack.c.h.b16 %v384
      %v1627 = vunpack.c.l.b16 %v385
      %v1628 = vunpack.c.h.b16 %v385
      %v1629 = vunpack.c.l.b16 %v386
      %v1630 = vunpack.c.h.b16 %v386
      %v1631 = vunpack.c.l.b16 %v387
      %v1632 = vunpack.c.h.b16 %v387
      %v1633 = vunpack.c.l.b16 %v388
      %v1634 = vunpack.c.h.b16 %v388
      %v1635 = vunpack.c.l.b16 %v389
      %v1636 = vunpack.c.h.b16 %v389
      %v1637 = vunpack.c.l.b16 %v390
      %v1638 = vunpack.c.h.b16 %v390
      %v1639 = vunpack.c.l.b16 %v391
      %v1640 = vunpack.c.h.b16 %v391
      %v1641 = vunpack.c.l.b16 %v392
      %v1642 = vunpack.c.h.b16 %v392
      %v1643 = vunpack.c.l.b16 %v393
      %v1644 = vunpack.c.h.b16 %v393
      %v1645 = vunpack.c.l.b16 %v394
      %v1646 = vunpack.c.h.b16 %v394
      %v1647 = vunpack.c.l.b16 %v395
      %v1648 = vunpack.c.h.b16 %v395
      %v1649 = vunpack.c.l.b16 %v396
      %v1650 = vunpack.c.h.b16 %v396
      %v1651 = vunpack.c.l.b16 %v397
      %v1652 = vunpack.c.h.b16 %v397
      %v1653 = vunpack.c.l.b16 %v398
      %v1654 = vunpack.c.h.b16 %v398
      %v1655 = vunpack.c.l.b16 %v399
      %v1656 = vunpack.c.h.b16 %v399
      %v1657 = vunpack.c.l.b16 %v400
      %v1658 = vunpack.c.h.b16 %v400
      %v1659 = vunpack.c.l.b16 %v401
      %v1660 = vunpack.c.h.b16 %v401
      %v1661 = vunpack.c.l.b16 %v402
      %v1662 = vunpack.c.h.b16 %v402
      %v1663 = vunpack.c.l.b16 %v403
      %v1664 = vunpack.c.h.b16 %v403
      %v1665 = vunpack.c.l.b16 %v404
      %v1666 = vunpack.c.h.b16 %v404
      %v1667 = vunpack.c.l.b16 %v405
      %v1668 = vunpack.c.h.b16 %v405
      %v1669 = vunpack.c.l.b16 %v406
      %v1670 = vunpack.c.h.b16 %v406
      %v1671 = vunpack.c.l.b16 %v407
      %v1672 = vunpack.c.h.b16 %v407
      %v1673 = vunpack.c.l.b16 %v408
      %v1674 = vunpack.c.h.b16 %v408
      %v1675 = vunpack.c.l.b16 %v409
      %v1676 = vunpack.c.h.b16 %v409
      %v1677 = vunpack.c.l.b16 %v410
      %v1678 = vunpack.c.h.b16 %v410
      %v1679 = vunpack.c.l.b16 %v411
      %v1680 = vunpack.c.h.b16 %v411
      %v1681 = vunpack.c.l.b16 %v412
      %v1682 = vunpack.c.h.b16 %v412
      %v1683 = vunpack.c.l.b16 %v413
      %v1684 = vunpack.c.h.b16 %v413
      %v1685 = vunpack.c.l.b16 %v414
      %v1686 = vunpack.c.h.b16 %v414
      %v1687 = vunpack.c.l.b16 %v415
      %v1688 = vunpack.c.h.b16 %v415
      %v1689 = vunpack.c.l.b16 %v416
      %v1690 = vunpack.c.h.b16 %v416
      %v1691 = vunpack.c.l.b16 %v417
      %v1692 = vunpack.c.h.b16 %v417
      %v1693 = vunpack.c.l.b16 %v418
      %v1694 = vunpack.c.h.b16 %v418
      %v1695 = vunpack.c.l.b16 %v419
      %v1696 = vunpack.c.h.b16 %v419
      %v1697 = vunpack.c.l.b16 %v420
      %v1698 = vunpack.c.h.b16 %v420
      %v1699 = vunpack.c.l.b16 %v421
      %v1700 = vunpack.c.h.b16 %v421
      %v1701 = vunpack.c.l.b16 %v422
      %v1702 = vunpack.c.h.b16 %v422
      %v1703 = vunpack.c.l.b16 %v423
      %v1704 = vunpack.c.h.b16 %v423
      %v1705 = vunpack.c.l.b16 %v424
      %v1706 = vunpack.c.h.b16 %v424
      %v1707 = vunpack.c.l.b16 %v425
      %v1708 = vunpack.c.h.b16 %v425
      %v1709 = vunpack.c.l.b16 %v426
      %v1710 = vunpack.c.h.b16 %v426
      %v1711 = vunpack.c.l.b16 %v427
      %v1712 = vunpack.c.h.b16 %v427
      %v1713 = vunpack.c.l.b16 %v428
      %v1714 = vunpack.c.h.b16 %v428
      %v1715 = vunpack.c.l.b16 %v429
      %v1716 = vunpack.c.h.b16 %v429
      %v1717 = vunpack.c.l.b16 %v430
      %v1718 = vunpack.c.h.b16 %v430
      %v1719 = vunpack.c.l.b16 %v431
      %v1720 = vunpack.c.h.b16 %v431
      %v1721 = vunpack.c.l.b16 %v432
      %v1722 = vunpack.c.h.b16 %v432
      %v1723 = vunpack.c.l.b16 %v433
      %v1724 = vunpack.c.h.b16 %v433
      %v1725 = vunpack.c.l.b16 %v434
      %v1726 = vunpack.c.h.b16 %v434
      %v1727 = vunpack.c.l.b16 %v435
      %v1728 = vunpack.c.h.b16 %v435
      %v1729 = vunpack.c.l.b16 %v436
      %v1730 = vunpack.c.h.b16 %v436
      %v1731 = vunpack.c.l.b16 %v437
      %v1732 = vunpack.c.h.b16 %v437
      %v1733 = vunpack.c.l.b16 %v438
      %v1734 = vunpack.c.h.b16 %v438
      %v1735 = vunpack.c.l.b16 %v439
      %v1736 = vunpack.c.h.b16 %v439
      %v1737 = vunpack.c.l.b16 %v440
      %v1738 = vunpack.c.h.b16 %v440
      %v1739 = vunpack.c.l.b16 %v441
      %v1740 = vunpack.c.h.b16 %v441
      %v1741 = vunpack.c.l.b16 %v442
      %v1742 = vunpack.c.h.b16 %v442
      %v1743 = vunpack.c.l.b16 %v443
      %v1744 = vunpack.c.h.b16 %v443
      %v1745 = vunpack.c.l.b16 %v444
      %v1746 = vunpack.c.h.b16 %v444
      %v1747 = vunpack.c.l.b16 %v445
      %v1748 = vunpack.c.h.b16 %v445
      %v1749 = vunpack.c.l.b16 %v446
      %v1750 = vunpack.c.h.b16 %v446
      %v1751 = vunpack.c.l.b16 %v447
      %v1752 = vunpack.c.h.b16 %v447
      %v1753 = vunpack.c.l.b16 %v448
      %v1754 = vunpack.c.h.b16 %v448
      %v1755 = vunpack.c.l.b16 %v449
      %v1756 = vunpack.c.h.b16 %v449
      %v1757 = vunpack.c.l.b16 %v450
      %v1758 = vunpack.c.h.b16 %v450
      %v1759 = vunpack.c.l.b16 %v451
      %v1760 = vunpack.c.h.b16 %v451
      %v1761 = vunpack.c.l.b16 %v452
      %v1762 = vunpack.c.h.b16 %v452
      %v1763 = vunpack.c.l.b16 %v453
      %v1764 = vunpack.c.h.b16 %v453
      %v1765 = vunpack.c.l.b16 %v454
      %v1766 = vunpack.c.h.b16 %v454
      %v1767 = vunpack.c.l.b16 %v455
      %v1768 = vunpack.c.h.b16 %v455
      %v1769 = vunpack.c.l.b16 %v456
      %v1770 = vunpack.c.h.b16 %v456
      %v1771 = vunpack.c.l.b16 %v457
      %v1772 = vunpack.c.h.b16 %v457
      %v1773 = vunpack.c.l.b16 %v458
      %v1774 = vunpack.c.h.b16 %v458
      %v1775 = vunpack.c.l.b16 %v459
      %v1776 = vunpack.c.h.b16 %v459
      %v1777 = vunpack.c.l.b16 %v460
      %v1778 = vunpack.c.h.b16 %v460
      %v1779 = vunpack.c.l.b16 %v461
      %v1780 = vunpack.c.h.b16 %v461
      %v1781 = vunpack.c.l.b16 %v462
      %v1782 = vunpack.c.h.b16 %v462
      %v1783 = vunpack.c.l.b16 %v463
      %v1784 = vunpack.c.h.b16 %v463
      %v1785 = vunpack.c.l.b16 %v464
      %v1786 = vunpack.c.h.b16 %v464
      %v1787 = vunpack.c.l.b16 %v465
      %v1788 = vunpack.c.h.b16 %v465
      %v1789 = vunpack.c.l.b16 %v466
      %v1790 = vunpack.c.h.b16 %v466
      %v1791 = vunpack.c.l.b16 %v467
      %v1792 = vunpack.c.h.b16 %v467
      %v1793 = vunpack.c.l.b16 %v468
      %v1794 = vunpack.c.h.b16 %v468
      %v1795 = vunpack.c.l.b16 %v469
      %v1796 = vunpack.c.h.b16 %v469
      %v1797 = vunpack.c.l.b16 %v470
      %v1798 = vunpack.c.h.b16 %v470
      %v1799 = vunpack.c.l.b16 %v471
      %v1800 = vunpack.c.h.b16 %v471
      %v1801 = vunpack.c.l.b16 %v472
      %v1802 = vunpack.c.h.b16 %v472
      %v1803 = vunpack.c.l.b16 %v473
      %v1804 = vunpack.c.h.b16 %v473
      %v1805 = vunpack.c.l.b16 %v474
      %v1806 = vunpack.c.h.b16 %v474
      %v1807 = vunpack.c.l.b16 %v475
      %v1808 = vunpack.c.h.b16 %v475
      %v1809 = vunpack.c.l.b16 %v476
      %v1810 = vunpack.c.h.b16 %v476
      %v1811 = vunpack.c.l.b16 %v477
      %v1812 = vunpack.c.h.b16 %v477
      %v1813 = vunpack.c.l.b16 %v478
      %v1814 = vunpack.c.h.b16 %v478
      %v1815 = vunpack.c.l.b16 %v479
      %v1816 = vunpack.c.h.b16 %v479
      %v1817 = vunpack.c.l.b16 %v480
      %v1818 = vunpack.c.h.b16 %v480
      %v1819 = vunpack.c.l.b16 %v481
      %v1820 = vunpack.c.h.b16 %v481
      %v1821 = vunpack.c.l.b16 %v482
      %v1822 = vunpack.c.h.b16 %v482
      %v1823 = vunpack.c.l.b16 %v483
      %v1824 = vunpack.c.h.b16 %v483
      %v1825 = vunpack.c.l.b16 %v484
      %v1826 = vunpack.c.h.b16 %v484
      %v1827 = vunpack.c.l.b16 %v485
      %v1828 = vunpack.c.h.b16 %v485
      %v1829 = vunpack.c.l.b16 %v486
      %v1830 = vunpack.c.h.b16 %v486
      %v1831 = vunpack.c.l.b16 %v487
      %v1832 = vunpack.c.h.b16 %v487
      %v1833 = vunpack.c.l.b16 %v488
      %v1834 = vunpack.c.h.b16 %v488
      %v1835 = vunpack.c.l.b16 %v489
      %v1836 = vunpack.c.h.b16 %v489
      %v1837 = vunpack.c.l.b16 %v490
      %v1838 = vunpack.c.h.b16 %v490
      %v1839 = vunpack.c.l.b16 %v491
      %v1840 = vunpack.c.h.b16 %v491
      %v1841 = vunpack.c.l.b16 %v492
      %v1842 = vunpack.c.h.b16 %v492
      %v1843 = vunpack.c.l.b16 %v493
      %v1844 = vunpack.c.h.b16 %v493
      %v1845 = vunpack.c.l.b16 %v494
      %v1846 = vunpack.c.h.b16 %v494
      %v1847 = vunpack.c.l.b16 %v495
      %v1848 = vunpack.c.h.b16 %v495
      %v1849 = vunpack.c.l.b16 %v496
      %v1850 = vunpack.c.h.b16 %v496
      %v1851 = vunpack.c.l.b16 %v497
      %v1852 = vunpack.c.h.b16 %v497
      %v1853 = vunpack.c.l.b16 %v498
      %v1854 = vunpack.c.h.b16 %v498
      %v1855 = vunpack.c.l.b16 %v499
      %v1856 = vunpack.c.h.b16 %v499
      %v1857 = vunpack.c.l.b16 %v500
      %v1858 = vunpack.c.h.b16 %v500
      %v1859 = vunpack.c.l.b16 %v501
      %v1860 = vunpack.c.h.b16 %v501
      %v1861 = vunpack.c.l.b16 %v502
      %v1862 = vunpack.c.h.b16 %v502
      %v1863 = vunpack.c.l.b16 %v503
      %v1864 = vunpack.c.h.b16 %v503
      %v1865 = vunpack.c.l.b16 %v504
      %v1866 = vunpack.c.h.b16 %v504
      %v1867 = vunpack.c.l.b16 %v505
      %v1868 = vunpack.c.h.b16 %v505
      %v1869 = vunpack.c.l.b16 %v506
      %v1870 = vunpack.c.h.b16 %v506
      %v1871 = vunpack.c.l.b16 %v507
      %v1872 = vunpack.c.h.b16 %v507
      %v1873 = vunpack.c.l.b16 %v508
      %v1874 = vunpack.c.h.b16 %v508
      %v1875 = vunpack.c.l.b16 %v509
      %v1876 = vunpack.c.h.b16 %v509
      %v1877 = vunpack.c.l.b16 %v510
      %v1878 = vunpack.c.h.b16 %v510
      %v1879 = vunpack.c.l.b16 %v511
      %v1880 = vunpack.c.h.b16 %v511
      %v1881 = vunpack.c.l.b16 %v512
      %v1882 = vunpack.c.h.b16 %v512
      %v1883 = vunpack.c.l.b16 %v513
      %v1884 = vunpack.c.h.b16 %v513
      %v1885 = vunpack.c.l.b16 %v514
      %v1886 = vunpack.c.h.b16 %v514
      %v1887 = vunpack.c.l.b16 %v515
      %v1888 = vunpack.c.h.b16 %v515
      %v1889 = vunpack.c.l.b16 %v516
      %v1890 = vunpack.c.h.b16 %v516
      %v1891 = vunpack.c.l.b16 %v517
      %v1892 = vunpack.c.h.b16 %v517
      %v1893 = vunpack.c.l.b16 %v518
      %v1894 = vunpack.c.h.b16 %v518
      %v1895 = vunpack.c.l.b16 %v519
      %v1896 = vunpack.c.h.b16 %v519
      %v1897 = vunpack.c.l.b16 %v520
      %v1898 = vunpack.c.h.b16 %v520
      %v1899 = vunpack.c.l.b16 %v521
      %v1900 = vunpack.c.h.b16 %v521
      %v1901 = vunpack.c.l.b16 %v522
      %v1902 = vunpack.c.h.b16 %v522
      %v1903 = vunpack.c.l.b16 %v523
      %v1904 = vunpack.c.h.b16 %v523
      %v1905 = vunpack.c.l.b16 %v524
      %v1906 = vunpack.c.h.b16 %v524
      %v1907 = vunpack.c.l.b16 %v525
      %v1908 = vunpack.c.h.b16 %v525
      %v1909 = vunpack.c.l.b16 %v526
      %v1910 = vunpack.c.h.b16 %v526
      %v1911 = vunpack.c.l.b16 %v527
      %v1912 = vunpack.c.h.b16 %v527
      %v1913 = vunpack.c.l.b16 %v528
      %v1914 = vunpack.c.h.b16 %v528
      %v1915 = vunpack.c.l.b16 %v529
      %v1916 = vunpack.c.h.b16 %v529
      %v1917 = vunpack.c.l.b16 %v530
      %v1918 = vunpack.c.h.b16 %v530
      %v1919 = vunpack.c.l.b16 %v531
      %v1920 = vunpack.c.h.b16 %v531
      %v1921 = vunpack.c.l.b16 %v532
      %v1922 = vunpack.c.h.b16 %v532
      %v1923 = vunpack.c.l.b16 %v533
      %v1924 = vunpack.c.h.b16 %v533
      %v1925 = vunpack.c.l.b16 %v534
      %v1926 = vunpack.c.h.b16 %v534
      %v1927 = vunpack.c.l.b16 %v535
      %v1928 = vunpack.c.h.b16 %v535
      %v1929 = vunpack.c.l.b16 %v536
      %v1930 = vunpack.c.h.b16 %v536
      %v1931 = vunpack.c.l.b16 %v537
      %v1932 = vunpack.c.h.b16 %v537
      %v1933 = vunpack.c.l.b16 %v538
      %v1934 = vunpack.c.h.b16 %v538
      %v1935 = vunpack.c.l.b16 %v539
      %v1936 = vunpack.c.h.b16 %v539
      %v1937 = vunpack.c.l.b16 %v540
      %v1938 = vunpack.c.h.b16 %v540
      %v1939 = vunpack.c.l.b16 %v541
      %v1940 = vunpack.c.h.b16 %v541
      %v1941 = vunpack.c.l.b16 %v542
      %v1942 = vunpack.c.h.b16 %v542
      %v1943 = vunpack.c.l.b16 %v543
      %v1944 = vunpack.c.h.b16 %v543
      %v1945 = vunpack.c.l.b16 %v544
      %v1946 = vunpack.c.h.b16 %v544
      %v1947 = vunpack.c.l.b16 %v545
      %v1948 = vunpack.c.h.b16 %v545
      %v1949 = vunpack.c.l.b16 %v546
      %v1950 = vunpack.c.h.b16 %v546
      %v1951 = vunpack.c.l.b16 %v547
      %v1952 = vunpack.c.h.b16 %v547
      %v1953 = vunpack.c.l.b16 %v548
      %v1954 = vunpack.c.h.b16 %v548
      %v1955 = vunpack.c.l.b16 %v549
      %v1956 = vunpack.c.h.b16 %v549
      %v1957 = vunpack.c.l.b16 %v550
      %v1958 = vunpack.c.h.b16 %v550
      %v1959 = vunpack.c.l.b16 %v551
      %v1960 = vunpack.c.h.b16 %v551
      %v1961 = vunpack.c.l.b16 %v552
      %v1962 = vunpack.c.h.b16 %v552
      %v1963 = vunpack.c.l.b16 %v553
      %v1964 = vunpack.c.h.b16 %v553
      %v1965 = vunpack.c.l.b16 %v554
      %v1966 = vunpack.c.h.b16 %v554
      %v1967 = vunpack.c.l.b16 %v555
      %v1968 = vunpack.c.h.b16 %v555
      %v1969 = vunpack.c.l.b16 %v556
      %v1970 = vunpack.c.h.b16 %v556
      %v1971 = vunpack.c.l.b16 %v557
      %v1972 = vunpack.c.h.b16 %v557
      %v1973 = vunpack.c.l.b16 %v558
      %v1974 = vunpack.c.h.b16 %v558
      %v1975 = vunpack.c.l.b16 %v559
      %v1976 = vunpack.c.h.b16 %v559
      %v1977 = vunpack.c.l.b16 %v560
      %v1978 = vunpack.c.h.b16 %v560
      %v1979 = vunpack.c.l.b16 %v561
      %v1980 = vunpack.c.h.b16 %v561
      %v1981 = vunpack.c.l.b16 %v562
      %v1982 = vunpack.c.h.b16 %v562
      %v1983 = vunpack.c.l.b16 %v563
      %v1984 = vunpack.c.h.b16 %v563
      %v1985 = vunpack.c.l.b16 %v564
      %v1986 = vunpack.c.h.b16 %v564
      %v1987 = vunpack.c.l.b16 %v565
      %v1988 = vunpack.c.h.b16 %v565
      %v1989 = vunpack.c.l.b16 %v566
      %v1990 = vunpack.c.h.b16 %v566
      %v1991 = vunpack.c.l.b16 %v567
      %v1992 = vunpack.c.h.b16 %v567
      %v1993 = vunpack.c.l.b16 %v568
      %v1994 = vunpack.c.h.b16 %v568
      %v1995 = vunpack.c.l.b16 %v569
      %v1996 = vunpack.c.h.b16 %v569
      %v1997 = vunpack.c.l.b16 %v570
      %v1998 = vunpack.c.h.b16 %v570
      %v1999 = vunpack.c.l.b16 %v571
      %v2000 = vunpack.c.h.b16 %v571
      %v2001 = vunpack.c.l.b16 %v572
      %v2002 = vunpack.c.h.b16 %v572
      %v2003 = vunpack.c.l.b16 %v573
      %v2004 = vunpack.c.h.b16 %v573
      %v2005 = vunpack.c.l.b16 %v574
      %v2006 = vunpack.c.h.b16 %v574
      %v2007 = vunpack.c.l.b16 %v575
      %v2008 = vunpack.c.h.b16 %v575
      %v2009 = vunpack.c.l.b16 %v576
      %v2010 = vunpack.c.h.b16 %v576
      %v2011 = vunpack.c.l.b16 %v577
      %v2012 = vunpack.c.h.b16 %v577
      %v2013 = vunpack.c.l.b16 %v578
      %v2014 = vunpack.c.h.b16 %v578
      %v2015 = vunpack.c.l.b16 %v579
      %v2016 = vunpack.c.h.b16 %v579
      %v2017 = vunpack.c.l.b16 %v580
      %v2018 = vunpack.c.h.b16 %v580
      %v2019 = vunpack.c.l.b16 %v581
      %v2020 = vunpack.c.h.b16 %v581
      %v2021 = vunpack.c.l.b16 %v582
      %v2022 = vunpack.c.h.b16 %v582
      %v2023 = vunpack.c.l.b16 %v583
      %v2024 = vunpack.c.h.b16 %v583
      %v2025 = vunpack.c.l.b16 %v584
      %v2026 = vunpack.c.h.b16 %v584
      %v2027 = vunpack.c.l.b16 %v585
      %v2028 = vunpack.c.h.b16 %v585
      %v2029 = vunpack.c.l.b16 %v586
      %v2030 = vunpack.c.h.b16 %v586
      %v2031 = vunpack.c.l.b16 %v587
      %v2032 = vunpack.c.h.b16 %v587
      %v2033 = vunpack.c.l.b16 %v588
      %v2034 = vunpack.c.h.b16 %v588
      %v2035 = vunpack.c.l.b16 %v589
      %v2036 = vunpack.c.h.b16 %v589
      %v2037 = vunpack.c.l.b16 %v590
      %v2038 = vunpack.c.h.b16 %v590
      %v2039 = vunpack.c.l.b16 %v591
      %v2040 = vunpack.c.h.b16 %v591
      %v2041 = vunpack.c.l.b16 %v592
      %v2042 = vunpack.c.h.b16 %v592
      %v2043 = vunpack.c.l.b16 %v593
      %v2044 = vunpack.c.h.b16 %v593
      %v2045 = vunpack.c.l.b16 %v594
      %v2046 = vunpack.c.h.b16 %v594
      %v2047 = vunpack.c.l.b16 %v595
      %v2048 = vunpack.c.h.b16 %v595
      %v2049 = vunpack.c.l.b16 %v596
      %v2050 = vunpack.c.h.b16 %v596
      %v2051 = vunpack.c.l.b16 %v597
      %v2052 = vunpack.c.h.b16 %v597
      %v2053 = vunpack.c.l.b16 %v598
      %v2054 = vunpack.c.h.b16 %v598
      %v2055 = vunpack.c.l.b16 %v599
      %v2056 = vunpack.c.h.b16 %v599
      %v2057 = vunpack.c.l.b16 %v600
      %v2058 = vunpack.c.h.b16 %v600
      %v2059 = vunpack.c.l.b16 %v601
      %v2060 = vunpack.c.h.b16 %v601
      %v2061 = vunpack.c.l.b16 %v602
      %v2062 = vunpack.c.h.b16 %v602
      %v2063 = vunpack.c.l.b16 %v603
      %v2064 = vunpack.c.h.b16 %v603
      %v2065 = vunpack.c.l.b16 %v604
      %v2066 = vunpack.c.h.b16 %v604
      %v2067 = vunpack.c.l.b16 %v605
      %v2068 = vunpack.c.h.b16 %v605
      %v2069 = vunpack.c.l.b16 %v606
      %v2070 = vunpack.c.h.b16 %v606
      %v2071 = vunpack.c.l.b16 %v607
      %v2072 = vunpack.c.h.b16 %v607
      %v2073 = vunpack.c.l.b16 %v608
      %v2074 = vunpack.c.h.b16 %v608
      %v2075 = vunpack.c.l.b16 %v609
      %v2076 = vunpack.c.h.b16 %v609
      %v2077 = vunpack.c.l.b16 %v610
      %v2078 = vunpack.c.h.b16 %v610
      %v2079 = vunpack.c.l.b16 %v611
      %v2080 = vunpack.c.h.b16 %v611
      %v2081 = vunpack.c.l.b16 %v612
      %v2082 = vunpack.c.h.b16 %v612
      %v2083 = vunpack.c.l.b16 %v613
      %v2084 = vunpack.c.h.b16 %v613
      %v2085 = vunpack.c.l.b16 %v614
      %v2086 = vunpack.c.h.b16 %v614
      %v2087 = vunpack.c.l.b16 %v615
      %v2088 = vunpack.c.h.b16 %v615
      %v2089 = vunpack.c.l.b16 %v616
      %v2090 = vunpack.c.h.b16 %v616
      %v2091 = vunpack.c.l.b16 %v617
      %v2092 = vunpack.c.h.b16 %v617
      %v2093 = vunpack.c.l.b16 %v618
      %v2094 = vunpack.c.h.b16 %v618
      %v2095 = vunpack.c.l.b16 %v619
      %v2096 = vunpack.c.h.b16 %v619
      %v2097 = vunpack.c.l.b16 %v620
      %v2098 = vunpack.c.h.b16 %v620
      %v2099 = vunpack.c.l.b16 %v621
      %v2100 = vunpack.c.h.b16 %v621
      %v2101 = vunpack.c.l.b16 %v622
      %v2102 = vunpack.c.h.b16 %v622
      %v2103 = vunpack.c.l.b16 %v623
      %v2104 = vunpack.c.h.b16 %v623
      %v2105 = vunpack.c.l.b16 %v624
      %v2106 = vunpack.c.h.b16 %v624
      %v2107 = vunpack.c.l.b16 %v625
      %v2108 = vunpack.c.h.b16 %v625
      %v2109 = vunpack.c.l.b16 %v626
      %v2110 = vunpack.c.h.b16 %v626
      %v2111 = vunpack.c.l.b16 %v627
      %v2112 = vunpack.c.h.b16 %v627
      %v2113 = vunpack.c.l.b16 %v628
      %v2114 = vunpack.c.h.b16 %v628
      %v2115 = vunpack.c.l.b16 %v629
      %v2116 = vunpack.c.h.b16 %v629
      %v2117 = vunpack.c.l.b16 %v630
      %v2118 = vunpack.c.h.b16 %v630
      %v2119 = vunpack.c.l.b16 %v631
      %v2120 = vunpack.c.h.b16 %v631
      %v2121 = vunpack.c.l.b16 %v632
      %v2122 = vunpack.c.h.b16 %v632
      %v2123 = vunpack.c.l.b16 %v633
      %v2124 = vunpack.c.h.b16 %v633
      %v2125 = vunpack.c.l.b16 %v634
      %v2126 = vunpack.c.h.b16 %v634
      %v2127 = vunpack.c.l.b16 %v635
      %v2128 = vunpack.c.h.b16 %v635
      %v2129 = vunpack.c.l.b16 %v636
      %v2130 = vunpack.c.h.b16 %v636
      %v2131 = vunpack.c.l.b16 %v637
      %v2132 = vunpack.c.h.b16 %v637
      %v2133 = vunpack.c.l.b16 %v638
      %v2134 = vunpack.c.h.b16 %v638
      %v2135 = vunpack.c.l.b16 %v639
      %v2136 = vunpack.c.h.b16 %v639
      %v2137 = vunpack.c.l.b16 %v640
      %v2138 = vunpack.c.h.b16 %v640
      %v2139 = vunpack.c.l.b16 %v641
      %v2140 = vunpack.c.h.b16 %v641
      %v2141 = vunpack.c.l.b16 %v642
      %v2142 = vunpack.c.h.b16 %v642
      %v2143 = vunpack.c.l.b16 %v643
      %v2144 = vunpack.c.h.b16 %v643
      %v2145 = vunpack.c.l.b16 %v644
      %v2146 = vunpack.c.h.b16 %v644
      %v2147 = vunpack.c.l.b16 %v645
      %v2148 = vunpack.c.h.b16 %v645
      %v2149 = vunpack.c.l.b16 %v646
      %v2150 = vunpack.c.h.b16 %v646
      %v2151 = vunpack.c.l.b16 %v647
      %v2152 = vunpack.c.h.b16 %v647
      %v2153 = vunpack.c.l.b16 %v648
      %v2154 = vunpack.c.h.b16 %v648
      %v2155 = vunpack.c.l.b16 %v649
      %v2156 = vunpack.c.h.b16 %v649
      %v2157 = vunpack.c.l.b16 %v650
      %v2158 = vunpack.c.h.b16 %v650
      %v2159 = vunpack.c.l.b16 %v651
      %v2160 = vunpack.c.h.b16 %v651
      %v2161 = vunpack.c.l.b16 %v652
      %v2162 = vunpack.c.h.b16 %v652
      %v2163 = vunpack.c.l.b16 %v653
      %v2164 = vunpack.c.h.b16 %v653
      %v2165 = vunpack.c.l.b16 %v654
      %v2166 = vunpack.c.h.b16 %v654
      %v2167 = vunpack.c.l.b16 %v655
      %v2168 = vunpack.c.h.b16 %v655
      %v2169 = vunpack.c.l.b16 %v656
      %v2170 = vunpack.c.h.b16 %v656
      %v2171 = vunpack.c.l.b16 %v657
      %v2172 = vunpack.c.h.b16 %v657
      %v2173 = vunpack.c.l.b16 %v658
      %v2174 = vunpack.c.h.b16 %v658
      %v2175 = vunpack.c.l.b16 %v659
      %v2176 = vunpack.c.h.b16 %v659
      %v2177 = vunpack.c.l.b16 %v660
      %v2178 = vunpack.c.h.b16 %v660
      %v2179 = vunpack.c.l.b16 %v661
      %v2180 = vunpack.c.h.b16 %v661
      %v2181 = vunpack.c.l.b16 %v662
      %v2182 = vunpack.c.h.b16 %v662
      %v2183 = vunpack.c.l.b16 %v663
      %v2184 = vunpack.c.h.b16 %v663
      %v2185 = vunpack.c.l.b16 %v664
      %v2186 = vunpack.c.h.b16 %v664
      %v2187 = vunpack.c.l.b16 %v665
      %v2188 = vunpack.c.h.b16 %v665
      %v2189 = vunpack.c.l.b16 %v666
      %v2190 = vunpack.c.h.b16 %v666
      %v2191 = vunpack.c.l.b16 %v667
      %v2192 = vunpack.c.h.b16 %v667
      %v2193 = vunpack.c.l.b16 %v668
      %v2194 = vunpack.c.h.b16 %v668
      %v2195 = vunpack.c.l.b16 %v669
      %v2196 = vunpack.c.h.b16 %v669
      %v2197 = vunpack.c.l.b16 %v670
      %v2198 = vunpack.c.h.b16 %v670
      %v2199 = vunpack.c.l.b16 %v671
      %v2200 = vunpack.c.h.b16 %v671
      %v2201 = vunpack.c.l.b16 %v672
      %v2202 = vunpack.c.h.b16 %v672
      %v2203 = vunpack.c.l.b16 %v673
      %v2204 = vunpack.c.h.b16 %v673
      %v2205 = vunpack.c.l.b16 %v674
      %v2206 = vunpack.c.h.b16 %v674
      %v2207 = vunpack.c.l.b16 %v675
      %v2208 = vunpack.c.h.b16 %v675
      %v2209 = vunpack.c.l.b16 %v676
      %v2210 = vunpack.c.h.b16 %v676
      %v2211 = vunpack.c.l.b16 %v677
      %v2212 = vunpack.c.h.b16 %v677
      %v2213 = vunpack.c.l.b16 %v678
      %v2214 = vunpack.c.h.b16 %v678
      %v2215 = vunpack.c.l.b16 %v679
      %v2216 = vunpack.c.h.b16 %v679
      %v2217 = vunpack.c.l.b16 %v680
      %v2218 = vunpack.c.h.b16 %v680
      %v2219 = vunpack.c.l.b16 %v681
      %v2220 = vunpack.c.h.b16 %v681
      %v2221 = vunpack.c.l.b16 %v682
      %v2222 = vunpack.c.h.b16 %v682
      %v2223 = vunpack.c.l.b16 %v683
      %v2224 = vunpack.c.h.b16 %v683
      %v2225 = vunpack.c.l.b16 %v684
      %v2226 = vunpack.c.h.b16 %v684
      %v2227 = vunpack.c.l.b16 %v685
      %v2228 = vunpack.c.h.b16 %v685
      %v2229 = vunpack.c.l.b16 %v686
      %v2230 = vunpack.c.h.b16 %v686
      %v2231 = vunpack.c.l.b16 %v687
      %v2232 = vunpack.c.h.b16 %v687
      %v2233 = vunpack.c.l.b16 %v688
      %v2234 = vunpack.c.h.b16 %v688
      %v2235 = vunpack.c.l.b16 %v689
      %v2236 = vunpack.c.h.b16 %v689
      %v2237 = vunpack.c.l.b16 %v690
      %v2238 = vunpack.c.h.b16 %v690
      %v2239 = vunpack.c.l.b16 %v691
      %v2240 = vunpack.c.h.b16 %v691
      %v2241 = vunpack.c.l.b16 %v692
      %v2242 = vunpack.c.h.b16 %v692
      %v2243 = vunpack.c.l.b16 %v693
      %v2244 = vunpack.c.h.b16 %v693
      %v2245 = vunpack.c.l.b16 %v694
      %v2246 = vunpack.c.h.b16 %v694
      %v2247 = vunpack.c.l.b16 %v695
      %v2248 = vunpack.c.h.b16 %v695
      %v2249 = vunpack.c.l.b16 %v696
      %v2250 = vunpack.c.h.b16 %v696
      %v2251 = vunpack.c.l.b16 %v697
      %v2252 = vunpack.c.h.b16 %v697
      %v2253 = vunpack.c.l.b16 %v698
      %v2254 = vunpack.c.h.b16 %v698
      %v2255 = vunpack.c.l.b16 %v699
      %v2256 = vunpack.c.h.b16 %v699
      %v2257 = vunpack.c.l.b16 %v700
      %v2258 = vunpack.c.h.b16 %v700
      %v2259 = vunpack.c.l.b16 %v701
      %v2260 = vunpack.c.h.b16 %v701
      %v2261 = vunpack.c.l.b16 %v702
      %v2262 = vunpack.c.h.b16 %v702
      %v2263 = vunpack.c.l.b16 %v703
      %v2264 = vunpack.c.h.b16 %v703
      %v2265 = vunpack.c.l.b16 %v704
      %v2266 = vunpack.c.h.b16 %v704
      %v2267 = vunpack.c.l.b16 %v705
      %v2268 = vunpack.c.h.b16 %v705
      %v2269 = vunpack.c.l.b16 %v706
      %v2270 = vunpack.c.h.b16 %v706
      %v2271 = vunpack.c.l.b16 %v707
      %v2272 = vunpack.c.h.b16 %v707
      %v2273 = vunpack.c.l.b16 %v708
      %v2274 = vunpack.c.h.b16 %v708
      %v2275 = vunpack.c.l.b16 %v709
      %v2276 = vunpack.c.h.b16 %v709
      %v2277 = vunpack.c.l.b16 %v710
      %v2278 = vunpack.c.h.b16 %v710
      %v2279 = vunpack.c.l.b16 %v711
      %v2280 = vunpack.c.h.b16 %v711
      %v2281 = vunpack.c.l.b16 %v712
      %v2282 = vunpack.c.h.b16 %v712
      %v2283 = vunpack.c.l.b16 %v713
      %v2284 = vunpack.c.h.b16 %v713
      %v2285 = vunpack.c.l.b16 %v714
      %v2286 = vunpack.c.h.b16 %v714
      %v2287 = vunpack.c.l.b16 %v715
      %v2288 = vunpack.c.h.b16 %v715
      %v2289 = vunpack.c.l.b16 %v716
      %v2290 = vunpack.c.h.b16 %v716
      %v2291 = vunpack.c.l.b16 %v717
      %v2292 = vunpack.c.h.b16 %v717
      %v2293 = vunpack.c.l.b16 %v718
      %v2294 = vunpack.c.h.b16 %v718
      %v2295 = vunpack.c.l.b16 %v719
      %v2296 = vunpack.c.h.b16 %v719
      %v2297 = vunpack.c.l.b16 %v720
      %v2298 = vunpack.c.h.b16 %v720
      %v2299 = vpack.c.b16 %v1283, %v1275
      %v2300 = vpack.c.b16 %v1284, %v1276
      %v2301 = vpack.c.b16 %v1285, %v1277
      %v2302 = vpack.c.b16 %v1286, %v1278
      %v2303 = vpack.c.b16 %v1287, %v1279
      %v2304 = vpack.c.b16 %v1288, %v1280
      %v2305 = vpack.c.b16 %v1289, %v1281
      %v2306 = vpack.c.b16 %v1290, %v1282
      %v2307 = vpack.c.b16 %v1299, %v1291
      %v2308 = vpack.c.b16 %v1300, %v1292
      %v2309 = vpack.c.b16 %v1301, %v1293
      %v2310 = vpack.c.b16 %v1302, %v1294
      %v2311 = vpack.c.b16 %v1303, %v1295
      %v2312 = vpack.c.b16 %v1304, %v1296
      %v2313 = vpack.c.b16 %v1305, %v1297
      %v2314 = vpack.c.b16 %v1306, %v1298
      %v2315 = vpack.c.b16 %v1315, %v1307
      %v2316 = vpack.c.b16 %v1316, %v1308
      %v2317 = vpack.c.b16 %v1317, %v1309
      %v2318 = vpack.c.b16 %v1318, %v1310
      %v2319 = vpack.c.b16 %v1319, %v1311
      %v2320 = vpack.c.b16 %v1320, %v1312
      %v2321 = vpack.c.b16 %v1321, %v1313
      %v2322 = vpack.c.b16 %v1322, %v1314
      %v2323 = vpack.c.b16 %v1331, %v1323
      %v2324 = vpack.c.b16 %v1332, %v1324
      %v2325 = vpack.c.b16 %v1333, %v1325
      %v2326 = vpack.c.b16 %v1334, %v1326
      %v2327 = vpack.c.b16 %v1335, %v1327
      %v2328 = vpack.c.b16 %v1336, %v1328
      %v2329 = vpack.c.b16 %v1337, %v1329
      %v2330 = vpack.c.b16 %v1338, %v1330
      %v2331 = vpack.c.b16 %v1347, %v1339
      %v2332 = vpack.c.b16 %v1348, %v1340
      %v2333 = vpack.c.b16 %v1349, %v1341
      %v2334 = vpack.c.b16 %v1350, %v1342
      %v2335 = vpack.c.b16 %v1351, %v1343
      %v2336 = vpack.c.b16 %v1352, %v1344
      %v2337 = vpack.c.b16 %v1353, %v1345
      %v2338 = vpack.c.b16 %v1354, %v1346
      %v2339 = vpack.c.b16 %v1363, %v1355
      %v2340 = vpack.c.b16 %v1364, %v1356
      %v2341 = vpack.c.b16 %v1365, %v1357
      %v2342 = vpack.c.b16 %v1366, %v1358
      %v2343 = vpack.c.b16 %v1367, %v1359
      %v2344 = vpack.c.b16 %v1368, %v1360
      %v2345 = vpack.c.b16 %v1369, %v1361
      %v2346 = vpack.c.b16 %v1370, %v1362
      %v2347 = vpack.c.b16 %v1379, %v1371
      %v2348 = vpack.c.b16 %v1380, %v1372
      %v2349 = vpack.c.b16 %v1381, %v1373
      %v2350 = vpack.c.b16 %v1382, %v1374
      %v2351 = vpack.c.b16 %v1383, %v1375
      %v2352 = vpack.c.b16 %v1384, %v1376
      %v2353 = vpack.c.b16 %v1385, %v1377
      %v2354 = vpack.c.b16 %v1386, %v1378
      %v2355 = vpack.c.b16 %v1395, %v1387
      %v2356 = vpack.c.b16 %v1396, %v1388
      %v2357 = vpack.c.b16 %v1397, %v1389
      %v2358 = vpack.c.b16 %v1398, %v1390
      %v2359 = vpack.c.b16 %v1399, %v1391
      %v2360 = vpack.c.b16 %v1400, %v1392
      %v2361 = vpack.c.b16 %v1401, %v1393
      %v2362 = vpack.c.b16 %v1402, %v1394
      %v2363 = vpack.c.b16 %v1411, %v1403
      %v2364 = vpack.c.b16 %v1412, %v1404
      %v2365 = vpack.c.b16 %v1413, %v1405
      %v2366 = vpack.c.b16 %v1414, %v1406
      %v2367 = vpack.c.b16 %v1415, %v1407
      %v2368 = vpack.c.b16 %v1416, %v1408
      %v2369 = vpack.c.b16 %v1417, %v1409
      %v2370 = vpack.c.b16 %v1418, %v1410
      %v2371 = vpack.c.b16 %v1427, %v1419
      %v2372 = vpack.c.b16 %v1428, %v1420
      %v2373 = vpack.c.b16 %v1429, %v1421
      %v2374 = vpack.c.b16 %v1430, %v1422
      %v2375 = vpack.c.b16 %v1431, %v1423
      %v2376 = vpack.c.b16 %v1432, %v1424
      %v2377 = vpack.c.b16 %v1433, %v1425
      %v2378 = vpack.c.b16 %v1434, %v1426
      %v2379 = vpack.c.b16 %v1443, %v1435
      %v2380 = vpack.c.b16 %v1444, %v1436
      %v2381 = vpack.c.b16 %v1445, %v1437
      %v2382 = vpack.c.b16 %v1446, %v1438
      %v2383 = vpack.c.b16 %v1447, %v1439
      %v2384 = vpack.c.b16 %v1448, %v1440
      %v2385 = vpack.c.b16 %v1449, %v1441
      %v2386 = vpack.c.b16 %v1450, %v1442
      %v2387 = vpack.c.b16 %v1459, %v1451
      %v2388 = vpack.c.b16 %v1460, %v1452
      %v2389 = vpack.c.b16 %v1461, %v1453
      %v2390 = vpack.c.b16 %v1462, %v1454
      %v2391 = vpack.c.b16 %v1463, %v1455
      %v2392 = vpack.c.b16 %v1464, %v1456
      %v2393 = vpack.c.b16 %v1465, %v1457
      %v2394 = vpack.c.b16 %v1466, %v1458
      %v2395 = vpack.c.b16 %v1475, %v1467
      %v2396 = vpack.c.b16 %v1476, %v1468
      %v2397 = vpack.c.b16 %v1477, %v1469
      %v2398 = vpack.c.b16 %v1478, %v1470
      %v2399 = vpack.c.b16 %v1479, %v1471
      %v2400 = vpack.c.b16 %v1480, %v1472
      %v2401 = vpack.c.b16 %v1481, %v1473
      %v2402 = vpack.c.b16 %v1482, %v1474
      %v2403 = vpack.c.b16 %v1491, %v1483
      %v2404 = vpack.c.b16 %v1492, %v1484
      %v2405 = vpack.c.b16 %v1493, %v1485
      %v2406 = vpack.c.b16 %v1494, %v1486
      %v2407 = vpack.c.b16 %v1495, %v1487
      %v2408 = vpack.c.b16 %v1496, %v1488
      %v2409 = vpack.c.b16 %v1497, %v1489
      %v2410 = vpack.c.b16 %v1498, %v1490
      %v2411 = vpack.c.b16 %v1507, %v1499
      %v2412 = vpack.c.b16 %v1508, %v1500
      %v2413 = vpack.c.b16 %v1509, %v1501
      %v2414 = vpack.c.b16 %v1510, %v1502
      %v2415 = vpack.c.b16 %v1511, %v1503
      %v2416 = vpack.c.b16 %v1512, %v1504
      %v2417 = vpack.c.b16 %v1513, %v1505
      %v2418 = vpack.c.b16 %v1514, %v1506
      %v2419 = vpack.c.b16 %v1523, %v1515
      %v2420 = vpack.c.b16 %v1524, %v1516
      %v2421 = vpack.c.b16 %v1525, %v1517
      %v2422 = vpack.c.b16 %v1526, %v1518
      %v2423 = vpack.c.b16 %v1527, %v1519
      %v2424 = vpack.c.b16 %v1528, %v1520
      %v2425 = vpack.c.b16 %v1529, %v1521
      %v2426 = vpack.c.b16 %v1530, %v1522
      %v2427 = vpack.c.b16 %v1539, %v1531
      %v2428 = vpack.c.b16 %v1540, %v1532
      %v2429 = vpack.c.b16 %v1541, %v1533
      %v2430 = vpack.c.b16 %v1542, %v1534
      %v2431 = vpack.c.b16 %v1543, %v1535
      %v2432 = vpack.c.b16 %v1544, %v1536
      %v2433 = vpack.c.b16 %v1545, %v1537
      %v2434 = vpack.c.b16 %v1546, %v1538
      %v2435 = vpack.c.b16 %v1555, %v1547
      %v2436 = vpack.c.b16 %v1556, %v1548
      %v2437 = vpack.c.b16 %v1557, %v1549
      %v2438 = vpack.c.b16 %v1558, %v1550
      %v2439 = vpack.c.b16 %v1559, %v1551
      %v2440 = vpack.c.b16 %v1560, %v1552
      %v2441 = vpack.c.b16 %v1561, %v1553
      %v2442 = vpack.c.b16 %v1562, %v1554
      %v2443 = vpack.c.b16 %v1571, %v1563
      %v2444 = vpack.c.b16 %v1572, %v1564
      %v2445 = vpack.c.b16 %v1573, %v1565
      %v2446 = vpack.c.b16 %v1574, %v1566
      %v2447 = vpack.c.b16 %v1575, %v1567
      %v2448 = vpack.c.b16 %v1576, %v1568
      %v2449 = vpack.c.b16 %v1577, %v1569
      %v2450 = vpack.c.b16 %v1578, %v1570
      %v2451 = vpack.c.b16 %v1587, %v1579
      %v2452 = vpack.c.b16 %v1588, %v1580
      %v2453 = vpack.c.b16 %v1589, %v1581
      %v2454 = vpack.c.b16 %v1590, %v1582
      %v2455 = vpack.c.b16 %v1591, %v1583
      %v2456 = vpack.c.b16 %v1592, %v1584
      %v2457 = vpack.c.b16 %v1593, %v1585
      %v2458 = vpack.c.b16 %v1594, %v1586
      %v2459 = vpack.c.b16 %v1603, %v1595
      %v2460 = vpack.c.b16 %v1604, %v1596
      %v2461 = vpack.c.b16 %v1605, %v1597
      %v2462 = vpack.c.b16 %v1606, %v1598
      %v2463 = vpack.c.b16 %v1607, %v1599
      %v2464 = vpack.c.b16 %v1608, %v1600
      %v2465 = vpack.c.b16 %v1609, %v1601
      %v2466 = vpack.c.b16 %v1610, %v1602
      %v2467 = vpack.c.b16 %v1619, %v1611
      %v2468 = vpack.c.b16 %v1620, %v1612
      %v2469 = vpack.c.b16 %v1621, %v1613
      %v2470 = vpack.c.b16 %v1622, %v1614
      %v2471 = vpack.c.b16 %v1623, %v1615
      %v2472 = vpack.c.b16 %v1624, %v1616
      %v2473 = vpack.c.b16 %v1625, %v1617
      %v2474 = vpack.c.b16 %v1626, %v1618
      %v2475 = vpack.c.b16 %v1635, %v1627
      %v2476 = vpack.c.b16 %v1636, %v1628
      %v2477 = vpack.c.b16 %v1637, %v1629
      %v2478 = vpack.c.b16 %v1638, %v1630
      %v2479 = vpack.c.b16 %v1639, %v1631
      %v2480 = vpack.c.b16 %v1640, %v1632
      %v2481 = vpack.c.b16 %v1641, %v1633
      %v2482 = vpack.c.b16 %v1642, %v1634
      %v2483 = vpack.c.b16 %v1651, %v1643
      %v2484 = vpack.c.b16 %v1652, %v1644
      %v2485 = vpack.c.b16 %v1653, %v1645
      %v2486 = vpack.c.b16 %v1654, %v1646
      %v2487 = vpack.c.b16 %v1655, %v1647
      %v2488 = vpack.c.b16 %v1656, %v1648
      %v2489 = vpack.c.b16 %v1657, %v1649
      %v2490 = vpack.c.b16 %v1658, %v1650
      %v2491 = vpack.c.b16 %v1667, %v1659
      %v2492 = vpack.c.b16 %v1668, %v1660
      %v2493 = vpack.c.b16 %v1669, %v1661
      %v2494 = vpack.c.b16 %v1670, %v1662
      %v2495 = vpack.c.b16 %v1671, %v1663
      %v2496 = vpack.c.b16 %v1672, %v1664
      %v2497 = vpack.c.b16 %v1673, %v1665
      %v2498 = vpack.c.b16 %v1674, %v1666
      %v2499 = vpack.c.b16 %v1683, %v1675
      %v2500 = vpack.c.b16 %v1684, %v1676
      %v2501 = vpack.c.b16 %v1685, %v1677
      %v2502 = vpack.c.b16 %v1686, %v1678
      %v2503 = vpack.c.b16 %v1687, %v1679
      %v2504 = vpack.c.b16 %v1688, %v1680
      %v2505 = vpack.c.b16 %v1689, %v1681
      %v2506 = vpack.c.b16 %v1690, %v1682
      %v2507 = vpack.c.b16 %v1699, %v1691
      %v2508 = vpack.c.b16 %v1700, %v1692
      %v2509 = vpack.c.b16 %v1701, %v1693
      %v2510 = vpack.c.b16 %v1702, %v1694
      %v2511 = vpack.c.b16 %v1703, %v1695
      %v2512 = vpack.c.b16 %v1704, %v1696
      %v2513 = vpack.c.b16 %v1705, %v1697
      %v2514 = vpack.c.b16 %v1706, %v1698
      %v2515 = vpack.c.b16 %v1715, %v1707
      %v2516 = vpack.c.b16 %v1716, %v1708
      %v2517 = vpack.c.b16 %v1717, %v1709
      %v2518 = vpack.c.b16 %v1718, %v1710
      %v2519 = vpack.c.b16 %v1719, %v1711
      %v2520 = vpack.c.b16 %v1720, %v1712
      %v2521 = vpack.c.b16 %v1721, %v1713
      %v2522 = vpack.c.b16 %v1722, %v1714
      %v2523 = vpack.c.b16 %v1731, %v1723
      %v2524 = vpack.c.b16 %v1732, %v1724
      %v2525 = vpack.c.b16 %v1733, %v1725
      %v2526 = vpack.c.b16 %v1734, %v1726
      %v2527 = vpack.c.b16 %v1735, %v1727
      %v2528 = vpack.c.b16 %v1736, %v1728
      %v2529 = vpack.c.b16 %v1737, %v1729
      %v2530 = vpack.c.b16 %v1738, %v1730
      %v2531 = vpack.c.b16 %v1747, %v1739
      %v2532 = vpack.c.b16 %v1748, %v1740
      %v2533 = vpack.c.b16 %v1749, %v1741
      %v2534 = vpack.c.b16 %v1750, %v1742
      %v2535 = vpack.c.b16 %v1751, %v1743
      %v2536 = vpack.c.b16 %v1752, %v1744
      %v2537 = vpack.c.b16 %v1753, %v1745
      %v2538 = vpack.c.b16 %v1754, %v1746
      %v2539 = vpack.c.b16 %v1763, %v1755
      %v2540 = vpack.c.b16 %v1764, %v1756
      %v2541 = vpack.c.b16 %v1765, %v1757
      %v2542 = vpack.c.b16 %v1766, %v1758
      %v2543 = vpack.c.b16 %v1767, %v1759
      %v2544 = vpack.c.b16 %v1768, %v1760
      %v2545 = vpack.c.b16 %v1769, %v1761
      %v2546 = vpack.c.b16 %v1770, %v1762
      %v2547 = vpack.c.b16 %v1779, %v1771
      %v2548 = vpack.c.b16 %v1780, %v1772
      %v2549 = vpack.c.b16 %v1781, %v1773
      %v2550 = vpack.c.b16 %v1782, %v1774
      %v2551 = vpack.c.b16 %v1783, %v1775
      %v2552 = vpack.c.b16 %v1784, %v1776
      %v2553 = vpack.c.b16 %v1785, %v1777
      %v2554 = vpack.c.b16 %v1786, %v1778
      %v2555 = vpack.c.b16 %v1795, %v1787
      %v2556 = vpack.c.b16 %v1796, %v1788
      %v2557 = vpack.c.b16 %v1797, %v1789
      %v2558 = vpack.c.b16 %v1798, %v1790
      %v2559 = vpack.c.b16 %v1799, %v1791
      %v2560 = vpack.c.b16 %v1800, %v1792
      %v2561 = vpack.c.b16 %v1801, %v1793
      %v2562 = vpack.c.b16 %v1802, %v1794
      %v2563 = vpack.c.b16 %v1811, %v1803
      %v2564 = vpack.c.b16 %v1812, %v1804
      %v2565 = vpack.c.b16 %v1813, %v1805
      %v2566 = vpack.c.b16 %v1814, %v1806
      %v2567 = vpack.c.b16 %v1815, %v1807
      %v2568 = vpack.c.b16 %v1816, %v1808
      %v2569 = vpack.c.b16 %v1817, %v1809
      %v2570 = vpack.c.b16 %v1818, %v1810
      %v2571 = vpack.c.b16 %v1827, %v1819
      %v2572 = vpack.c.b16 %v1828, %v1820
      %v2573 = vpack.c.b16 %v1829, %v1821
      %v2574 = vpack.c.b16 %v1830, %v1822
      %v2575 = vpack.c.b16 %v1831, %v1823
      %v2576 = vpack.c.b16 %v1832, %v1824
      %v2577 = vpack.c.b16 %v1833, %v1825
      %v2578 = vpack.c.b16 %v1834, %v1826
      %v2579 = vpack.c.b16 %v1843, %v1835
      %v2580 = vpack.c.b16 %v1844, %v1836
      %v2581 = vpack.c.b16 %v1845, %v1837
      %v2582 = vpack.c.b16 %v1846, %v1838
      %v2583 = vpack.c.b16 %v1847, %v1839
      %v2584 = vpack.c.b16 %v1848, %v1840
      %v2585 = vpack.c.b16 %v1849, %v1841
      %v2586 = vpack.c.b16 %v1850, %v1842
      %v2587 = vpack.c.b16 %v1859, %v1851
      %v2588 = vpack.c.b16 %v1860, %v1852
      %v2589 = vpack.c.b16 %v1861, %v1853
      %v2590 = vpack.c.b16 %v1862, %v1854
      %v2591 = vpack.c.b16 %v1863, %v1855
      %v2592 = vpack.c.b16 %v1864, %v1856
      %v2593 = vpack.c.b16 %v1865, %v1857
      %v2594 = vpack.c.b16 %v1866, %v1858
      %v2595 = vpack.c.b16 %v1875, %v1867
      %v2596 = vpack.c.b16 %v1876, %v1868
      %v2597 = vpack.c.b16 %v1877, %v1869
      %v2598 = vpack.c.b16 %v1878, %v1870
      %v2599 = vpack.c.b16 %v1879, %v1871
      %v2600 = vpack.c.b16 %v1880, %v1872
      %v2601 = vpack.c.b16 %v1881, %v1873
      %v2602 = vpack.c.b16 %v1882, %v1874
      %v2603 = vpack.c.b16 %v1891, %v1883
      %v2604 = vpack.c.b16 %v1892, %v1884
      %v2605 = vpack.c.b16 %v1893, %v1885
      %v2606 = vpack.c.b16 %v1894, %v1886
      %v2607 = vpack.c.b16 %v1895, %v1887
      %v2608 = vpack.c.b16 %v1896, %v1888
      %v2609 = vpack.c.b16 %v1897, %v1889
      %v2610 = vpack.c.b16 %v1898, %v1890
      %v2611 = vpack.c.b16 %v1907, %v1899
      %v2612 = vpack.c.b16 %v1908, %v1900
      %v2613 = vpack.c.b16 %v1909, %v1901
      %v2614 = vpack.c.b16 %v1910, %v1902
      %v2615 = vpack.c.b16 %v1911, %v1903
      %v2616 = vpack.c.b16 %v1912, %v1904
      %v2617 = vpack.c.b16 %v1913, %v1905
      %v2618 = vpack.c.b16 %v1914, %v1906
      %v2619 = vpack.c.b16 %v1923, %v1915
      %v2620 = vpack.c.b16 %v1924, %v1916
      %v2621 = vpack.c.b16 %v1925, %v1917
      %v2622 = vpack.c.b16 %v1926, %v1918
      %v2623 = vpack.c.b16 %v1927, %v1919
      %v2624 = vpack.c.b16 %v1928, %v1920
      %v2625 = vpack.c.b16 %v1929, %v1921
      %v2626 = vpack.c.b16 %v1930, %v1922
      %v2627 = vpack.c.b16 %v1939, %v1931
      %v2628 = vpack.c.b16 %v1940, %v1932
      %v2629 = vpack.c.b16 %v1941, %v1933
      %v2630 = vpack.c.b16 %v1942, %v1934
      %v2631 = vpack.c.b16 %v1943, %v1935
      %v2632 = vpack.c.b16 %v1944, %v1936
      %v2633 = vpack.c.b16 %v1945, %v1937
      %v2634 = vpack.c.b16 %v1946, %v1938
      %v2635 = vpack.c.b16 %v1955, %v1947
      %v2636 = vpack.c.b16 %v1956, %v1948
      %v2637 = vpack.c.b16 %v1957, %v1949
      %v2638 = vpack.c.b16 %v1958, %v1950
      %v2639 = vpack.c.b16 %v1959, %v1951
      %v2640 = vpack.c.b16 %v1960, %v1952
      %v2641 = vpack.c.b16 %v1961, %v1953
      %v2642 = vpack.c.b16 %v1962, %v1954
      %v2643 = vpack.c.b16 %v1971, %v1963
      %v2644 = vpack.c.b16 %v1972, %v1964
      %v2645 = vpack.c.b16 %v1973, %v1965
      %v2646 = vpack.c.b16 %v1974, %v1966
      %v2647 = vpack.c.b16 %v1975, %v1967
      %v2648 = vpack.c.b16 %v1976, %v1968
      %v2649 = vpack.c.b16 %v1977, %v1969
      %v2650 = vpack.c.b16 %v1978, %v1970
      %v2651 = vpack.c.b16 %v1987, %v1979
      %v2652 = vpack.c.b16 %v1988, %v1980
      %v2653 = vpack.c.b16 %v1989, %v1981
      %v2654 = vpack.c.b16 %v1990, %v1982
      %v2655 = vpack.c.b16 %v1991, %v1983
      %v2656 = vpack.c.b16 %v1992, %v1984
      %v2657 = vpack.c.b16 %v1993, %v1985
      %v2658 = vpack.c.b16 %v1994, %v1986
      %v2659 = vpack.c.b16 %v2003, %v1995
      %v2660 = vpack.c.b16 %v2004, %v1996
      %v2661 = vpack.c.b16 %v2005, %v1997
      %v2662 = vpack.c.b16 %v2006, %v1998
      %v2663 = vpack.c.b16 %v2007, %v1999
      %v2664 = vpack.c.b16 %v2008, %v2000
      %v2665 = vpack.c.b16 %v2009, %v2001
      %v2666 = vpack.c.b16 %v2010, %v2002
      %v2667 = vpack.c.b16 %v2019, %v2011
      %v2668 = vpack.c.b16 %v2020, %v2012
      %v2669 = vpack.c.b16 %v2021, %v2013
      %v2670 = vpack.c.b16 %v2022, %v2014
      %v2671 = vpack.c.b16 %v2023, %v2015
      %v2672 = vpack.c.b16 %v2024, %v2016
      %v2673 = vpack.c.b16 %v2025, %v2017
      %v2674 = vpack.c.b16 %v2026, %v2018
      %v2675 = vpack.c.b16 %v2035, %v2027
      %v2676 = vpack.c.b16 %v2036, %v2028
      %v2677 = vpack.c.b16 %v2037, %v2029
      %v2678 = vpack.c.b16 %v2038, %v2030
      %v2679 = vpack.c.b16 %v2039, %v2031
      %v2680 = vpack.c.b16 %v2040, %v2032
      %v2681 = vpack.c.b16 %v2041, %v2033
      %v2682 = vpack.c.b16 %v2042, %v2034
      %v2683 = vpack.c.b16 %v2051, %v2043
      %v2684 = vpack.c.b16 %v2052, %v2044
      %v2685 = vpack.c.b16 %v2053, %v2045
      %v2686 = vpack.c.b16 %v2054, %v2046
      %v2687 = vpack.c.b16 %v2055, %v2047
      %v2688 = vpack.c.b16 %v2056, %v2048
      %v2689 = vpack.c.b16 %v2057, %v2049
      %v2690 = vpack.c.b16 %v2058, %v2050
      %v2691 = vpack.c.b16 %v2067, %v2059
      %v2692 = vpack.c.b16 %v2068, %v2060
      %v2693 = vpack.c.b16 %v2069, %v2061
      %v2694 = vpack.c.b16 %v2070, %v2062
      %v2695 = vpack.c.b16 %v2071, %v2063
      %v2696 = vpack.c.b16 %v2072, %v2064
      %v2697 = vpack.c.b16 %v2073, %v2065
      %v2698 = vpack.c.b16 %v2074, %v2066
      %v2699 = vpack.c.b16 %v2083, %v2075
      %v2700 = vpack.c.b16 %v2084, %v2076
      %v2701 = vpack.c.b16 %v2085, %v2077
      %v2702 = vpack.c.b16 %v2086, %v2078
      %v2703 = vpack.c.b16 %v2087, %v2079
      %v2704 = vpack.c.b16 %v2088, %v2080
      %v2705 = vpack.c.b16 %v2089, %v2081
      %v2706 = vpack.c.b16 %v2090, %v2082
      %v2707 = vpack.c.b16 %v2099, %v2091
      %v2708 = vpack.c.b16 %v2100, %v2092
      %v2709 = vpack.c.b16 %v2101, %v2093
      %v2710 = vpack.c.b16 %v2102, %v2094
      %v2711 = vpack.c.b16 %v2103, %v2095
      %v2712 = vpack.c.b16 %v2104, %v2096
      %v2713 = vpack.c.b16 %v2105, %v2097
      %v2714 = vpack.c.b16 %v2106, %v2098
      %v2715 = vpack.c.b16 %v2115, %v2107
      %v2716 = vpack.c.b16 %v2116, %v2108
      %v2717 = vpack.c.b16 %v2117, %v2109
      %v2718 = vpack.c.b16 %v2118, %v2110
      %v2719 = vpack.c.b16 %v2119, %v2111
      %v2720 = vpack.c.b16 %v2120, %v2112
      %v2721 = vpack.c.b16 %v2121, %v2113
      %v2722 = vpack.c.b16 %v2122, %v2114
      %v2723 = vpack.c.b16 %v2131, %v2123
      %v2724 = vpack.c.b16 %v2132, %v2124
      %v2725 = vpack.c.b16 %v2133, %v2125
      %v2726 = vpack.c.b16 %v2134, %v2126
      %v2727 = vpack.c.b16 %v2135, %v2127
      %v2728 = vpack.c.b16 %v2136, %v2128
      %v2729 = vpack.c.b16 %v2137, %v2129
      %v2730 = vpack.c.b16 %v2138, %v2130
      %v2731 = vpack.c.b16 %v2147, %v2139
      %v2732 = vpack.c.b16 %v2148, %v2140
      %v2733 = vpack.c.b16 %v2149, %v2141
      %v2734 = vpack.c.b16 %v2150, %v2142
      %v2735 = vpack.c.b16 %v2151, %v2143
      %v2736 = vpack.c.b16 %v2152, %v2144
      %v2737 = vpack.c.b16 %v2153, %v2145
      %v2738 = vpack.c.b16 %v2154, %v2146
      %v2739 = vpack.c.b16 %v2163, %v2155
      %v2740 = vpack.c.b16 %v2164, %v2156
      %v2741 = vpack.c.b16 %v2165, %v2157
      %v2742 = vpack.c.b16 %v2166, %v2158
      %v2743 = vpack.c.b16 %v2167, %v2159
      %v2744 = vpack.c.b16 %v2168, %v2160
      %v2745 = vpack.c.b16 %v2169, %v2161
      %v2746 = vpack.c.b16 %v2170, %v2162
      %v2747 = vpack.c.b16 %v2179, %v2171
      %v2748 = vpack.c.b16 %v2180, %v2172
      %v2749 = vpack.c.b16 %v2181, %v2173
      %v2750 = vpack.c.b16 %v2182, %v2174
      %v2751 = vpack.c.b16 %v2183, %v2175
      %v2752 = vpack.c.b16 %v2184, %v2176
      %v2753 = vpack.c.b16 %v2185, %v2177
      %v2754 = vpack.c.b16 %v2186, %v2178
      %v2755 = vpack.c.b16 %v2195, %v2187
      %v2756 = vpack.c.b16 %v2196, %v2188
      %v2757 = vpack.c.b16 %v2197, %v2189
      %v2758 = vpack.c.b16 %v2198, %v2190
      %v2759 = vpack.c.b16 %v2199, %v2191
      %v2760 = vpack.c.b16 %v2200, %v2192
      %v2761 = vpack.c.b16 %v2201, %v2193
      %v2762 = vpack.c.b16 %v2202, %v2194
      %v2763 = vpack.c.b16 %v2211, %v2203
      %v2764 = vpack.c.b16 %v2212, %v2204
      %v2765 = vpack.c.b16 %v2213, %v2205
      %v2766 = vpack.c.b16 %v2214, %v2206
      %v2767 = vpack.c.b16 %v2215, %v2207
      %v2768 = vpack.c.b16 %v2216, %v2208
      %v2769 = vpack.c.b16 %v2217, %v2209
      %v2770 = vpack.c.b16 %v2218, %v2210
      %v2771 = vpack.c.b16 %v2227, %v2219
      %v2772 = vpack.c.b16 %v2228, %v2220
      %v2773 = vpack.c.b16 %v2229, %v2221
      %v2774 = vpack.c.b16 %v2230, %v2222
      %v2775 = vpack.c.b16 %v2231, %v2223
      %v2776 = vpack.c.b16 %v2232, %v2224
      %v2777 = vpack.c.b16 %v2233, %v2225
      %v2778 = vpack.c.b16 %v2234, %v2226
      %v2779 = vpack.c.b16 %v2243, %v2235
      %v2780 = vpack.c.b16 %v2244, %v2236
      %v2781 = vpack.c.b16 %v2245, %v2237
      %v2782 = vpack.c.b16 %v2246, %v2238
      %v2783 = vpack.c.b16 %v2247, %v2239
      %v2784 = vpack.c.b16 %v2248, %v2240
      %v2785 = vpack.c.b16 %v2249, %v2241
      %v2786 = vpack.c.b16 %v2250, %v2242
      %v2787 = vpack.c.b16 %v2259, %v2251
      %v2788 = vpack.c.b16 %v2260, %v2252
      %v2789 = vpack.c.b16 %v2261, %v2253
      %v2790 = vpack.c.b16 %v2262, %v2254
      %v2791 = vpack.c.b16 %v2263, %v2255
      %v2792 = vpack.c.b16 %v2264, %v2256
      %v2793 = vpack.c.b16 %v2265, %v2257
      %v2794 = vpack.c.b16 %v2266, %v2258
      %v2795 = vpack.c.b16 %v2275, %v2267
      %v2796 = vpack.c.b16 %v2276, %v2268
      %v2797 = vpack.c.b16 %v2277, %v2269
      %v2798 = vpack.c.b16 %v2278, %v2270
      %v2799 = vpack.c.b16 %v2279, %v2271
      %v2800 = vpack.c.b16 %v2280, %v2272
      %v2801 = vpack.c.b16 %v2281, %v2273
      %v2802 = vpack.c.b16 %v2282, %v2274
      %v2803 = vpack.c.b16 %v2291, %v2283
      %v2804 = vpack.c.b16 %v2292, %v2284
      %v2805 = vpack.c.b16 %v2293, %v2285
      %v2806 = vpack.c.b16 %v2294, %v2286
      %v2807 = vpack.c.b16 %v2295, %v2287
      %v2808 = vpack.c.b16 %v2296, %v2288
      %v2809 = vpack.c.b16 %v2297, %v2289
      %v2810 = vpack.c.b16 %v2298, %v2290
      %3323 = vmatprep.subr.bf16.mxu0 %v2356
      %3324 = vmatpush1.bf16.msra.mxu0 %v2355
      %3325 = vmatprep.subr.bf16.mxu0 %v2348
      %3326 = vmatpush1.bf16.msra.mxu0 %v2347
      %3327 = vmatprep.subr.bf16.mxu0 %v2340
      %3328 = vmatpush1.bf16.msra.mxu0 %v2339
      %3329 = vmatprep.subr.bf16.mxu0 %v2332
      %3330 = vmatpush1.bf16.msra.mxu0 %v2331
      %3331 = vmatprep.subr.bf16.mxu0 %v2324
      %3332 = vmatpush1.bf16.msra.mxu0 %v2323
      %3333 = vmatprep.subr.bf16.mxu0 %v2316
      %3334 = vmatpush1.bf16.msra.mxu0 %v2315
      %3335 = vmatprep.subr.bf16.mxu0 %v2308
      %3336 = vmatpush1.bf16.msra.mxu0 %v2307
      %3337 = vmatprep.subr.bf16.mxu0 %v2300
      %3338 = vmatpush1.bf16.msra.mxu0 %v2299
      %3339 = vmatprep.subr.bf16.mxu0 %v2420
      %3340 = vmatpush2.bf16.msra.mxu0 %v2419
      %3341 = vmatprep.subr.bf16.mxu0 %v2412
      %3342 = vmatpush2.bf16.msra.mxu0 %v2411
      %3343 = vmatprep.subr.bf16.mxu0 %v2404
      %3344 = vmatpush2.bf16.msra.mxu0 %v2403
      %3345 = vmatprep.subr.bf16.mxu0 %v2396
      %3346 = vmatpush2.bf16.msra.mxu0 %v2395
      %3347 = vmatprep.subr.bf16.mxu0 %v2388
      %3348 = vmatpush2.bf16.msra.mxu0 %v2387
      %3349 = vmatprep.subr.bf16.mxu0 %v2380
      %3350 = vmatpush2.bf16.msra.mxu0 %v2379
      %3351 = vmatprep.subr.bf16.mxu0 %v2372
      %3352 = vmatpush2.bf16.msra.mxu0 %v2371
      %3353 = vmatprep.subr.bf16.mxu0 %v2364
      %3354 = vmatpush2.bf16.msra.mxu0 %v2363
      %3355 = vmatprep.mubr.bf16.mxu0 %v202
      %3356 = vmatmul.mubr.bf16.gmra.mxu0 %v201
      %v3357 = vpop.f32.mrf.mxu0
      %v3358 = vadd.f32 %v726, %v3357
      %v3359 = vpop.f32.mrf.mxu0
      %v3360 = vadd.f32 %v730, %v3359
      %v3361 = vpop.f32.mrf.mxu0
      %v3362 = vpop.f32.mrf.mxu0
      %3363 = vdwg.mxu0
      %3364 = vmatprep.subr.bf16.mxu0 %v2484
      %3365 = vmatpush1.bf16.msra.mxu0 %v2483
      %3366 = vmatprep.subr.bf16.mxu0 %v2476
      %3367 = vmatpush1.bf16.msra.mxu0 %v2475
      %3368 = vmatprep.subr.bf16.mxu0 %v2468
      %3369 = vmatpush1.bf16.msra.mxu0 %v2467
      %3370 = vmatprep.subr.bf16.mxu0 %v2460
      %3371 = vmatpush1.bf16.msra.mxu0 %v2459
      %3372 = vmatprep.subr.bf16.mxu0 %v2452
      %3373 = vmatpush1.bf16.msra.mxu0 %v2451
      %3374 = vmatprep.subr.bf16.mxu0 %v2444
      %3375 = vmatpush1.bf16.msra.mxu0 %v2443
      %3376 = vmatprep.subr.bf16.mxu0 %v2436
      %3377 = vmatpush1.bf16.msra.mxu0 %v2435
      %3378 = vmatprep.subr.bf16.mxu0 %v2428
      %3379 = vmatpush1.bf16.msra.mxu0 %v2427
      %3380 = vmatprep.subr.bf16.mxu0 %v2548
      %3381 = vmatpush2.bf16.msra.mxu0 %v2547
      %3382 = vmatprep.subr.bf16.mxu0 %v2540
      %3383 = vmatpush2.bf16.msra.mxu0 %v2539
      %3384 = vmatprep.subr.bf16.mxu0 %v2532
      %3385 = vmatpush2.bf16.msra.mxu0 %v2531
      %3386 = vmatprep.subr.bf16.mxu0 %v2524
      %3387 = vmatpush2.bf16.msra.mxu0 %v2523
      %3388 = vmatprep.subr.bf16.mxu0 %v2516
      %3389 = vmatpush2.bf16.msra.mxu0 %v2515
      %3390 = vmatprep.subr.bf16.mxu0 %v2508
      %3391 = vmatpush2.bf16.msra.mxu0 %v2507
      %3392 = vmatprep.subr.bf16.mxu0 %v2500
      %3393 = vmatpush2.bf16.msra.mxu0 %v2499
      %3394 = vmatprep.subr.bf16.mxu0 %v2492
      %3395 = vmatpush2.bf16.msra.mxu0 %v2491
      %3396 = vmatprep.mubr.bf16.mxu0 %v204
      %3397 = vmatmul.mubr.bf16.gmra.mxu0 %v203
      %v3398 = vpop.f32.mrf.mxu0
      %v3399 = vadd.f32 %v3358, %v3398
      %v3400 = vpop.f32.mrf.mxu0
      %v3401 = vadd.f32 %v3360, %v3400
      %v3402 = vpop.f32.mrf.mxu0
      %v3403 = vpop.f32.mrf.mxu0
      %3404 = vdwg.mxu0
      %3405 = vmatprep.subr.bf16.mxu0 %v2612
      %3406 = vmatpush1.bf16.msra.mxu0 %v2611
      %3407 = vmatprep.subr.bf16.mxu0 %v2604
      %3408 = vmatpush1.bf16.msra.mxu0 %v2603
      %3409 = vmatprep.subr.bf16.mxu0 %v2596
      %3410 = vmatpush1.bf16.msra.mxu0 %v2595
      %3411 = vmatprep.subr.bf16.mxu0 %v2588
      %3412 = vmatpush1.bf16.msra.mxu0 %v2587
      %3413 = vmatprep.subr.bf16.mxu0 %v2580
      %3414 = vmatpush1.bf16.msra.mxu0 %v2579
      %3415 = vmatprep.subr.bf16.mxu0 %v2572
      %3416 = vmatpush1.bf16.msra.mxu0 %v2571
      %3417 = vmatprep.subr.bf16.mxu0 %v2564
      %3418 = vmatpush1.bf16.msra.mxu0 %v2563
      %3419 = vmatprep.subr.bf16.mxu0 %v2556
      %3420 = vmatpush1.bf16.msra.mxu0 %v2555
      %3421 = vmatprep.subr.bf16.mxu0 %v2676
      %3422 = vmatpush2.bf16.msra.mxu0 %v2675
      %3423 = vmatprep.subr.bf16.mxu0 %v2668
      %3424 = vmatpush2.bf16.msra.mxu0 %v2667
      %3425 = vmatprep.subr.bf16.mxu0 %v2660
      %3426 = vmatpush2.bf16.msra.mxu0 %v2659
      %3427 = vmatprep.subr.bf16.mxu0 %v2652
      %3428 = vmatpush2.bf16.msra.mxu0 %v2651
      %3429 = vmatprep.subr.bf16.mxu0 %v2644
      %3430 = vmatpush2.bf16.msra.mxu0 %v2643
      %3431 = vmatprep.subr.bf16.mxu0 %v2636
      %3432 = vmatpush2.bf16.msra.mxu0 %v2635
      %3433 = vmatprep.subr.bf16.mxu0 %v2628
      %3434 = vmatpush2.bf16.msra.mxu0 %v2627
      %3435 = vmatprep.subr.bf16.mxu0 %v2620
      %3436 = vmatpush2.bf16.msra.mxu0 %v2619
      %3437 = vmatprep.mubr.bf16.mxu0 %v206
      %3438 = vmatmul.mubr.bf16.gmra.mxu0 %v205
      %v3439 = vpop.f32.mrf.mxu0
      %v3440 = vadd.f32 %v3399, %v3439
      %v3441 = vpop.f32.mrf.mxu0
      %v3442 = vadd.f32 %v3401, %v3441
      %v3443 = vpop.f32.mrf.mxu0
      %v3444 = vpop.f32.mrf.mxu0
      %3445 = vdwg.mxu0
      %3446 = vmatprep.subr.bf16.mxu0 %v2740
      %3447 = vmatpush1.bf16.msra.mxu0 %v2739
      %3448 = vmatprep.subr.bf16.mxu0 %v2732
      %3449 = vmatpush1.bf16.msra.mxu0 %v2731
      %3450 = vmatprep.subr.bf16.mxu0 %v2724
      %3451 = vmatpush1.bf16.msra.mxu0 %v2723
      %3452 = vmatprep.subr.bf16.mxu0 %v2716
      %3453 = vmatpush1.bf16.msra.mxu0 %v2715
      %3454 = vmatprep.subr.bf16.mxu0 %v2708
      %3455 = vmatpush1.bf16.msra.mxu0 %v2707
      %3456 = vmatprep.subr.bf16.mxu0 %v2700
      %3457 = vmatpush1.bf16.msra.mxu0 %v2699
      %3458 = vmatprep.subr.bf16.mxu0 %v2692
      %3459 = vmatpush1.bf16.msra.mxu0 %v2691
      %3460 = vmatprep.subr.bf16.mxu0 %v2684
      %3461 = vmatpush1.bf16.msra.mxu0 %v2683
      %3462 = vmatprep.subr.bf16.mxu0 %v2804
      %3463 = vmatpush2.bf16.msra.mxu0 %v2803
      %3464 = vmatprep.subr.bf16.mxu0 %v2796
      %3465 = vmatpush2.bf16.msra.mxu0 %v2795
      %3466 = vmatprep.subr.bf16.mxu0 %v2788
      %3467 = vmatpush2.bf16.msra.mxu0 %v2787
      %3468 = vmatprep.subr.bf16.mxu0 %v2780
      %3469 = vmatpush2.bf16.msra.mxu0 %v2779
      %3470 = vmatprep.subr.bf16.mxu0 %v2772
      %3471 = vmatpush2.bf16.msra.mxu0 %v2771
      %3472 = vmatprep.subr.bf16.mxu0 %v2764
      %3473 = vmatpush2.bf16.msra.mxu0 %v2763
      %3474 = vmatprep.subr.bf16.mxu0 %v2756
      %3475 = vmatpush2.bf16.msra.mxu0 %v2755
      %3476 = vmatprep.subr.bf16.mxu0 %v2748
      %3477 = vmatpush2.bf16.msra.mxu0 %v2747
      %3478 = vmatprep.mubr.bf16.mxu0 %v208
      %3479 = vmatmul.mubr.bf16.gmra.mxu0 %v207
      %v3480 = vpop.f32.mrf.mxu0
      %v3481 = vadd.f32 %v3440, %v3480
      %v3482 = vpop.f32.mrf.mxu0
      %v3483 = vadd.f32 %v3442, %v3482
      %v3484 = vpop.f32.mrf.mxu0
      %v3485 = vpop.f32.mrf.mxu0
      %3486 = vdwg.mxu0
      %3487 = vmatprep.subr.bf16.mxu0 %v2358
      %3488 = vmatpush1.bf16.msra.mxu0 %v2357
      %3489 = vmatprep.subr.bf16.mxu0 %v2350
      %3490 = vmatpush1.bf16.msra.mxu0 %v2349
      %3491 = vmatprep.subr.bf16.mxu0 %v2342
      %3492 = vmatpush1.bf16.msra.mxu0 %v2341
      %3493 = vmatprep.subr.bf16.mxu0 %v2334
      %3494 = vmatpush1.bf16.msra.mxu0 %v2333
      %3495 = vmatprep.subr.bf16.mxu0 %v2326
      %3496 = vmatpush1.bf16.msra.mxu0 %v2325
      %3497 = vmatprep.subr.bf16.mxu0 %v2318
      %3498 = vmatpush1.bf16.msra.mxu0 %v2317
      %3499 = vmatprep.subr.bf16.mxu0 %v2310
      %3500 = vmatpush1.bf16.msra.mxu0 %v2309
      %3501 = vmatprep.subr.bf16.mxu0 %v2302
      %3502 = vmatpush1.bf16.msra.mxu0 %v2301
      %3503 = vmatprep.subr.bf16.mxu0 %v2422
      %3504 = vmatpush2.bf16.msra.mxu0 %v2421
      %3505 = vmatprep.subr.bf16.mxu0 %v2414
      %3506 = vmatpush2.bf16.msra.mxu0 %v2413
      %3507 = vmatprep.subr.bf16.mxu0 %v2406
      %3508 = vmatpush2.bf16.msra.mxu0 %v2405
      %3509 = vmatprep.subr.bf16.mxu0 %v2398
      %3510 = vmatpush2.bf16.msra.mxu0 %v2397
      %3511 = vmatprep.subr.bf16.mxu0 %v2390
      %3512 = vmatpush2.bf16.msra.mxu0 %v2389
      %3513 = vmatprep.subr.bf16.mxu0 %v2382
      %3514 = vmatpush2.bf16.msra.mxu0 %v2381
      %3515 = vmatprep.subr.bf16.mxu0 %v2374
      %3516 = vmatpush2.bf16.msra.mxu0 %v2373
      %3517 = vmatprep.subr.bf16.mxu0 %v2366
      %3518 = vmatpush2.bf16.msra.mxu0 %v2365
      %3519 = vmatprep.mubr.bf16.mxu0 %v202
      %3520 = vmatmul.mubr.bf16.gmra.mxu0 %v201
      %v3521 = vpop.f32.mrf.mxu0
      %v3522 = vadd.f32 %v734, %v3521
      %v3523 = vpop.f32.mrf.mxu0
      %v3524 = vadd.f32 %v738, %v3523
      %v3525 = vpop.f32.mrf.mxu0
      %v3526 = vpop.f32.mrf.mxu0
      %3527 = vdwg.mxu0
      %3528 = vmatprep.subr.bf16.mxu0 %v2486
      %3529 = vmatpush1.bf16.msra.mxu0 %v2485
      %3530 = vmatprep.subr.bf16.mxu0 %v2478
      %3531 = vmatpush1.bf16.msra.mxu0 %v2477
      %3532 = vmatprep.subr.bf16.mxu0 %v2470
      %3533 = vmatpush1.bf16.msra.mxu0 %v2469
      %3534 = vmatprep.subr.bf16.mxu0 %v2462
      %3535 = vmatpush1.bf16.msra.mxu0 %v2461
      %3536 = vmatprep.subr.bf16.mxu0 %v2454
      %3537 = vmatpush1.bf16.msra.mxu0 %v2453
      %3538 = vmatprep.subr.bf16.mxu0 %v2446
      %3539 = vmatpush1.bf16.msra.mxu0 %v2445
      %3540 = vmatprep.subr.bf16.mxu0 %v2438
      %3541 = vmatpush1.bf16.msra.mxu0 %v2437
      %3542 = vmatprep.subr.bf16.mxu0 %v2430
      %3543 = vmatpush1.bf16.msra.mxu0 %v2429
      %3544 = vmatprep.subr.bf16.mxu0 %v2550
      %3545 = vmatpush2.bf16.msra.mxu0 %v2549
      %3546 = vmatprep.subr.bf16.mxu0 %v2542
      %3547 = vmatpush2.bf16.msra.mxu0 %v2541
      %3548 = vmatprep.subr.bf16.mxu0 %v2534
      %3549 = vmatpush2.bf16.msra.mxu0 %v2533
      %3550 = vmatprep.subr.bf16.mxu0 %v2526
      %3551 = vmatpush2.bf16.msra.mxu0 %v2525
      %3552 = vmatprep.subr.bf16.mxu0 %v2518
      %3553 = vmatpush2.bf16.msra.mxu0 %v2517
      %3554 = vmatprep.subr.bf16.mxu0 %v2510
      %3555 = vmatpush2.bf16.msra.mxu0 %v2509
      %3556 = vmatprep.subr.bf16.mxu0 %v2502
      %3557 = vmatpush2.bf16.msra.mxu0 %v2501
      %3558 = vmatprep.subr.bf16.mxu0 %v2494
      %3559 = vmatpush2.bf16.msra.mxu0 %v2493
      %3560 = vmatprep.mubr.bf16.mxu0 %v204
      %3561 = vmatmul.mubr.bf16.gmra.mxu0 %v203
      %v3562 = vpop.f32.mrf.mxu0
      %v3563 = vadd.f32 %v3522, %v3562
      %v3564 = vpop.f32.mrf.mxu0
      %v3565 = vadd.f32 %v3524, %v3564
      %v3566 = vpop.f32.mrf.mxu0
      %v3567 = vpop.f32.mrf.mxu0
      %3568 = vdwg.mxu0
      %3569 = vmatprep.subr.bf16.mxu0 %v2614
      %3570 = vmatpush1.bf16.msra.mxu0 %v2613
      %3571 = vmatprep.subr.bf16.mxu0 %v2606
      %3572 = vmatpush1.bf16.msra.mxu0 %v2605
      %3573 = vmatprep.subr.bf16.mxu0 %v2598
      %3574 = vmatpush1.bf16.msra.mxu0 %v2597
      %3575 = vmatprep.subr.bf16.mxu0 %v2590
      %3576 = vmatpush1.bf16.msra.mxu0 %v2589
      %3577 = vmatprep.subr.bf16.mxu0 %v2582
      %3578 = vmatpush1.bf16.msra.mxu0 %v2581
      %3579 = vmatprep.subr.bf16.mxu0 %v2574
      %3580 = vmatpush1.bf16.msra.mxu0 %v2573
      %3581 = vmatprep.subr.bf16.mxu0 %v2566
      %3582 = vmatpush1.bf16.msra.mxu0 %v2565
      %3583 = vmatprep.subr.bf16.mxu0 %v2558
      %3584 = vmatpush1.bf16.msra.mxu0 %v2557
      %3585 = vmatprep.subr.bf16.mxu0 %v2678
      %3586 = vmatpush2.bf16.msra.mxu0 %v2677
      %3587 = vmatprep.subr.bf16.mxu0 %v2670
      %3588 = vmatpush2.bf16.msra.mxu0 %v2669
      %3589 = vmatprep.subr.bf16.mxu0 %v2662
      %3590 = vmatpush2.bf16.msra.mxu0 %v2661
      %3591 = vmatprep.subr.bf16.mxu0 %v2654
      %3592 = vmatpush2.bf16.msra.mxu0 %v2653
      %3593 = vmatprep.subr.bf16.mxu0 %v2646
      %3594 = vmatpush2.bf16.msra.mxu0 %v2645
      %3595 = vmatprep.subr.bf16.mxu0 %v2638
      %3596 = vmatpush2.bf16.msra.mxu0 %v2637
      %3597 = vmatprep.subr.bf16.mxu0 %v2630
      %3598 = vmatpush2.bf16.msra.mxu0 %v2629
      %3599 = vmatprep.subr.bf16.mxu0 %v2622
      %3600 = vmatpush2.bf16.msra.mxu0 %v2621
      %3601 = vmatprep.mubr.bf16.mxu0 %v206
      %3602 = vmatmul.mubr.bf16.gmra.mxu0 %v205
      %v3603 = vpop.f32.mrf.mxu0
      %v3604 = vadd.f32 %v3563, %v3603
      %v3605 = vpop.f32.mrf.mxu0
      %v3606 = vadd.f32 %v3565, %v3605
      %v3607 = vpop.f32.mrf.mxu0
      %v3608 = vpop.f32.mrf.mxu0
      %3609 = vdwg.mxu0
      %3610 = vmatprep.subr.bf16.mxu0 %v2742
      %3611 = vmatpush1.bf16.msra.mxu0 %v2741
      %3612 = vmatprep.subr.bf16.mxu0 %v2734
      %3613 = vmatpush1.bf16.msra.mxu0 %v2733
      %3614 = vmatprep.subr.bf16.mxu0 %v2726
      %3615 = vmatpush1.bf16.msra.mxu0 %v2725
      %3616 = vmatprep.subr.bf16.mxu0 %v2718
      %3617 = vmatpush1.bf16.msra.mxu0 %v2717
      %3618 = vmatprep.subr.bf16.mxu0 %v2710
      %3619 = vmatpush1.bf16.msra.mxu0 %v2709
      %3620 = vmatprep.subr.bf16.mxu0 %v2702
      %3621 = vmatpush1.bf16.msra.mxu0 %v2701
      %3622 = vmatprep.subr.bf16.mxu0 %v2694
      %3623 = vmatpush1.bf16.msra.mxu0 %v2693
      %3624 = vmatprep.subr.bf16.mxu0 %v2686
      %3625 = vmatpush1.bf16.msra.mxu0 %v2685
      %3626 = vmatprep.subr.bf16.mxu0 %v2806
      %3627 = vmatpush2.bf16.msra.mxu0 %v2805
      %3628 = vmatprep.subr.bf16.mxu0 %v2798
      %3629 = vmatpush2.bf16.msra.mxu0 %v2797
      %3630 = vmatprep.subr.bf16.mxu0 %v2790
      %3631 = vmatpush2.bf16.msra.mxu0 %v2789
      %3632 = vmatprep.subr.bf16.mxu0 %v2782
      %3633 = vmatpush2.bf16.msra.mxu0 %v2781
      %3634 = vmatprep.subr.bf16.mxu0 %v2774
      %3635 = vmatpush2.bf16.msra.mxu0 %v2773
      %3636 = vmatprep.subr.bf16.mxu0 %v2766
      %3637 = vmatpush2.bf16.msra.mxu0 %v2765
      %3638 = vmatprep.subr.bf16.mxu0 %v2758
      %3639 = vmatpush2.bf16.msra.mxu0 %v2757
      %3640 = vmatprep.subr.bf16.mxu0 %v2750
      %3641 = vmatpush2.bf16.msra.mxu0 %v2749
      %3642 = vmatprep.mubr.bf16.mxu0 %v208
      %3643 = vmatmul.mubr.bf16.gmra.mxu0 %v207
      %v3644 = vpop.f32.mrf.mxu0
      %v3645 = vadd.f32 %v3604, %v3644
      %v3646 = vpop.f32.mrf.mxu0
      %v3647 = vadd.f32 %v3606, %v3646
      %v3648 = vpop.f32.mrf.mxu0
      %v3649 = vpop.f32.mrf.mxu0
      %3650 = vdwg.mxu0
      %3651 = vmatprep.subr.bf16.mxu0 %v2360
      %3652 = vmatpush1.bf16.msra.mxu0 %v2359
      %3653 = vmatprep.subr.bf16.mxu0 %v2352
      %3654 = vmatpush1.bf16.msra.mxu0 %v2351
      %3655 = vmatprep.subr.bf16.mxu0 %v2344
      %3656 = vmatpush1.bf16.msra.mxu0 %v2343
      %3657 = vmatprep.subr.bf16.mxu0 %v2336
      %3658 = vmatpush1.bf16.msra.mxu0 %v2335
      %3659 = vmatprep.subr.bf16.mxu0 %v2328
      %3660 = vmatpush1.bf16.msra.mxu0 %v2327
      %3661 = vmatprep.subr.bf16.mxu0 %v2320
      %3662 = vmatpush1.bf16.msra.mxu0 %v2319
      %3663 = vmatprep.subr.bf16.mxu0 %v2312
      %3664 = vmatpush1.bf16.msra.mxu0 %v2311
      %3665 = vmatprep.subr.bf16.mxu0 %v2304
      %3666 = vmatpush1.bf16.msra.mxu0 %v2303
      %3667 = vmatprep.subr.bf16.mxu0 %v2424
      %3668 = vmatpush2.bf16.msra.mxu0 %v2423
      %3669 = vmatprep.subr.bf16.mxu0 %v2416
      %3670 = vmatpush2.bf16.msra.mxu0 %v2415
      %3671 = vmatprep.subr.bf16.mxu0 %v2408
      %3672 = vmatpush2.bf16.msra.mxu0 %v2407
      %3673 = vmatprep.subr.bf16.mxu0 %v2400
      %3674 = vmatpush2.bf16.msra.mxu0 %v2399
      %3675 = vmatprep.subr.bf16.mxu0 %v2392
      %3676 = vmatpush2.bf16.msra.mxu0 %v2391
      %3677 = vmatprep.subr.bf16.mxu0 %v2384
      %3678 = vmatpush2.bf16.msra.mxu0 %v2383
      %3679 = vmatprep.subr.bf16.mxu0 %v2376
      %3680 = vmatpush2.bf16.msra.mxu0 %v2375
      %3681 = vmatprep.subr.bf16.mxu0 %v2368
      %3682 = vmatpush2.bf16.msra.mxu0 %v2367
      %3683 = vmatprep.mubr.bf16.mxu0 %v202
      %3684 = vmatmul.mubr.bf16.gmra.mxu0 %v201
      %v3685 = vpop.f32.mrf.mxu0
      %v3686 = vadd.f32 %v742, %v3685
      %v3687 = vpop.f32.mrf.mxu0
      %v3688 = vadd.f32 %v746, %v3687
      %v3689 = vpop.f32.mrf.mxu0
      %v3690 = vpop.f32.mrf.mxu0
      %3691 = vdwg.mxu0
      %3692 = vmatprep.subr.bf16.mxu0 %v2488
      %3693 = vmatpush1.bf16.msra.mxu0 %v2487
      %3694 = vmatprep.subr.bf16.mxu0 %v2480
      %3695 = vmatpush1.bf16.msra.mxu0 %v2479
      %3696 = vmatprep.subr.bf16.mxu0 %v2472
      %3697 = vmatpush1.bf16.msra.mxu0 %v2471
      %3698 = vmatprep.subr.bf16.mxu0 %v2464
      %3699 = vmatpush1.bf16.msra.mxu0 %v2463
      %3700 = vmatprep.subr.bf16.mxu0 %v2456
      %3701 = vmatpush1.bf16.msra.mxu0 %v2455
      %3702 = vmatprep.subr.bf16.mxu0 %v2448
      %3703 = vmatpush1.bf16.msra.mxu0 %v2447
      %3704 = vmatprep.subr.bf16.mxu0 %v2440
      %3705 = vmatpush1.bf16.msra.mxu0 %v2439
      %3706 = vmatprep.subr.bf16.mxu0 %v2432
      %3707 = vmatpush1.bf16.msra.mxu0 %v2431
      %3708 = vmatprep.subr.bf16.mxu0 %v2552
      %3709 = vmatpush2.bf16.msra.mxu0 %v2551
      %3710 = vmatprep.subr.bf16.mxu0 %v2544
      %3711 = vmatpush2.bf16.msra.mxu0 %v2543
      %3712 = vmatprep.subr.bf16.mxu0 %v2536
      %3713 = vmatpush2.bf16.msra.mxu0 %v2535
      %3714 = vmatprep.subr.bf16.mxu0 %v2528
      %3715 = vmatpush2.bf16.msra.mxu0 %v2527
      %3716 = vmatprep.subr.bf16.mxu0 %v2520
      %3717 = vmatpush2.bf16.msra.mxu0 %v2519
      %3718 = vmatprep.subr.bf16.mxu0 %v2512
      %3719 = vmatpush2.bf16.msra.mxu0 %v2511
      %3720 = vmatprep.subr.bf16.mxu0 %v2504
      %3721 = vmatpush2.bf16.msra.mxu0 %v2503
      %3722 = vmatprep.subr.bf16.mxu0 %v2496
      %3723 = vmatpush2.bf16.msra.mxu0 %v2495
      %3724 = vmatprep.mubr.bf16.mxu0 %v204
      %3725 = vmatmul.mubr.bf16.gmra.mxu0 %v203
      %v3726 = vpop.f32.mrf.mxu0
      %v3727 = vadd.f32 %v3686, %v3726
      %v3728 = vpop.f32.mrf.mxu0
      %v3729 = vadd.f32 %v3688, %v3728
      %v3730 = vpop.f32.mrf.mxu0
      %v3731 = vpop.f32.mrf.mxu0
      %3732 = vdwg.mxu0
      %3733 = vmatprep.subr.bf16.mxu0 %v2616
      %3734 = vmatpush1.bf16.msra.mxu0 %v2615
      %3735 = vmatprep.subr.bf16.mxu0 %v2608
      %3736 = vmatpush1.bf16.msra.mxu0 %v2607
      %3737 = vmatprep.subr.bf16.mxu0 %v2600
      %3738 = vmatpush1.bf16.msra.mxu0 %v2599
      %3739 = vmatprep.subr.bf16.mxu0 %v2592
      %3740 = vmatpush1.bf16.msra.mxu0 %v2591
      %3741 = vmatprep.subr.bf16.mxu0 %v2584
      %3742 = vmatpush1.bf16.msra.mxu0 %v2583
      %3743 = vmatprep.subr.bf16.mxu0 %v2576
      %3744 = vmatpush1.bf16.msra.mxu0 %v2575
      %3745 = vmatprep.subr.bf16.mxu0 %v2568
      %3746 = vmatpush1.bf16.msra.mxu0 %v2567
      %3747 = vmatprep.subr.bf16.mxu0 %v2560
      %3748 = vmatpush1.bf16.msra.mxu0 %v2559
      %3749 = vmatprep.subr.bf16.mxu0 %v2680
      %3750 = vmatpush2.bf16.msra.mxu0 %v2679
      %3751 = vmatprep.subr.bf16.mxu0 %v2672
      %3752 = vmatpush2.bf16.msra.mxu0 %v2671
      %3753 = vmatprep.subr.bf16.mxu0 %v2664
      %3754 = vmatpush2.bf16.msra.mxu0 %v2663
      %3755 = vmatprep.subr.bf16.mxu0 %v2656
      %3756 = vmatpush2.bf16.msra.mxu0 %v2655
      %3757 = vmatprep.subr.bf16.mxu0 %v2648
      %3758 = vmatpush2.bf16.msra.mxu0 %v2647
      %3759 = vmatprep.subr.bf16.mxu0 %v2640
      %3760 = vmatpush2.bf16.msra.mxu0 %v2639
      %3761 = vmatprep.subr.bf16.mxu0 %v2632
      %3762 = vmatpush2.bf16.msra.mxu0 %v2631
      %3763 = vmatprep.subr.bf16.mxu0 %v2624
      %3764 = vmatpush2.bf16.msra.mxu0 %v2623
      %3765 = vmatprep.mubr.bf16.mxu0 %v206
      %3766 = vmatmul.mubr.bf16.gmra.mxu0 %v205
      %v3767 = vpop.f32.mrf.mxu0
      %v3768 = vadd.f32 %v3727, %v3767
      %v3769 = vpop.f32.mrf.mxu0
      %v3770 = vadd.f32 %v3729, %v3769
      %v3771 = vpop.f32.mrf.mxu0
      %v3772 = vpop.f32.mrf.mxu0
      %3773 = vdwg.mxu0
      %3774 = vmatprep.subr.bf16.mxu0 %v2744
      %3775 = vmatpush1.bf16.msra.mxu0 %v2743
      %3776 = vmatprep.subr.bf16.mxu0 %v2736
      %3777 = vmatpush1.bf16.msra.mxu0 %v2735
      %3778 = vmatprep.subr.bf16.mxu0 %v2728
      %3779 = vmatpush1.bf16.msra.mxu0 %v2727
      %3780 = vmatprep.subr.bf16.mxu0 %v2720
      %3781 = vmatpush1.bf16.msra.mxu0 %v2719
      %3782 = vmatprep.subr.bf16.mxu0 %v2712
      %3783 = vmatpush1.bf16.msra.mxu0 %v2711
      %3784 = vmatprep.subr.bf16.mxu0 %v2704
      %3785 = vmatpush1.bf16.msra.mxu0 %v2703
      %3786 = vmatprep.subr.bf16.mxu0 %v2696
      %3787 = vmatpush1.bf16.msra.mxu0 %v2695
      %3788 = vmatprep.subr.bf16.mxu0 %v2688
      %3789 = vmatpush1.bf16.msra.mxu0 %v2687
      %3790 = vmatprep.subr.bf16.mxu0 %v2808
      %3791 = vmatpush2.bf16.msra.mxu0 %v2807
      %3792 = vmatprep.subr.bf16.mxu0 %v2800
      %3793 = vmatpush2.bf16.msra.mxu0 %v2799
      %3794 = vmatprep.subr.bf16.mxu0 %v2792
      %3795 = vmatpush2.bf16.msra.mxu0 %v2791
      %3796 = vmatprep.subr.bf16.mxu0 %v2784
      %3797 = vmatpush2.bf16.msra.mxu0 %v2783
      %3798 = vmatprep.subr.bf16.mxu0 %v2776
      %3799 = vmatpush2.bf16.msra.mxu0 %v2775
      %3800 = vmatprep.subr.bf16.mxu0 %v2768
      %3801 = vmatpush2.bf16.msra.mxu0 %v2767
      %3802 = vmatprep.subr.bf16.mxu0 %v2760
      %3803 = vmatpush2.bf16.msra.mxu0 %v2759
      %3804 = vmatprep.subr.bf16.mxu0 %v2752
      %3805 = vmatpush2.bf16.msra.mxu0 %v2751
      %3806 = vmatprep.mubr.bf16.mxu0 %v208
      %3807 = vmatmul.mubr.bf16.gmra.mxu0 %v207
      %v3808 = vpop.f32.mrf.mxu0
      %v3809 = vadd.f32 %v3768, %v3808
      %v3810 = vpop.f32.mrf.mxu0
      %v3811 = vadd.f32 %v3770, %v3810
      %v3812 = vpop.f32.mrf.mxu0
      %v3813 = vpop.f32.mrf.mxu0
      %3814 = vdwg.mxu0
      %3815 = vmatprep.subr.bf16.mxu0 %v2362
      %3816 = vmatpush1.bf16.msra.mxu0 %v2361
      %3817 = vmatprep.subr.bf16.mxu0 %v2354
      %3818 = vmatpush1.bf16.msra.mxu0 %v2353
      %3819 = vmatprep.subr.bf16.mxu0 %v2346
      %3820 = vmatpush1.bf16.msra.mxu0 %v2345
      %3821 = vmatprep.subr.bf16.mxu0 %v2338
      %3822 = vmatpush1.bf16.msra.mxu0 %v2337
      %3823 = vmatprep.subr.bf16.mxu0 %v2330
      %3824 = vmatpush1.bf16.msra.mxu0 %v2329
      %3825 = vmatprep.subr.bf16.mxu0 %v2322
      %3826 = vmatpush1.bf16.msra.mxu0 %v2321
      %3827 = vmatprep.subr.bf16.mxu0 %v2314
      %3828 = vmatpush1.bf16.msra.mxu0 %v2313
      %3829 = vmatprep.subr.bf16.mxu0 %v2306
      %3830 = vmatpush1.bf16.msra.mxu0 %v2305
      %3831 = vmatprep.subr.bf16.mxu0 %v2426
      %3832 = vmatpush2.bf16.msra.mxu0 %v2425
      %3833 = vmatprep.subr.bf16.mxu0 %v2418
      %3834 = vmatpush2.bf16.msra.mxu0 %v2417
      %3835 = vmatprep.subr.bf16.mxu0 %v2410
      %3836 = vmatpush2.bf16.msra.mxu0 %v2409
      %3837 = vmatprep.subr.bf16.mxu0 %v2402
      %3838 = vmatpush2.bf16.msra.mxu0 %v2401
      %3839 = vmatprep.subr.bf16.mxu0 %v2394
      %3840 = vmatpush2.bf16.msra.mxu0 %v2393
      %3841 = vmatprep.subr.bf16.mxu0 %v2386
      %3842 = vmatpush2.bf16.msra.mxu0 %v2385
      %3843 = vmatprep.subr.bf16.mxu0 %v2378
      %3844 = vmatpush2.bf16.msra.mxu0 %v2377
      %3845 = vmatprep.subr.bf16.mxu0 %v2370
      %3846 = vmatpush2.bf16.msra.mxu0 %v2369
      %3847 = vmatprep.mubr.bf16.mxu0 %v202
      %3848 = vmatmul.mubr.bf16.gmra.mxu0 %v201
      %v3849 = vpop.f32.mrf.mxu0
      %v3850 = vadd.f32 %v750, %v3849
      %v3851 = vpop.f32.mrf.mxu0
      %v3852 = vadd.f32 %v754, %v3851
      %v3853 = vpop.f32.mrf.mxu0
      %v3854 = vpop.f32.mrf.mxu0
      %3855 = vdwg.mxu0
      %3856 = vmatprep.subr.bf16.mxu0 %v2490
      %3857 = vmatpush1.bf16.msra.mxu0 %v2489
      %3858 = vmatprep.subr.bf16.mxu0 %v2482
      %3859 = vmatpush1.bf16.msra.mxu0 %v2481
      %3860 = vmatprep.subr.bf16.mxu0 %v2474
      %3861 = vmatpush1.bf16.msra.mxu0 %v2473
      %3862 = vmatprep.subr.bf16.mxu0 %v2466
      %3863 = vmatpush1.bf16.msra.mxu0 %v2465
      %3864 = vmatprep.subr.bf16.mxu0 %v2458
      %3865 = vmatpush1.bf16.msra.mxu0 %v2457
      %3866 = vmatprep.subr.bf16.mxu0 %v2450
      %3867 = vmatpush1.bf16.msra.mxu0 %v2449
      %3868 = vmatprep.subr.bf16.mxu0 %v2442
      %3869 = vmatpush1.bf16.msra.mxu0 %v2441
      %3870 = vmatprep.subr.bf16.mxu0 %v2434
      %3871 = vmatpush1.bf16.msra.mxu0 %v2433
      %3872 = vmatprep.subr.bf16.mxu0 %v2554
      %3873 = vmatpush2.bf16.msra.mxu0 %v2553
      %3874 = vmatprep.subr.bf16.mxu0 %v2546
      %3875 = vmatpush2.bf16.msra.mxu0 %v2545
      %3876 = vmatprep.subr.bf16.mxu0 %v2538
      %3877 = vmatpush2.bf16.msra.mxu0 %v2537
      %3878 = vmatprep.subr.bf16.mxu0 %v2530
      %3879 = vmatpush2.bf16.msra.mxu0 %v2529
      %3880 = vmatprep.subr.bf16.mxu0 %v2522
      %3881 = vmatpush2.bf16.msra.mxu0 %v2521
      %3882 = vmatprep.subr.bf16.mxu0 %v2514
      %3883 = vmatpush2.bf16.msra.mxu0 %v2513
      %3884 = vmatprep.subr.bf16.mxu0 %v2506
      %3885 = vmatpush2.bf16.msra.mxu0 %v2505
      %3886 = vmatprep.subr.bf16.mxu0 %v2498
      %3887 = vmatpush2.bf16.msra.mxu0 %v2497
      %3888 = vmatprep.mubr.bf16.mxu0 %v204
      %3889 = vmatmul.mubr.bf16.gmra.mxu0 %v203
      %v3890 = vpop.f32.mrf.mxu0
      %v3891 = vadd.f32 %v3850, %v3890
      %v3892 = vpop.f32.mrf.mxu0
      %v3893 = vadd.f32 %v3852, %v3892
      %v3894 = vpop.f32.mrf.mxu0
      %v3895 = vpop.f32.mrf.mxu0
      %3896 = vdwg.mxu0
      %3897 = vmatprep.subr.bf16.mxu0 %v2618
      %3898 = vmatpush1.bf16.msra.mxu0 %v2617
      %3899 = vmatprep.subr.bf16.mxu0 %v2610
      %3900 = vmatpush1.bf16.msra.mxu0 %v2609
      %3901 = vmatprep.subr.bf16.mxu0 %v2602
      %3902 = vmatpush1.bf16.msra.mxu0 %v2601
      %3903 = vmatprep.subr.bf16.mxu0 %v2594
      %3904 = vmatpush1.bf16.msra.mxu0 %v2593
      %3905 = vmatprep.subr.bf16.mxu0 %v2586
      %3906 = vmatpush1.bf16.msra.mxu0 %v2585
      %3907 = vmatprep.subr.bf16.mxu0 %v2578
      %3908 = vmatpush1.bf16.msra.mxu0 %v2577
      %3909 = vmatprep.subr.bf16.mxu0 %v2570
      %3910 = vmatpush1.bf16.msra.mxu0 %v2569
      %3911 = vmatprep.subr.bf16.mxu0 %v2562
      %3912 = vmatpush1.bf16.msra.mxu0 %v2561
      %3913 = vmatprep.subr.bf16.mxu0 %v2682
      %3914 = vmatpush2.bf16.msra.mxu0 %v2681
      %3915 = vmatprep.subr.bf16.mxu0 %v2674
      %3916 = vmatpush2.bf16.msra.mxu0 %v2673
      %3917 = vmatprep.subr.bf16.mxu0 %v2666
      %3918 = vmatpush2.bf16.msra.mxu0 %v2665
      %3919 = vmatprep.subr.bf16.mxu0 %v2658
      %3920 = vmatpush2.bf16.msra.mxu0 %v2657
      %3921 = vmatprep.subr.bf16.mxu0 %v2650
      %3922 = vmatpush2.bf16.msra.mxu0 %v2649
      %3923 = vmatprep.subr.bf16.mxu0 %v2642
      %3924 = vmatpush2.bf16.msra.mxu0 %v2641
      %3925 = vmatprep.subr.bf16.mxu0 %v2634
      %3926 = vmatpush2.bf16.msra.mxu0 %v2633
      %3927 = vmatprep.subr.bf16.mxu0 %v2626
      %3928 = vmatpush2.bf16.msra.mxu0 %v2625
      %3929 = vmatprep.mubr.bf16.mxu0 %v206
      %3930 = vmatmul.mubr.bf16.gmra.mxu0 %v205
      %v3931 = vpop.f32.mrf.mxu0
      %v3932 = vadd.f32 %v3891, %v3931
      %v3933 = vpop.f32.mrf.mxu0
      %v3934 = vadd.f32 %v3893, %v3933
      %v3935 = vpop.f32.mrf.mxu0
      %v3936 = vpop.f32.mrf.mxu0
      %3937 = vdwg.mxu0
      %3938 = vmatprep.subr.bf16.mxu0 %v2746
      %3939 = vmatpush1.bf16.msra.mxu0 %v2745
      %3940 = vmatprep.subr.bf16.mxu0 %v2738
      %3941 = vmatpush1.bf16.msra.mxu0 %v2737
      %3942 = vmatprep.subr.bf16.mxu0 %v2730
      %3943 = vmatpush1.bf16.msra.mxu0 %v2729
      %3944 = vmatprep.subr.bf16.mxu0 %v2722
      %3945 = vmatpush1.bf16.msra.mxu0 %v2721
      %3946 = vmatprep.subr.bf16.mxu0 %v2714
      %3947 = vmatpush1.bf16.msra.mxu0 %v2713
      %3948 = vmatprep.subr.bf16.mxu0 %v2706
      %3949 = vmatpush1.bf16.msra.mxu0 %v2705
      %3950 = vmatprep.subr.bf16.mxu0 %v2698
      %3951 = vmatpush1.bf16.msra.mxu0 %v2697
      %3952 = vmatprep.subr.bf16.mxu0 %v2690
      %3953 = vmatpush1.bf16.msra.mxu0 %v2689
      %3954 = vmatprep.subr.bf16.mxu0 %v2810
      %3955 = vmatpush2.bf16.msra.mxu0 %v2809
      %3956 = vmatprep.subr.bf16.mxu0 %v2802
      %3957 = vmatpush2.bf16.msra.mxu0 %v2801
      %3958 = vmatprep.subr.bf16.mxu0 %v2794
      %3959 = vmatpush2.bf16.msra.mxu0 %v2793
      %3960 = vmatprep.subr.bf16.mxu0 %v2786
      %3961 = vmatpush2.bf16.msra.mxu0 %v2785
      %3962 = vmatprep.subr.bf16.mxu0 %v2778
      %3963 = vmatpush2.bf16.msra.mxu0 %v2777
      %3964 = vmatprep.subr.bf16.mxu0 %v2770
      %3965 = vmatpush2.bf16.msra.mxu0 %v2769
      %3966 = vmatprep.subr.bf16.mxu0 %v2762
      %3967 = vmatpush2.bf16.msra.mxu0 %v2761
      %3968 = vmatprep.subr.bf16.mxu0 %v2754
      %3969 = vmatpush2.bf16.msra.mxu0 %v2753
      %3970 = vmatprep.mubr.bf16.mxu0 %v208
      %3971 = vmatmul.mubr.bf16.gmra.mxu0 %v207
      %v3972 = vpop.f32.mrf.mxu0
      %v3973 = vadd.f32 %v3932, %v3972
      %v3974 = vpop.f32.mrf.mxu0
      %v3975 = vadd.f32 %v3934, %v3974
      %v3976 = vpop.f32.mrf.mxu0
      %v3977 = vpop.f32.mrf.mxu0
      %3978 = vdwg.mxu0
      %v3979 = vmax.f32 %v3481, 0.0
      %v3980 = vmax.f32 %v3483, 0.0
      %v3981 = vmax.f32 %v3645, 0.0
      %v3982 = vmax.f32 %v3647, 0.0
      %v3983 = vmax.f32 %v3809, 0.0
      %v3984 = vmax.f32 %v3811, 0.0
      %v3985 = vmax.f32 %v3973, 0.0
      %v3986 = vmax.f32 %v3975, 0.0
      %p3987 = scmp.lt.s32.totalorder %s14, 4
      // Predicated region
      $region37: #{vae_mlp_mri_forward.8} parent=31 // pred_check
        %p3988 = pneg %p3987
      $region38: #{vae_mlp_mri_forward.8} parent=31 // pred_check_branch
        %3990 = sbr.rel (%p3988) target = $region40
      $region39: #{vae_mlp_mri_forward.8} parent=31 // pred_region
        %3991 = vst [vmem:[#allocation2] sm:$0xff] %v3979
        %3992 = vst [vmem:[#allocation2 + $0x8] sm:$0xff] %v3980
        %3993 = vst [vmem:[#allocation2 + $0x10] sm:$0xff] %v3981
        %3994 = vst [vmem:[#allocation2 + $0x18] sm:$0xff] %v3982
        %3995 = vst [vmem:[#allocation2 + $0x20] sm:$0xff] %v3983
        %3996 = vst [vmem:[#allocation2 + $0x28] sm:$0xff] %v3984
        %3997 = vst [vmem:[#allocation2 + $0x30] sm:$0xff] %v3985
        %3998 = vst [vmem:[#allocation2 + $0x38] sm:$0xff] %v3986
      $region40: #{vae_mlp_mri_forward.8} parent=31 // pred_fallthru
        _
      %p3999 = scmp.eq.s32.totalorder %s14, 4
      // Predicated region
      $region41: #{vae_mlp_mri_forward.8} parent=31 // pred_check
        %p4000 = pneg %p3999
      $region42: #{vae_mlp_mri_forward.8} parent=31 // pred_check_branch
        %4002 = sbr.rel (%p4000) target = $region44
      $region43: #{vae_mlp_mri_forward.8} parent=31 // pred_region
        %4003 = vst [vmem:[%s3] sm:$0xff] %v3979
        %4004 = vst [vmem:[%s3 + $0x8] sm:$0xff] %v3980
        %4005 = vst [vmem:[%s3 + $0x10] sm:$0xff] %v3981
        %4006 = vst [vmem:[%s3 + $0x18] sm:$0xff] %v3982
        %4007 = vst [vmem:[%s3 + $0x20] sm:$0xff] %v3983
        %4008 = vst [vmem:[%s3 + $0x28] sm:$0xff] %v3984
        %4009 = vst [vmem:[%s3 + $0x30] sm:$0xff] %v3985
        %4010 = vst [vmem:[%s3 + $0x38] sm:$0xff] %v3986
      $region44: #{vae_mlp_mri_forward.8} parent=31 // pred_fallthru
        _
      // Predicated region
      $region45: #{vae_mlp_mri_forward.8} parent=31 // pred_check
        %p4011 = pneg %p100
      $region46: #{vae_mlp_mri_forward.8} parent=31 // pred_check_branch
        %4013 = sbr.rel (%p4011) target = $region48
      $region47: #{vae_mlp_mri_forward.8} parent=31 // pred_region
        _
      $region48: #{vae_mlp_mri_forward.8} parent=31 // pred_fallthru
        _
      // Predicated region
      $region49: #{vae_mlp_mri_forward.8} parent=31 // pred_check
        %p4014 = pneg %p100
      $region50: #{vae_mlp_mri_forward.8} parent=31 // pred_check_branch
        %4016 = sbr.rel (%p4014) target = $region52
      $region51: #{vae_mlp_mri_forward.8} parent=31 // pred_region
        _
      $region52: #{vae_mlp_mri_forward.8} parent=31 // pred_fallthru
        _
    $region32: #{vae_mlp_mri_forward.8} parent=5 // pred_fallthru
      _
    %p4017 = scmp.le.s32.totalorder 2, %s9
    // Predicated region
    $region53: #{vae_mlp_mri_forward.8} parent=5 // pred_check
      %p4018 = pneg %p4017
    $region54: #{vae_mlp_mri_forward.8} parent=5 // pred_check_branch
      %4020 = sbr.rel (%p4018) target = $region56
    $region55: #{vae_mlp_mri_forward.8} parent=5 // pred_region
      %s4021 = ssub.s32 %s9, 2
    $region56: #{vae_mlp_mri_forward.8} parent=5 // pred_fallthru
      _
  $region6: #{vae_mlp_mri_forward.8} parent=0 // loop_footer
    %s13 = sadd.s32 1, %s9
  $region7: #{vae_mlp_mri_forward.8} parent=0 // loop_footer_branch
    %8 = sbr.rel target = $region3
  $region8: #{vae_mlp_mri_forward.8} parent=0 // loop_exit
    _

// kernel: vae_mlp_mri_forward.6
$region0: #{vae_mlp_mri_forward.6}
  #allocation0 [shape = 'u32[]', space=smem, size = 0x4, offset = 0x4, fixed_abs, tag = 'smem constant byte address 0x4 - core index']
  #allocation1 [shape = 'u32[144,128]{1,0:T(1,128)}', space=vmem, size = 0x12000, scoped, tag = 'internal scratch']
  #allocation2 [shape = 'f32[8,1024]{1,0:T(8,128)}', space=vmem, size = 0x8000, scoped, tag = 'scratch operand']
  %s0 = inlined_call_operand.vmem [shape: f32[8,1024], index: 0, kind: input, shape index: {}]
  %s1 = inlined_call_operand.hbm [shape: bf16[5,1024,1024], index: 1, kind: input, shape index: {}]
  %s2 = inlined_call_operand.hbm [shape: f32[5,1,1024], index: 2, kind: input, shape index: {}]
  %s3 = inlined_call_operand.vmem [shape: f32[8,1024], index: 3, kind: output, shape index: {}]
  %s4 = sld [smem:[#allocation0]]
  $region65: #{vae_mlp_mri_forward.6} parent=0
    _
  %s6 = ssub.s32 1, %s4
  %s7 = scalar_select 0, %s6, %s4
  $region1: #{vae_mlp_mri_forward.6} parent=0
    #allocation3 [shape = 'u8[4194304]{0}', space=vmem, size = 0x400000, scoped, tag = 'input window, operand 1']
    #allocation4 [shape = 's32[2]{0}', space=sflag, size = 0x8, scoped, tag = 'scoped memory for vae_mlp_mri_forward.6']
    #allocation5 [shape = 'u8[8192]{0}', space=vmem, size = 0x2000, scoped, tag = 'input window, operand 2']
    #allocation6 [shape = 's32[2]{0}', space=sflag, size = 0x8, scoped, tag = 'scoped memory for vae_mlp_mri_forward.6']
    %8 = vsyncpa [#allocation4], 0
    %s9 = scalar_lea.sflag [#allocation4], 1
    %10 = vsyncpa %s9, 0
    %11 = vsyncpa [#allocation6], 0
    %s12 = scalar_lea.sflag [#allocation6], 1
    %13 = vsyncpa %s12, 0
    loop: start=0, step=1, limit=7
    $region2: #{vae_mlp_mri_forward.6} parent=1 // loop_pre_header
      _
    $region3: #{vae_mlp_mri_forward.6} parent=1 // loop_header
      %s15 = sphi 0, %s19
      %p16 = scmp.ge.s32.totalorder %s15, 7
      %s23 = sphi 0, %s23
      %s25 = sphi 0, %s23
      %s26 = sphi 0, %s25
      %s40 = sphi 0, %s26
      %s46 = sphi 0, %s48
      %s49 = sphi 0, %s46
      %s50 = sphi 0, %s49
      %s66 = sphi 0, %s50
      %s72 = sphi 0, %s74
      %s75 = sphi 0, %s72
      %s76 = sphi 0, %s75
      %s92 = sphi 0, %s76
      %s96 = sphi 0, %s96
      %s98 = sphi 0, %s96
      %s99 = sphi 0, %s98
      %s113 = sphi 0, %s99
    $region4: #{vae_mlp_mri_forward.6} parent=1 // loop_header_branch
      %18 = sbr.rel (%p16) target = $region8
    $region5: #{vae_mlp_mri_forward.6} parent=1 // loop_body
      %s20 = ssub.s32 %s15, 1
      %s21 = ssub.s32 %s15, 2
      %s22 = sadd.s32 %s15, 1
      %s24 = sadd.s32 %s23, 1
      %p27 = scmp.eq.s32.totalorder %s15, 4
      %p28 = scmp.ne.s32.totalorder %s23, %s25
      %p29 = scmp.eq.s32.totalorder %s15, 0
      %p30 = por %p28, %p29
      %p31 = scmp.ne.s32.totalorder %s23, %s25
      %p32 = scmp.eq.s32.totalorder %s20, 4
      %p33 = por %p31, %p32
      %p34 = scmp.ne.s32.totalorder %s25, %s26
      %p35 = scmp.eq.s32.totalorder %s20, 0
      %p36 = por %p34, %p35
      %p37 = scmp.ne.s32.totalorder %s25, %s26
      %p38 = scmp.eq.s32.totalorder %s21, 4
      %p39 = por %p37, %p38
      %p41 = scmp.ne.s32.totalorder %s26, %s40
      %p42 = scmp.eq.s32.totalorder %s21, 0
      %p43 = por %p41, %p42
      %s44 = ssub.s32 %s15, %s22
      %p45 = scmp.eq.s32.totalorder %s44, 0
      %s47 = sadd.s32 %s46, 1
      %s48 = scalar_select %p45, %s46, %s47
      %p51 = pneg %p45
      %p52 = scmp.eq.s32.totalorder %s15, 4
      %p53 = por %p51, %p52
      %p54 = scmp.ne.s32.totalorder %s46, %s49
      %p55 = scmp.eq.s32.totalorder %s15, 0
      %p56 = por %p54, %p55
      %p57 = scmp.ne.s32.totalorder %s46, %s49
      %p58 = scmp.eq.s32.totalorder %s20, 4
      %p59 = por %p57, %p58
      %p60 = scmp.ne.s32.totalorder %s49, %s50
      %p61 = scmp.eq.s32.totalorder %s20, 0
      %p62 = por %p60, %p61
      %p63 = scmp.ne.s32.totalorder %s49, %s50
      %p64 = scmp.eq.s32.totalorder %s21, 4
      %p65 = por %p63, %p64
      %p67 = scmp.ne.s32.totalorder %s50, %s66
      %p68 = scmp.eq.s32.totalorder %s21, 0
      %p69 = por %p67, %p68
      %s70 = ssub.s32 %s15, %s22
      %p71 = scmp.eq.s32.totalorder %s70, 0
      %s73 = sadd.s32 %s72, 1
      %s74 = scalar_select %p71, %s72, %s73
      %p77 = pneg %p71
      %p78 = scmp.eq.s32.totalorder %s15, 4
      %p79 = por %p77, %p78
      %p80 = scmp.ne.s32.totalorder %s72, %s75
      %p81 = scmp.eq.s32.totalorder %s15, 0
      %p82 = por %p80, %p81
      %p83 = scmp.ne.s32.totalorder %s72, %s75
      %p84 = scmp.eq.s32.totalorder %s20, 4
      %p85 = por %p83, %p84
      %p86 = scmp.ne.s32.totalorder %s75, %s76
      %p87 = scmp.eq.s32.totalorder %s20, 0
      %p88 = por %p86, %p87
      %p89 = scmp.ne.s32.totalorder %s75, %s76
      %p90 = scmp.eq.s32.totalorder %s21, 4
      %p91 = por %p89, %p90
      %p93 = scmp.ne.s32.totalorder %s76, %s92
      %p94 = scmp.eq.s32.totalorder %s21, 0
      %p95 = por %p93, %p94
      %s97 = sadd.s32 %s96, 1
      %p100 = scmp.eq.s32.totalorder %s15, 4
      %p101 = scmp.ne.s32.totalorder %s96, %s98
      %p102 = scmp.eq.s32.totalorder %s15, 0
      %p103 = por %p101, %p102
      %p104 = scmp.ne.s32.totalorder %s96, %s98
      %p105 = scmp.eq.s32.totalorder %s20, 4
      %p106 = por %p104, %p105
      %p107 = scmp.ne.s32.totalorder %s98, %s99
      %p108 = scmp.eq.s32.totalorder %s20, 0
      %p109 = por %p107, %p108
      %p110 = scmp.ne.s32.totalorder %s98, %s99
      %p111 = scmp.eq.s32.totalorder %s21, 4
      %p112 = por %p110, %p111
      %p114 = scmp.ne.s32.totalorder %s99, %s113
      %p115 = scmp.eq.s32.totalorder %s21, 0
      %p116 = por %p114, %p115
      %p117 = scmp.le.s32.totalorder 1, %s15
      %p118 = scmp.lt.s32.totalorder %s15, 6
      %p119 = pnand %p117, %p118
      %p120 = pneg %p119
      // Predicated region
      $region9: #{vae_mlp_mri_forward.6} parent=5 // pred_check
        _
      $region10: #{vae_mlp_mri_forward.6} parent=5 // pred_check_branch
        %122 = sbr.rel (%p119) target = $region12
      $region11: #{vae_mlp_mri_forward.6} parent=5 // pred_region
        %s123 = ssub.s32 %s15, 1
        // Predicated region
        $region13: #{vae_mlp_mri_forward.6} parent=11 // pred_check
          %p124 = pneg %p36
        $region14: #{vae_mlp_mri_forward.6} parent=11 // pred_check_branch
          %126 = sbr.rel (%p124) target = $region16
        $region15: #{vae_mlp_mri_forward.6} parent=11 // pred_region
          _
        $region16: #{vae_mlp_mri_forward.6} parent=11 // pred_fallthru
          _
      $region12: #{vae_mlp_mri_forward.6} parent=5 // pred_fallthru
        _
      %p127 = scmp.lt.s32.totalorder %s15, 5
      // Predicated region
      $region17: #{vae_mlp_mri_forward.6} parent=5 // pred_check
        %p128 = pneg %p127
      $region18: #{vae_mlp_mri_forward.6} parent=5 // pred_check_branch
        %130 = sbr.rel (%p128) target = $region20
      $region19: #{vae_mlp_mri_forward.6} parent=5 // pred_region
        // Predicated region
        $region21: #{vae_mlp_mri_forward.6} parent=19 // pred_check
          %p131 = pneg %p56
        $region22: #{vae_mlp_mri_forward.6} parent=19 // pred_check_branch
          %133 = sbr.rel (%p131) target = $region24
        $region23: #{vae_mlp_mri_forward.6} parent=19 // pred_region
          %s134 = sand.u32 %s46, 1
          %s135 = scalar_lea.sflag [#allocation4], %s134
          %s136 = sand.u32 %s46, 1
          %s137 = smul.addr %s136, 4096
          %s138 = scalar_lea.vmem [#allocation3], %s137
          %s140 = ssub.s32 65536, 65536
          %141 = vsyncadd %s135, %s140
          %s142 = smul.addr %s15, 1024
          %s143 = smul.addr %s142, 64
          %s144 = scalar_lea.hbm %s1, %s143
          %s145 = sshll.u32 %s138, 4
          %s146 = int_to_ptr.vmem [resolvable:$true] %s145
          %151 = dma.hbm_to_vmem [thread:$0]  %s144, 65536, %s146, %s135, 512, 512, 32
        $region24: #{vae_mlp_mri_forward.6} parent=19 // pred_fallthru
          _
        // Predicated region
        $region25: #{vae_mlp_mri_forward.6} parent=19 // pred_check
          %p152 = pneg %p82
        $region26: #{vae_mlp_mri_forward.6} parent=19 // pred_check_branch
          %154 = sbr.rel (%p152) target = $region28
        $region27: #{vae_mlp_mri_forward.6} parent=19 // pred_region
          %s155 = sand.u32 %s72, 1
          %s156 = scalar_lea.sflag [#allocation6], %s155
          %s157 = sand.u32 %s72, 1
          %s158 = smul.addr %s157, 8
          %s159 = scalar_lea.vmem [#allocation5], %s158
          %s161 = ssub.s32 128, 128
          %162 = vsyncadd %s156, %s161
          %s163 = smul.addr %s15, 8
          %s164 = smul.addr %s163, 16
          %s165 = scalar_lea.hbm %s2, %s164
          %s167 = sshll.u32 %s159, 4
          %s168 = int_to_ptr.vmem [resolvable:$true] %s167
          %170 = dma.hbm_to_vmem [thread:$0]  %s165, 128, %s168, %s156
        $region28: #{vae_mlp_mri_forward.6} parent=19 // pred_fallthru
          _
      $region20: #{vae_mlp_mri_forward.6} parent=5 // pred_fallthru
        _
      %p171 = scmp.le.s32.totalorder 1, %s15
      %p172 = scmp.lt.s32.totalorder %s15, 6
      %p173 = pnand %p171, %p172
      %p174 = pneg %p173
      // Predicated region
      $region29: #{vae_mlp_mri_forward.6} parent=5 // pred_check
        _
      $region30: #{vae_mlp_mri_forward.6} parent=5 // pred_check_branch
        %176 = sbr.rel (%p173) target = $region32
      $region31: #{vae_mlp_mri_forward.6} parent=5 // pred_region
        %s177 = ssub.s32 %s15, 1
        %s178 = sand.u32 %s49, 1
        %s179 = scalar_lea.sflag [#allocation4], %s178
        %s180 = sand.u32 %s49, 1
        %s181 = smul.addr %s180, 4096
        %s182 = scalar_lea.vmem [#allocation3], %s181
        // Predicated region
        $region33: #{vae_mlp_mri_forward.6} parent=31 // pred_check
          %p183 = pneg %p62
        $region34: #{vae_mlp_mri_forward.6} parent=31 // pred_check_branch
          %185 = sbr.rel (%p183) target = $region36
        $region35: #{vae_mlp_mri_forward.6} parent=31 // pred_region
          %186 = dma.done %s179, 65536
        $region36: #{vae_mlp_mri_forward.6} parent=31 // pred_fallthru
          _
        %s187 = sand.u32 %s75, 1
        %s188 = scalar_lea.sflag [#allocation6], %s187
        %s189 = sand.u32 %s75, 1
        %s190 = smul.addr %s189, 8
        %s191 = scalar_lea.vmem [#allocation5], %s190
        // Predicated region
        $region37: #{vae_mlp_mri_forward.6} parent=31 // pred_check
          %p192 = pneg %p88
        $region38: #{vae_mlp_mri_forward.6} parent=31 // pred_check_branch
          %194 = sbr.rel (%p192) target = $region40
        $region39: #{vae_mlp_mri_forward.6} parent=31 // pred_region
          %195 = dma.done %s188, 128
        $region40: #{vae_mlp_mri_forward.6} parent=31 // pred_fallthru
          _
        %p196 = pneg %p36
        %p197 = pneg %p33
        %s198 = sand.u32 %s49, 1
        %s199 = scalar_lea.sflag [#allocation4], %s198
        %s200 = sand.u32 %s49, 1
        %s201 = smul.addr %s200, 4096
        %s202 = scalar_lea.vmem [#allocation3], %s201
        %p203 = pneg %p62
        %p204 = pneg %p59
        %s205 = sand.u32 %s75, 1
        %s206 = scalar_lea.sflag [#allocation6], %s205
        %s207 = sand.u32 %s75, 1
        %s208 = smul.addr %s207, 8
        %s209 = scalar_lea.vmem [#allocation5], %s208
        %p210 = pneg %p88
        %p211 = pneg %p85
        %p212 = pneg %p109
        %p213 = pneg %p106
        %p214 = scmp.eq.s32.totalorder %s20, 0
        // Predicated region
        $region41: #{vae_mlp_mri_forward.6} parent=31 // pred_check
          %p215 = pneg %p214
        $region42: #{vae_mlp_mri_forward.6} parent=31 // pred_check_branch
          %217 = sbr.rel (%p215) target = $region44
        $region43: #{vae_mlp_mri_forward.6} parent=31 // pred_region
          %v218 = vld [vmem:[%s0] sm:$0xff]
          %v219 = vld [vmem:[%s0 + $0x8] sm:$0xff]
          %v220 = vld [vmem:[%s0 + $0x10] sm:$0xff]
          %v221 = vld [vmem:[%s0 + $0x18] sm:$0xff]
          %v222 = vld [vmem:[%s0 + $0x20] sm:$0xff]
          %v223 = vld [vmem:[%s0 + $0x28] sm:$0xff]
          %v224 = vld [vmem:[%s0 + $0x30] sm:$0xff]
          %v225 = vld [vmem:[%s0 + $0x38] sm:$0xff]
          %226 = vst [vmem:[#allocation2] sm:$0xff] %v218
          %227 = vst [vmem:[#allocation2 + $0x8] sm:$0xff] %v219
          %228 = vst [vmem:[#allocation2 + $0x10] sm:$0xff] %v220
          %229 = vst [vmem:[#allocation2 + $0x18] sm:$0xff] %v221
          %230 = vst [vmem:[#allocation2 + $0x20] sm:$0xff] %v222
          %231 = vst [vmem:[#allocation2 + $0x28] sm:$0xff] %v223
          %232 = vst [vmem:[#allocation2 + $0x30] sm:$0xff] %v224
          %233 = vst [vmem:[#allocation2 + $0x38] sm:$0xff] %v225
        $region44: #{vae_mlp_mri_forward.6} parent=31 // pred_fallthru
          _
        %v234 = vld [vmem:[#allocation2] sm:$0xff]
        %v235 = vld [vmem:[#allocation2 + $0x8] sm:$0xff]
        %v236 = vld [vmem:[#allocation2 + $0x10] sm:$0xff]
        %v237 = vld [vmem:[#allocation2 + $0x18] sm:$0xff]
        %v238 = vld [vmem:[#allocation2 + $0x20] sm:$0xff]
        %v239 = vld [vmem:[#allocation2 + $0x28] sm:$0xff]
        %v240 = vld [vmem:[#allocation2 + $0x30] sm:$0xff]
        %v241 = vld [vmem:[#allocation2 + $0x38] sm:$0xff]
        %v242 = vpack.c.bf16 %v234, %v234
        %v243 = vpack.c.bf16 %v235, %v235
        %v244 = vpack.c.bf16 %v236, %v236
        %v245 = vpack.c.bf16 %v237, %v237
        %v246 = vpack.c.bf16 %v238, %v238
        %v247 = vpack.c.bf16 %v239, %v239
        %v248 = vpack.c.bf16 %v240, %v240
        %v249 = vpack.c.bf16 %v241, %v241
        %v250 = vld [vmem:[%s182] sm:$0xff]
        %v251 = vld [vmem:[%s182 + $0x8] sm:$0xff]
        %v252 = vld [vmem:[%s182 + $0x10] sm:$0xff]
        %v253 = vld [vmem:[%s182 + $0x18] sm:$0xff]
        %v254 = vld [vmem:[%s182 + $0x20] sm:$0xff]
        %v255 = vld [vmem:[%s182 + $0x28] sm:$0xff]
        %v256 = vld [vmem:[%s182 + $0x30] sm:$0xff]
        %v257 = vld [vmem:[%s182 + $0x38] sm:$0xff]
        %v258 = vld [vmem:[%s182 + $0x40] sm:$0xff]
        %v259 = vld [vmem:[%s182 + $0x48] sm:$0xff]
        %v260 = vld [vmem:[%s182 + $0x50] sm:$0xff]
        %v261 = vld [vmem:[%s182 + $0x58] sm:$0xff]
        %v262 = vld [vmem:[%s182 + $0x60] sm:$0xff]
        %v263 = vld [vmem:[%s182 + $0x68] sm:$0xff]
        %v264 = vld [vmem:[%s182 + $0x70] sm:$0xff]
        %v265 = vld [vmem:[%s182 + $0x78] sm:$0xff]
        %v266 = vld [vmem:[%s182 + $0x80] sm:$0xff]
        %v267 = vld [vmem:[%s182 + $0x88] sm:$0xff]
        %v268 = vld [vmem:[%s182 + $0x90] sm:$0xff]
        %v269 = vld [vmem:[%s182 + $0x98] sm:$0xff]
        %v270 = vld [vmem:[%s182 + $0xa0] sm:$0xff]
        %v271 = vld [vmem:[%s182 + $0xa8] sm:$0xff]
        %v272 = vld [vmem:[%s182 + $0xb0] sm:$0xff]
        %v273 = vld [vmem:[%s182 + $0xb8] sm:$0xff]
        %v274 = vld [vmem:[%s182 + $0xc0] sm:$0xff]
        %v275 = vld [vmem:[%s182 + $0xc8] sm:$0xff]
        %v276 = vld [vmem:[%s182 + $0xd0] sm:$0xff]
        %v277 = vld [vmem:[%s182 + $0xd8] sm:$0xff]
        %v278 = vld [vmem:[%s182 + $0xe0] sm:$0xff]
        %v279 = vld [vmem:[%s182 + $0xe8] sm:$0xff]
        %v280 = vld [vmem:[%s182 + $0xf0] sm:$0xff]
        %v281 = vld [vmem:[%s182 + $0xf8] sm:$0xff]
        %v282 = vld [vmem:[%s182 + $0x100] sm:$0xff]
        %v283 = vld [vmem:[%s182 + $0x108] sm:$0xff]
        %v284 = vld [vmem:[%s182 + $0x110] sm:$0xff]
        %v285 = vld [vmem:[%s182 + $0x118] sm:$0xff]
        %v286 = vld [vmem:[%s182 + $0x120] sm:$0xff]
        %v287 = vld [vmem:[%s182 + $0x128] sm:$0xff]
        %v288 = vld [vmem:[%s182 + $0x130] sm:$0xff]
        %v289 = vld [vmem:[%s182 + $0x138] sm:$0xff]
        %v290 = vld [vmem:[%s182 + $0x140] sm:$0xff]
        %v291 = vld [vmem:[%s182 + $0x148] sm:$0xff]
        %v292 = vld [vmem:[%s182 + $0x150] sm:$0xff]
        %v293 = vld [vmem:[%s182 + $0x158] sm:$0xff]
        %v294 = vld [vmem:[%s182 + $0x160] sm:$0xff]
        %v295 = vld [vmem:[%s182 + $0x168] sm:$0xff]
        %v296 = vld [vmem:[%s182 + $0x170] sm:$0xff]
        %v297 = vld [vmem:[%s182 + $0x178] sm:$0xff]
        %v298 = vld [vmem:[%s182 + $0x180] sm:$0xff]
        %v299 = vld [vmem:[%s182 + $0x188] sm:$0xff]
        %v300 = vld [vmem:[%s182 + $0x190] sm:$0xff]
        %v301 = vld [vmem:[%s182 + $0x198] sm:$0xff]
        %v302 = vld [vmem:[%s182 + $0x1a0] sm:$0xff]
        %v303 = vld [vmem:[%s182 + $0x1a8] sm:$0xff]
        %v304 = vld [vmem:[%s182 + $0x1b0] sm:$0xff]
        %v305 = vld [vmem:[%s182 + $0x1b8] sm:$0xff]
        %v306 = vld [vmem:[%s182 + $0x1c0] sm:$0xff]
        %v307 = vld [vmem:[%s182 + $0x1c8] sm:$0xff]
        %v308 = vld [vmem:[%s182 + $0x1d0] sm:$0xff]
        %v309 = vld [vmem:[%s182 + $0x1d8] sm:$0xff]
        %v310 = vld [vmem:[%s182 + $0x1e0] sm:$0xff]
        %v311 = vld [vmem:[%s182 + $0x1e8] sm:$0xff]
        %v312 = vld [vmem:[%s182 + $0x1f0] sm:$0xff]
        %v313 = vld [vmem:[%s182 + $0x1f8] sm:$0xff]
        %v314 = vld [vmem:[%s182 + $0x200] sm:$0xff]
        %v315 = vld [vmem:[%s182 + $0x208] sm:$0xff]
        %v316 = vld [vmem:[%s182 + $0x210] sm:$0xff]
        %v317 = vld [vmem:[%s182 + $0x218] sm:$0xff]
        %v318 = vld [vmem:[%s182 + $0x220] sm:$0xff]
        %v319 = vld [vmem:[%s182 + $0x228] sm:$0xff]
        %v320 = vld [vmem:[%s182 + $0x230] sm:$0xff]
        %v321 = vld [vmem:[%s182 + $0x238] sm:$0xff]
        %v322 = vld [vmem:[%s182 + $0x240] sm:$0xff]
        %v323 = vld [vmem:[%s182 + $0x248] sm:$0xff]
        %v324 = vld [vmem:[%s182 + $0x250] sm:$0xff]
        %v325 = vld [vmem:[%s182 + $0x258] sm:$0xff]
        %v326 = vld [vmem:[%s182 + $0x260] sm:$0xff]
        %v327 = vld [vmem:[%s182 + $0x268] sm:$0xff]
        %v328 = vld [vmem:[%s182 + $0x270] sm:$0xff]
        %v329 = vld [vmem:[%s182 + $0x278] sm:$0xff]
        %v330 = vld [vmem:[%s182 + $0x280] sm:$0xff]
        %v331 = vld [vmem:[%s182 + $0x288] sm:$0xff]
        %v332 = vld [vmem:[%s182 + $0x290] sm:$0xff]
        %v333 = vld [vmem:[%s182 + $0x298] sm:$0xff]
        %v334 = vld [vmem:[%s182 + $0x2a0] sm:$0xff]
        %v335 = vld [vmem:[%s182 + $0x2a8] sm:$0xff]
        %v336 = vld [vmem:[%s182 + $0x2b0] sm:$0xff]
        %v337 = vld [vmem:[%s182 + $0x2b8] sm:$0xff]
        %v338 = vld [vmem:[%s182 + $0x2c0] sm:$0xff]
        %v339 = vld [vmem:[%s182 + $0x2c8] sm:$0xff]
        %v340 = vld [vmem:[%s182 + $0x2d0] sm:$0xff]
        %v341 = vld [vmem:[%s182 + $0x2d8] sm:$0xff]
        %v342 = vld [vmem:[%s182 + $0x2e0] sm:$0xff]
        %v343 = vld [vmem:[%s182 + $0x2e8] sm:$0xff]
        %v344 = vld [vmem:[%s182 + $0x2f0] sm:$0xff]
        %v345 = vld [vmem:[%s182 + $0x2f8] sm:$0xff]
        %v346 = vld [vmem:[%s182 + $0x300] sm:$0xff]
        %v347 = vld [vmem:[%s182 + $0x308] sm:$0xff]
        %v348 = vld [vmem:[%s182 + $0x310] sm:$0xff]
        %v349 = vld [vmem:[%s182 + $0x318] sm:$0xff]
        %v350 = vld [vmem:[%s182 + $0x320] sm:$0xff]
        %v351 = vld [vmem:[%s182 + $0x328] sm:$0xff]
        %v352 = vld [vmem:[%s182 + $0x330] sm:$0xff]
        %v353 = vld [vmem:[%s182 + $0x338] sm:$0xff]
        %v354 = vld [vmem:[%s182 + $0x340] sm:$0xff]
        %v355 = vld [vmem:[%s182 + $0x348] sm:$0xff]
        %v356 = vld [vmem:[%s182 + $0x350] sm:$0xff]
        %v357 = vld [vmem:[%s182 + $0x358] sm:$0xff]
        %v358 = vld [vmem:[%s182 + $0x360] sm:$0xff]
        %v359 = vld [vmem:[%s182 + $0x368] sm:$0xff]
        %v360 = vld [vmem:[%s182 + $0x370] sm:$0xff]
        %v361 = vld [vmem:[%s182 + $0x378] sm:$0xff]
        %v362 = vld [vmem:[%s182 + $0x380] sm:$0xff]
        %v363 = vld [vmem:[%s182 + $0x388] sm:$0xff]
        %v364 = vld [vmem:[%s182 + $0x390] sm:$0xff]
        %v365 = vld [vmem:[%s182 + $0x398] sm:$0xff]
        %v366 = vld [vmem:[%s182 + $0x3a0] sm:$0xff]
        %v367 = vld [vmem:[%s182 + $0x3a8] sm:$0xff]
        %v368 = vld [vmem:[%s182 + $0x3b0] sm:$0xff]
        %v369 = vld [vmem:[%s182 + $0x3b8] sm:$0xff]
        %v370 = vld [vmem:[%s182 + $0x3c0] sm:$0xff]
        %v371 = vld [vmem:[%s182 + $0x3c8] sm:$0xff]
        %v372 = vld [vmem:[%s182 + $0x3d0] sm:$0xff]
        %v373 = vld [vmem:[%s182 + $0x3d8] sm:$0xff]
        %v374 = vld [vmem:[%s182 + $0x3e0] sm:$0xff]
        %v375 = vld [vmem:[%s182 + $0x3e8] sm:$0xff]
        %v376 = vld [vmem:[%s182 + $0x3f0] sm:$0xff]
        %v377 = vld [vmem:[%s182 + $0x3f8] sm:$0xff]
        %v378 = vld [vmem:[%s182 + $0x400] sm:$0xff]
        %v379 = vld [vmem:[%s182 + $0x408] sm:$0xff]
        %v380 = vld [vmem:[%s182 + $0x410] sm:$0xff]
        %v381 = vld [vmem:[%s182 + $0x418] sm:$0xff]
        %v382 = vld [vmem:[%s182 + $0x420] sm:$0xff]
        %v383 = vld [vmem:[%s182 + $0x428] sm:$0xff]
        %v384 = vld [vmem:[%s182 + $0x430] sm:$0xff]
        %v385 = vld [vmem:[%s182 + $0x438] sm:$0xff]
        %v386 = vld [vmem:[%s182 + $0x440] sm:$0xff]
        %v387 = vld [vmem:[%s182 + $0x448] sm:$0xff]
        %v388 = vld [vmem:[%s182 + $0x450] sm:$0xff]
        %v389 = vld [vmem:[%s182 + $0x458] sm:$0xff]
        %v390 = vld [vmem:[%s182 + $0x460] sm:$0xff]
        %v391 = vld [vmem:[%s182 + $0x468] sm:$0xff]
        %v392 = vld [vmem:[%s182 + $0x470] sm:$0xff]
        %v393 = vld [vmem:[%s182 + $0x478] sm:$0xff]
        %v394 = vld [vmem:[%s182 + $0x480] sm:$0xff]
        %v395 = vld [vmem:[%s182 + $0x488] sm:$0xff]
        %v396 = vld [vmem:[%s182 + $0x490] sm:$0xff]
        %v397 = vld [vmem:[%s182 + $0x498] sm:$0xff]
        %v398 = vld [vmem:[%s182 + $0x4a0] sm:$0xff]
        %v399 = vld [vmem:[%s182 + $0x4a8] sm:$0xff]
        %v400 = vld [vmem:[%s182 + $0x4b0] sm:$0xff]
        %v401 = vld [vmem:[%s182 + $0x4b8] sm:$0xff]
        %v402 = vld [vmem:[%s182 + $0x4c0] sm:$0xff]
        %v403 = vld [vmem:[%s182 + $0x4c8] sm:$0xff]
        %v404 = vld [vmem:[%s182 + $0x4d0] sm:$0xff]
        %v405 = vld [vmem:[%s182 + $0x4d8] sm:$0xff]
        %v406 = vld [vmem:[%s182 + $0x4e0] sm:$0xff]
        %v407 = vld [vmem:[%s182 + $0x4e8] sm:$0xff]
        %v408 = vld [vmem:[%s182 + $0x4f0] sm:$0xff]
        %v409 = vld [vmem:[%s182 + $0x4f8] sm:$0xff]
        %v410 = vld [vmem:[%s182 + $0x500] sm:$0xff]
        %v411 = vld [vmem:[%s182 + $0x508] sm:$0xff]
        %v412 = vld [vmem:[%s182 + $0x510] sm:$0xff]
        %v413 = vld [vmem:[%s182 + $0x518] sm:$0xff]
        %v414 = vld [vmem:[%s182 + $0x520] sm:$0xff]
        %v415 = vld [vmem:[%s182 + $0x528] sm:$0xff]
        %v416 = vld [vmem:[%s182 + $0x530] sm:$0xff]
        %v417 = vld [vmem:[%s182 + $0x538] sm:$0xff]
        %v418 = vld [vmem:[%s182 + $0x540] sm:$0xff]
        %v419 = vld [vmem:[%s182 + $0x548] sm:$0xff]
        %v420 = vld [vmem:[%s182 + $0x550] sm:$0xff]
        %v421 = vld [vmem:[%s182 + $0x558] sm:$0xff]
        %v422 = vld [vmem:[%s182 + $0x560] sm:$0xff]
        %v423 = vld [vmem:[%s182 + $0x568] sm:$0xff]
        %v424 = vld [vmem:[%s182 + $0x570] sm:$0xff]
        %v425 = vld [vmem:[%s182 + $0x578] sm:$0xff]
        %v426 = vld [vmem:[%s182 + $0x580] sm:$0xff]
        %v427 = vld [vmem:[%s182 + $0x588] sm:$0xff]
        %v428 = vld [vmem:[%s182 + $0x590] sm:$0xff]
        %v429 = vld [vmem:[%s182 + $0x598] sm:$0xff]
        %v430 = vld [vmem:[%s182 + $0x5a0] sm:$0xff]
        %v431 = vld [vmem:[%s182 + $0x5a8] sm:$0xff]
        %v432 = vld [vmem:[%s182 + $0x5b0] sm:$0xff]
        %v433 = vld [vmem:[%s182 + $0x5b8] sm:$0xff]
        %v434 = vld [vmem:[%s182 + $0x5c0] sm:$0xff]
        %v435 = vld [vmem:[%s182 + $0x5c8] sm:$0xff]
        %v436 = vld [vmem:[%s182 + $0x5d0] sm:$0xff]
        %v437 = vld [vmem:[%s182 + $0x5d8] sm:$0xff]
        %v438 = vld [vmem:[%s182 + $0x5e0] sm:$0xff]
        %v439 = vld [vmem:[%s182 + $0x5e8] sm:$0xff]
        %v440 = vld [vmem:[%s182 + $0x5f0] sm:$0xff]
        %v441 = vld [vmem:[%s182 + $0x5f8] sm:$0xff]
        %v442 = vld [vmem:[%s182 + $0x600] sm:$0xff]
        %v443 = vld [vmem:[%s182 + $0x608] sm:$0xff]
        %v444 = vld [vmem:[%s182 + $0x610] sm:$0xff]
        %v445 = vld [vmem:[%s182 + $0x618] sm:$0xff]
        %v446 = vld [vmem:[%s182 + $0x620] sm:$0xff]
        %v447 = vld [vmem:[%s182 + $0x628] sm:$0xff]
        %v448 = vld [vmem:[%s182 + $0x630] sm:$0xff]
        %v449 = vld [vmem:[%s182 + $0x638] sm:$0xff]
        %v450 = vld [vmem:[%s182 + $0x640] sm:$0xff]
        %v451 = vld [vmem:[%s182 + $0x648] sm:$0xff]
        %v452 = vld [vmem:[%s182 + $0x650] sm:$0xff]
        %v453 = vld [vmem:[%s182 + $0x658] sm:$0xff]
        %v454 = vld [vmem:[%s182 + $0x660] sm:$0xff]
        %v455 = vld [vmem:[%s182 + $0x668] sm:$0xff]
        %v456 = vld [vmem:[%s182 + $0x670] sm:$0xff]
        %v457 = vld [vmem:[%s182 + $0x678] sm:$0xff]
        %v458 = vld [vmem:[%s182 + $0x680] sm:$0xff]
        %v459 = vld [vmem:[%s182 + $0x688] sm:$0xff]
        %v460 = vld [vmem:[%s182 + $0x690] sm:$0xff]
        %v461 = vld [vmem:[%s182 + $0x698] sm:$0xff]
        %v462 = vld [vmem:[%s182 + $0x6a0] sm:$0xff]
        %v463 = vld [vmem:[%s182 + $0x6a8] sm:$0xff]
        %v464 = vld [vmem:[%s182 + $0x6b0] sm:$0xff]
        %v465 = vld [vmem:[%s182 + $0x6b8] sm:$0xff]
        %v466 = vld [vmem:[%s182 + $0x6c0] sm:$0xff]
        %v467 = vld [vmem:[%s182 + $0x6c8] sm:$0xff]
        %v468 = vld [vmem:[%s182 + $0x6d0] sm:$0xff]
        %v469 = vld [vmem:[%s182 + $0x6d8] sm:$0xff]
        %v470 = vld [vmem:[%s182 + $0x6e0] sm:$0xff]
        %v471 = vld [vmem:[%s182 + $0x6e8] sm:$0xff]
        %v472 = vld [vmem:[%s182 + $0x6f0] sm:$0xff]
        %v473 = vld [vmem:[%s182 + $0x6f8] sm:$0xff]
        %v474 = vld [vmem:[%s182 + $0x700] sm:$0xff]
        %v475 = vld [vmem:[%s182 + $0x708] sm:$0xff]
        %v476 = vld [vmem:[%s182 + $0x710] sm:$0xff]
        %v477 = vld [vmem:[%s182 + $0x718] sm:$0xff]
        %v478 = vld [vmem:[%s182 + $0x720] sm:$0xff]
        %v479 = vld [vmem:[%s182 + $0x728] sm:$0xff]
        %v480 = vld [vmem:[%s182 + $0x730] sm:$0xff]
        %v481 = vld [vmem:[%s182 + $0x738] sm:$0xff]
        %v482 = vld [vmem:[%s182 + $0x740] sm:$0xff]
        %v483 = vld [vmem:[%s182 + $0x748] sm:$0xff]
        %v484 = vld [vmem:[%s182 + $0x750] sm:$0xff]
        %v485 = vld [vmem:[%s182 + $0x758] sm:$0xff]
        %v486 = vld [vmem:[%s182 + $0x760] sm:$0xff]
        %v487 = vld [vmem:[%s182 + $0x768] sm:$0xff]
        %v488 = vld [vmem:[%s182 + $0x770] sm:$0xff]
        %v489 = vld [vmem:[%s182 + $0x778] sm:$0xff]
        %v490 = vld [vmem:[%s182 + $0x780] sm:$0xff]
        %v491 = vld [vmem:[%s182 + $0x788] sm:$0xff]
        %v492 = vld [vmem:[%s182 + $0x790] sm:$0xff]
        %v493 = vld [vmem:[%s182 + $0x798] sm:$0xff]
        %v494 = vld [vmem:[%s182 + $0x7a0] sm:$0xff]
        %v495 = vld [vmem:[%s182 + $0x7a8] sm:$0xff]
        %v496 = vld [vmem:[%s182 + $0x7b0] sm:$0xff]
        %v497 = vld [vmem:[%s182 + $0x7b8] sm:$0xff]
        %v498 = vld [vmem:[%s182 + $0x7c0] sm:$0xff]
        %v499 = vld [vmem:[%s182 + $0x7c8] sm:$0xff]
        %v500 = vld [vmem:[%s182 + $0x7d0] sm:$0xff]
        %v501 = vld [vmem:[%s182 + $0x7d8] sm:$0xff]
        %v502 = vld [vmem:[%s182 + $0x7e0] sm:$0xff]
        %v503 = vld [vmem:[%s182 + $0x7e8] sm:$0xff]
        %v504 = vld [vmem:[%s182 + $0x7f0] sm:$0xff]
        %v505 = vld [vmem:[%s182 + $0x7f8] sm:$0xff]
        %v506 = vld [vmem:[%s182 + $0x800] sm:$0xff]
        %v507 = vld [vmem:[%s182 + $0x808] sm:$0xff]
        %v508 = vld [vmem:[%s182 + $0x810] sm:$0xff]
        %v509 = vld [vmem:[%s182 + $0x818] sm:$0xff]
        %v510 = vld [vmem:[%s182 + $0x820] sm:$0xff]
        %v511 = vld [vmem:[%s182 + $0x828] sm:$0xff]
        %v512 = vld [vmem:[%s182 + $0x830] sm:$0xff]
        %v513 = vld [vmem:[%s182 + $0x838] sm:$0xff]
        %v514 = vld [vmem:[%s182 + $0x840] sm:$0xff]
        %v515 = vld [vmem:[%s182 + $0x848] sm:$0xff]
        %v516 = vld [vmem:[%s182 + $0x850] sm:$0xff]
        %v517 = vld [vmem:[%s182 + $0x858] sm:$0xff]
        %v518 = vld [vmem:[%s182 + $0x860] sm:$0xff]
        %v519 = vld [vmem:[%s182 + $0x868] sm:$0xff]
        %v520 = vld [vmem:[%s182 + $0x870] sm:$0xff]
        %v521 = vld [vmem:[%s182 + $0x878] sm:$0xff]
        %v522 = vld [vmem:[%s182 + $0x880] sm:$0xff]
        %v523 = vld [vmem:[%s182 + $0x888] sm:$0xff]
        %v524 = vld [vmem:[%s182 + $0x890] sm:$0xff]
        %v525 = vld [vmem:[%s182 + $0x898] sm:$0xff]
        %v526 = vld [vmem:[%s182 + $0x8a0] sm:$0xff]
        %v527 = vld [vmem:[%s182 + $0x8a8] sm:$0xff]
        %v528 = vld [vmem:[%s182 + $0x8b0] sm:$0xff]
        %v529 = vld [vmem:[%s182 + $0x8b8] sm:$0xff]
        %v530 = vld [vmem:[%s182 + $0x8c0] sm:$0xff]
        %v531 = vld [vmem:[%s182 + $0x8c8] sm:$0xff]
        %v532 = vld [vmem:[%s182 + $0x8d0] sm:$0xff]
        %v533 = vld [vmem:[%s182 + $0x8d8] sm:$0xff]
        %v534 = vld [vmem:[%s182 + $0x8e0] sm:$0xff]
        %v535 = vld [vmem:[%s182 + $0x8e8] sm:$0xff]
        %v536 = vld [vmem:[%s182 + $0x8f0] sm:$0xff]
        %v537 = vld [vmem:[%s182 + $0x8f8] sm:$0xff]
        %v538 = vld [vmem:[%s182 + $0x900] sm:$0xff]
        %v539 = vld [vmem:[%s182 + $0x908] sm:$0xff]
        %v540 = vld [vmem:[%s182 + $0x910] sm:$0xff]
        %v541 = vld [vmem:[%s182 + $0x918] sm:$0xff]
        %v542 = vld [vmem:[%s182 + $0x920] sm:$0xff]
        %v543 = vld [vmem:[%s182 + $0x928] sm:$0xff]
        %v544 = vld [vmem:[%s182 + $0x930] sm:$0xff]
        %v545 = vld [vmem:[%s182 + $0x938] sm:$0xff]
        %v546 = vld [vmem:[%s182 + $0x940] sm:$0xff]
        %v547 = vld [vmem:[%s182 + $0x948] sm:$0xff]
        %v548 = vld [vmem:[%s182 + $0x950] sm:$0xff]
        %v549 = vld [vmem:[%s182 + $0x958] sm:$0xff]
        %v550 = vld [vmem:[%s182 + $0x960] sm:$0xff]
        %v551 = vld [vmem:[%s182 + $0x968] sm:$0xff]
        %v552 = vld [vmem:[%s182 + $0x970] sm:$0xff]
        %v553 = vld [vmem:[%s182 + $0x978] sm:$0xff]
        %v554 = vld [vmem:[%s182 + $0x980] sm:$0xff]
        %v555 = vld [vmem:[%s182 + $0x988] sm:$0xff]
        %v556 = vld [vmem:[%s182 + $0x990] sm:$0xff]
        %v557 = vld [vmem:[%s182 + $0x998] sm:$0xff]
        %v558 = vld [vmem:[%s182 + $0x9a0] sm:$0xff]
        %v559 = vld [vmem:[%s182 + $0x9a8] sm:$0xff]
        %v560 = vld [vmem:[%s182 + $0x9b0] sm:$0xff]
        %v561 = vld [vmem:[%s182 + $0x9b8] sm:$0xff]
        %v562 = vld [vmem:[%s182 + $0x9c0] sm:$0xff]
        %v563 = vld [vmem:[%s182 + $0x9c8] sm:$0xff]
        %v564 = vld [vmem:[%s182 + $0x9d0] sm:$0xff]
        %v565 = vld [vmem:[%s182 + $0x9d8] sm:$0xff]
        %v566 = vld [vmem:[%s182 + $0x9e0] sm:$0xff]
        %v567 = vld [vmem:[%s182 + $0x9e8] sm:$0xff]
        %v568 = vld [vmem:[%s182 + $0x9f0] sm:$0xff]
        %v569 = vld [vmem:[%s182 + $0x9f8] sm:$0xff]
        %v570 = vld [vmem:[%s182 + $0xa00] sm:$0xff]
        %v571 = vld [vmem:[%s182 + $0xa08] sm:$0xff]
        %v572 = vld [vmem:[%s182 + $0xa10] sm:$0xff]
        %v573 = vld [vmem:[%s182 + $0xa18] sm:$0xff]
        %v574 = vld [vmem:[%s182 + $0xa20] sm:$0xff]
        %v575 = vld [vmem:[%s182 + $0xa28] sm:$0xff]
        %v576 = vld [vmem:[%s182 + $0xa30] sm:$0xff]
        %v577 = vld [vmem:[%s182 + $0xa38] sm:$0xff]
        %v578 = vld [vmem:[%s182 + $0xa40] sm:$0xff]
        %v579 = vld [vmem:[%s182 + $0xa48] sm:$0xff]
        %v580 = vld [vmem:[%s182 + $0xa50] sm:$0xff]
        %v581 = vld [vmem:[%s182 + $0xa58] sm:$0xff]
        %v582 = vld [vmem:[%s182 + $0xa60] sm:$0xff]
        %v583 = vld [vmem:[%s182 + $0xa68] sm:$0xff]
        %v584 = vld [vmem:[%s182 + $0xa70] sm:$0xff]
        %v585 = vld [vmem:[%s182 + $0xa78] sm:$0xff]
        %v586 = vld [vmem:[%s182 + $0xa80] sm:$0xff]
        %v587 = vld [vmem:[%s182 + $0xa88] sm:$0xff]
        %v588 = vld [vmem:[%s182 + $0xa90] sm:$0xff]
        %v589 = vld [vmem:[%s182 + $0xa98] sm:$0xff]
        %v590 = vld [vmem:[%s182 + $0xaa0] sm:$0xff]
        %v591 = vld [vmem:[%s182 + $0xaa8] sm:$0xff]
        %v592 = vld [vmem:[%s182 + $0xab0] sm:$0xff]
        %v593 = vld [vmem:[%s182 + $0xab8] sm:$0xff]
        %v594 = vld [vmem:[%s182 + $0xac0] sm:$0xff]
        %v595 = vld [vmem:[%s182 + $0xac8] sm:$0xff]
        %v596 = vld [vmem:[%s182 + $0xad0] sm:$0xff]
        %v597 = vld [vmem:[%s182 + $0xad8] sm:$0xff]
        %v598 = vld [vmem:[%s182 + $0xae0] sm:$0xff]
        %v599 = vld [vmem:[%s182 + $0xae8] sm:$0xff]
        %v600 = vld [vmem:[%s182 + $0xaf0] sm:$0xff]
        %v601 = vld [vmem:[%s182 + $0xaf8] sm:$0xff]
        %v602 = vld [vmem:[%s182 + $0xb00] sm:$0xff]
        %v603 = vld [vmem:[%s182 + $0xb08] sm:$0xff]
        %v604 = vld [vmem:[%s182 + $0xb10] sm:$0xff]
        %v605 = vld [vmem:[%s182 + $0xb18] sm:$0xff]
        %v606 = vld [vmem:[%s182 + $0xb20] sm:$0xff]
        %v607 = vld [vmem:[%s182 + $0xb28] sm:$0xff]
        %v608 = vld [vmem:[%s182 + $0xb30] sm:$0xff]
        %v609 = vld [vmem:[%s182 + $0xb38] sm:$0xff]
        %v610 = vld [vmem:[%s182 + $0xb40] sm:$0xff]
        %v611 = vld [vmem:[%s182 + $0xb48] sm:$0xff]
        %v612 = vld [vmem:[%s182 + $0xb50] sm:$0xff]
        %v613 = vld [vmem:[%s182 + $0xb58] sm:$0xff]
        %v614 = vld [vmem:[%s182 + $0xb60] sm:$0xff]
        %v615 = vld [vmem:[%s182 + $0xb68] sm:$0xff]
        %v616 = vld [vmem:[%s182 + $0xb70] sm:$0xff]
        %v617 = vld [vmem:[%s182 + $0xb78] sm:$0xff]
        %v618 = vld [vmem:[%s182 + $0xb80] sm:$0xff]
        %v619 = vld [vmem:[%s182 + $0xb88] sm:$0xff]
        %v620 = vld [vmem:[%s182 + $0xb90] sm:$0xff]
        %v621 = vld [vmem:[%s182 + $0xb98] sm:$0xff]
        %v622 = vld [vmem:[%s182 + $0xba0] sm:$0xff]
        %v623 = vld [vmem:[%s182 + $0xba8] sm:$0xff]
        %v624 = vld [vmem:[%s182 + $0xbb0] sm:$0xff]
        %v625 = vld [vmem:[%s182 + $0xbb8] sm:$0xff]
        %v626 = vld [vmem:[%s182 + $0xbc0] sm:$0xff]
        %v627 = vld [vmem:[%s182 + $0xbc8] sm:$0xff]
        %v628 = vld [vmem:[%s182 + $0xbd0] sm:$0xff]
        %v629 = vld [vmem:[%s182 + $0xbd8] sm:$0xff]
        %v630 = vld [vmem:[%s182 + $0xbe0] sm:$0xff]
        %v631 = vld [vmem:[%s182 + $0xbe8] sm:$0xff]
        %v632 = vld [vmem:[%s182 + $0xbf0] sm:$0xff]
        %v633 = vld [vmem:[%s182 + $0xbf8] sm:$0xff]
        %v634 = vld [vmem:[%s182 + $0xc00] sm:$0xff]
        %v635 = vld [vmem:[%s182 + $0xc08] sm:$0xff]
        %v636 = vld [vmem:[%s182 + $0xc10] sm:$0xff]
        %v637 = vld [vmem:[%s182 + $0xc18] sm:$0xff]
        %v638 = vld [vmem:[%s182 + $0xc20] sm:$0xff]
        %v639 = vld [vmem:[%s182 + $0xc28] sm:$0xff]
        %v640 = vld [vmem:[%s182 + $0xc30] sm:$0xff]
        %v641 = vld [vmem:[%s182 + $0xc38] sm:$0xff]
        %v642 = vld [vmem:[%s182 + $0xc40] sm:$0xff]
        %v643 = vld [vmem:[%s182 + $0xc48] sm:$0xff]
        %v644 = vld [vmem:[%s182 + $0xc50] sm:$0xff]
        %v645 = vld [vmem:[%s182 + $0xc58] sm:$0xff]
        %v646 = vld [vmem:[%s182 + $0xc60] sm:$0xff]
        %v647 = vld [vmem:[%s182 + $0xc68] sm:$0xff]
        %v648 = vld [vmem:[%s182 + $0xc70] sm:$0xff]
        %v649 = vld [vmem:[%s182 + $0xc78] sm:$0xff]
        %v650 = vld [vmem:[%s182 + $0xc80] sm:$0xff]
        %v651 = vld [vmem:[%s182 + $0xc88] sm:$0xff]
        %v652 = vld [vmem:[%s182 + $0xc90] sm:$0xff]
        %v653 = vld [vmem:[%s182 + $0xc98] sm:$0xff]
        %v654 = vld [vmem:[%s182 + $0xca0] sm:$0xff]
        %v655 = vld [vmem:[%s182 + $0xca8] sm:$0xff]
        %v656 = vld [vmem:[%s182 + $0xcb0] sm:$0xff]
        %v657 = vld [vmem:[%s182 + $0xcb8] sm:$0xff]
        %v658 = vld [vmem:[%s182 + $0xcc0] sm:$0xff]
        %v659 = vld [vmem:[%s182 + $0xcc8] sm:$0xff]
        %v660 = vld [vmem:[%s182 + $0xcd0] sm:$0xff]
        %v661 = vld [vmem:[%s182 + $0xcd8] sm:$0xff]
        %v662 = vld [vmem:[%s182 + $0xce0] sm:$0xff]
        %v663 = vld [vmem:[%s182 + $0xce8] sm:$0xff]
        %v664 = vld [vmem:[%s182 + $0xcf0] sm:$0xff]
        %v665 = vld [vmem:[%s182 + $0xcf8] sm:$0xff]
        %v666 = vld [vmem:[%s182 + $0xd00] sm:$0xff]
        %v667 = vld [vmem:[%s182 + $0xd08] sm:$0xff]
        %v668 = vld [vmem:[%s182 + $0xd10] sm:$0xff]
        %v669 = vld [vmem:[%s182 + $0xd18] sm:$0xff]
        %v670 = vld [vmem:[%s182 + $0xd20] sm:$0xff]
        %v671 = vld [vmem:[%s182 + $0xd28] sm:$0xff]
        %v672 = vld [vmem:[%s182 + $0xd30] sm:$0xff]
        %v673 = vld [vmem:[%s182 + $0xd38] sm:$0xff]
        %v674 = vld [vmem:[%s182 + $0xd40] sm:$0xff]
        %v675 = vld [vmem:[%s182 + $0xd48] sm:$0xff]
        %v676 = vld [vmem:[%s182 + $0xd50] sm:$0xff]
        %v677 = vld [vmem:[%s182 + $0xd58] sm:$0xff]
        %v678 = vld [vmem:[%s182 + $0xd60] sm:$0xff]
        %v679 = vld [vmem:[%s182 + $0xd68] sm:$0xff]
        %v680 = vld [vmem:[%s182 + $0xd70] sm:$0xff]
        %v681 = vld [vmem:[%s182 + $0xd78] sm:$0xff]
        %v682 = vld [vmem:[%s182 + $0xd80] sm:$0xff]
        %v683 = vld [vmem:[%s182 + $0xd88] sm:$0xff]
        %v684 = vld [vmem:[%s182 + $0xd90] sm:$0xff]
        %v685 = vld [vmem:[%s182 + $0xd98] sm:$0xff]
        %v686 = vld [vmem:[%s182 + $0xda0] sm:$0xff]
        %v687 = vld [vmem:[%s182 + $0xda8] sm:$0xff]
        %v688 = vld [vmem:[%s182 + $0xdb0] sm:$0xff]
        %v689 = vld [vmem:[%s182 + $0xdb8] sm:$0xff]
        %v690 = vld [vmem:[%s182 + $0xdc0] sm:$0xff]
        %v691 = vld [vmem:[%s182 + $0xdc8] sm:$0xff]
        %v692 = vld [vmem:[%s182 + $0xdd0] sm:$0xff]
        %v693 = vld [vmem:[%s182 + $0xdd8] sm:$0xff]
        %v694 = vld [vmem:[%s182 + $0xde0] sm:$0xff]
        %v695 = vld [vmem:[%s182 + $0xde8] sm:$0xff]
        %v696 = vld [vmem:[%s182 + $0xdf0] sm:$0xff]
        %v697 = vld [vmem:[%s182 + $0xdf8] sm:$0xff]
        %v698 = vld [vmem:[%s182 + $0xe00] sm:$0xff]
        %v699 = vld [vmem:[%s182 + $0xe08] sm:$0xff]
        %v700 = vld [vmem:[%s182 + $0xe10] sm:$0xff]
        %v701 = vld [vmem:[%s182 + $0xe18] sm:$0xff]
        %v702 = vld [vmem:[%s182 + $0xe20] sm:$0xff]
        %v703 = vld [vmem:[%s182 + $0xe28] sm:$0xff]
        %v704 = vld [vmem:[%s182 + $0xe30] sm:$0xff]
        %v705 = vld [vmem:[%s182 + $0xe38] sm:$0xff]
        %v706 = vld [vmem:[%s182 + $0xe40] sm:$0xff]
        %v707 = vld [vmem:[%s182 + $0xe48] sm:$0xff]
        %v708 = vld [vmem:[%s182 + $0xe50] sm:$0xff]
        %v709 = vld [vmem:[%s182 + $0xe58] sm:$0xff]
        %v710 = vld [vmem:[%s182 + $0xe60] sm:$0xff]
        %v711 = vld [vmem:[%s182 + $0xe68] sm:$0xff]
        %v712 = vld [vmem:[%s182 + $0xe70] sm:$0xff]
        %v713 = vld [vmem:[%s182 + $0xe78] sm:$0xff]
        %v714 = vld [vmem:[%s182 + $0xe80] sm:$0xff]
        %v715 = vld [vmem:[%s182 + $0xe88] sm:$0xff]
        %v716 = vld [vmem:[%s182 + $0xe90] sm:$0xff]
        %v717 = vld [vmem:[%s182 + $0xe98] sm:$0xff]
        %v718 = vld [vmem:[%s182 + $0xea0] sm:$0xff]
        %v719 = vld [vmem:[%s182 + $0xea8] sm:$0xff]
        %v720 = vld [vmem:[%s182 + $0xeb0] sm:$0xff]
        %v721 = vld [vmem:[%s182 + $0xeb8] sm:$0xff]
        %v722 = vld [vmem:[%s182 + $0xec0] sm:$0xff]
        %v723 = vld [vmem:[%s182 + $0xec8] sm:$0xff]
        %v724 = vld [vmem:[%s182 + $0xed0] sm:$0xff]
        %v725 = vld [vmem:[%s182 + $0xed8] sm:$0xff]
        %v726 = vld [vmem:[%s182 + $0xee0] sm:$0xff]
        %v727 = vld [vmem:[%s182 + $0xee8] sm:$0xff]
        %v728 = vld [vmem:[%s182 + $0xef0] sm:$0xff]
        %v729 = vld [vmem:[%s182 + $0xef8] sm:$0xff]
        %v730 = vld [vmem:[%s182 + $0xf00] sm:$0xff]
        %v731 = vld [vmem:[%s182 + $0xf08] sm:$0xff]
        %v732 = vld [vmem:[%s182 + $0xf10] sm:$0xff]
        %v733 = vld [vmem:[%s182 + $0xf18] sm:$0xff]
        %v734 = vld [vmem:[%s182 + $0xf20] sm:$0xff]
        %v735 = vld [vmem:[%s182 + $0xf28] sm:$0xff]
        %v736 = vld [vmem:[%s182 + $0xf30] sm:$0xff]
        %v737 = vld [vmem:[%s182 + $0xf38] sm:$0xff]
        %v738 = vld [vmem:[%s182 + $0xf40] sm:$0xff]
        %v739 = vld [vmem:[%s182 + $0xf48] sm:$0xff]
        %v740 = vld [vmem:[%s182 + $0xf50] sm:$0xff]
        %v741 = vld [vmem:[%s182 + $0xf58] sm:$0xff]
        %v742 = vld [vmem:[%s182 + $0xf60] sm:$0xff]
        %v743 = vld [vmem:[%s182 + $0xf68] sm:$0xff]
        %v744 = vld [vmem:[%s182 + $0xf70] sm:$0xff]
        %v745 = vld [vmem:[%s182 + $0xf78] sm:$0xff]
        %v746 = vld [vmem:[%s182 + $0xf80] sm:$0xff]
        %v747 = vld [vmem:[%s182 + $0xf88] sm:$0xff]
        %v748 = vld [vmem:[%s182 + $0xf90] sm:$0xff]
        %v749 = vld [vmem:[%s182 + $0xf98] sm:$0xff]
        %v750 = vld [vmem:[%s182 + $0xfa0] sm:$0xff]
        %v751 = vld [vmem:[%s182 + $0xfa8] sm:$0xff]
        %v752 = vld [vmem:[%s182 + $0xfb0] sm:$0xff]
        %v753 = vld [vmem:[%s182 + $0xfb8] sm:$0xff]
        %v754 = vld [vmem:[%s182 + $0xfc0] sm:$0xff]
        %v755 = vld [vmem:[%s182 + $0xfc8] sm:$0xff]
        %v756 = vld [vmem:[%s182 + $0xfd0] sm:$0xff]
        %v757 = vld [vmem:[%s182 + $0xfd8] sm:$0xff]
        %v758 = vld [vmem:[%s182 + $0xfe0] sm:$0xff]
        %v759 = vld [vmem:[%s182 + $0xfe8] sm:$0xff]
        %v760 = vld [vmem:[%s182 + $0xff0] sm:$0xff]
        %v761 = vld [vmem:[%s182 + $0xff8] sm:$0xff]
        %v762 = vld [vmem:[%s191] sm:$0xff]
        %v764 = vlaneseq
        %v765 = vshrl.u32 %v764, 7
        %v766 = vsub.s32 0, %v765
        %v767 = vrot.slane %v762, %v766
        %v768 = vlaneseq
        %v769 = vshrl.u32 %v768, 7
        %v770 = vsub.s32 1, %v769
        %v771 = vrot.slane %v762, %v770
        %v772 = vlaneseq
        %v773 = vshrl.u32 %v772, 7
        %v774 = vsub.s32 2, %v773
        %v775 = vrot.slane %v762, %v774
        %v776 = vlaneseq
        %v777 = vshrl.u32 %v776, 7
        %v778 = vsub.s32 3, %v777
        %v779 = vrot.slane %v762, %v778
        %v780 = vlaneseq
        %v781 = vshrl.u32 %v780, 7
        %v782 = vsub.s32 4, %v781
        %v783 = vrot.slane %v762, %v782
        %v784 = vlaneseq
        %v785 = vshrl.u32 %v784, 7
        %v786 = vsub.s32 5, %v785
        %v787 = vrot.slane %v762, %v786
        %v788 = vlaneseq
        %v789 = vshrl.u32 %v788, 7
        %v790 = vsub.s32 6, %v789
        %v791 = vrot.slane %v762, %v790
        %v792 = vlaneseq
        %v793 = vshrl.u32 %v792, 7
        %v794 = vsub.s32 7, %v793
        %v795 = vrot.slane %v762, %v794
        %v1316 = vunpack.c.l.b16 %v250
        %v1317 = vunpack.c.h.b16 %v250
        %v1318 = vunpack.c.l.b16 %v251
        %v1319 = vunpack.c.h.b16 %v251
        %v1320 = vunpack.c.l.b16 %v252
        %v1321 = vunpack.c.h.b16 %v252
        %v1322 = vunpack.c.l.b16 %v253
        %v1323 = vunpack.c.h.b16 %v253
        %v1324 = vunpack.c.l.b16 %v254
        %v1325 = vunpack.c.h.b16 %v254
        %v1326 = vunpack.c.l.b16 %v255
        %v1327 = vunpack.c.h.b16 %v255
        %v1328 = vunpack.c.l.b16 %v256
        %v1329 = vunpack.c.h.b16 %v256
        %v1330 = vunpack.c.l.b16 %v257
        %v1331 = vunpack.c.h.b16 %v257
        %v1332 = vunpack.c.l.b16 %v258
        %v1333 = vunpack.c.h.b16 %v258
        %v1334 = vunpack.c.l.b16 %v259
        %v1335 = vunpack.c.h.b16 %v259
        %v1336 = vunpack.c.l.b16 %v260
        %v1337 = vunpack.c.h.b16 %v260
        %v1338 = vunpack.c.l.b16 %v261
        %v1339 = vunpack.c.h.b16 %v261
        %v1340 = vunpack.c.l.b16 %v262
        %v1341 = vunpack.c.h.b16 %v262
        %v1342 = vunpack.c.l.b16 %v263
        %v1343 = vunpack.c.h.b16 %v263
        %v1344 = vunpack.c.l.b16 %v264
        %v1345 = vunpack.c.h.b16 %v264
        %v1346 = vunpack.c.l.b16 %v265
        %v1347 = vunpack.c.h.b16 %v265
        %v1348 = vunpack.c.l.b16 %v266
        %v1349 = vunpack.c.h.b16 %v266
        %v1350 = vunpack.c.l.b16 %v267
        %v1351 = vunpack.c.h.b16 %v267
        %v1352 = vunpack.c.l.b16 %v268
        %v1353 = vunpack.c.h.b16 %v268
        %v1354 = vunpack.c.l.b16 %v269
        %v1355 = vunpack.c.h.b16 %v269
        %v1356 = vunpack.c.l.b16 %v270
        %v1357 = vunpack.c.h.b16 %v270
        %v1358 = vunpack.c.l.b16 %v271
        %v1359 = vunpack.c.h.b16 %v271
        %v1360 = vunpack.c.l.b16 %v272
        %v1361 = vunpack.c.h.b16 %v272
        %v1362 = vunpack.c.l.b16 %v273
        %v1363 = vunpack.c.h.b16 %v273
        %v1364 = vunpack.c.l.b16 %v274
        %v1365 = vunpack.c.h.b16 %v274
        %v1366 = vunpack.c.l.b16 %v275
        %v1367 = vunpack.c.h.b16 %v275
        %v1368 = vunpack.c.l.b16 %v276
        %v1369 = vunpack.c.h.b16 %v276
        %v1370 = vunpack.c.l.b16 %v277
        %v1371 = vunpack.c.h.b16 %v277
        %v1372 = vunpack.c.l.b16 %v278
        %v1373 = vunpack.c.h.b16 %v278
        %v1374 = vunpack.c.l.b16 %v279
        %v1375 = vunpack.c.h.b16 %v279
        %v1376 = vunpack.c.l.b16 %v280
        %v1377 = vunpack.c.h.b16 %v280
        %v1378 = vunpack.c.l.b16 %v281
        %v1379 = vunpack.c.h.b16 %v281
        %v1380 = vunpack.c.l.b16 %v282
        %v1381 = vunpack.c.h.b16 %v282
        %v1382 = vunpack.c.l.b16 %v283
        %v1383 = vunpack.c.h.b16 %v283
        %v1384 = vunpack.c.l.b16 %v284
        %v1385 = vunpack.c.h.b16 %v284
        %v1386 = vunpack.c.l.b16 %v285
        %v1387 = vunpack.c.h.b16 %v285
        %v1388 = vunpack.c.l.b16 %v286
        %v1389 = vunpack.c.h.b16 %v286
        %v1390 = vunpack.c.l.b16 %v287
        %v1391 = vunpack.c.h.b16 %v287
        %v1392 = vunpack.c.l.b16 %v288
        %v1393 = vunpack.c.h.b16 %v288
        %v1394 = vunpack.c.l.b16 %v289
        %v1395 = vunpack.c.h.b16 %v289
        %v1396 = vunpack.c.l.b16 %v290
        %v1397 = vunpack.c.h.b16 %v290
        %v1398 = vunpack.c.l.b16 %v291
        %v1399 = vunpack.c.h.b16 %v291
        %v1400 = vunpack.c.l.b16 %v292
        %v1401 = vunpack.c.h.b16 %v292
        %v1402 = vunpack.c.l.b16 %v293
        %v1403 = vunpack.c.h.b16 %v293
        %v1404 = vunpack.c.l.b16 %v294
        %v1405 = vunpack.c.h.b16 %v294
        %v1406 = vunpack.c.l.b16 %v295
        %v1407 = vunpack.c.h.b16 %v295
        %v1408 = vunpack.c.l.b16 %v296
        %v1409 = vunpack.c.h.b16 %v296
        %v1410 = vunpack.c.l.b16 %v297
        %v1411 = vunpack.c.h.b16 %v297
        %v1412 = vunpack.c.l.b16 %v298
        %v1413 = vunpack.c.h.b16 %v298
        %v1414 = vunpack.c.l.b16 %v299
        %v1415 = vunpack.c.h.b16 %v299
        %v1416 = vunpack.c.l.b16 %v300
        %v1417 = vunpack.c.h.b16 %v300
        %v1418 = vunpack.c.l.b16 %v301
        %v1419 = vunpack.c.h.b16 %v301
        %v1420 = vunpack.c.l.b16 %v302
        %v1421 = vunpack.c.h.b16 %v302
        %v1422 = vunpack.c.l.b16 %v303
        %v1423 = vunpack.c.h.b16 %v303
        %v1424 = vunpack.c.l.b16 %v304
        %v1425 = vunpack.c.h.b16 %v304
        %v1426 = vunpack.c.l.b16 %v305
        %v1427 = vunpack.c.h.b16 %v305
        %v1428 = vunpack.c.l.b16 %v306
        %v1429 = vunpack.c.h.b16 %v306
        %v1430 = vunpack.c.l.b16 %v307
        %v1431 = vunpack.c.h.b16 %v307
        %v1432 = vunpack.c.l.b16 %v308
        %v1433 = vunpack.c.h.b16 %v308
        %v1434 = vunpack.c.l.b16 %v309
        %v1435 = vunpack.c.h.b16 %v309
        %v1436 = vunpack.c.l.b16 %v310
        %v1437 = vunpack.c.h.b16 %v310
        %v1438 = vunpack.c.l.b16 %v311
        %v1439 = vunpack.c.h.b16 %v311
        %v1440 = vunpack.c.l.b16 %v312
        %v1441 = vunpack.c.h.b16 %v312
        %v1442 = vunpack.c.l.b16 %v313
        %v1443 = vunpack.c.h.b16 %v313
        %v1444 = vunpack.c.l.b16 %v314
        %v1445 = vunpack.c.h.b16 %v314
        %v1446 = vunpack.c.l.b16 %v315
        %v1447 = vunpack.c.h.b16 %v315
        %v1448 = vunpack.c.l.b16 %v316
        %v1449 = vunpack.c.h.b16 %v316
        %v1450 = vunpack.c.l.b16 %v317
        %v1451 = vunpack.c.h.b16 %v317
        %v1452 = vunpack.c.l.b16 %v318
        %v1453 = vunpack.c.h.b16 %v318
        %v1454 = vunpack.c.l.b16 %v319
        %v1455 = vunpack.c.h.b16 %v319
        %v1456 = vunpack.c.l.b16 %v320
        %v1457 = vunpack.c.h.b16 %v320
        %v1458 = vunpack.c.l.b16 %v321
        %v1459 = vunpack.c.h.b16 %v321
        %v1460 = vunpack.c.l.b16 %v322
        %v1461 = vunpack.c.h.b16 %v322
        %v1462 = vunpack.c.l.b16 %v323
        %v1463 = vunpack.c.h.b16 %v323
        %v1464 = vunpack.c.l.b16 %v324
        %v1465 = vunpack.c.h.b16 %v324
        %v1466 = vunpack.c.l.b16 %v325
        %v1467 = vunpack.c.h.b16 %v325
        %v1468 = vunpack.c.l.b16 %v326
        %v1469 = vunpack.c.h.b16 %v326
        %v1470 = vunpack.c.l.b16 %v327
        %v1471 = vunpack.c.h.b16 %v327
        %v1472 = vunpack.c.l.b16 %v328
        %v1473 = vunpack.c.h.b16 %v328
        %v1474 = vunpack.c.l.b16 %v329
        %v1475 = vunpack.c.h.b16 %v329
        %v1476 = vunpack.c.l.b16 %v330
        %v1477 = vunpack.c.h.b16 %v330
        %v1478 = vunpack.c.l.b16 %v331
        %v1479 = vunpack.c.h.b16 %v331
        %v1480 = vunpack.c.l.b16 %v332
        %v1481 = vunpack.c.h.b16 %v332
        %v1482 = vunpack.c.l.b16 %v333
        %v1483 = vunpack.c.h.b16 %v333
        %v1484 = vunpack.c.l.b16 %v334
        %v1485 = vunpack.c.h.b16 %v334
        %v1486 = vunpack.c.l.b16 %v335
        %v1487 = vunpack.c.h.b16 %v335
        %v1488 = vunpack.c.l.b16 %v336
        %v1489 = vunpack.c.h.b16 %v336
        %v1490 = vunpack.c.l.b16 %v337
        %v1491 = vunpack.c.h.b16 %v337
        %v1492 = vunpack.c.l.b16 %v338
        %v1493 = vunpack.c.h.b16 %v338
        %v1494 = vunpack.c.l.b16 %v339
        %v1495 = vunpack.c.h.b16 %v339
        %v1496 = vunpack.c.l.b16 %v340
        %v1497 = vunpack.c.h.b16 %v340
        %v1498 = vunpack.c.l.b16 %v341
        %v1499 = vunpack.c.h.b16 %v341
        %v1500 = vunpack.c.l.b16 %v342
        %v1501 = vunpack.c.h.b16 %v342
        %v1502 = vunpack.c.l.b16 %v343
        %v1503 = vunpack.c.h.b16 %v343
        %v1504 = vunpack.c.l.b16 %v344
        %v1505 = vunpack.c.h.b16 %v344
        %v1506 = vunpack.c.l.b16 %v345
        %v1507 = vunpack.c.h.b16 %v345
        %v1508 = vunpack.c.l.b16 %v346
        %v1509 = vunpack.c.h.b16 %v346
        %v1510 = vunpack.c.l.b16 %v347
        %v1511 = vunpack.c.h.b16 %v347
        %v1512 = vunpack.c.l.b16 %v348
        %v1513 = vunpack.c.h.b16 %v348
        %v1514 = vunpack.c.l.b16 %v349
        %v1515 = vunpack.c.h.b16 %v349
        %v1516 = vunpack.c.l.b16 %v350
        %v1517 = vunpack.c.h.b16 %v350
        %v1518 = vunpack.c.l.b16 %v351
        %v1519 = vunpack.c.h.b16 %v351
        %v1520 = vunpack.c.l.b16 %v352
        %v1521 = vunpack.c.h.b16 %v352
        %v1522 = vunpack.c.l.b16 %v353
        %v1523 = vunpack.c.h.b16 %v353
        %v1524 = vunpack.c.l.b16 %v354
        %v1525 = vunpack.c.h.b16 %v354
        %v1526 = vunpack.c.l.b16 %v355
        %v1527 = vunpack.c.h.b16 %v355
        %v1528 = vunpack.c.l.b16 %v356
        %v1529 = vunpack.c.h.b16 %v356
        %v1530 = vunpack.c.l.b16 %v357
        %v1531 = vunpack.c.h.b16 %v357
        %v1532 = vunpack.c.l.b16 %v358
        %v1533 = vunpack.c.h.b16 %v358
        %v1534 = vunpack.c.l.b16 %v359
        %v1535 = vunpack.c.h.b16 %v359
        %v1536 = vunpack.c.l.b16 %v360
        %v1537 = vunpack.c.h.b16 %v360
        %v1538 = vunpack.c.l.b16 %v361
        %v1539 = vunpack.c.h.b16 %v361
        %v1540 = vunpack.c.l.b16 %v362
        %v1541 = vunpack.c.h.b16 %v362
        %v1542 = vunpack.c.l.b16 %v363
        %v1543 = vunpack.c.h.b16 %v363
        %v1544 = vunpack.c.l.b16 %v364
        %v1545 = vunpack.c.h.b16 %v364
        %v1546 = vunpack.c.l.b16 %v365
        %v1547 = vunpack.c.h.b16 %v365
        %v1548 = vunpack.c.l.b16 %v366
        %v1549 = vunpack.c.h.b16 %v366
        %v1550 = vunpack.c.l.b16 %v367
        %v1551 = vunpack.c.h.b16 %v367
        %v1552 = vunpack.c.l.b16 %v368
        %v1553 = vunpack.c.h.b16 %v368
        %v1554 = vunpack.c.l.b16 %v369
        %v1555 = vunpack.c.h.b16 %v369
        %v1556 = vunpack.c.l.b16 %v370
        %v1557 = vunpack.c.h.b16 %v370
        %v1558 = vunpack.c.l.b16 %v371
        %v1559 = vunpack.c.h.b16 %v371
        %v1560 = vunpack.c.l.b16 %v372
        %v1561 = vunpack.c.h.b16 %v372
        %v1562 = vunpack.c.l.b16 %v373
        %v1563 = vunpack.c.h.b16 %v373
        %v1564 = vunpack.c.l.b16 %v374
        %v1565 = vunpack.c.h.b16 %v374
        %v1566 = vunpack.c.l.b16 %v375
        %v1567 = vunpack.c.h.b16 %v375
        %v1568 = vunpack.c.l.b16 %v376
        %v1569 = vunpack.c.h.b16 %v376
        %v1570 = vunpack.c.l.b16 %v377
        %v1571 = vunpack.c.h.b16 %v377
        %v1572 = vunpack.c.l.b16 %v378
        %v1573 = vunpack.c.h.b16 %v378
        %v1574 = vunpack.c.l.b16 %v379
        %v1575 = vunpack.c.h.b16 %v379
        %v1576 = vunpack.c.l.b16 %v380
        %v1577 = vunpack.c.h.b16 %v380
        %v1578 = vunpack.c.l.b16 %v381
        %v1579 = vunpack.c.h.b16 %v381
        %v1580 = vunpack.c.l.b16 %v382
        %v1581 = vunpack.c.h.b16 %v382
        %v1582 = vunpack.c.l.b16 %v383
        %v1583 = vunpack.c.h.b16 %v383
        %v1584 = vunpack.c.l.b16 %v384
        %v1585 = vunpack.c.h.b16 %v384
        %v1586 = vunpack.c.l.b16 %v385
        %v1587 = vunpack.c.h.b16 %v385
        %v1588 = vunpack.c.l.b16 %v386
        %v1589 = vunpack.c.h.b16 %v386
        %v1590 = vunpack.c.l.b16 %v387
        %v1591 = vunpack.c.h.b16 %v387
        %v1592 = vunpack.c.l.b16 %v388
        %v1593 = vunpack.c.h.b16 %v388
        %v1594 = vunpack.c.l.b16 %v389
        %v1595 = vunpack.c.h.b16 %v389
        %v1596 = vunpack.c.l.b16 %v390
        %v1597 = vunpack.c.h.b16 %v390
        %v1598 = vunpack.c.l.b16 %v391
        %v1599 = vunpack.c.h.b16 %v391
        %v1600 = vunpack.c.l.b16 %v392
        %v1601 = vunpack.c.h.b16 %v392
        %v1602 = vunpack.c.l.b16 %v393
        %v1603 = vunpack.c.h.b16 %v393
        %v1604 = vunpack.c.l.b16 %v394
        %v1605 = vunpack.c.h.b16 %v394
        %v1606 = vunpack.c.l.b16 %v395
        %v1607 = vunpack.c.h.b16 %v395
        %v1608 = vunpack.c.l.b16 %v396
        %v1609 = vunpack.c.h.b16 %v396
        %v1610 = vunpack.c.l.b16 %v397
        %v1611 = vunpack.c.h.b16 %v397
        %v1612 = vunpack.c.l.b16 %v398
        %v1613 = vunpack.c.h.b16 %v398
        %v1614 = vunpack.c.l.b16 %v399
        %v1615 = vunpack.c.h.b16 %v399
        %v1616 = vunpack.c.l.b16 %v400
        %v1617 = vunpack.c.h.b16 %v400
        %v1618 = vunpack.c.l.b16 %v401
        %v1619 = vunpack.c.h.b16 %v401
        %v1620 = vunpack.c.l.b16 %v402
        %v1621 = vunpack.c.h.b16 %v402
        %v1622 = vunpack.c.l.b16 %v403
        %v1623 = vunpack.c.h.b16 %v403
        %v1624 = vunpack.c.l.b16 %v404
        %v1625 = vunpack.c.h.b16 %v404
        %v1626 = vunpack.c.l.b16 %v405
        %v1627 = vunpack.c.h.b16 %v405
        %v1628 = vunpack.c.l.b16 %v406
        %v1629 = vunpack.c.h.b16 %v406
        %v1630 = vunpack.c.l.b16 %v407
        %v1631 = vunpack.c.h.b16 %v407
        %v1632 = vunpack.c.l.b16 %v408
        %v1633 = vunpack.c.h.b16 %v408
        %v1634 = vunpack.c.l.b16 %v409
        %v1635 = vunpack.c.h.b16 %v409
        %v1636 = vunpack.c.l.b16 %v410
        %v1637 = vunpack.c.h.b16 %v410
        %v1638 = vunpack.c.l.b16 %v411
        %v1639 = vunpack.c.h.b16 %v411
        %v1640 = vunpack.c.l.b16 %v412
        %v1641 = vunpack.c.h.b16 %v412
        %v1642 = vunpack.c.l.b16 %v413
        %v1643 = vunpack.c.h.b16 %v413
        %v1644 = vunpack.c.l.b16 %v414
        %v1645 = vunpack.c.h.b16 %v414
        %v1646 = vunpack.c.l.b16 %v415
        %v1647 = vunpack.c.h.b16 %v415
        %v1648 = vunpack.c.l.b16 %v416
        %v1649 = vunpack.c.h.b16 %v416
        %v1650 = vunpack.c.l.b16 %v417
        %v1651 = vunpack.c.h.b16 %v417
        %v1652 = vunpack.c.l.b16 %v418
        %v1653 = vunpack.c.h.b16 %v418
        %v1654 = vunpack.c.l.b16 %v419
        %v1655 = vunpack.c.h.b16 %v419
        %v1656 = vunpack.c.l.b16 %v420
        %v1657 = vunpack.c.h.b16 %v420
        %v1658 = vunpack.c.l.b16 %v421
        %v1659 = vunpack.c.h.b16 %v421
        %v1660 = vunpack.c.l.b16 %v422
        %v1661 = vunpack.c.h.b16 %v422
        %v1662 = vunpack.c.l.b16 %v423
        %v1663 = vunpack.c.h.b16 %v423
        %v1664 = vunpack.c.l.b16 %v424
        %v1665 = vunpack.c.h.b16 %v424
        %v1666 = vunpack.c.l.b16 %v425
        %v1667 = vunpack.c.h.b16 %v425
        %v1668 = vunpack.c.l.b16 %v426
        %v1669 = vunpack.c.h.b16 %v426
        %v1670 = vunpack.c.l.b16 %v427
        %v1671 = vunpack.c.h.b16 %v427
        %v1672 = vunpack.c.l.b16 %v428
        %v1673 = vunpack.c.h.b16 %v428
        %v1674 = vunpack.c.l.b16 %v429
        %v1675 = vunpack.c.h.b16 %v429
        %v1676 = vunpack.c.l.b16 %v430
        %v1677 = vunpack.c.h.b16 %v430
        %v1678 = vunpack.c.l.b16 %v431
        %v1679 = vunpack.c.h.b16 %v431
        %v1680 = vunpack.c.l.b16 %v432
        %v1681 = vunpack.c.h.b16 %v432
        %v1682 = vunpack.c.l.b16 %v433
        %v1683 = vunpack.c.h.b16 %v433
        %v1684 = vunpack.c.l.b16 %v434
        %v1685 = vunpack.c.h.b16 %v434
        %v1686 = vunpack.c.l.b16 %v435
        %v1687 = vunpack.c.h.b16 %v435
        %v1688 = vunpack.c.l.b16 %v436
        %v1689 = vunpack.c.h.b16 %v436
        %v1690 = vunpack.c.l.b16 %v437
        %v1691 = vunpack.c.h.b16 %v437
        %v1692 = vunpack.c.l.b16 %v438
        %v1693 = vunpack.c.h.b16 %v438
        %v1694 = vunpack.c.l.b16 %v439
        %v1695 = vunpack.c.h.b16 %v439
        %v1696 = vunpack.c.l.b16 %v440
        %v1697 = vunpack.c.h.b16 %v440
        %v1698 = vunpack.c.l.b16 %v441
        %v1699 = vunpack.c.h.b16 %v441
        %v1700 = vunpack.c.l.b16 %v442
        %v1701 = vunpack.c.h.b16 %v442
        %v1702 = vunpack.c.l.b16 %v443
        %v1703 = vunpack.c.h.b16 %v443
        %v1704 = vunpack.c.l.b16 %v444
        %v1705 = vunpack.c.h.b16 %v444
        %v1706 = vunpack.c.l.b16 %v445
        %v1707 = vunpack.c.h.b16 %v445
        %v1708 = vunpack.c.l.b16 %v446
        %v1709 = vunpack.c.h.b16 %v446
        %v1710 = vunpack.c.l.b16 %v447
        %v1711 = vunpack.c.h.b16 %v447
        %v1712 = vunpack.c.l.b16 %v448
        %v1713 = vunpack.c.h.b16 %v448
        %v1714 = vunpack.c.l.b16 %v449
        %v1715 = vunpack.c.h.b16 %v449
        %v1716 = vunpack.c.l.b16 %v450
        %v1717 = vunpack.c.h.b16 %v450
        %v1718 = vunpack.c.l.b16 %v451
        %v1719 = vunpack.c.h.b16 %v451
        %v1720 = vunpack.c.l.b16 %v452
        %v1721 = vunpack.c.h.b16 %v452
        %v1722 = vunpack.c.l.b16 %v453
        %v1723 = vunpack.c.h.b16 %v453
        %v1724 = vunpack.c.l.b16 %v454
        %v1725 = vunpack.c.h.b16 %v454
        %v1726 = vunpack.c.l.b16 %v455
        %v1727 = vunpack.c.h.b16 %v455
        %v1728 = vunpack.c.l.b16 %v456
        %v1729 = vunpack.c.h.b16 %v456
        %v1730 = vunpack.c.l.b16 %v457
        %v1731 = vunpack.c.h.b16 %v457
        %v1732 = vunpack.c.l.b16 %v458
        %v1733 = vunpack.c.h.b16 %v458
        %v1734 = vunpack.c.l.b16 %v459
        %v1735 = vunpack.c.h.b16 %v459
        %v1736 = vunpack.c.l.b16 %v460
        %v1737 = vunpack.c.h.b16 %v460
        %v1738 = vunpack.c.l.b16 %v461
        %v1739 = vunpack.c.h.b16 %v461
        %v1740 = vunpack.c.l.b16 %v462
        %v1741 = vunpack.c.h.b16 %v462
        %v1742 = vunpack.c.l.b16 %v463
        %v1743 = vunpack.c.h.b16 %v463
        %v1744 = vunpack.c.l.b16 %v464
        %v1745 = vunpack.c.h.b16 %v464
        %v1746 = vunpack.c.l.b16 %v465
        %v1747 = vunpack.c.h.b16 %v465
        %v1748 = vunpack.c.l.b16 %v466
        %v1749 = vunpack.c.h.b16 %v466
        %v1750 = vunpack.c.l.b16 %v467
        %v1751 = vunpack.c.h.b16 %v467
        %v1752 = vunpack.c.l.b16 %v468
        %v1753 = vunpack.c.h.b16 %v468
        %v1754 = vunpack.c.l.b16 %v469
        %v1755 = vunpack.c.h.b16 %v469
        %v1756 = vunpack.c.l.b16 %v470
        %v1757 = vunpack.c.h.b16 %v470
        %v1758 = vunpack.c.l.b16 %v471
        %v1759 = vunpack.c.h.b16 %v471
        %v1760 = vunpack.c.l.b16 %v472
        %v1761 = vunpack.c.h.b16 %v472
        %v1762 = vunpack.c.l.b16 %v473
        %v1763 = vunpack.c.h.b16 %v473
        %v1764 = vunpack.c.l.b16 %v474
        %v1765 = vunpack.c.h.b16 %v474
        %v1766 = vunpack.c.l.b16 %v475
        %v1767 = vunpack.c.h.b16 %v475
        %v1768 = vunpack.c.l.b16 %v476
        %v1769 = vunpack.c.h.b16 %v476
        %v1770 = vunpack.c.l.b16 %v477
        %v1771 = vunpack.c.h.b16 %v477
        %v1772 = vunpack.c.l.b16 %v478
        %v1773 = vunpack.c.h.b16 %v478
        %v1774 = vunpack.c.l.b16 %v479
        %v1775 = vunpack.c.h.b16 %v479
        %v1776 = vunpack.c.l.b16 %v480
        %v1777 = vunpack.c.h.b16 %v480
        %v1778 = vunpack.c.l.b16 %v481
        %v1779 = vunpack.c.h.b16 %v481
        %v1780 = vunpack.c.l.b16 %v482
        %v1781 = vunpack.c.h.b16 %v482
        %v1782 = vunpack.c.l.b16 %v483
        %v1783 = vunpack.c.h.b16 %v483
        %v1784 = vunpack.c.l.b16 %v484
        %v1785 = vunpack.c.h.b16 %v484
        %v1786 = vunpack.c.l.b16 %v485
        %v1787 = vunpack.c.h.b16 %v485
        %v1788 = vunpack.c.l.b16 %v486
        %v1789 = vunpack.c.h.b16 %v486
        %v1790 = vunpack.c.l.b16 %v487
        %v1791 = vunpack.c.h.b16 %v487
        %v1792 = vunpack.c.l.b16 %v488
        %v1793 = vunpack.c.h.b16 %v488
        %v1794 = vunpack.c.l.b16 %v489
        %v1795 = vunpack.c.h.b16 %v489
        %v1796 = vunpack.c.l.b16 %v490
        %v1797 = vunpack.c.h.b16 %v490
        %v1798 = vunpack.c.l.b16 %v491
        %v1799 = vunpack.c.h.b16 %v491
        %v1800 = vunpack.c.l.b16 %v492
        %v1801 = vunpack.c.h.b16 %v492
        %v1802 = vunpack.c.l.b16 %v493
        %v1803 = vunpack.c.h.b16 %v493
        %v1804 = vunpack.c.l.b16 %v494
        %v1805 = vunpack.c.h.b16 %v494
        %v1806 = vunpack.c.l.b16 %v495
        %v1807 = vunpack.c.h.b16 %v495
        %v1808 = vunpack.c.l.b16 %v496
        %v1809 = vunpack.c.h.b16 %v496
        %v1810 = vunpack.c.l.b16 %v497
        %v1811 = vunpack.c.h.b16 %v497
        %v1812 = vunpack.c.l.b16 %v498
        %v1813 = vunpack.c.h.b16 %v498
        %v1814 = vunpack.c.l.b16 %v499
        %v1815 = vunpack.c.h.b16 %v499
        %v1816 = vunpack.c.l.b16 %v500
        %v1817 = vunpack.c.h.b16 %v500
        %v1818 = vunpack.c.l.b16 %v501
        %v1819 = vunpack.c.h.b16 %v501
        %v1820 = vunpack.c.l.b16 %v502
        %v1821 = vunpack.c.h.b16 %v502
        %v1822 = vunpack.c.l.b16 %v503
        %v1823 = vunpack.c.h.b16 %v503
        %v1824 = vunpack.c.l.b16 %v504
        %v1825 = vunpack.c.h.b16 %v504
        %v1826 = vunpack.c.l.b16 %v505
        %v1827 = vunpack.c.h.b16 %v505
        %v1828 = vunpack.c.l.b16 %v506
        %v1829 = vunpack.c.h.b16 %v506
        %v1830 = vunpack.c.l.b16 %v507
        %v1831 = vunpack.c.h.b16 %v507
        %v1832 = vunpack.c.l.b16 %v508
        %v1833 = vunpack.c.h.b16 %v508
        %v1834 = vunpack.c.l.b16 %v509
        %v1835 = vunpack.c.h.b16 %v509
        %v1836 = vunpack.c.l.b16 %v510
        %v1837 = vunpack.c.h.b16 %v510
        %v1838 = vunpack.c.l.b16 %v511
        %v1839 = vunpack.c.h.b16 %v511
        %v1840 = vunpack.c.l.b16 %v512
        %v1841 = vunpack.c.h.b16 %v512
        %v1842 = vunpack.c.l.b16 %v513
        %v1843 = vunpack.c.h.b16 %v513
        %v1844 = vunpack.c.l.b16 %v514
        %v1845 = vunpack.c.h.b16 %v514
        %v1846 = vunpack.c.l.b16 %v515
        %v1847 = vunpack.c.h.b16 %v515
        %v1848 = vunpack.c.l.b16 %v516
        %v1849 = vunpack.c.h.b16 %v516
        %v1850 = vunpack.c.l.b16 %v517
        %v1851 = vunpack.c.h.b16 %v517
        %v1852 = vunpack.c.l.b16 %v518
        %v1853 = vunpack.c.h.b16 %v518
        %v1854 = vunpack.c.l.b16 %v519
        %v1855 = vunpack.c.h.b16 %v519
        %v1856 = vunpack.c.l.b16 %v520
        %v1857 = vunpack.c.h.b16 %v520
        %v1858 = vunpack.c.l.b16 %v521
        %v1859 = vunpack.c.h.b16 %v521
        %v1860 = vunpack.c.l.b16 %v522
        %v1861 = vunpack.c.h.b16 %v522
        %v1862 = vunpack.c.l.b16 %v523
        %v1863 = vunpack.c.h.b16 %v523
        %v1864 = vunpack.c.l.b16 %v524
        %v1865 = vunpack.c.h.b16 %v524
        %v1866 = vunpack.c.l.b16 %v525
        %v1867 = vunpack.c.h.b16 %v525
        %v1868 = vunpack.c.l.b16 %v526
        %v1869 = vunpack.c.h.b16 %v526
        %v1870 = vunpack.c.l.b16 %v527
        %v1871 = vunpack.c.h.b16 %v527
        %v1872 = vunpack.c.l.b16 %v528
        %v1873 = vunpack.c.h.b16 %v528
        %v1874 = vunpack.c.l.b16 %v529
        %v1875 = vunpack.c.h.b16 %v529
        %v1876 = vunpack.c.l.b16 %v530
        %v1877 = vunpack.c.h.b16 %v530
        %v1878 = vunpack.c.l.b16 %v531
        %v1879 = vunpack.c.h.b16 %v531
        %v1880 = vunpack.c.l.b16 %v532
        %v1881 = vunpack.c.h.b16 %v532
        %v1882 = vunpack.c.l.b16 %v533
        %v1883 = vunpack.c.h.b16 %v533
        %v1884 = vunpack.c.l.b16 %v534
        %v1885 = vunpack.c.h.b16 %v534
        %v1886 = vunpack.c.l.b16 %v535
        %v1887 = vunpack.c.h.b16 %v535
        %v1888 = vunpack.c.l.b16 %v536
        %v1889 = vunpack.c.h.b16 %v536
        %v1890 = vunpack.c.l.b16 %v537
        %v1891 = vunpack.c.h.b16 %v537
        %v1892 = vunpack.c.l.b16 %v538
        %v1893 = vunpack.c.h.b16 %v538
        %v1894 = vunpack.c.l.b16 %v539
        %v1895 = vunpack.c.h.b16 %v539
        %v1896 = vunpack.c.l.b16 %v540
        %v1897 = vunpack.c.h.b16 %v540
        %v1898 = vunpack.c.l.b16 %v541
        %v1899 = vunpack.c.h.b16 %v541
        %v1900 = vunpack.c.l.b16 %v542
        %v1901 = vunpack.c.h.b16 %v542
        %v1902 = vunpack.c.l.b16 %v543
        %v1903 = vunpack.c.h.b16 %v543
        %v1904 = vunpack.c.l.b16 %v544
        %v1905 = vunpack.c.h.b16 %v544
        %v1906 = vunpack.c.l.b16 %v545
        %v1907 = vunpack.c.h.b16 %v545
        %v1908 = vunpack.c.l.b16 %v546
        %v1909 = vunpack.c.h.b16 %v546
        %v1910 = vunpack.c.l.b16 %v547
        %v1911 = vunpack.c.h.b16 %v547
        %v1912 = vunpack.c.l.b16 %v548
        %v1913 = vunpack.c.h.b16 %v548
        %v1914 = vunpack.c.l.b16 %v549
        %v1915 = vunpack.c.h.b16 %v549
        %v1916 = vunpack.c.l.b16 %v550
        %v1917 = vunpack.c.h.b16 %v550
        %v1918 = vunpack.c.l.b16 %v551
        %v1919 = vunpack.c.h.b16 %v551
        %v1920 = vunpack.c.l.b16 %v552
        %v1921 = vunpack.c.h.b16 %v552
        %v1922 = vunpack.c.l.b16 %v553
        %v1923 = vunpack.c.h.b16 %v553
        %v1924 = vunpack.c.l.b16 %v554
        %v1925 = vunpack.c.h.b16 %v554
        %v1926 = vunpack.c.l.b16 %v555
        %v1927 = vunpack.c.h.b16 %v555
        %v1928 = vunpack.c.l.b16 %v556
        %v1929 = vunpack.c.h.b16 %v556
        %v1930 = vunpack.c.l.b16 %v557
        %v1931 = vunpack.c.h.b16 %v557
        %v1932 = vunpack.c.l.b16 %v558
        %v1933 = vunpack.c.h.b16 %v558
        %v1934 = vunpack.c.l.b16 %v559
        %v1935 = vunpack.c.h.b16 %v559
        %v1936 = vunpack.c.l.b16 %v560
        %v1937 = vunpack.c.h.b16 %v560
        %v1938 = vunpack.c.l.b16 %v561
        %v1939 = vunpack.c.h.b16 %v561
        %v1940 = vunpack.c.l.b16 %v562
        %v1941 = vunpack.c.h.b16 %v562
        %v1942 = vunpack.c.l.b16 %v563
        %v1943 = vunpack.c.h.b16 %v563
        %v1944 = vunpack.c.l.b16 %v564
        %v1945 = vunpack.c.h.b16 %v564
        %v1946 = vunpack.c.l.b16 %v565
        %v1947 = vunpack.c.h.b16 %v565
        %v1948 = vunpack.c.l.b16 %v566
        %v1949 = vunpack.c.h.b16 %v566
        %v1950 = vunpack.c.l.b16 %v567
        %v1951 = vunpack.c.h.b16 %v567
        %v1952 = vunpack.c.l.b16 %v568
        %v1953 = vunpack.c.h.b16 %v568
        %v1954 = vunpack.c.l.b16 %v569
        %v1955 = vunpack.c.h.b16 %v569
        %v1956 = vunpack.c.l.b16 %v570
        %v1957 = vunpack.c.h.b16 %v570
        %v1958 = vunpack.c.l.b16 %v571
        %v1959 = vunpack.c.h.b16 %v571
        %v1960 = vunpack.c.l.b16 %v572
        %v1961 = vunpack.c.h.b16 %v572
        %v1962 = vunpack.c.l.b16 %v573
        %v1963 = vunpack.c.h.b16 %v573
        %v1964 = vunpack.c.l.b16 %v574
        %v1965 = vunpack.c.h.b16 %v574
        %v1966 = vunpack.c.l.b16 %v575
        %v1967 = vunpack.c.h.b16 %v575
        %v1968 = vunpack.c.l.b16 %v576
        %v1969 = vunpack.c.h.b16 %v576
        %v1970 = vunpack.c.l.b16 %v577
        %v1971 = vunpack.c.h.b16 %v577
        %v1972 = vunpack.c.l.b16 %v578
        %v1973 = vunpack.c.h.b16 %v578
        %v1974 = vunpack.c.l.b16 %v579
        %v1975 = vunpack.c.h.b16 %v579
        %v1976 = vunpack.c.l.b16 %v580
        %v1977 = vunpack.c.h.b16 %v580
        %v1978 = vunpack.c.l.b16 %v581
        %v1979 = vunpack.c.h.b16 %v581
        %v1980 = vunpack.c.l.b16 %v582
        %v1981 = vunpack.c.h.b16 %v582
        %v1982 = vunpack.c.l.b16 %v583
        %v1983 = vunpack.c.h.b16 %v583
        %v1984 = vunpack.c.l.b16 %v584
        %v1985 = vunpack.c.h.b16 %v584
        %v1986 = vunpack.c.l.b16 %v585
        %v1987 = vunpack.c.h.b16 %v585
        %v1988 = vunpack.c.l.b16 %v586
        %v1989 = vunpack.c.h.b16 %v586
        %v1990 = vunpack.c.l.b16 %v587
        %v1991 = vunpack.c.h.b16 %v587
        %v1992 = vunpack.c.l.b16 %v588
        %v1993 = vunpack.c.h.b16 %v588
        %v1994 = vunpack.c.l.b16 %v589
        %v1995 = vunpack.c.h.b16 %v589
        %v1996 = vunpack.c.l.b16 %v590
        %v1997 = vunpack.c.h.b16 %v590
        %v1998 = vunpack.c.l.b16 %v591
        %v1999 = vunpack.c.h.b16 %v591
        %v2000 = vunpack.c.l.b16 %v592
        %v2001 = vunpack.c.h.b16 %v592
        %v2002 = vunpack.c.l.b16 %v593
        %v2003 = vunpack.c.h.b16 %v593
        %v2004 = vunpack.c.l.b16 %v594
        %v2005 = vunpack.c.h.b16 %v594
        %v2006 = vunpack.c.l.b16 %v595
        %v2007 = vunpack.c.h.b16 %v595
        %v2008 = vunpack.c.l.b16 %v596
        %v2009 = vunpack.c.h.b16 %v596
        %v2010 = vunpack.c.l.b16 %v597
        %v2011 = vunpack.c.h.b16 %v597
        %v2012 = vunpack.c.l.b16 %v598
        %v2013 = vunpack.c.h.b16 %v598
        %v2014 = vunpack.c.l.b16 %v599
        %v2015 = vunpack.c.h.b16 %v599
        %v2016 = vunpack.c.l.b16 %v600
        %v2017 = vunpack.c.h.b16 %v600
        %v2018 = vunpack.c.l.b16 %v601
        %v2019 = vunpack.c.h.b16 %v601
        %v2020 = vunpack.c.l.b16 %v602
        %v2021 = vunpack.c.h.b16 %v602
        %v2022 = vunpack.c.l.b16 %v603
        %v2023 = vunpack.c.h.b16 %v603
        %v2024 = vunpack.c.l.b16 %v604
        %v2025 = vunpack.c.h.b16 %v604
        %v2026 = vunpack.c.l.b16 %v605
        %v2027 = vunpack.c.h.b16 %v605
        %v2028 = vunpack.c.l.b16 %v606
        %v2029 = vunpack.c.h.b16 %v606
        %v2030 = vunpack.c.l.b16 %v607
        %v2031 = vunpack.c.h.b16 %v607
        %v2032 = vunpack.c.l.b16 %v608
        %v2033 = vunpack.c.h.b16 %v608
        %v2034 = vunpack.c.l.b16 %v609
        %v2035 = vunpack.c.h.b16 %v609
        %v2036 = vunpack.c.l.b16 %v610
        %v2037 = vunpack.c.h.b16 %v610
        %v2038 = vunpack.c.l.b16 %v611
        %v2039 = vunpack.c.h.b16 %v611
        %v2040 = vunpack.c.l.b16 %v612
        %v2041 = vunpack.c.h.b16 %v612
        %v2042 = vunpack.c.l.b16 %v613
        %v2043 = vunpack.c.h.b16 %v613
        %v2044 = vunpack.c.l.b16 %v614
        %v2045 = vunpack.c.h.b16 %v614
        %v2046 = vunpack.c.l.b16 %v615
        %v2047 = vunpack.c.h.b16 %v615
        %v2048 = vunpack.c.l.b16 %v616
        %v2049 = vunpack.c.h.b16 %v616
        %v2050 = vunpack.c.l.b16 %v617
        %v2051 = vunpack.c.h.b16 %v617
        %v2052 = vunpack.c.l.b16 %v618
        %v2053 = vunpack.c.h.b16 %v618
        %v2054 = vunpack.c.l.b16 %v619
        %v2055 = vunpack.c.h.b16 %v619
        %v2056 = vunpack.c.l.b16 %v620
        %v2057 = vunpack.c.h.b16 %v620
        %v2058 = vunpack.c.l.b16 %v621
        %v2059 = vunpack.c.h.b16 %v621
        %v2060 = vunpack.c.l.b16 %v622
        %v2061 = vunpack.c.h.b16 %v622
        %v2062 = vunpack.c.l.b16 %v623
        %v2063 = vunpack.c.h.b16 %v623
        %v2064 = vunpack.c.l.b16 %v624
        %v2065 = vunpack.c.h.b16 %v624
        %v2066 = vunpack.c.l.b16 %v625
        %v2067 = vunpack.c.h.b16 %v625
        %v2068 = vunpack.c.l.b16 %v626
        %v2069 = vunpack.c.h.b16 %v626
        %v2070 = vunpack.c.l.b16 %v627
        %v2071 = vunpack.c.h.b16 %v627
        %v2072 = vunpack.c.l.b16 %v628
        %v2073 = vunpack.c.h.b16 %v628
        %v2074 = vunpack.c.l.b16 %v629
        %v2075 = vunpack.c.h.b16 %v629
        %v2076 = vunpack.c.l.b16 %v630
        %v2077 = vunpack.c.h.b16 %v630
        %v2078 = vunpack.c.l.b16 %v631
        %v2079 = vunpack.c.h.b16 %v631
        %v2080 = vunpack.c.l.b16 %v632
        %v2081 = vunpack.c.h.b16 %v632
        %v2082 = vunpack.c.l.b16 %v633
        %v2083 = vunpack.c.h.b16 %v633
        %v2084 = vunpack.c.l.b16 %v634
        %v2085 = vunpack.c.h.b16 %v634
        %v2086 = vunpack.c.l.b16 %v635
        %v2087 = vunpack.c.h.b16 %v635
        %v2088 = vunpack.c.l.b16 %v636
        %v2089 = vunpack.c.h.b16 %v636
        %v2090 = vunpack.c.l.b16 %v637
        %v2091 = vunpack.c.h.b16 %v637
        %v2092 = vunpack.c.l.b16 %v638
        %v2093 = vunpack.c.h.b16 %v638
        %v2094 = vunpack.c.l.b16 %v639
        %v2095 = vunpack.c.h.b16 %v639
        %v2096 = vunpack.c.l.b16 %v640
        %v2097 = vunpack.c.h.b16 %v640
        %v2098 = vunpack.c.l.b16 %v641
        %v2099 = vunpack.c.h.b16 %v641
        %v2100 = vunpack.c.l.b16 %v642
        %v2101 = vunpack.c.h.b16 %v642
        %v2102 = vunpack.c.l.b16 %v643
        %v2103 = vunpack.c.h.b16 %v643
        %v2104 = vunpack.c.l.b16 %v644
        %v2105 = vunpack.c.h.b16 %v644
        %v2106 = vunpack.c.l.b16 %v645
        %v2107 = vunpack.c.h.b16 %v645
        %v2108 = vunpack.c.l.b16 %v646
        %v2109 = vunpack.c.h.b16 %v646
        %v2110 = vunpack.c.l.b16 %v647
        %v2111 = vunpack.c.h.b16 %v647
        %v2112 = vunpack.c.l.b16 %v648
        %v2113 = vunpack.c.h.b16 %v648
        %v2114 = vunpack.c.l.b16 %v649
        %v2115 = vunpack.c.h.b16 %v649
        %v2116 = vunpack.c.l.b16 %v650
        %v2117 = vunpack.c.h.b16 %v650
        %v2118 = vunpack.c.l.b16 %v651
        %v2119 = vunpack.c.h.b16 %v651
        %v2120 = vunpack.c.l.b16 %v652
        %v2121 = vunpack.c.h.b16 %v652
        %v2122 = vunpack.c.l.b16 %v653
        %v2123 = vunpack.c.h.b16 %v653
        %v2124 = vunpack.c.l.b16 %v654
        %v2125 = vunpack.c.h.b16 %v654
        %v2126 = vunpack.c.l.b16 %v655
        %v2127 = vunpack.c.h.b16 %v655
        %v2128 = vunpack.c.l.b16 %v656
        %v2129 = vunpack.c.h.b16 %v656
        %v2130 = vunpack.c.l.b16 %v657
        %v2131 = vunpack.c.h.b16 %v657
        %v2132 = vunpack.c.l.b16 %v658
        %v2133 = vunpack.c.h.b16 %v658
        %v2134 = vunpack.c.l.b16 %v659
        %v2135 = vunpack.c.h.b16 %v659
        %v2136 = vunpack.c.l.b16 %v660
        %v2137 = vunpack.c.h.b16 %v660
        %v2138 = vunpack.c.l.b16 %v661
        %v2139 = vunpack.c.h.b16 %v661
        %v2140 = vunpack.c.l.b16 %v662
        %v2141 = vunpack.c.h.b16 %v662
        %v2142 = vunpack.c.l.b16 %v663
        %v2143 = vunpack.c.h.b16 %v663
        %v2144 = vunpack.c.l.b16 %v664
        %v2145 = vunpack.c.h.b16 %v664
        %v2146 = vunpack.c.l.b16 %v665
        %v2147 = vunpack.c.h.b16 %v665
        %v2148 = vunpack.c.l.b16 %v666
        %v2149 = vunpack.c.h.b16 %v666
        %v2150 = vunpack.c.l.b16 %v667
        %v2151 = vunpack.c.h.b16 %v667
        %v2152 = vunpack.c.l.b16 %v668
        %v2153 = vunpack.c.h.b16 %v668
        %v2154 = vunpack.c.l.b16 %v669
        %v2155 = vunpack.c.h.b16 %v669
        %v2156 = vunpack.c.l.b16 %v670
        %v2157 = vunpack.c.h.b16 %v670
        %v2158 = vunpack.c.l.b16 %v671
        %v2159 = vunpack.c.h.b16 %v671
        %v2160 = vunpack.c.l.b16 %v672
        %v2161 = vunpack.c.h.b16 %v672
        %v2162 = vunpack.c.l.b16 %v673
        %v2163 = vunpack.c.h.b16 %v673
        %v2164 = vunpack.c.l.b16 %v674
        %v2165 = vunpack.c.h.b16 %v674
        %v2166 = vunpack.c.l.b16 %v675
        %v2167 = vunpack.c.h.b16 %v675
        %v2168 = vunpack.c.l.b16 %v676
        %v2169 = vunpack.c.h.b16 %v676
        %v2170 = vunpack.c.l.b16 %v677
        %v2171 = vunpack.c.h.b16 %v677
        %v2172 = vunpack.c.l.b16 %v678
        %v2173 = vunpack.c.h.b16 %v678
        %v2174 = vunpack.c.l.b16 %v679
        %v2175 = vunpack.c.h.b16 %v679
        %v2176 = vunpack.c.l.b16 %v680
        %v2177 = vunpack.c.h.b16 %v680
        %v2178 = vunpack.c.l.b16 %v681
        %v2179 = vunpack.c.h.b16 %v681
        %v2180 = vunpack.c.l.b16 %v682
        %v2181 = vunpack.c.h.b16 %v682
        %v2182 = vunpack.c.l.b16 %v683
        %v2183 = vunpack.c.h.b16 %v683
        %v2184 = vunpack.c.l.b16 %v684
        %v2185 = vunpack.c.h.b16 %v684
        %v2186 = vunpack.c.l.b16 %v685
        %v2187 = vunpack.c.h.b16 %v685
        %v2188 = vunpack.c.l.b16 %v686
        %v2189 = vunpack.c.h.b16 %v686
        %v2190 = vunpack.c.l.b16 %v687
        %v2191 = vunpack.c.h.b16 %v687
        %v2192 = vunpack.c.l.b16 %v688
        %v2193 = vunpack.c.h.b16 %v688
        %v2194 = vunpack.c.l.b16 %v689
        %v2195 = vunpack.c.h.b16 %v689
        %v2196 = vunpack.c.l.b16 %v690
        %v2197 = vunpack.c.h.b16 %v690
        %v2198 = vunpack.c.l.b16 %v691
        %v2199 = vunpack.c.h.b16 %v691
        %v2200 = vunpack.c.l.b16 %v692
        %v2201 = vunpack.c.h.b16 %v692
        %v2202 = vunpack.c.l.b16 %v693
        %v2203 = vunpack.c.h.b16 %v693
        %v2204 = vunpack.c.l.b16 %v694
        %v2205 = vunpack.c.h.b16 %v694
        %v2206 = vunpack.c.l.b16 %v695
        %v2207 = vunpack.c.h.b16 %v695
        %v2208 = vunpack.c.l.b16 %v696
        %v2209 = vunpack.c.h.b16 %v696
        %v2210 = vunpack.c.l.b16 %v697
        %v2211 = vunpack.c.h.b16 %v697
        %v2212 = vunpack.c.l.b16 %v698
        %v2213 = vunpack.c.h.b16 %v698
        %v2214 = vunpack.c.l.b16 %v699
        %v2215 = vunpack.c.h.b16 %v699
        %v2216 = vunpack.c.l.b16 %v700
        %v2217 = vunpack.c.h.b16 %v700
        %v2218 = vunpack.c.l.b16 %v701
        %v2219 = vunpack.c.h.b16 %v701
        %v2220 = vunpack.c.l.b16 %v702
        %v2221 = vunpack.c.h.b16 %v702
        %v2222 = vunpack.c.l.b16 %v703
        %v2223 = vunpack.c.h.b16 %v703
        %v2224 = vunpack.c.l.b16 %v704
        %v2225 = vunpack.c.h.b16 %v704
        %v2226 = vunpack.c.l.b16 %v705
        %v2227 = vunpack.c.h.b16 %v705
        %v2228 = vunpack.c.l.b16 %v706
        %v2229 = vunpack.c.h.b16 %v706
        %v2230 = vunpack.c.l.b16 %v707
        %v2231 = vunpack.c.h.b16 %v707
        %v2232 = vunpack.c.l.b16 %v708
        %v2233 = vunpack.c.h.b16 %v708
        %v2234 = vunpack.c.l.b16 %v709
        %v2235 = vunpack.c.h.b16 %v709
        %v2236 = vunpack.c.l.b16 %v710
        %v2237 = vunpack.c.h.b16 %v710
        %v2238 = vunpack.c.l.b16 %v711
        %v2239 = vunpack.c.h.b16 %v711
        %v2240 = vunpack.c.l.b16 %v712
        %v2241 = vunpack.c.h.b16 %v712
        %v2242 = vunpack.c.l.b16 %v713
        %v2243 = vunpack.c.h.b16 %v713
        %v2244 = vunpack.c.l.b16 %v714
        %v2245 = vunpack.c.h.b16 %v714
        %v2246 = vunpack.c.l.b16 %v715
        %v2247 = vunpack.c.h.b16 %v715
        %v2248 = vunpack.c.l.b16 %v716
        %v2249 = vunpack.c.h.b16 %v716
        %v2250 = vunpack.c.l.b16 %v717
        %v2251 = vunpack.c.h.b16 %v717
        %v2252 = vunpack.c.l.b16 %v718
        %v2253 = vunpack.c.h.b16 %v718
        %v2254 = vunpack.c.l.b16 %v719
        %v2255 = vunpack.c.h.b16 %v719
        %v2256 = vunpack.c.l.b16 %v720
        %v2257 = vunpack.c.h.b16 %v720
        %v2258 = vunpack.c.l.b16 %v721
        %v2259 = vunpack.c.h.b16 %v721
        %v2260 = vunpack.c.l.b16 %v722
        %v2261 = vunpack.c.h.b16 %v722
        %v2262 = vunpack.c.l.b16 %v723
        %v2263 = vunpack.c.h.b16 %v723
        %v2264 = vunpack.c.l.b16 %v724
        %v2265 = vunpack.c.h.b16 %v724
        %v2266 = vunpack.c.l.b16 %v725
        %v2267 = vunpack.c.h.b16 %v725
        %v2268 = vunpack.c.l.b16 %v726
        %v2269 = vunpack.c.h.b16 %v726
        %v2270 = vunpack.c.l.b16 %v727
        %v2271 = vunpack.c.h.b16 %v727
        %v2272 = vunpack.c.l.b16 %v728
        %v2273 = vunpack.c.h.b16 %v728
        %v2274 = vunpack.c.l.b16 %v729
        %v2275 = vunpack.c.h.b16 %v729
        %v2276 = vunpack.c.l.b16 %v730
        %v2277 = vunpack.c.h.b16 %v730
        %v2278 = vunpack.c.l.b16 %v731
        %v2279 = vunpack.c.h.b16 %v731
        %v2280 = vunpack.c.l.b16 %v732
        %v2281 = vunpack.c.h.b16 %v732
        %v2282 = vunpack.c.l.b16 %v733
        %v2283 = vunpack.c.h.b16 %v733
        %v2284 = vunpack.c.l.b16 %v734
        %v2285 = vunpack.c.h.b16 %v734
        %v2286 = vunpack.c.l.b16 %v735
        %v2287 = vunpack.c.h.b16 %v735
        %v2288 = vunpack.c.l.b16 %v736
        %v2289 = vunpack.c.h.b16 %v736
        %v2290 = vunpack.c.l.b16 %v737
        %v2291 = vunpack.c.h.b16 %v737
        %v2292 = vunpack.c.l.b16 %v738
        %v2293 = vunpack.c.h.b16 %v738
        %v2294 = vunpack.c.l.b16 %v739
        %v2295 = vunpack.c.h.b16 %v739
        %v2296 = vunpack.c.l.b16 %v740
        %v2297 = vunpack.c.h.b16 %v740
        %v2298 = vunpack.c.l.b16 %v741
        %v2299 = vunpack.c.h.b16 %v741
        %v2300 = vunpack.c.l.b16 %v742
        %v2301 = vunpack.c.h.b16 %v742
        %v2302 = vunpack.c.l.b16 %v743
        %v2303 = vunpack.c.h.b16 %v743
        %v2304 = vunpack.c.l.b16 %v744
        %v2305 = vunpack.c.h.b16 %v744
        %v2306 = vunpack.c.l.b16 %v745
        %v2307 = vunpack.c.h.b16 %v745
        %v2308 = vunpack.c.l.b16 %v746
        %v2309 = vunpack.c.h.b16 %v746
        %v2310 = vunpack.c.l.b16 %v747
        %v2311 = vunpack.c.h.b16 %v747
        %v2312 = vunpack.c.l.b16 %v748
        %v2313 = vunpack.c.h.b16 %v748
        %v2314 = vunpack.c.l.b16 %v749
        %v2315 = vunpack.c.h.b16 %v749
        %v2316 = vunpack.c.l.b16 %v750
        %v2317 = vunpack.c.h.b16 %v750
        %v2318 = vunpack.c.l.b16 %v751
        %v2319 = vunpack.c.h.b16 %v751
        %v2320 = vunpack.c.l.b16 %v752
        %v2321 = vunpack.c.h.b16 %v752
        %v2322 = vunpack.c.l.b16 %v753
        %v2323 = vunpack.c.h.b16 %v753
        %v2324 = vunpack.c.l.b16 %v754
        %v2325 = vunpack.c.h.b16 %v754
        %v2326 = vunpack.c.l.b16 %v755
        %v2327 = vunpack.c.h.b16 %v755
        %v2328 = vunpack.c.l.b16 %v756
        %v2329 = vunpack.c.h.b16 %v756
        %v2330 = vunpack.c.l.b16 %v757
        %v2331 = vunpack.c.h.b16 %v757
        %v2332 = vunpack.c.l.b16 %v758
        %v2333 = vunpack.c.h.b16 %v758
        %v2334 = vunpack.c.l.b16 %v759
        %v2335 = vunpack.c.h.b16 %v759
        %v2336 = vunpack.c.l.b16 %v760
        %v2337 = vunpack.c.h.b16 %v760
        %v2338 = vunpack.c.l.b16 %v761
        %v2339 = vunpack.c.h.b16 %v761
        %v2340 = vpack.c.b16 %v1324, %v1316
        %v2341 = vpack.c.b16 %v1325, %v1317
        %v2342 = vpack.c.b16 %v1326, %v1318
        %v2343 = vpack.c.b16 %v1327, %v1319
        %v2344 = vpack.c.b16 %v1328, %v1320
        %v2345 = vpack.c.b16 %v1329, %v1321
        %v2346 = vpack.c.b16 %v1330, %v1322
        %v2347 = vpack.c.b16 %v1331, %v1323
        %v2348 = vpack.c.b16 %v1340, %v1332
        %v2349 = vpack.c.b16 %v1341, %v1333
        %v2350 = vpack.c.b16 %v1342, %v1334
        %v2351 = vpack.c.b16 %v1343, %v1335
        %v2352 = vpack.c.b16 %v1344, %v1336
        %v2353 = vpack.c.b16 %v1345, %v1337
        %v2354 = vpack.c.b16 %v1346, %v1338
        %v2355 = vpack.c.b16 %v1347, %v1339
        %v2356 = vpack.c.b16 %v1356, %v1348
        %v2357 = vpack.c.b16 %v1357, %v1349
        %v2358 = vpack.c.b16 %v1358, %v1350
        %v2359 = vpack.c.b16 %v1359, %v1351
        %v2360 = vpack.c.b16 %v1360, %v1352
        %v2361 = vpack.c.b16 %v1361, %v1353
        %v2362 = vpack.c.b16 %v1362, %v1354
        %v2363 = vpack.c.b16 %v1363, %v1355
        %v2364 = vpack.c.b16 %v1372, %v1364
        %v2365 = vpack.c.b16 %v1373, %v1365
        %v2366 = vpack.c.b16 %v1374, %v1366
        %v2367 = vpack.c.b16 %v1375, %v1367
        %v2368 = vpack.c.b16 %v1376, %v1368
        %v2369 = vpack.c.b16 %v1377, %v1369
        %v2370 = vpack.c.b16 %v1378, %v1370
        %v2371 = vpack.c.b16 %v1379, %v1371
        %v2372 = vpack.c.b16 %v1388, %v1380
        %v2373 = vpack.c.b16 %v1389, %v1381
        %v2374 = vpack.c.b16 %v1390, %v1382
        %v2375 = vpack.c.b16 %v1391, %v1383
        %v2376 = vpack.c.b16 %v1392, %v1384
        %v2377 = vpack.c.b16 %v1393, %v1385
        %v2378 = vpack.c.b16 %v1394, %v1386
        %v2379 = vpack.c.b16 %v1395, %v1387
        %v2380 = vpack.c.b16 %v1404, %v1396
        %v2381 = vpack.c.b16 %v1405, %v1397
        %v2382 = vpack.c.b16 %v1406, %v1398
        %v2383 = vpack.c.b16 %v1407, %v1399
        %v2384 = vpack.c.b16 %v1408, %v1400
        %v2385 = vpack.c.b16 %v1409, %v1401
        %v2386 = vpack.c.b16 %v1410, %v1402
        %v2387 = vpack.c.b16 %v1411, %v1403
        %v2388 = vpack.c.b16 %v1420, %v1412
        %v2389 = vpack.c.b16 %v1421, %v1413
        %v2390 = vpack.c.b16 %v1422, %v1414
        %v2391 = vpack.c.b16 %v1423, %v1415
        %v2392 = vpack.c.b16 %v1424, %v1416
        %v2393 = vpack.c.b16 %v1425, %v1417
        %v2394 = vpack.c.b16 %v1426, %v1418
        %v2395 = vpack.c.b16 %v1427, %v1419
        %v2396 = vpack.c.b16 %v1436, %v1428
        %v2397 = vpack.c.b16 %v1437, %v1429
        %v2398 = vpack.c.b16 %v1438, %v1430
        %v2399 = vpack.c.b16 %v1439, %v1431
        %v2400 = vpack.c.b16 %v1440, %v1432
        %v2401 = vpack.c.b16 %v1441, %v1433
        %v2402 = vpack.c.b16 %v1442, %v1434
        %v2403 = vpack.c.b16 %v1443, %v1435
        %v2404 = vpack.c.b16 %v1452, %v1444
        %v2405 = vpack.c.b16 %v1453, %v1445
        %v2406 = vpack.c.b16 %v1454, %v1446
        %v2407 = vpack.c.b16 %v1455, %v1447
        %v2408 = vpack.c.b16 %v1456, %v1448
        %v2409 = vpack.c.b16 %v1457, %v1449
        %v2410 = vpack.c.b16 %v1458, %v1450
        %v2411 = vpack.c.b16 %v1459, %v1451
        %v2412 = vpack.c.b16 %v1468, %v1460
        %v2413 = vpack.c.b16 %v1469, %v1461
        %v2414 = vpack.c.b16 %v1470, %v1462
        %v2415 = vpack.c.b16 %v1471, %v1463
        %v2416 = vpack.c.b16 %v1472, %v1464
        %v2417 = vpack.c.b16 %v1473, %v1465
        %v2418 = vpack.c.b16 %v1474, %v1466
        %v2419 = vpack.c.b16 %v1475, %v1467
        %v2420 = vpack.c.b16 %v1484, %v1476
        %v2421 = vpack.c.b16 %v1485, %v1477
        %v2422 = vpack.c.b16 %v1486, %v1478
        %v2423 = vpack.c.b16 %v1487, %v1479
        %v2424 = vpack.c.b16 %v1488, %v1480
        %v2425 = vpack.c.b16 %v1489, %v1481
        %v2426 = vpack.c.b16 %v1490, %v1482
        %v2427 = vpack.c.b16 %v1491, %v1483
        %v2428 = vpack.c.b16 %v1500, %v1492
        %v2429 = vpack.c.b16 %v1501, %v1493
        %v2430 = vpack.c.b16 %v1502, %v1494
        %v2431 = vpack.c.b16 %v1503, %v1495
        %v2432 = vpack.c.b16 %v1504, %v1496
        %v2433 = vpack.c.b16 %v1505, %v1497
        %v2434 = vpack.c.b16 %v1506, %v1498
        %v2435 = vpack.c.b16 %v1507, %v1499
        %v2436 = vpack.c.b16 %v1516, %v1508
        %v2437 = vpack.c.b16 %v1517, %v1509
        %v2438 = vpack.c.b16 %v1518, %v1510
        %v2439 = vpack.c.b16 %v1519, %v1511
        %v2440 = vpack.c.b16 %v1520, %v1512
        %v2441 = vpack.c.b16 %v1521, %v1513
        %v2442 = vpack.c.b16 %v1522, %v1514
        %v2443 = vpack.c.b16 %v1523, %v1515
        %v2444 = vpack.c.b16 %v1532, %v1524
        %v2445 = vpack.c.b16 %v1533, %v1525
        %v2446 = vpack.c.b16 %v1534, %v1526
        %v2447 = vpack.c.b16 %v1535, %v1527
        %v2448 = vpack.c.b16 %v1536, %v1528
        %v2449 = vpack.c.b16 %v1537, %v1529
        %v2450 = vpack.c.b16 %v1538, %v1530
        %v2451 = vpack.c.b16 %v1539, %v1531
        %v2452 = vpack.c.b16 %v1548, %v1540
        %v2453 = vpack.c.b16 %v1549, %v1541
        %v2454 = vpack.c.b16 %v1550, %v1542
        %v2455 = vpack.c.b16 %v1551, %v1543
        %v2456 = vpack.c.b16 %v1552, %v1544
        %v2457 = vpack.c.b16 %v1553, %v1545
        %v2458 = vpack.c.b16 %v1554, %v1546
        %v2459 = vpack.c.b16 %v1555, %v1547
        %v2460 = vpack.c.b16 %v1564, %v1556
        %v2461 = vpack.c.b16 %v1565, %v1557
        %v2462 = vpack.c.b16 %v1566, %v1558
        %v2463 = vpack.c.b16 %v1567, %v1559
        %v2464 = vpack.c.b16 %v1568, %v1560
        %v2465 = vpack.c.b16 %v1569, %v1561
        %v2466 = vpack.c.b16 %v1570, %v1562
        %v2467 = vpack.c.b16 %v1571, %v1563
        %v2468 = vpack.c.b16 %v1580, %v1572
        %v2469 = vpack.c.b16 %v1581, %v1573
        %v2470 = vpack.c.b16 %v1582, %v1574
        %v2471 = vpack.c.b16 %v1583, %v1575
        %v2472 = vpack.c.b16 %v1584, %v1576
        %v2473 = vpack.c.b16 %v1585, %v1577
        %v2474 = vpack.c.b16 %v1586, %v1578
        %v2475 = vpack.c.b16 %v1587, %v1579
        %v2476 = vpack.c.b16 %v1596, %v1588
        %v2477 = vpack.c.b16 %v1597, %v1589
        %v2478 = vpack.c.b16 %v1598, %v1590
        %v2479 = vpack.c.b16 %v1599, %v1591
        %v2480 = vpack.c.b16 %v1600, %v1592
        %v2481 = vpack.c.b16 %v1601, %v1593
        %v2482 = vpack.c.b16 %v1602, %v1594
        %v2483 = vpack.c.b16 %v1603, %v1595
        %v2484 = vpack.c.b16 %v1612, %v1604
        %v2485 = vpack.c.b16 %v1613, %v1605
        %v2486 = vpack.c.b16 %v1614, %v1606
        %v2487 = vpack.c.b16 %v1615, %v1607
        %v2488 = vpack.c.b16 %v1616, %v1608
        %v2489 = vpack.c.b16 %v1617, %v1609
        %v2490 = vpack.c.b16 %v1618, %v1610
        %v2491 = vpack.c.b16 %v1619, %v1611
        %v2492 = vpack.c.b16 %v1628, %v1620
        %v2493 = vpack.c.b16 %v1629, %v1621
        %v2494 = vpack.c.b16 %v1630, %v1622
        %v2495 = vpack.c.b16 %v1631, %v1623
        %v2496 = vpack.c.b16 %v1632, %v1624
        %v2497 = vpack.c.b16 %v1633, %v1625
        %v2498 = vpack.c.b16 %v1634, %v1626
        %v2499 = vpack.c.b16 %v1635, %v1627
        %v2500 = vpack.c.b16 %v1644, %v1636
        %v2501 = vpack.c.b16 %v1645, %v1637
        %v2502 = vpack.c.b16 %v1646, %v1638
        %v2503 = vpack.c.b16 %v1647, %v1639
        %v2504 = vpack.c.b16 %v1648, %v1640
        %v2505 = vpack.c.b16 %v1649, %v1641
        %v2506 = vpack.c.b16 %v1650, %v1642
        %v2507 = vpack.c.b16 %v1651, %v1643
        %v2508 = vpack.c.b16 %v1660, %v1652
        %v2509 = vpack.c.b16 %v1661, %v1653
        %v2510 = vpack.c.b16 %v1662, %v1654
        %v2511 = vpack.c.b16 %v1663, %v1655
        %v2512 = vpack.c.b16 %v1664, %v1656
        %v2513 = vpack.c.b16 %v1665, %v1657
        %v2514 = vpack.c.b16 %v1666, %v1658
        %v2515 = vpack.c.b16 %v1667, %v1659
        %v2516 = vpack.c.b16 %v1676, %v1668
        %v2517 = vpack.c.b16 %v1677, %v1669
        %v2518 = vpack.c.b16 %v1678, %v1670
        %v2519 = vpack.c.b16 %v1679, %v1671
        %v2520 = vpack.c.b16 %v1680, %v1672
        %v2521 = vpack.c.b16 %v1681, %v1673
        %v2522 = vpack.c.b16 %v1682, %v1674
        %v2523 = vpack.c.b16 %v1683, %v1675
        %v2524 = vpack.c.b16 %v1692, %v1684
        %v2525 = vpack.c.b16 %v1693, %v1685
        %v2526 = vpack.c.b16 %v1694, %v1686
        %v2527 = vpack.c.b16 %v1695, %v1687
        %v2528 = vpack.c.b16 %v1696, %v1688
        %v2529 = vpack.c.b16 %v1697, %v1689
        %v2530 = vpack.c.b16 %v1698, %v1690
        %v2531 = vpack.c.b16 %v1699, %v1691
        %v2532 = vpack.c.b16 %v1708, %v1700
        %v2533 = vpack.c.b16 %v1709, %v1701
        %v2534 = vpack.c.b16 %v1710, %v1702
        %v2535 = vpack.c.b16 %v1711, %v1703
        %v2536 = vpack.c.b16 %v1712, %v1704
        %v2537 = vpack.c.b16 %v1713, %v1705
        %v2538 = vpack.c.b16 %v1714, %v1706
        %v2539 = vpack.c.b16 %v1715, %v1707
        %v2540 = vpack.c.b16 %v1724, %v1716
        %v2541 = vpack.c.b16 %v1725, %v1717
        %v2542 = vpack.c.b16 %v1726, %v1718
        %v2543 = vpack.c.b16 %v1727, %v1719
        %v2544 = vpack.c.b16 %v1728, %v1720
        %v2545 = vpack.c.b16 %v1729, %v1721
        %v2546 = vpack.c.b16 %v1730, %v1722
        %v2547 = vpack.c.b16 %v1731, %v1723
        %v2548 = vpack.c.b16 %v1740, %v1732
        %v2549 = vpack.c.b16 %v1741, %v1733
        %v2550 = vpack.c.b16 %v1742, %v1734
        %v2551 = vpack.c.b16 %v1743, %v1735
        %v2552 = vpack.c.b16 %v1744, %v1736
        %v2553 = vpack.c.b16 %v1745, %v1737
        %v2554 = vpack.c.b16 %v1746, %v1738
        %v2555 = vpack.c.b16 %v1747, %v1739
        %v2556 = vpack.c.b16 %v1756, %v1748
        %v2557 = vpack.c.b16 %v1757, %v1749
        %v2558 = vpack.c.b16 %v1758, %v1750
        %v2559 = vpack.c.b16 %v1759, %v1751
        %v2560 = vpack.c.b16 %v1760, %v1752
        %v2561 = vpack.c.b16 %v1761, %v1753
        %v2562 = vpack.c.b16 %v1762, %v1754
        %v2563 = vpack.c.b16 %v1763, %v1755
        %v2564 = vpack.c.b16 %v1772, %v1764
        %v2565 = vpack.c.b16 %v1773, %v1765
        %v2566 = vpack.c.b16 %v1774, %v1766
        %v2567 = vpack.c.b16 %v1775, %v1767
        %v2568 = vpack.c.b16 %v1776, %v1768
        %v2569 = vpack.c.b16 %v1777, %v1769
        %v2570 = vpack.c.b16 %v1778, %v1770
        %v2571 = vpack.c.b16 %v1779, %v1771
        %v2572 = vpack.c.b16 %v1788, %v1780
        %v2573 = vpack.c.b16 %v1789, %v1781
        %v2574 = vpack.c.b16 %v1790, %v1782
        %v2575 = vpack.c.b16 %v1791, %v1783
        %v2576 = vpack.c.b16 %v1792, %v1784
        %v2577 = vpack.c.b16 %v1793, %v1785
        %v2578 = vpack.c.b16 %v1794, %v1786
        %v2579 = vpack.c.b16 %v1795, %v1787
        %v2580 = vpack.c.b16 %v1804, %v1796
        %v2581 = vpack.c.b16 %v1805, %v1797
        %v2582 = vpack.c.b16 %v1806, %v1798
        %v2583 = vpack.c.b16 %v1807, %v1799
        %v2584 = vpack.c.b16 %v1808, %v1800
        %v2585 = vpack.c.b16 %v1809, %v1801
        %v2586 = vpack.c.b16 %v1810, %v1802
        %v2587 = vpack.c.b16 %v1811, %v1803
        %v2588 = vpack.c.b16 %v1820, %v1812
        %v2589 = vpack.c.b16 %v1821, %v1813
        %v2590 = vpack.c.b16 %v1822, %v1814
        %v2591 = vpack.c.b16 %v1823, %v1815
        %v2592 = vpack.c.b16 %v1824, %v1816
        %v2593 = vpack.c.b16 %v1825, %v1817
        %v2594 = vpack.c.b16 %v1826, %v1818
        %v2595 = vpack.c.b16 %v1827, %v1819
        %v2596 = vpack.c.b16 %v1836, %v1828
        %v2597 = vpack.c.b16 %v1837, %v1829
        %v2598 = vpack.c.b16 %v1838, %v1830
        %v2599 = vpack.c.b16 %v1839, %v1831
        %v2600 = vpack.c.b16 %v1840, %v1832
        %v2601 = vpack.c.b16 %v1841, %v1833
        %v2602 = vpack.c.b16 %v1842, %v1834
        %v2603 = vpack.c.b16 %v1843, %v1835
        %v2604 = vpack.c.b16 %v1852, %v1844
        %v2605 = vpack.c.b16 %v1853, %v1845
        %v2606 = vpack.c.b16 %v1854, %v1846
        %v2607 = vpack.c.b16 %v1855, %v1847
        %v2608 = vpack.c.b16 %v1856, %v1848
        %v2609 = vpack.c.b16 %v1857, %v1849
        %v2610 = vpack.c.b16 %v1858, %v1850
        %v2611 = vpack.c.b16 %v1859, %v1851
        %v2612 = vpack.c.b16 %v1868, %v1860
        %v2613 = vpack.c.b16 %v1869, %v1861
        %v2614 = vpack.c.b16 %v1870, %v1862
        %v2615 = vpack.c.b16 %v1871, %v1863
        %v2616 = vpack.c.b16 %v1872, %v1864
        %v2617 = vpack.c.b16 %v1873, %v1865
        %v2618 = vpack.c.b16 %v1874, %v1866
        %v2619 = vpack.c.b16 %v1875, %v1867
        %v2620 = vpack.c.b16 %v1884, %v1876
        %v2621 = vpack.c.b16 %v1885, %v1877
        %v2622 = vpack.c.b16 %v1886, %v1878
        %v2623 = vpack.c.b16 %v1887, %v1879
        %v2624 = vpack.c.b16 %v1888, %v1880
        %v2625 = vpack.c.b16 %v1889, %v1881
        %v2626 = vpack.c.b16 %v1890, %v1882
        %v2627 = vpack.c.b16 %v1891, %v1883
        %v2628 = vpack.c.b16 %v1900, %v1892
        %v2629 = vpack.c.b16 %v1901, %v1893
        %v2630 = vpack.c.b16 %v1902, %v1894
        %v2631 = vpack.c.b16 %v1903, %v1895
        %v2632 = vpack.c.b16 %v1904, %v1896
        %v2633 = vpack.c.b16 %v1905, %v1897
        %v2634 = vpack.c.b16 %v1906, %v1898
        %v2635 = vpack.c.b16 %v1907, %v1899
        %v2636 = vpack.c.b16 %v1916, %v1908
        %v2637 = vpack.c.b16 %v1917, %v1909
        %v2638 = vpack.c.b16 %v1918, %v1910
        %v2639 = vpack.c.b16 %v1919, %v1911
        %v2640 = vpack.c.b16 %v1920, %v1912
        %v2641 = vpack.c.b16 %v1921, %v1913
        %v2642 = vpack.c.b16 %v1922, %v1914
        %v2643 = vpack.c.b16 %v1923, %v1915
        %v2644 = vpack.c.b16 %v1932, %v1924
        %v2645 = vpack.c.b16 %v1933, %v1925
        %v2646 = vpack.c.b16 %v1934, %v1926
        %v2647 = vpack.c.b16 %v1935, %v1927
        %v2648 = vpack.c.b16 %v1936, %v1928
        %v2649 = vpack.c.b16 %v1937, %v1929
        %v2650 = vpack.c.b16 %v1938, %v1930
        %v2651 = vpack.c.b16 %v1939, %v1931
        %v2652 = vpack.c.b16 %v1948, %v1940
        %v2653 = vpack.c.b16 %v1949, %v1941
        %v2654 = vpack.c.b16 %v1950, %v1942
        %v2655 = vpack.c.b16 %v1951, %v1943
        %v2656 = vpack.c.b16 %v1952, %v1944
        %v2657 = vpack.c.b16 %v1953, %v1945
        %v2658 = vpack.c.b16 %v1954, %v1946
        %v2659 = vpack.c.b16 %v1955, %v1947
        %v2660 = vpack.c.b16 %v1964, %v1956
        %v2661 = vpack.c.b16 %v1965, %v1957
        %v2662 = vpack.c.b16 %v1966, %v1958
        %v2663 = vpack.c.b16 %v1967, %v1959
        %v2664 = vpack.c.b16 %v1968, %v1960
        %v2665 = vpack.c.b16 %v1969, %v1961
        %v2666 = vpack.c.b16 %v1970, %v1962
        %v2667 = vpack.c.b16 %v1971, %v1963
        %v2668 = vpack.c.b16 %v1980, %v1972
        %v2669 = vpack.c.b16 %v1981, %v1973
        %v2670 = vpack.c.b16 %v1982, %v1974
        %v2671 = vpack.c.b16 %v1983, %v1975
        %v2672 = vpack.c.b16 %v1984, %v1976
        %v2673 = vpack.c.b16 %v1985, %v1977
        %v2674 = vpack.c.b16 %v1986, %v1978
        %v2675 = vpack.c.b16 %v1987, %v1979
        %v2676 = vpack.c.b16 %v1996, %v1988
        %v2677 = vpack.c.b16 %v1997, %v1989
        %v2678 = vpack.c.b16 %v1998, %v1990
        %v2679 = vpack.c.b16 %v1999, %v1991
        %v2680 = vpack.c.b16 %v2000, %v1992
        %v2681 = vpack.c.b16 %v2001, %v1993
        %v2682 = vpack.c.b16 %v2002, %v1994
        %v2683 = vpack.c.b16 %v2003, %v1995
        %v2684 = vpack.c.b16 %v2012, %v2004
        %v2685 = vpack.c.b16 %v2013, %v2005
        %v2686 = vpack.c.b16 %v2014, %v2006
        %v2687 = vpack.c.b16 %v2015, %v2007
        %v2688 = vpack.c.b16 %v2016, %v2008
        %v2689 = vpack.c.b16 %v2017, %v2009
        %v2690 = vpack.c.b16 %v2018, %v2010
        %v2691 = vpack.c.b16 %v2019, %v2011
        %v2692 = vpack.c.b16 %v2028, %v2020
        %v2693 = vpack.c.b16 %v2029, %v2021
        %v2694 = vpack.c.b16 %v2030, %v2022
        %v2695 = vpack.c.b16 %v2031, %v2023
        %v2696 = vpack.c.b16 %v2032, %v2024
        %v2697 = vpack.c.b16 %v2033, %v2025
        %v2698 = vpack.c.b16 %v2034, %v2026
        %v2699 = vpack.c.b16 %v2035, %v2027
        %v2700 = vpack.c.b16 %v2044, %v2036
        %v2701 = vpack.c.b16 %v2045, %v2037
        %v2702 = vpack.c.b16 %v2046, %v2038
        %v2703 = vpack.c.b16 %v2047, %v2039
        %v2704 = vpack.c.b16 %v2048, %v2040
        %v2705 = vpack.c.b16 %v2049, %v2041
        %v2706 = vpack.c.b16 %v2050, %v2042
        %v2707 = vpack.c.b16 %v2051, %v2043
        %v2708 = vpack.c.b16 %v2060, %v2052
        %v2709 = vpack.c.b16 %v2061, %v2053
        %v2710 = vpack.c.b16 %v2062, %v2054
        %v2711 = vpack.c.b16 %v2063, %v2055
        %v2712 = vpack.c.b16 %v2064, %v2056
        %v2713 = vpack.c.b16 %v2065, %v2057
        %v2714 = vpack.c.b16 %v2066, %v2058
        %v2715 = vpack.c.b16 %v2067, %v2059
        %v2716 = vpack.c.b16 %v2076, %v2068
        %v2717 = vpack.c.b16 %v2077, %v2069
        %v2718 = vpack.c.b16 %v2078, %v2070
        %v2719 = vpack.c.b16 %v2079, %v2071
        %v2720 = vpack.c.b16 %v2080, %v2072
        %v2721 = vpack.c.b16 %v2081, %v2073
        %v2722 = vpack.c.b16 %v2082, %v2074
        %v2723 = vpack.c.b16 %v2083, %v2075
        %v2724 = vpack.c.b16 %v2092, %v2084
        %v2725 = vpack.c.b16 %v2093, %v2085
        %v2726 = vpack.c.b16 %v2094, %v2086
        %v2727 = vpack.c.b16 %v2095, %v2087
        %v2728 = vpack.c.b16 %v2096, %v2088
        %v2729 = vpack.c.b16 %v2097, %v2089
        %v2730 = vpack.c.b16 %v2098, %v2090
        %v2731 = vpack.c.b16 %v2099, %v2091
        %v2732 = vpack.c.b16 %v2108, %v2100
        %v2733 = vpack.c.b16 %v2109, %v2101
        %v2734 = vpack.c.b16 %v2110, %v2102
        %v2735 = vpack.c.b16 %v2111, %v2103
        %v2736 = vpack.c.b16 %v2112, %v2104
        %v2737 = vpack.c.b16 %v2113, %v2105
        %v2738 = vpack.c.b16 %v2114, %v2106
        %v2739 = vpack.c.b16 %v2115, %v2107
        %v2740 = vpack.c.b16 %v2124, %v2116
        %v2741 = vpack.c.b16 %v2125, %v2117
        %v2742 = vpack.c.b16 %v2126, %v2118
        %v2743 = vpack.c.b16 %v2127, %v2119
        %v2744 = vpack.c.b16 %v2128, %v2120
        %v2745 = vpack.c.b16 %v2129, %v2121
        %v2746 = vpack.c.b16 %v2130, %v2122
        %v2747 = vpack.c.b16 %v2131, %v2123
        %v2748 = vpack.c.b16 %v2140, %v2132
        %v2749 = vpack.c.b16 %v2141, %v2133
        %v2750 = vpack.c.b16 %v2142, %v2134
        %v2751 = vpack.c.b16 %v2143, %v2135
        %v2752 = vpack.c.b16 %v2144, %v2136
        %v2753 = vpack.c.b16 %v2145, %v2137
        %v2754 = vpack.c.b16 %v2146, %v2138
        %v2755 = vpack.c.b16 %v2147, %v2139
        %v2756 = vpack.c.b16 %v2156, %v2148
        %v2757 = vpack.c.b16 %v2157, %v2149
        %v2758 = vpack.c.b16 %v2158, %v2150
        %v2759 = vpack.c.b16 %v2159, %v2151
        %v2760 = vpack.c.b16 %v2160, %v2152
        %v2761 = vpack.c.b16 %v2161, %v2153
        %v2762 = vpack.c.b16 %v2162, %v2154
        %v2763 = vpack.c.b16 %v2163, %v2155
        %v2764 = vpack.c.b16 %v2172, %v2164
        %v2765 = vpack.c.b16 %v2173, %v2165
        %v2766 = vpack.c.b16 %v2174, %v2166
        %v2767 = vpack.c.b16 %v2175, %v2167
        %v2768 = vpack.c.b16 %v2176, %v2168
        %v2769 = vpack.c.b16 %v2177, %v2169
        %v2770 = vpack.c.b16 %v2178, %v2170
        %v2771 = vpack.c.b16 %v2179, %v2171
        %v2772 = vpack.c.b16 %v2188, %v2180
        %v2773 = vpack.c.b16 %v2189, %v2181
        %v2774 = vpack.c.b16 %v2190, %v2182
        %v2775 = vpack.c.b16 %v2191, %v2183
        %v2776 = vpack.c.b16 %v2192, %v2184
        %v2777 = vpack.c.b16 %v2193, %v2185
        %v2778 = vpack.c.b16 %v2194, %v2186
        %v2779 = vpack.c.b16 %v2195, %v2187
        %v2780 = vpack.c.b16 %v2204, %v2196
        %v2781 = vpack.c.b16 %v2205, %v2197
        %v2782 = vpack.c.b16 %v2206, %v2198
        %v2783 = vpack.c.b16 %v2207, %v2199
        %v2784 = vpack.c.b16 %v2208, %v2200
        %v2785 = vpack.c.b16 %v2209, %v2201
        %v2786 = vpack.c.b16 %v2210, %v2202
        %v2787 = vpack.c.b16 %v2211, %v2203
        %v2788 = vpack.c.b16 %v2220, %v2212
        %v2789 = vpack.c.b16 %v2221, %v2213
        %v2790 = vpack.c.b16 %v2222, %v2214
        %v2791 = vpack.c.b16 %v2223, %v2215
        %v2792 = vpack.c.b16 %v2224, %v2216
        %v2793 = vpack.c.b16 %v2225, %v2217
        %v2794 = vpack.c.b16 %v2226, %v2218
        %v2795 = vpack.c.b16 %v2227, %v2219
        %v2796 = vpack.c.b16 %v2236, %v2228
        %v2797 = vpack.c.b16 %v2237, %v2229
        %v2798 = vpack.c.b16 %v2238, %v2230
        %v2799 = vpack.c.b16 %v2239, %v2231
        %v2800 = vpack.c.b16 %v2240, %v2232
        %v2801 = vpack.c.b16 %v2241, %v2233
        %v2802 = vpack.c.b16 %v2242, %v2234
        %v2803 = vpack.c.b16 %v2243, %v2235
        %v2804 = vpack.c.b16 %v2252, %v2244
        %v2805 = vpack.c.b16 %v2253, %v2245
        %v2806 = vpack.c.b16 %v2254, %v2246
        %v2807 = vpack.c.b16 %v2255, %v2247
        %v2808 = vpack.c.b16 %v2256, %v2248
        %v2809 = vpack.c.b16 %v2257, %v2249
        %v2810 = vpack.c.b16 %v2258, %v2250
        %v2811 = vpack.c.b16 %v2259, %v2251
        %v2812 = vpack.c.b16 %v2268, %v2260
        %v2813 = vpack.c.b16 %v2269, %v2261
        %v2814 = vpack.c.b16 %v2270, %v2262
        %v2815 = vpack.c.b16 %v2271, %v2263
        %v2816 = vpack.c.b16 %v2272, %v2264
        %v2817 = vpack.c.b16 %v2273, %v2265
        %v2818 = vpack.c.b16 %v2274, %v2266
        %v2819 = vpack.c.b16 %v2275, %v2267
        %v2820 = vpack.c.b16 %v2284, %v2276
        %v2821 = vpack.c.b16 %v2285, %v2277
        %v2822 = vpack.c.b16 %v2286, %v2278
        %v2823 = vpack.c.b16 %v2287, %v2279
        %v2824 = vpack.c.b16 %v2288, %v2280
        %v2825 = vpack.c.b16 %v2289, %v2281
        %v2826 = vpack.c.b16 %v2290, %v2282
        %v2827 = vpack.c.b16 %v2291, %v2283
        %v2828 = vpack.c.b16 %v2300, %v2292
        %v2829 = vpack.c.b16 %v2301, %v2293
        %v2830 = vpack.c.b16 %v2302, %v2294
        %v2831 = vpack.c.b16 %v2303, %v2295
        %v2832 = vpack.c.b16 %v2304, %v2296
        %v2833 = vpack.c.b16 %v2305, %v2297
        %v2834 = vpack.c.b16 %v2306, %v2298
        %v2835 = vpack.c.b16 %v2307, %v2299
        %v2836 = vpack.c.b16 %v2316, %v2308
        %v2837 = vpack.c.b16 %v2317, %v2309
        %v2838 = vpack.c.b16 %v2318, %v2310
        %v2839 = vpack.c.b16 %v2319, %v2311
        %v2840 = vpack.c.b16 %v2320, %v2312
        %v2841 = vpack.c.b16 %v2321, %v2313
        %v2842 = vpack.c.b16 %v2322, %v2314
        %v2843 = vpack.c.b16 %v2323, %v2315
        %v2844 = vpack.c.b16 %v2332, %v2324
        %v2845 = vpack.c.b16 %v2333, %v2325
        %v2846 = vpack.c.b16 %v2334, %v2326
        %v2847 = vpack.c.b16 %v2335, %v2327
        %v2848 = vpack.c.b16 %v2336, %v2328
        %v2849 = vpack.c.b16 %v2337, %v2329
        %v2850 = vpack.c.b16 %v2338, %v2330
        %v2851 = vpack.c.b16 %v2339, %v2331
        %3364 = vmatprep.subr.bf16.mxu0 %v2397
        %3365 = vmatpush1.bf16.msra.mxu0 %v2396
        %3366 = vmatprep.subr.bf16.mxu0 %v2389
        %3367 = vmatpush1.bf16.msra.mxu0 %v2388
        %3368 = vmatprep.subr.bf16.mxu0 %v2381
        %3369 = vmatpush1.bf16.msra.mxu0 %v2380
        %3370 = vmatprep.subr.bf16.mxu0 %v2373
        %3371 = vmatpush1.bf16.msra.mxu0 %v2372
        %3372 = vmatprep.subr.bf16.mxu0 %v2365
        %3373 = vmatpush1.bf16.msra.mxu0 %v2364
        %3374 = vmatprep.subr.bf16.mxu0 %v2357
        %3375 = vmatpush1.bf16.msra.mxu0 %v2356
        %3376 = vmatprep.subr.bf16.mxu0 %v2349
        %3377 = vmatpush1.bf16.msra.mxu0 %v2348
        %3378 = vmatprep.subr.bf16.mxu0 %v2341
        %3379 = vmatpush1.bf16.msra.mxu0 %v2340
        %3380 = vmatprep.subr.bf16.mxu0 %v2461
        %3381 = vmatpush2.bf16.msra.mxu0 %v2460
        %3382 = vmatprep.subr.bf16.mxu0 %v2453
        %3383 = vmatpush2.bf16.msra.mxu0 %v2452
        %3384 = vmatprep.subr.bf16.mxu0 %v2445
        %3385 = vmatpush2.bf16.msra.mxu0 %v2444
        %3386 = vmatprep.subr.bf16.mxu0 %v2437
        %3387 = vmatpush2.bf16.msra.mxu0 %v2436
        %3388 = vmatprep.subr.bf16.mxu0 %v2429
        %3389 = vmatpush2.bf16.msra.mxu0 %v2428
        %3390 = vmatprep.subr.bf16.mxu0 %v2421
        %3391 = vmatpush2.bf16.msra.mxu0 %v2420
        %3392 = vmatprep.subr.bf16.mxu0 %v2413
        %3393 = vmatpush2.bf16.msra.mxu0 %v2412
        %3394 = vmatprep.subr.bf16.mxu0 %v2405
        %3395 = vmatpush2.bf16.msra.mxu0 %v2404
        %3396 = vmatprep.mubr.bf16.mxu0 %v243
        %3397 = vmatmul.mubr.bf16.gmra.mxu0 %v242
        %v3398 = vpop.f32.mrf.mxu0
        %v3399 = vadd.f32 %v767, %v3398
        %v3400 = vpop.f32.mrf.mxu0
        %v3401 = vadd.f32 %v771, %v3400
        %v3402 = vpop.f32.mrf.mxu0
        %v3403 = vpop.f32.mrf.mxu0
        %3404 = vdwg.mxu0
        %3405 = vmatprep.subr.bf16.mxu0 %v2525
        %3406 = vmatpush1.bf16.msra.mxu0 %v2524
        %3407 = vmatprep.subr.bf16.mxu0 %v2517
        %3408 = vmatpush1.bf16.msra.mxu0 %v2516
        %3409 = vmatprep.subr.bf16.mxu0 %v2509
        %3410 = vmatpush1.bf16.msra.mxu0 %v2508
        %3411 = vmatprep.subr.bf16.mxu0 %v2501
        %3412 = vmatpush1.bf16.msra.mxu0 %v2500
        %3413 = vmatprep.subr.bf16.mxu0 %v2493
        %3414 = vmatpush1.bf16.msra.mxu0 %v2492
        %3415 = vmatprep.subr.bf16.mxu0 %v2485
        %3416 = vmatpush1.bf16.msra.mxu0 %v2484
        %3417 = vmatprep.subr.bf16.mxu0 %v2477
        %3418 = vmatpush1.bf16.msra.mxu0 %v2476
        %3419 = vmatprep.subr.bf16.mxu0 %v2469
        %3420 = vmatpush1.bf16.msra.mxu0 %v2468
        %3421 = vmatprep.subr.bf16.mxu0 %v2589
        %3422 = vmatpush2.bf16.msra.mxu0 %v2588
        %3423 = vmatprep.subr.bf16.mxu0 %v2581
        %3424 = vmatpush2.bf16.msra.mxu0 %v2580
        %3425 = vmatprep.subr.bf16.mxu0 %v2573
        %3426 = vmatpush2.bf16.msra.mxu0 %v2572
        %3427 = vmatprep.subr.bf16.mxu0 %v2565
        %3428 = vmatpush2.bf16.msra.mxu0 %v2564
        %3429 = vmatprep.subr.bf16.mxu0 %v2557
        %3430 = vmatpush2.bf16.msra.mxu0 %v2556
        %3431 = vmatprep.subr.bf16.mxu0 %v2549
        %3432 = vmatpush2.bf16.msra.mxu0 %v2548
        %3433 = vmatprep.subr.bf16.mxu0 %v2541
        %3434 = vmatpush2.bf16.msra.mxu0 %v2540
        %3435 = vmatprep.subr.bf16.mxu0 %v2533
        %3436 = vmatpush2.bf16.msra.mxu0 %v2532
        %3437 = vmatprep.mubr.bf16.mxu0 %v245
        %3438 = vmatmul.mubr.bf16.gmra.mxu0 %v244
        %v3439 = vpop.f32.mrf.mxu0
        %v3440 = vadd.f32 %v3399, %v3439
        %v3441 = vpop.f32.mrf.mxu0
        %v3442 = vadd.f32 %v3401, %v3441
        %v3443 = vpop.f32.mrf.mxu0
        %v3444 = vpop.f32.mrf.mxu0
        %3445 = vdwg.mxu0
        %3446 = vmatprep.subr.bf16.mxu0 %v2653
        %3447 = vmatpush1.bf16.msra.mxu0 %v2652
        %3448 = vmatprep.subr.bf16.mxu0 %v2645
        %3449 = vmatpush1.bf16.msra.mxu0 %v2644
        %3450 = vmatprep.subr.bf16.mxu0 %v2637
        %3451 = vmatpush1.bf16.msra.mxu0 %v2636
        %3452 = vmatprep.subr.bf16.mxu0 %v2629
        %3453 = vmatpush1.bf16.msra.mxu0 %v2628
        %3454 = vmatprep.subr.bf16.mxu0 %v2621
        %3455 = vmatpush1.bf16.msra.mxu0 %v2620
        %3456 = vmatprep.subr.bf16.mxu0 %v2613
        %3457 = vmatpush1.bf16.msra.mxu0 %v2612
        %3458 = vmatprep.subr.bf16.mxu0 %v2605
        %3459 = vmatpush1.bf16.msra.mxu0 %v2604
        %3460 = vmatprep.subr.bf16.mxu0 %v2597
        %3461 = vmatpush1.bf16.msra.mxu0 %v2596
        %3462 = vmatprep.subr.bf16.mxu0 %v2717
        %3463 = vmatpush2.bf16.msra.mxu0 %v2716
        %3464 = vmatprep.subr.bf16.mxu0 %v2709
        %3465 = vmatpush2.bf16.msra.mxu0 %v2708
        %3466 = vmatprep.subr.bf16.mxu0 %v2701
        %3467 = vmatpush2.bf16.msra.mxu0 %v2700
        %3468 = vmatprep.subr.bf16.mxu0 %v2693
        %3469 = vmatpush2.bf16.msra.mxu0 %v2692
        %3470 = vmatprep.subr.bf16.mxu0 %v2685
        %3471 = vmatpush2.bf16.msra.mxu0 %v2684
        %3472 = vmatprep.subr.bf16.mxu0 %v2677
        %3473 = vmatpush2.bf16.msra.mxu0 %v2676
        %3474 = vmatprep.subr.bf16.mxu0 %v2669
        %3475 = vmatpush2.bf16.msra.mxu0 %v2668
        %3476 = vmatprep.subr.bf16.mxu0 %v2661
        %3477 = vmatpush2.bf16.msra.mxu0 %v2660
        %3478 = vmatprep.mubr.bf16.mxu0 %v247
        %3479 = vmatmul.mubr.bf16.gmra.mxu0 %v246
        %v3480 = vpop.f32.mrf.mxu0
        %v3481 = vadd.f32 %v3440, %v3480
        %v3482 = vpop.f32.mrf.mxu0
        %v3483 = vadd.f32 %v3442, %v3482
        %v3484 = vpop.f32.mrf.mxu0
        %v3485 = vpop.f32.mrf.mxu0
        %3486 = vdwg.mxu0
        %3487 = vmatprep.subr.bf16.mxu0 %v2781
        %3488 = vmatpush1.bf16.msra.mxu0 %v2780
        %3489 = vmatprep.subr.bf16.mxu0 %v2773
        %3490 = vmatpush1.bf16.msra.mxu0 %v2772
        %3491 = vmatprep.subr.bf16.mxu0 %v2765
        %3492 = vmatpush1.bf16.msra.mxu0 %v2764
        %3493 = vmatprep.subr.bf16.mxu0 %v2757
        %3494 = vmatpush1.bf16.msra.mxu0 %v2756
        %3495 = vmatprep.subr.bf16.mxu0 %v2749
        %3496 = vmatpush1.bf16.msra.mxu0 %v2748
        %3497 = vmatprep.subr.bf16.mxu0 %v2741
        %3498 = vmatpush1.bf16.msra.mxu0 %v2740
        %3499 = vmatprep.subr.bf16.mxu0 %v2733
        %3500 = vmatpush1.bf16.msra.mxu0 %v2732
        %3501 = vmatprep.subr.bf16.mxu0 %v2725
        %3502 = vmatpush1.bf16.msra.mxu0 %v2724
        %3503 = vmatprep.subr.bf16.mxu0 %v2845
        %3504 = vmatpush2.bf16.msra.mxu0 %v2844
        %3505 = vmatprep.subr.bf16.mxu0 %v2837
        %3506 = vmatpush2.bf16.msra.mxu0 %v2836
        %3507 = vmatprep.subr.bf16.mxu0 %v2829
        %3508 = vmatpush2.bf16.msra.mxu0 %v2828
        %3509 = vmatprep.subr.bf16.mxu0 %v2821
        %3510 = vmatpush2.bf16.msra.mxu0 %v2820
        %3511 = vmatprep.subr.bf16.mxu0 %v2813
        %3512 = vmatpush2.bf16.msra.mxu0 %v2812
        %3513 = vmatprep.subr.bf16.mxu0 %v2805
        %3514 = vmatpush2.bf16.msra.mxu0 %v2804
        %3515 = vmatprep.subr.bf16.mxu0 %v2797
        %3516 = vmatpush2.bf16.msra.mxu0 %v2796
        %3517 = vmatprep.subr.bf16.mxu0 %v2789
        %3518 = vmatpush2.bf16.msra.mxu0 %v2788
        %3519 = vmatprep.mubr.bf16.mxu0 %v249
        %3520 = vmatmul.mubr.bf16.gmra.mxu0 %v248
        %v3521 = vpop.f32.mrf.mxu0
        %v3522 = vadd.f32 %v3481, %v3521
        %v3523 = vpop.f32.mrf.mxu0
        %v3524 = vadd.f32 %v3483, %v3523
        %v3525 = vpop.f32.mrf.mxu0
        %v3526 = vpop.f32.mrf.mxu0
        %3527 = vdwg.mxu0
        %3528 = vmatprep.subr.bf16.mxu0 %v2399
        %3529 = vmatpush1.bf16.msra.mxu0 %v2398
        %3530 = vmatprep.subr.bf16.mxu0 %v2391
        %3531 = vmatpush1.bf16.msra.mxu0 %v2390
        %3532 = vmatprep.subr.bf16.mxu0 %v2383
        %3533 = vmatpush1.bf16.msra.mxu0 %v2382
        %3534 = vmatprep.subr.bf16.mxu0 %v2375
        %3535 = vmatpush1.bf16.msra.mxu0 %v2374
        %3536 = vmatprep.subr.bf16.mxu0 %v2367
        %3537 = vmatpush1.bf16.msra.mxu0 %v2366
        %3538 = vmatprep.subr.bf16.mxu0 %v2359
        %3539 = vmatpush1.bf16.msra.mxu0 %v2358
        %3540 = vmatprep.subr.bf16.mxu0 %v2351
        %3541 = vmatpush1.bf16.msra.mxu0 %v2350
        %3542 = vmatprep.subr.bf16.mxu0 %v2343
        %3543 = vmatpush1.bf16.msra.mxu0 %v2342
        %3544 = vmatprep.subr.bf16.mxu0 %v2463
        %3545 = vmatpush2.bf16.msra.mxu0 %v2462
        %3546 = vmatprep.subr.bf16.mxu0 %v2455
        %3547 = vmatpush2.bf16.msra.mxu0 %v2454
        %3548 = vmatprep.subr.bf16.mxu0 %v2447
        %3549 = vmatpush2.bf16.msra.mxu0 %v2446
        %3550 = vmatprep.subr.bf16.mxu0 %v2439
        %3551 = vmatpush2.bf16.msra.mxu0 %v2438
        %3552 = vmatprep.subr.bf16.mxu0 %v2431
        %3553 = vmatpush2.bf16.msra.mxu0 %v2430
        %3554 = vmatprep.subr.bf16.mxu0 %v2423
        %3555 = vmatpush2.bf16.msra.mxu0 %v2422
        %3556 = vmatprep.subr.bf16.mxu0 %v2415
        %3557 = vmatpush2.bf16.msra.mxu0 %v2414
        %3558 = vmatprep.subr.bf16.mxu0 %v2407
        %3559 = vmatpush2.bf16.msra.mxu0 %v2406
        %3560 = vmatprep.mubr.bf16.mxu0 %v243
        %3561 = vmatmul.mubr.bf16.gmra.mxu0 %v242
        %v3562 = vpop.f32.mrf.mxu0
        %v3563 = vadd.f32 %v775, %v3562
        %v3564 = vpop.f32.mrf.mxu0
        %v3565 = vadd.f32 %v779, %v3564
        %v3566 = vpop.f32.mrf.mxu0
        %v3567 = vpop.f32.mrf.mxu0
        %3568 = vdwg.mxu0
        %3569 = vmatprep.subr.bf16.mxu0 %v2527
        %3570 = vmatpush1.bf16.msra.mxu0 %v2526
        %3571 = vmatprep.subr.bf16.mxu0 %v2519
        %3572 = vmatpush1.bf16.msra.mxu0 %v2518
        %3573 = vmatprep.subr.bf16.mxu0 %v2511
        %3574 = vmatpush1.bf16.msra.mxu0 %v2510
        %3575 = vmatprep.subr.bf16.mxu0 %v2503
        %3576 = vmatpush1.bf16.msra.mxu0 %v2502
        %3577 = vmatprep.subr.bf16.mxu0 %v2495
        %3578 = vmatpush1.bf16.msra.mxu0 %v2494
        %3579 = vmatprep.subr.bf16.mxu0 %v2487
        %3580 = vmatpush1.bf16.msra.mxu0 %v2486
        %3581 = vmatprep.subr.bf16.mxu0 %v2479
        %3582 = vmatpush1.bf16.msra.mxu0 %v2478
        %3583 = vmatprep.subr.bf16.mxu0 %v2471
        %3584 = vmatpush1.bf16.msra.mxu0 %v2470
        %3585 = vmatprep.subr.bf16.mxu0 %v2591
        %3586 = vmatpush2.bf16.msra.mxu0 %v2590
        %3587 = vmatprep.subr.bf16.mxu0 %v2583
        %3588 = vmatpush2.bf16.msra.mxu0 %v2582
        %3589 = vmatprep.subr.bf16.mxu0 %v2575
        %3590 = vmatpush2.bf16.msra.mxu0 %v2574
        %3591 = vmatprep.subr.bf16.mxu0 %v2567
        %3592 = vmatpush2.bf16.msra.mxu0 %v2566
        %3593 = vmatprep.subr.bf16.mxu0 %v2559
        %3594 = vmatpush2.bf16.msra.mxu0 %v2558
        %3595 = vmatprep.subr.bf16.mxu0 %v2551
        %3596 = vmatpush2.bf16.msra.mxu0 %v2550
        %3597 = vmatprep.subr.bf16.mxu0 %v2543
        %3598 = vmatpush2.bf16.msra.mxu0 %v2542
        %3599 = vmatprep.subr.bf16.mxu0 %v2535
        %3600 = vmatpush2.bf16.msra.mxu0 %v2534
        %3601 = vmatprep.mubr.bf16.mxu0 %v245
        %3602 = vmatmul.mubr.bf16.gmra.mxu0 %v244
        %v3603 = vpop.f32.mrf.mxu0
        %v3604 = vadd.f32 %v3563, %v3603
        %v3605 = vpop.f32.mrf.mxu0
        %v3606 = vadd.f32 %v3565, %v3605
        %v3607 = vpop.f32.mrf.mxu0
        %v3608 = vpop.f32.mrf.mxu0
        %3609 = vdwg.mxu0
        %3610 = vmatprep.subr.bf16.mxu0 %v2655
        %3611 = vmatpush1.bf16.msra.mxu0 %v2654
        %3612 = vmatprep.subr.bf16.mxu0 %v2647
        %3613 = vmatpush1.bf16.msra.mxu0 %v2646
        %3614 = vmatprep.subr.bf16.mxu0 %v2639
        %3615 = vmatpush1.bf16.msra.mxu0 %v2638
        %3616 = vmatprep.subr.bf16.mxu0 %v2631
        %3617 = vmatpush1.bf16.msra.mxu0 %v2630
        %3618 = vmatprep.subr.bf16.mxu0 %v2623
        %3619 = vmatpush1.bf16.msra.mxu0 %v2622
        %3620 = vmatprep.subr.bf16.mxu0 %v2615
        %3621 = vmatpush1.bf16.msra.mxu0 %v2614
        %3622 = vmatprep.subr.bf16.mxu0 %v2607
        %3623 = vmatpush1.bf16.msra.mxu0 %v2606
        %3624 = vmatprep.subr.bf16.mxu0 %v2599
        %3625 = vmatpush1.bf16.msra.mxu0 %v2598
        %3626 = vmatprep.subr.bf16.mxu0 %v2719
        %3627 = vmatpush2.bf16.msra.mxu0 %v2718
        %3628 = vmatprep.subr.bf16.mxu0 %v2711
        %3629 = vmatpush2.bf16.msra.mxu0 %v2710
        %3630 = vmatprep.subr.bf16.mxu0 %v2703
        %3631 = vmatpush2.bf16.msra.mxu0 %v2702
        %3632 = vmatprep.subr.bf16.mxu0 %v2695
        %3633 = vmatpush2.bf16.msra.mxu0 %v2694
        %3634 = vmatprep.subr.bf16.mxu0 %v2687
        %3635 = vmatpush2.bf16.msra.mxu0 %v2686
        %3636 = vmatprep.subr.bf16.mxu0 %v2679
        %3637 = vmatpush2.bf16.msra.mxu0 %v2678
        %3638 = vmatprep.subr.bf16.mxu0 %v2671
        %3639 = vmatpush2.bf16.msra.mxu0 %v2670
        %3640 = vmatprep.subr.bf16.mxu0 %v2663
        %3641 = vmatpush2.bf16.msra.mxu0 %v2662
        %3642 = vmatprep.mubr.bf16.mxu0 %v247
        %3643 = vmatmul.mubr.bf16.gmra.mxu0 %v246
        %v3644 = vpop.f32.mrf.mxu0
        %v3645 = vadd.f32 %v3604, %v3644
        %v3646 = vpop.f32.mrf.mxu0
        %v3647 = vadd.f32 %v3606, %v3646
        %v3648 = vpop.f32.mrf.mxu0
        %v3649 = vpop.f32.mrf.mxu0
        %3650 = vdwg.mxu0
        %3651 = vmatprep.subr.bf16.mxu0 %v2783
        %3652 = vmatpush1.bf16.msra.mxu0 %v2782
        %3653 = vmatprep.subr.bf16.mxu0 %v2775
        %3654 = vmatpush1.bf16.msra.mxu0 %v2774
        %3655 = vmatprep.subr.bf16.mxu0 %v2767
        %3656 = vmatpush1.bf16.msra.mxu0 %v2766
        %3657 = vmatprep.subr.bf16.mxu0 %v2759
        %3658 = vmatpush1.bf16.msra.mxu0 %v2758
        %3659 = vmatprep.subr.bf16.mxu0 %v2751
        %3660 = vmatpush1.bf16.msra.mxu0 %v2750
        %3661 = vmatprep.subr.bf16.mxu0 %v2743
        %3662 = vmatpush1.bf16.msra.mxu0 %v2742
        %3663 = vmatprep.subr.bf16.mxu0 %v2735
        %3664 = vmatpush1.bf16.msra.mxu0 %v2734
        %3665 = vmatprep.subr.bf16.mxu0 %v2727
        %3666 = vmatpush1.bf16.msra.mxu0 %v2726
        %3667 = vmatprep.subr.bf16.mxu0 %v2847
        %3668 = vmatpush2.bf16.msra.mxu0 %v2846
        %3669 = vmatprep.subr.bf16.mxu0 %v2839
        %3670 = vmatpush2.bf16.msra.mxu0 %v2838
        %3671 = vmatprep.subr.bf16.mxu0 %v2831
        %3672 = vmatpush2.bf16.msra.mxu0 %v2830
        %3673 = vmatprep.subr.bf16.mxu0 %v2823
        %3674 = vmatpush2.bf16.msra.mxu0 %v2822
        %3675 = vmatprep.subr.bf16.mxu0 %v2815
        %3676 = vmatpush2.bf16.msra.mxu0 %v2814
        %3677 = vmatprep.subr.bf16.mxu0 %v2807
        %3678 = vmatpush2.bf16.msra.mxu0 %v2806
        %3679 = vmatprep.subr.bf16.mxu0 %v2799
        %3680 = vmatpush2.bf16.msra.mxu0 %v2798
        %3681 = vmatprep.subr.bf16.mxu0 %v2791
        %3682 = vmatpush2.bf16.msra.mxu0 %v2790
        %3683 = vmatprep.mubr.bf16.mxu0 %v249
        %3684 = vmatmul.mubr.bf16.gmra.mxu0 %v248
        %v3685 = vpop.f32.mrf.mxu0
        %v3686 = vadd.f32 %v3645, %v3685
        %v3687 = vpop.f32.mrf.mxu0
        %v3688 = vadd.f32 %v3647, %v3687
        %v3689 = vpop.f32.mrf.mxu0
        %v3690 = vpop.f32.mrf.mxu0
        %3691 = vdwg.mxu0
        %3692 = vmatprep.subr.bf16.mxu0 %v2401
        %3693 = vmatpush1.bf16.msra.mxu0 %v2400
        %3694 = vmatprep.subr.bf16.mxu0 %v2393
        %3695 = vmatpush1.bf16.msra.mxu0 %v2392
        %3696 = vmatprep.subr.bf16.mxu0 %v2385
        %3697 = vmatpush1.bf16.msra.mxu0 %v2384
        %3698 = vmatprep.subr.bf16.mxu0 %v2377
        %3699 = vmatpush1.bf16.msra.mxu0 %v2376
        %3700 = vmatprep.subr.bf16.mxu0 %v2369
        %3701 = vmatpush1.bf16.msra.mxu0 %v2368
        %3702 = vmatprep.subr.bf16.mxu0 %v2361
        %3703 = vmatpush1.bf16.msra.mxu0 %v2360
        %3704 = vmatprep.subr.bf16.mxu0 %v2353
        %3705 = vmatpush1.bf16.msra.mxu0 %v2352
        %3706 = vmatprep.subr.bf16.mxu0 %v2345
        %3707 = vmatpush1.bf16.msra.mxu0 %v2344
        %3708 = vmatprep.subr.bf16.mxu0 %v2465
        %3709 = vmatpush2.bf16.msra.mxu0 %v2464
        %3710 = vmatprep.subr.bf16.mxu0 %v2457
        %3711 = vmatpush2.bf16.msra.mxu0 %v2456
        %3712 = vmatprep.subr.bf16.mxu0 %v2449
        %3713 = vmatpush2.bf16.msra.mxu0 %v2448
        %3714 = vmatprep.subr.bf16.mxu0 %v2441
        %3715 = vmatpush2.bf16.msra.mxu0 %v2440
        %3716 = vmatprep.subr.bf16.mxu0 %v2433
        %3717 = vmatpush2.bf16.msra.mxu0 %v2432
        %3718 = vmatprep.subr.bf16.mxu0 %v2425
        %3719 = vmatpush2.bf16.msra.mxu0 %v2424
        %3720 = vmatprep.subr.bf16.mxu0 %v2417
        %3721 = vmatpush2.bf16.msra.mxu0 %v2416
        %3722 = vmatprep.subr.bf16.mxu0 %v2409
        %3723 = vmatpush2.bf16.msra.mxu0 %v2408
        %3724 = vmatprep.mubr.bf16.mxu0 %v243
        %3725 = vmatmul.mubr.bf16.gmra.mxu0 %v242
        %v3726 = vpop.f32.mrf.mxu0
        %v3727 = vadd.f32 %v783, %v3726
        %v3728 = vpop.f32.mrf.mxu0
        %v3729 = vadd.f32 %v787, %v3728
        %v3730 = vpop.f32.mrf.mxu0
        %v3731 = vpop.f32.mrf.mxu0
        %3732 = vdwg.mxu0
        %3733 = vmatprep.subr.bf16.mxu0 %v2529
        %3734 = vmatpush1.bf16.msra.mxu0 %v2528
        %3735 = vmatprep.subr.bf16.mxu0 %v2521
        %3736 = vmatpush1.bf16.msra.mxu0 %v2520
        %3737 = vmatprep.subr.bf16.mxu0 %v2513
        %3738 = vmatpush1.bf16.msra.mxu0 %v2512
        %3739 = vmatprep.subr.bf16.mxu0 %v2505
        %3740 = vmatpush1.bf16.msra.mxu0 %v2504
        %3741 = vmatprep.subr.bf16.mxu0 %v2497
        %3742 = vmatpush1.bf16.msra.mxu0 %v2496
        %3743 = vmatprep.subr.bf16.mxu0 %v2489
        %3744 = vmatpush1.bf16.msra.mxu0 %v2488
        %3745 = vmatprep.subr.bf16.mxu0 %v2481
        %3746 = vmatpush1.bf16.msra.mxu0 %v2480
        %3747 = vmatprep.subr.bf16.mxu0 %v2473
        %3748 = vmatpush1.bf16.msra.mxu0 %v2472
        %3749 = vmatprep.subr.bf16.mxu0 %v2593
        %3750 = vmatpush2.bf16.msra.mxu0 %v2592
        %3751 = vmatprep.subr.bf16.mxu0 %v2585
        %3752 = vmatpush2.bf16.msra.mxu0 %v2584
        %3753 = vmatprep.subr.bf16.mxu0 %v2577
        %3754 = vmatpush2.bf16.msra.mxu0 %v2576
        %3755 = vmatprep.subr.bf16.mxu0 %v2569
        %3756 = vmatpush2.bf16.msra.mxu0 %v2568
        %3757 = vmatprep.subr.bf16.mxu0 %v2561
        %3758 = vmatpush2.bf16.msra.mxu0 %v2560
        %3759 = vmatprep.subr.bf16.mxu0 %v2553
        %3760 = vmatpush2.bf16.msra.mxu0 %v2552
        %3761 = vmatprep.subr.bf16.mxu0 %v2545
        %3762 = vmatpush2.bf16.msra.mxu0 %v2544
        %3763 = vmatprep.subr.bf16.mxu0 %v2537
        %3764 = vmatpush2.bf16.msra.mxu0 %v2536
        %3765 = vmatprep.mubr.bf16.mxu0 %v245
        %3766 = vmatmul.mubr.bf16.gmra.mxu0 %v244
        %v3767 = vpop.f32.mrf.mxu0
        %v3768 = vadd.f32 %v3727, %v3767
        %v3769 = vpop.f32.mrf.mxu0
        %v3770 = vadd.f32 %v3729, %v3769
        %v3771 = vpop.f32.mrf.mxu0
        %v3772 = vpop.f32.mrf.mxu0
        %3773 = vdwg.mxu0
        %3774 = vmatprep.subr.bf16.mxu0 %v2657
        %3775 = vmatpush1.bf16.msra.mxu0 %v2656
        %3776 = vmatprep.subr.bf16.mxu0 %v2649
        %3777 = vmatpush1.bf16.msra.mxu0 %v2648
        %3778 = vmatprep.subr.bf16.mxu0 %v2641
        %3779 = vmatpush1.bf16.msra.mxu0 %v2640
        %3780 = vmatprep.subr.bf16.mxu0 %v2633
        %3781 = vmatpush1.bf16.msra.mxu0 %v2632
        %3782 = vmatprep.subr.bf16.mxu0 %v2625
        %3783 = vmatpush1.bf16.msra.mxu0 %v2624
        %3784 = vmatprep.subr.bf16.mxu0 %v2617
        %3785 = vmatpush1.bf16.msra.mxu0 %v2616
        %3786 = vmatprep.subr.bf16.mxu0 %v2609
        %3787 = vmatpush1.bf16.msra.mxu0 %v2608
        %3788 = vmatprep.subr.bf16.mxu0 %v2601
        %3789 = vmatpush1.bf16.msra.mxu0 %v2600
        %3790 = vmatprep.subr.bf16.mxu0 %v2721
        %3791 = vmatpush2.bf16.msra.mxu0 %v2720
        %3792 = vmatprep.subr.bf16.mxu0 %v2713
        %3793 = vmatpush2.bf16.msra.mxu0 %v2712
        %3794 = vmatprep.subr.bf16.mxu0 %v2705
        %3795 = vmatpush2.bf16.msra.mxu0 %v2704
        %3796 = vmatprep.subr.bf16.mxu0 %v2697
        %3797 = vmatpush2.bf16.msra.mxu0 %v2696
        %3798 = vmatprep.subr.bf16.mxu0 %v2689
        %3799 = vmatpush2.bf16.msra.mxu0 %v2688
        %3800 = vmatprep.subr.bf16.mxu0 %v2681
        %3801 = vmatpush2.bf16.msra.mxu0 %v2680
        %3802 = vmatprep.subr.bf16.mxu0 %v2673
        %3803 = vmatpush2.bf16.msra.mxu0 %v2672
        %3804 = vmatprep.subr.bf16.mxu0 %v2665
        %3805 = vmatpush2.bf16.msra.mxu0 %v2664
        %3806 = vmatprep.mubr.bf16.mxu0 %v247
        %3807 = vmatmul.mubr.bf16.gmra.mxu0 %v246
        %v3808 = vpop.f32.mrf.mxu0
        %v3809 = vadd.f32 %v3768, %v3808
        %v3810 = vpop.f32.mrf.mxu0
        %v3811 = vadd.f32 %v3770, %v3810
        %v3812 = vpop.f32.mrf.mxu0
        %v3813 = vpop.f32.mrf.mxu0
        %3814 = vdwg.mxu0
        %3815 = vmatprep.subr.bf16.mxu0 %v2785
        %3816 = vmatpush1.bf16.msra.mxu0 %v2784
        %3817 = vmatprep.subr.bf16.mxu0 %v2777
        %3818 = vmatpush1.bf16.msra.mxu0 %v2776
        %3819 = vmatprep.subr.bf16.mxu0 %v2769
        %3820 = vmatpush1.bf16.msra.mxu0 %v2768
        %3821 = vmatprep.subr.bf16.mxu0 %v2761
        %3822 = vmatpush1.bf16.msra.mxu0 %v2760
        %3823 = vmatprep.subr.bf16.mxu0 %v2753
        %3824 = vmatpush1.bf16.msra.mxu0 %v2752
        %3825 = vmatprep.subr.bf16.mxu0 %v2745
        %3826 = vmatpush1.bf16.msra.mxu0 %v2744
        %3827 = vmatprep.subr.bf16.mxu0 %v2737
        %3828 = vmatpush1.bf16.msra.mxu0 %v2736
        %3829 = vmatprep.subr.bf16.mxu0 %v2729
        %3830 = vmatpush1.bf16.msra.mxu0 %v2728
        %3831 = vmatprep.subr.bf16.mxu0 %v2849
        %3832 = vmatpush2.bf16.msra.mxu0 %v2848
        %3833 = vmatprep.subr.bf16.mxu0 %v2841
        %3834 = vmatpush2.bf16.msra.mxu0 %v2840
        %3835 = vmatprep.subr.bf16.mxu0 %v2833
        %3836 = vmatpush2.bf16.msra.mxu0 %v2832
        %3837 = vmatprep.subr.bf16.mxu0 %v2825
        %3838 = vmatpush2.bf16.msra.mxu0 %v2824
        %3839 = vmatprep.subr.bf16.mxu0 %v2817
        %3840 = vmatpush2.bf16.msra.mxu0 %v2816
        %3841 = vmatprep.subr.bf16.mxu0 %v2809
        %3842 = vmatpush2.bf16.msra.mxu0 %v2808
        %3843 = vmatprep.subr.bf16.mxu0 %v2801
        %3844 = vmatpush2.bf16.msra.mxu0 %v2800
        %3845 = vmatprep.subr.bf16.mxu0 %v2793
        %3846 = vmatpush2.bf16.msra.mxu0 %v2792
        %3847 = vmatprep.mubr.bf16.mxu0 %v249
        %3848 = vmatmul.mubr.bf16.gmra.mxu0 %v248
        %v3849 = vpop.f32.mrf.mxu0
        %v3850 = vadd.f32 %v3809, %v3849
        %v3851 = vpop.f32.mrf.mxu0
        %v3852 = vadd.f32 %v3811, %v3851
        %v3853 = vpop.f32.mrf.mxu0
        %v3854 = vpop.f32.mrf.mxu0
        %3855 = vdwg.mxu0
        %3856 = vmatprep.subr.bf16.mxu0 %v2403
        %3857 = vmatpush1.bf16.msra.mxu0 %v2402
        %3858 = vmatprep.subr.bf16.mxu0 %v2395
        %3859 = vmatpush1.bf16.msra.mxu0 %v2394
        %3860 = vmatprep.subr.bf16.mxu0 %v2387
        %3861 = vmatpush1.bf16.msra.mxu0 %v2386
        %3862 = vmatprep.subr.bf16.mxu0 %v2379
        %3863 = vmatpush1.bf16.msra.mxu0 %v2378
        %3864 = vmatprep.subr.bf16.mxu0 %v2371
        %3865 = vmatpush1.bf16.msra.mxu0 %v2370
        %3866 = vmatprep.subr.bf16.mxu0 %v2363
        %3867 = vmatpush1.bf16.msra.mxu0 %v2362
        %3868 = vmatprep.subr.bf16.mxu0 %v2355
        %3869 = vmatpush1.bf16.msra.mxu0 %v2354
        %3870 = vmatprep.subr.bf16.mxu0 %v2347
        %3871 = vmatpush1.bf16.msra.mxu0 %v2346
        %3872 = vmatprep.subr.bf16.mxu0 %v2467
        %3873 = vmatpush2.bf16.msra.mxu0 %v2466
        %3874 = vmatprep.subr.bf16.mxu0 %v2459
        %3875 = vmatpush2.bf16.msra.mxu0 %v2458
        %3876 = vmatprep.subr.bf16.mxu0 %v2451
        %3877 = vmatpush2.bf16.msra.mxu0 %v2450
        %3878 = vmatprep.subr.bf16.mxu0 %v2443
        %3879 = vmatpush2.bf16.msra.mxu0 %v2442
        %3880 = vmatprep.subr.bf16.mxu0 %v2435
        %3881 = vmatpush2.bf16.msra.mxu0 %v2434
        %3882 = vmatprep.subr.bf16.mxu0 %v2427
        %3883 = vmatpush2.bf16.msra.mxu0 %v2426
        %3884 = vmatprep.subr.bf16.mxu0 %v2419
        %3885 = vmatpush2.bf16.msra.mxu0 %v2418
        %3886 = vmatprep.subr.bf16.mxu0 %v2411
        %3887 = vmatpush2.bf16.msra.mxu0 %v2410
        %3888 = vmatprep.mubr.bf16.mxu0 %v243
        %3889 = vmatmul.mubr.bf16.gmra.mxu0 %v242
        %v3890 = vpop.f32.mrf.mxu0
        %v3891 = vadd.f32 %v791, %v3890
        %v3892 = vpop.f32.mrf.mxu0
        %v3893 = vadd.f32 %v795, %v3892
        %v3894 = vpop.f32.mrf.mxu0
        %v3895 = vpop.f32.mrf.mxu0
        %3896 = vdwg.mxu0
        %3897 = vmatprep.subr.bf16.mxu0 %v2531
        %3898 = vmatpush1.bf16.msra.mxu0 %v2530
        %3899 = vmatprep.subr.bf16.mxu0 %v2523
        %3900 = vmatpush1.bf16.msra.mxu0 %v2522
        %3901 = vmatprep.subr.bf16.mxu0 %v2515
        %3902 = vmatpush1.bf16.msra.mxu0 %v2514
        %3903 = vmatprep.subr.bf16.mxu0 %v2507
        %3904 = vmatpush1.bf16.msra.mxu0 %v2506
        %3905 = vmatprep.subr.bf16.mxu0 %v2499
        %3906 = vmatpush1.bf16.msra.mxu0 %v2498
        %3907 = vmatprep.subr.bf16.mxu0 %v2491
        %3908 = vmatpush1.bf16.msra.mxu0 %v2490
        %3909 = vmatprep.subr.bf16.mxu0 %v2483
        %3910 = vmatpush1.bf16.msra.mxu0 %v2482
        %3911 = vmatprep.subr.bf16.mxu0 %v2475
        %3912 = vmatpush1.bf16.msra.mxu0 %v2474
        %3913 = vmatprep.subr.bf16.mxu0 %v2595
        %3914 = vmatpush2.bf16.msra.mxu0 %v2594
        %3915 = vmatprep.subr.bf16.mxu0 %v2587
        %3916 = vmatpush2.bf16.msra.mxu0 %v2586
        %3917 = vmatprep.subr.bf16.mxu0 %v2579
        %3918 = vmatpush2.bf16.msra.mxu0 %v2578
        %3919 = vmatprep.subr.bf16.mxu0 %v2571
        %3920 = vmatpush2.bf16.msra.mxu0 %v2570
        %3921 = vmatprep.subr.bf16.mxu0 %v2563
        %3922 = vmatpush2.bf16.msra.mxu0 %v2562
        %3923 = vmatprep.subr.bf16.mxu0 %v2555
        %3924 = vmatpush2.bf16.msra.mxu0 %v2554
        %3925 = vmatprep.subr.bf16.mxu0 %v2547
        %3926 = vmatpush2.bf16.msra.mxu0 %v2546
        %3927 = vmatprep.subr.bf16.mxu0 %v2539
        %3928 = vmatpush2.bf16.msra.mxu0 %v2538
        %3929 = vmatprep.mubr.bf16.mxu0 %v245
        %3930 = vmatmul.mubr.bf16.gmra.mxu0 %v244
        %v3931 = vpop.f32.mrf.mxu0
        %v3932 = vadd.f32 %v3891, %v3931
        %v3933 = vpop.f32.mrf.mxu0
        %v3934 = vadd.f32 %v3893, %v3933
        %v3935 = vpop.f32.mrf.mxu0
        %v3936 = vpop.f32.mrf.mxu0
        %3937 = vdwg.mxu0
        %3938 = vmatprep.subr.bf16.mxu0 %v2659
        %3939 = vmatpush1.bf16.msra.mxu0 %v2658
        %3940 = vmatprep.subr.bf16.mxu0 %v2651
        %3941 = vmatpush1.bf16.msra.mxu0 %v2650
        %3942 = vmatprep.subr.bf16.mxu0 %v2643
        %3943 = vmatpush1.bf16.msra.mxu0 %v2642
        %3944 = vmatprep.subr.bf16.mxu0 %v2635
        %3945 = vmatpush1.bf16.msra.mxu0 %v2634
        %3946 = vmatprep.subr.bf16.mxu0 %v2627
        %3947 = vmatpush1.bf16.msra.mxu0 %v2626
        %3948 = vmatprep.subr.bf16.mxu0 %v2619
        %3949 = vmatpush1.bf16.msra.mxu0 %v2618
        %3950 = vmatprep.subr.bf16.mxu0 %v2611
        %3951 = vmatpush1.bf16.msra.mxu0 %v2610
        %3952 = vmatprep.subr.bf16.mxu0 %v2603
        %3953 = vmatpush1.bf16.msra.mxu0 %v2602
        %3954 = vmatprep.subr.bf16.mxu0 %v2723
        %3955 = vmatpush2.bf16.msra.mxu0 %v2722
        %3956 = vmatprep.subr.bf16.mxu0 %v2715
        %3957 = vmatpush2.bf16.msra.mxu0 %v2714
        %3958 = vmatprep.subr.bf16.mxu0 %v2707
        %3959 = vmatpush2.bf16.msra.mxu0 %v2706
        %3960 = vmatprep.subr.bf16.mxu0 %v2699
        %3961 = vmatpush2.bf16.msra.mxu0 %v2698
        %3962 = vmatprep.subr.bf16.mxu0 %v2691
        %3963 = vmatpush2.bf16.msra.mxu0 %v2690
        %3964 = vmatprep.subr.bf16.mxu0 %v2683
        %3965 = vmatpush2.bf16.msra.mxu0 %v2682
        %3966 = vmatprep.subr.bf16.mxu0 %v2675
        %3967 = vmatpush2.bf16.msra.mxu0 %v2674
        %3968 = vmatprep.subr.bf16.mxu0 %v2667
        %3969 = vmatpush2.bf16.msra.mxu0 %v2666
        %3970 = vmatprep.mubr.bf16.mxu0 %v247
        %3971 = vmatmul.mubr.bf16.gmra.mxu0 %v246
        %v3972 = vpop.f32.mrf.mxu0
        %v3973 = vadd.f32 %v3932, %v3972
        %v3974 = vpop.f32.mrf.mxu0
        %v3975 = vadd.f32 %v3934, %v3974
        %v3976 = vpop.f32.mrf.mxu0
        %v3977 = vpop.f32.mrf.mxu0
        %3978 = vdwg.mxu0
        %3979 = vmatprep.subr.bf16.mxu0 %v2787
        %3980 = vmatpush1.bf16.msra.mxu0 %v2786
        %3981 = vmatprep.subr.bf16.mxu0 %v2779
        %3982 = vmatpush1.bf16.msra.mxu0 %v2778
        %3983 = vmatprep.subr.bf16.mxu0 %v2771
        %3984 = vmatpush1.bf16.msra.mxu0 %v2770
        %3985 = vmatprep.subr.bf16.mxu0 %v2763
        %3986 = vmatpush1.bf16.msra.mxu0 %v2762
        %3987 = vmatprep.subr.bf16.mxu0 %v2755
        %3988 = vmatpush1.bf16.msra.mxu0 %v2754
        %3989 = vmatprep.subr.bf16.mxu0 %v2747
        %3990 = vmatpush1.bf16.msra.mxu0 %v2746
        %3991 = vmatprep.subr.bf16.mxu0 %v2739
        %3992 = vmatpush1.bf16.msra.mxu0 %v2738
        %3993 = vmatprep.subr.bf16.mxu0 %v2731
        %3994 = vmatpush1.bf16.msra.mxu0 %v2730
        %3995 = vmatprep.subr.bf16.mxu0 %v2851
        %3996 = vmatpush2.bf16.msra.mxu0 %v2850
        %3997 = vmatprep.subr.bf16.mxu0 %v2843
        %3998 = vmatpush2.bf16.msra.mxu0 %v2842
        %3999 = vmatprep.subr.bf16.mxu0 %v2835
        %4000 = vmatpush2.bf16.msra.mxu0 %v2834
        %4001 = vmatprep.subr.bf16.mxu0 %v2827
        %4002 = vmatpush2.bf16.msra.mxu0 %v2826
        %4003 = vmatprep.subr.bf16.mxu0 %v2819
        %4004 = vmatpush2.bf16.msra.mxu0 %v2818
        %4005 = vmatprep.subr.bf16.mxu0 %v2811
        %4006 = vmatpush2.bf16.msra.mxu0 %v2810
        %4007 = vmatprep.subr.bf16.mxu0 %v2803
        %4008 = vmatpush2.bf16.msra.mxu0 %v2802
        %4009 = vmatprep.subr.bf16.mxu0 %v2795
        %4010 = vmatpush2.bf16.msra.mxu0 %v2794
        %4011 = vmatprep.mubr.bf16.mxu0 %v249
        %4012 = vmatmul.mubr.bf16.gmra.mxu0 %v248
        %v4013 = vpop.f32.mrf.mxu0
        %v4014 = vadd.f32 %v3973, %v4013
        %v4015 = vpop.f32.mrf.mxu0
        %v4016 = vadd.f32 %v3975, %v4015
        %v4017 = vpop.f32.mrf.mxu0
        %v4018 = vpop.f32.mrf.mxu0
        %4019 = vdwg.mxu0
        %v4020 = vmax.f32 %v3522, 0.0
        %v4021 = vmax.f32 %v3524, 0.0
        %v4022 = vmax.f32 %v3686, 0.0
        %v4023 = vmax.f32 %v3688, 0.0
        %v4024 = vmax.f32 %v3850, 0.0
        %v4025 = vmax.f32 %v3852, 0.0
        %v4026 = vmax.f32 %v4014, 0.0
        %v4027 = vmax.f32 %v4016, 0.0
        %p4028 = scmp.lt.s32.totalorder %s20, 4
        // Predicated region
        $region45: #{vae_mlp_mri_forward.6} parent=31 // pred_check
          %p4029 = pneg %p4028
        $region46: #{vae_mlp_mri_forward.6} parent=31 // pred_check_branch
          %4031 = sbr.rel (%p4029) target = $region48
        $region47: #{vae_mlp_mri_forward.6} parent=31 // pred_region
          %4032 = vst [vmem:[#allocation2] sm:$0xff] %v4020
          %4033 = vst [vmem:[#allocation2 + $0x8] sm:$0xff] %v4021
          %4034 = vst [vmem:[#allocation2 + $0x10] sm:$0xff] %v4022
          %4035 = vst [vmem:[#allocation2 + $0x18] sm:$0xff] %v4023
          %4036 = vst [vmem:[#allocation2 + $0x20] sm:$0xff] %v4024
          %4037 = vst [vmem:[#allocation2 + $0x28] sm:$0xff] %v4025
          %4038 = vst [vmem:[#allocation2 + $0x30] sm:$0xff] %v4026
          %4039 = vst [vmem:[#allocation2 + $0x38] sm:$0xff] %v4027
        $region48: #{vae_mlp_mri_forward.6} parent=31 // pred_fallthru
          _
        %p4040 = scmp.eq.s32.totalorder %s20, 4
        // Predicated region
        $region49: #{vae_mlp_mri_forward.6} parent=31 // pred_check
          %p4041 = pneg %p4040
        $region50: #{vae_mlp_mri_forward.6} parent=31 // pred_check_branch
          %4043 = sbr.rel (%p4041) target = $region52
        $region51: #{vae_mlp_mri_forward.6} parent=31 // pred_region
          %4044 = vst [vmem:[%s3] sm:$0xff] %v4020
          %4045 = vst [vmem:[%s3 + $0x8] sm:$0xff] %v4021
          %4046 = vst [vmem:[%s3 + $0x10] sm:$0xff] %v4022
          %4047 = vst [vmem:[%s3 + $0x18] sm:$0xff] %v4023
          %4048 = vst [vmem:[%s3 + $0x20] sm:$0xff] %v4024
          %4049 = vst [vmem:[%s3 + $0x28] sm:$0xff] %v4025
          %4050 = vst [vmem:[%s3 + $0x30] sm:$0xff] %v4026
          %4051 = vst [vmem:[%s3 + $0x38] sm:$0xff] %v4027
        $region52: #{vae_mlp_mri_forward.6} parent=31 // pred_fallthru
          _
        // Predicated region
        $region53: #{vae_mlp_mri_forward.6} parent=31 // pred_check
          %p4052 = pneg %p106
        $region54: #{vae_mlp_mri_forward.6} parent=31 // pred_check_branch
          %4054 = sbr.rel (%p4052) target = $region56
        $region55: #{vae_mlp_mri_forward.6} parent=31 // pred_region
          _
        $region56: #{vae_mlp_mri_forward.6} parent=31 // pred_fallthru
          _
        // Predicated region
        $region57: #{vae_mlp_mri_forward.6} parent=31 // pred_check
          %p4055 = pneg %p106
        $region58: #{vae_mlp_mri_forward.6} parent=31 // pred_check_branch
          %4057 = sbr.rel (%p4055) target = $region60
        $region59: #{vae_mlp_mri_forward.6} parent=31 // pred_region
          _
        $region60: #{vae_mlp_mri_forward.6} parent=31 // pred_fallthru
          _
      $region32: #{vae_mlp_mri_forward.6} parent=5 // pred_fallthru
        _
      %p4058 = scmp.le.s32.totalorder 2, %s15
      // Predicated region
      $region61: #{vae_mlp_mri_forward.6} parent=5 // pred_check
        %p4059 = pneg %p4058
      $region62: #{vae_mlp_mri_forward.6} parent=5 // pred_check_branch
        %4061 = sbr.rel (%p4059) target = $region64
      $region63: #{vae_mlp_mri_forward.6} parent=5 // pred_region
        %s4062 = ssub.s32 %s15, 2
      $region64: #{vae_mlp_mri_forward.6} parent=5 // pred_fallthru
        _
    $region6: #{vae_mlp_mri_forward.6} parent=1 // loop_footer
      %s19 = sadd.s32 1, %s15
    $region7: #{vae_mlp_mri_forward.6} parent=1 // loop_footer_branch
      %14 = sbr.rel target = $region3
    $region8: #{vae_mlp_mri_forward.6} parent=1 // loop_exit
      _
    %4063 = vsyncpa [#allocation4], 1
    %s4064 = scalar_lea.sflag [#allocation4], 1
    %4065 = vsyncpa %s4064, 1
    %4066 = vsyncpa [#allocation6], 1
    %s4067 = scalar_lea.sflag [#allocation6], 1
    %4068 = vsyncpa %s4067, 1

</llo_original>
